<compile_context>
chip_gen: v6e
topology: v6e:2x2x1
jax: 0.10.0
libtpu: 0.0.40
codegen_flags: <defaults>
</compile_context>

<pallas_src>
import functools

import jax
import jax.numpy as jnp
from jax import lax
from jax.experimental import pallas as pl
from jax.experimental.pallas import tpu as pltpu

CONTEXT_LENGTH = 94
INST_LENGTH = 39
LANE_BLK = 128            # one 128-lane block per sample inside a tile


def _cnn3_p2_kernel(ck1, ck2, ck3, ch3, bt,
                    x_ref, x0_ref, e_ref,          # x slab, x[:, :, 0], block-broadcast E
                    wp0_ref, wp1_ref, bp_ref,      # convp taps 0/1 + bias
                    w2_ref, b2_ref,                # convp2 (Linear pc->pc)
                    w1_ref, b1_ref,                # conv1  (ck1, ch1, pc)
                    wc2_ref, bc2_ref,              # conv2  (ck2, ch2, ch1)
                    wc3_ref, bc3_ref,              # conv3  (ck3, ch3, ch2)
                    wf1_ref, bf1_ref,              # fc1    (ch3, f1, bt*128) replicated/padded
                    wf2_ref, bf2_ref,              # fc2    (f1, out)
                    o_ref,
                    s1, s2, s3):
    f32 = jnp.float32
    W = bt * LANE_BLK

    # ---- pairwise "convp" over (0, i) for i = 1..93, then convp2 -------------
    # h[p, b*128+l] = Wp1 . x[b,:,l] + Wp0 . x[b,:,0] + bp   (valid for l in [1,94))
    xv = x_ref[...]                                             # (39, W)
    h = jnp.dot(wp1_ref[...], xv, preferred_element_type=f32)   # (pc, W)
    # per-sample base term Wp0 . x[b,:,0], broadcast across each 128-lane block
    base_pb = lax.dot_general(wp0_ref[...], x0_ref[...],
                              (((1,), (1,)), ((), ())),
                              preferred_element_type=f32)       # (pc, bt)
    base = jnp.dot(base_pb, e_ref[...], preferred_element_type=f32)  # (pc, W)
    h = jnp.maximum(h + base + bp_ref[...], 0.0)
    y = jnp.dot(w2_ref[...], h, preferred_element_type=f32) + b2_ref[...]
    s1[:, pl.ds(0, W)] = jnp.maximum(y, 0.0)                    # (pc, W)
    s1[:, pl.ds(W, LANE_BLK)] = jnp.zeros((s1.shape[0], LANE_BLK), f32)

    # ---- conv1 (valid convp output index l-1 sits at slab column l -> +1 shift)
    acc = b1_ref[...]
    for k in range(ck1):
        acc = acc + jnp.dot(w1_ref[k], s1[:, pl.ds(k + 1, W)],
                            preferred_element_type=f32)
    s2[:, pl.ds(0, W)] = jnp.maximum(acc, 0.0)                  # (ch1, W)
    s2[:, pl.ds(W, LANE_BLK)] = jnp.zeros((s2.shape[0], LANE_BLK), f32)

    # ---- conv2 ---------------------------------------------------------------
    acc = bc2_ref[...]
    for k in range(ck2):
        acc = acc + jnp.dot(wc2_ref[k], s2[:, pl.ds(k, W)],
                            preferred_element_type=f32)
    s3[:, pl.ds(0, W)] = jnp.maximum(acc, 0.0)                  # (ch2, W)
    s3[:, pl.ds(W, LANE_BLK)] = jnp.zeros((s3.shape[0], LANE_BLK), f32)

    # ---- conv3 (no shifted reads of its output -> keep it in vregs) ----------
    acc = bc3_ref[...]
    for k in range(ck3):
        acc = acc + jnp.dot(wc3_ref[k], s3[:, pl.ds(k, W)],
                            preferred_element_type=f32)
    s4 = jnp.maximum(acc, 0.0)                                  # (ch3, W)

    # ---- fc1: batched block-masked contraction per conv3 channel -------------
    # out1[b, f] = sum_c sum_l s4[c, b*128+l] * fc1_w[f, c*L3+l]
    # (E zeroes cross-sample lanes; wf1 is zero-padded for l >= L3.)
    ev = e_ref[...]                                             # (bt, W)
    f1 = bf1_ref.shape[-1]
    acc1 = jnp.zeros((bt, f1), f32)
    for c in range(ch3):
        s4e = ev * s4[c:c + 1, :]                               # (bt, W)
        acc1 = acc1 + lax.dot_general(s4e, wf1_ref[c],
                                      (((1,), (1,)), ((), ())),
                                      preferred_element_type=f32)   # (bt, f1)
    h1 = jnp.maximum(acc1 + bf1_ref[...], 0.0)                  # (bt, f1)

    # ---- fc2 ------------------------------------------------------------------
    o_ref[...] = jnp.dot(h1, wf2_ref[...],
                         preferred_element_type=f32) + bf2_ref[...]


def cnn3_p2_forward(x, params, *, ck1, ck2, ck3, b_tile=8):
    """Pallas forward.  b_tile must be a multiple of 8 (sublane granularity)."""
    (wp, bp, w2, b2, wc1, bc1, wc2, bc2, wc3, bc3,
     wf1, bf1, wf2, bf2) = params
    B = x.shape[0]
    x = x.reshape(B, INST_LENGTH, CONTEXT_LENGTH).astype(jnp.float32)
    pc = wp.shape[0]
    ch1, ch2, ch3 = wc1.shape[0], wc2.shape[0], wc3.shape[0]
    f1 = wf1.shape[0]
    n_out = wf2.shape[0]
    Lp = CONTEXT_LENGTH - 1
    L1 = Lp - ck1 + 1
    L2 = L1 - ck2 + 1
    L3 = L2 - ck3 + 1

    bt = b_tile
    Bp = ((B + bt - 1) // bt) * bt          # pad batch to a multiple of b_tile
    n_steps = Bp // bt
    W = bt * LANE_BLK

    # ---- input re-layout (plain-JAX glue): one 128-lane block per sample -----
    xp = jnp.pad(x, ((0, Bp - B), (0, 0), (0, LANE_BLK - CONTEXT_LENGTH)))
    x_slab = jnp.transpose(xp, (1, 0, 2)).reshape(INST_LENGTH, Bp * LANE_BLK)
    x0 = jnp.pad(x[:, :, 0], ((0, Bp - B), (0, 0)))             # (Bp, 39)

    # block-broadcast / block-sum selector: E[b, b*128 + l] = 1
    e_mat = jnp.repeat(jnp.eye(bt, dtype=jnp.float32), LANE_BLK, axis=1)

    # ---- parameter re-layouts (plain-JAX glue) --------------------------------
    wp0 = wp[:, :, 0]
    wp1 = wp[:, :, 1]
    bpk = bp[:, None]
    b2k = b2[:, None]
    w1k = jnp.transpose(wc1, (2, 0, 1))                         # (ck1, ch1, pc)
    b1k = bc1[:, None]
    w2ck = jnp.transpose(wc2, (2, 0, 1))                        # (ck2, ch2, ch1)
    b2ck = bc2[:, None]
    w3ck = jnp.transpose(wc3, (2, 0, 1))                        # (ck3, ch3, ch2)
    b3ck = bc3[:, None]
    wf1_3d = jnp.transpose(wf1.reshape(f1, ch3, L3), (1, 0, 2)) # (ch3, f1, L3)
    wf1_pad = jnp.pad(wf1_3d, ((0, 0), (0, 0), (0, LANE_BLK - L3)))
    wf1rep = jnp.tile(wf1_pad, (1, 1, bt))                      # (ch3, f1, W)
    bf1k = bf1[None, :]
    wf2k = wf2.T                                                # (f1, out)
    bf2k = bf2[None, :]

    kernel = functools.partial(_cnn3_p2_kernel, ck1, ck2, ck3, ch3, bt)

    ins = (x_slab, x0, e_mat,
           wp0, wp1, bpk, w2, b2k,
           w1k, b1k, w2ck, b2ck, w3ck, b3ck,
           wf1rep, bf1k, wf2k, bf2k)

    def const_spec(a):
        return pl.BlockSpec(a.shape, lambda g, _nd=a.ndim: (0,) * _nd)

    in_specs = [
        pl.BlockSpec((INST_LENGTH, W), lambda g: (0, g)),       # x slab tile
        pl.BlockSpec((bt, INST_LENGTH), lambda g: (g, 0)),      # x[:, :, 0] tile
    ]
    in_specs += [const_spec(a) for a in ins[2:]]

    out = pl.pallas_call(
        kernel,
        out_shape=jax.ShapeDtypeStruct((Bp, n_out), jnp.float32),
        grid_spec=pltpu.PrefetchScalarGridSpec(
            num_scalar_prefetch=0,
            grid=(n_steps,),
            in_specs=in_specs,
            out_specs=pl.BlockSpec((bt, n_out), lambda g: (g, 0)),
            scratch_shapes=[
                pltpu.VMEM((pc, W + LANE_BLK), jnp.float32),
                pltpu.VMEM((ch1, W + LANE_BLK), jnp.float32),
                pltpu.VMEM((ch2, W + LANE_BLK), jnp.float32),
            ]),
        compiler_params=pltpu.CompilerParams(
            dimension_semantics=("parallel",)),
    )(*ins)
    return out[:B]


def cnn3_p2_reference(x, params, *, ck1, ck2, ck3):
    """Pure-JAX reference matching the PyTorch forward (for validation)."""
    (wp, bp, w2, b2, wc1, bc1, wc2, bc2, wc3, bc3,
     wf1, bf1, wf2, bf2) = params
    B = x.shape[0]
    x = x.reshape(B, INST_LENGTH, CONTEXT_LENGTH)
    base = jnp.einsum('oc,bc->bo', wp[:, :, 0], x[:, :, 0])
    rest = jnp.einsum('oc,bci->boi', wp[:, :, 1], x[:, :, 1:])
    h = jax.nn.relu(base[:, :, None] + rest + bp[None, :, None])
    y = jnp.einsum('po,boi->bpi', w2, h) + b2[None, :, None]
    a = jax.nn.relu(y)

    def conv1d(a, w, b):
        K = w.shape[2]
        Lo = a.shape[2] - K + 1
        out = b[None, :, None]
        for k in range(K):
            out = out + jnp.einsum('oc,bcl->bol', w[:, :, k], a[:, :, k:k + Lo])
        return out

    a = jax.nn.relu(conv1d(a, wc1, bc1))
    a = jax.nn.relu(conv1d(a, wc2, bc2))
    a = jax.nn.relu(conv1d(a, wc3, bc3))
    flat = a.reshape(B, -1)
    h1 = jax.nn.relu(flat @ wf1.T + bf1[None, :])
    return h1 @ wf2.T + bf2[None, :]


if __name__ == "__main__":
    # Small, deterministic hyper-parameters consistent with the module's __init__.
    out_dim, pc = 4, 16
    ck1, ch1 = 3, 16
    ck2, ch2 = 3, 16
    ck3, ch3 = 2, 8
    f1 = 32
    B = 10                                  # exercises batch padding (10 -> 16, 2 steps)
    L3 = CONTEXT_LENGTH - 1 - ck1 - ck2 - ck3 + 3
    f1_input = ch3 * L3

    key = jax.random.PRNGKey(0)
    ks = jax.random.split(key, 16)

    def init(k, shape, fan_in):
        bound = 1.0 / (fan_in ** 0.5)
        return jax.random.uniform(k, shape, jnp.float32, -bound, bound)

    params = (
        init(ks[0], (pc, INST_LENGTH, 2), INST_LENGTH * 2),    # convp.weight
        init(ks[1], (pc,), INST_LENGTH * 2),                   # convp.bias
        init(ks[2], (pc, pc), pc),                             # convp2.weight
        init(ks[3], (pc,), pc),                                # convp2.bias
        init(ks[4], (ch1, pc, ck1), pc * ck1),                 # conv1.weight
        init(ks[5], (ch1,), pc * ck1),                         # conv1.bias
        init(ks[6], (ch2, ch1, ck2), ch1 * ck2),               # conv2.weight
        init(ks[7], (ch2,), ch1 * ck2),                        # conv2.bias
        init(ks[8], (ch3, ch2, ck3), ch2 * ck3),               # conv3.weight
        init(ks[9], (ch3,), ch2 * ck3),                        # conv3.bias
        init(ks[10], (f1, f1_input), f1_input),                # fc1.weight
        init(ks[11], (f1,), f1_input),                         # fc1.bias
        init(ks[12], (out_dim, f1), f1),                       # fc2.weight
        init(ks[13], (out_dim,), f1),                          # fc2.bias
    )
    x = jax.random.normal(ks[14], (B, INST_LENGTH, CONTEXT_LENGTH), jnp.float32)

    y = jax.block_until_ready(
        cnn3_p2_forward(x, params, ck1=ck1, ck2=ck2, ck3=ck3, b_tile=8))
    y_ref = cnn3_p2_reference(x, params, ck1=ck1, ck2=ck2, ck3=ck3)

    assert y.shape == (B, out_dim)
    assert jnp.allclose(y, y_ref, atol=1e-3, rtol=1e-3)
    print("KERNEL_OK")
</pallas_src>

<mosaic_0001>
module attributes {stable_mosaic.version = 11 : i64} {
  func.func @_cnn3_p2_kernel(%arg0: i32, %arg1: memref<39x1024xf32, #tpu.memory_space<vmem>>, %arg2: memref<8x39xf32, #tpu.memory_space<vmem>>, %arg3: memref<8x1024xf32, #tpu.memory_space<vmem>>, %arg4: memref<16x39xf32, #tpu.memory_space<vmem>>, %arg5: memref<16x39xf32, #tpu.memory_space<vmem>>, %arg6: memref<16x1xf32, #tpu.memory_space<vmem>>, %arg7: memref<16x16xf32, #tpu.memory_space<vmem>>, %arg8: memref<16x1xf32, #tpu.memory_space<vmem>>, %arg9: memref<3x16x16xf32, #tpu.memory_space<vmem>>, %arg10: memref<16x1xf32, #tpu.memory_space<vmem>>, %arg11: memref<3x16x16xf32, #tpu.memory_space<vmem>>, %arg12: memref<16x1xf32, #tpu.memory_space<vmem>>, %arg13: memref<2x8x16xf32, #tpu.memory_space<vmem>>, %arg14: memref<8x1xf32, #tpu.memory_space<vmem>>, %arg15: memref<8x32x1024xf32, #tpu.memory_space<vmem>>, %arg16: memref<1x32xf32, #tpu.memory_space<vmem>>, %arg17: memref<32x4xf32, #tpu.memory_space<vmem>>, %arg18: memref<1x4xf32, #tpu.memory_space<vmem>>, %arg19: memref<8x4xf32, #tpu.memory_space<vmem>>, %arg20: memref<16x1152xf32, #tpu.memory_space<vmem>>, %arg21: memref<16x1152xf32, #tpu.memory_space<vmem>>, %arg22: memref<16x1152xf32, #tpu.memory_space<vmem>>) attributes {dimension_semantics = [#tpu.dimension_semantics<parallel>], iteration_bounds = array<i64: 2>, scalar_prefetch = 0 : i64, scratch_operands = 3 : i64, tpu.core_type = #tpu.core_type<tc>, window_params = [{transform_indices = @transform_0, window_bounds = array<i64: 39, 1024>}, {transform_indices = @transform_1, window_bounds = array<i64: 8, 39>}, {pipeline_mode = #tpu.pipeline_mode<synchronous>, transform_indices = @transform_2, window_bounds = array<i64: 8, 1024>}, {pipeline_mode = #tpu.pipeline_mode<synchronous>, transform_indices = @transform_3, window_bounds = array<i64: 16, 39>}, {pipeline_mode = #tpu.pipeline_mode<synchronous>, transform_indices = @transform_4, window_bounds = array<i64: 16, 39>}, {pipeline_mode = #tpu.pipeline_mode<synchronous>, transform_indices = @transform_5, window_bounds = array<i64: 16, 1>}, {pipeline_mode = #tpu.pipeline_mode<synchronous>, transform_indices = @transform_6, window_bounds = array<i64: 16, 16>}, {pipeline_mode = #tpu.pipeline_mode<synchronous>, transform_indices = @transform_7, window_bounds = array<i64: 16, 1>}, {pipeline_mode = #tpu.pipeline_mode<synchronous>, transform_indices = @transform_8, window_bounds = array<i64: 3, 16, 16>}, {pipeline_mode = #tpu.pipeline_mode<synchronous>, transform_indices = @transform_9, window_bounds = array<i64: 16, 1>}, {pipeline_mode = #tpu.pipeline_mode<synchronous>, transform_indices = @transform_10, window_bounds = array<i64: 3, 16, 16>}, {pipeline_mode = #tpu.pipeline_mode<synchronous>, transform_indices = @transform_11, window_bounds = array<i64: 16, 1>}, {pipeline_mode = #tpu.pipeline_mode<synchronous>, transform_indices = @transform_12, window_bounds = array<i64: 2, 8, 16>}, {pipeline_mode = #tpu.pipeline_mode<synchronous>, transform_indices = @transform_13, window_bounds = array<i64: 8, 1>}, {pipeline_mode = #tpu.pipeline_mode<synchronous>, transform_indices = @transform_14, window_bounds = array<i64: 8, 32, 1024>}, {pipeline_mode = #tpu.pipeline_mode<synchronous>, transform_indices = @transform_15, window_bounds = array<i64: 1, 32>}, {pipeline_mode = #tpu.pipeline_mode<synchronous>, transform_indices = @transform_16, window_bounds = array<i64: 32, 4>}, {pipeline_mode = #tpu.pipeline_mode<synchronous>, transform_indices = @transform_17, window_bounds = array<i64: 1, 4>}, {transform_indices = @transform_18, window_bounds = array<i64: 8, 4>}]} {
    %c0 = arith.constant 0 : index
    %c0_0 = arith.constant 0 : index
    %0 = vector.load %arg1[%c0, %c0_0] : memref<39x1024xf32, #tpu.memory_space<vmem>>, vector<39x1024xf32>
    %c0_1 = arith.constant 0 : index
    %c0_2 = arith.constant 0 : index
    %1 = vector.load %arg5[%c0_1, %c0_2] : memref<16x39xf32, #tpu.memory_space<vmem>>, vector<16x39xf32>
    %cst = arith.constant dense<0.000000e+00> : vector<16x1024xf32>
    %2 = tpu.matmul %1, %0, %cst {dimension_numbers = #tpu.dot_dimension_numbers<[1], [0], [0], [1], [0, 0, 1, 1], [], []>} : vector<16x39xf32>, vector<39x1024xf32>, vector<16x1024xf32> -> vector<16x1024xf32>
    %c0_3 = arith.constant 0 : index
    %c0_4 = arith.constant 0 : index
    %3 = vector.load %arg4[%c0_3, %c0_4] : memref<16x39xf32, #tpu.memory_space<vmem>>, vector<16x39xf32>
    %c0_5 = arith.constant 0 : index
    %c0_6 = arith.constant 0 : index
    %4 = vector.load %arg2[%c0_5, %c0_6] : memref<8x39xf32, #tpu.memory_space<vmem>>, vector<8x39xf32>
    %cst_7 = arith.constant dense<0.000000e+00> : vector<16x8xf32>
    %5 = tpu.matmul %3, %4, %cst_7 {dimension_numbers = #tpu.dot_dimension_numbers<[1], [1], [0], [0], [0, 0, 1, 0], [], []>} : vector<16x39xf32>, vector<8x39xf32>, vector<16x8xf32> -> vector<16x8xf32>
    %c0_8 = arith.constant 0 : index
    %c0_9 = arith.constant 0 : index
    %6 = vector.load %arg3[%c0_8, %c0_9] : memref<8x1024xf32, #tpu.memory_space<vmem>>, vector<8x1024xf32>
    %cst_10 = arith.constant dense<0.000000e+00> : vector<16x1024xf32>
    %7 = tpu.matmul %5, %6, %cst_10 {dimension_numbers = #tpu.dot_dimension_numbers<[1], [0], [0], [1], [0, 0, 1, 1], [], []>} : vector<16x8xf32>, vector<8x1024xf32>, vector<16x1024xf32> -> vector<16x1024xf32>
    %8 = arith.addf %2, %7 : vector<16x1024xf32>
    %c0_11 = arith.constant 0 : index
    %c0_12 = arith.constant 0 : index
    %9 = vector.load %arg6[%c0_11, %c0_12] : memref<16x1xf32, #tpu.memory_space<vmem>>, vector<16x1xf32>
    %10 = vector.broadcast %9 : vector<16x1xf32> to vector<16x1024xf32>
    %11 = arith.addf %8, %10 : vector<16x1024xf32>
    %cst_13 = arith.constant 0.000000e+00 : f32
    %12 = vector.broadcast %cst_13 : f32 to vector<16x1024xf32>
    %13 = arith.maximumf %11, %12 : vector<16x1024xf32>
    %c0_14 = arith.constant 0 : index
    %c0_15 = arith.constant 0 : index
    %14 = vector.load %arg7[%c0_14, %c0_15] : memref<16x16xf32, #tpu.memory_space<vmem>>, vector<16x16xf32>
    %cst_16 = arith.constant dense<0.000000e+00> : vector<16x1024xf32>
    %15 = tpu.matmul %14, %13, %cst_16 {dimension_numbers = #tpu.dot_dimension_numbers<[1], [0], [0], [1], [0, 0, 1, 1], [], []>} : vector<16x16xf32>, vector<16x1024xf32>, vector<16x1024xf32> -> vector<16x1024xf32>
    %c0_17 = arith.constant 0 : index
    %c0_18 = arith.constant 0 : index
    %16 = vector.load %arg8[%c0_17, %c0_18] : memref<16x1xf32, #tpu.memory_space<vmem>>, vector<16x1xf32>
    %17 = vector.broadcast %16 : vector<16x1xf32> to vector<16x1024xf32>
    %18 = arith.addf %15, %17 : vector<16x1024xf32>
    %cst_19 = arith.constant 0.000000e+00 : f32
    %19 = vector.broadcast %cst_19 : f32 to vector<16x1024xf32>
    %20 = arith.maximumf %18, %19 : vector<16x1024xf32>
    %c0_20 = arith.constant 0 : index
    %c0_21 = arith.constant 0 : index
    %21 = vector.load %arg20[%c0_20, %c0_21] : memref<16x1152xf32, #tpu.memory_space<vmem>>, vector<16x1024xf32>
    tpu.vector_store %arg20[%c0_20, %c0_21], %20 {strides = array<i32>} : memref<16x1152xf32, #tpu.memory_space<vmem>>, vector<16x1024xf32>,
    %cst_22 = arith.constant 0.000000e+00 : f32
    %22 = vector.broadcast %cst_22 : f32 to vector<16x128xf32>
    %c0_23 = arith.constant 0 : index
    %c1024 = arith.constant 1024 : index
    %23 = vector.load %arg20[%c0_23, %c1024] : memref<16x1152xf32, #tpu.memory_space<vmem>>, vector<16x128xf32>
    tpu.vector_store %arg20[%c0_23, %c1024], %22 {strides = array<i32>} : memref<16x1152xf32, #tpu.memory_space<vmem>>, vector<16x128xf32>,
    %c0_24 = arith.constant 0 : index
    %c0_25 = arith.constant 0 : index
    %24 = vector.load %arg10[%c0_24, %c0_25] : memref<16x1xf32, #tpu.memory_space<vmem>>, vector<16x1xf32>
    %c0_26 = arith.constant 0 : index
    %c0_27 = arith.constant 0 : index
    %c0_28 = arith.constant 0 : index
    %25 = vector.load %arg9[%c0_26, %c0_27, %c0_28] : memref<3x16x16xf32, #tpu.memory_space<vmem>>, vector<1x16x16xf32>
    %26 = vector.shape_cast %25 : vector<1x16x16xf32> to vector<16x16xf32>
    %c0_29 = arith.constant 0 : index
    %c1 = arith.constant 1 : index
    %27 = vector.load %arg20[%c0_29, %c1] : memref<16x1152xf32, #tpu.memory_space<vmem>>, vector<16x1024xf32>
    %cst_30 = arith.constant dense<0.000000e+00> : vector<16x1024xf32>
    %28 = tpu.matmul %26, %27, %cst_30 {dimension_numbers = #tpu.dot_dimension_numbers<[1], [0], [0], [1], [0, 0, 1, 1], [], []>} : vector<16x16xf32>, vector<16x1024xf32>, vector<16x1024xf32> -> vector<16x1024xf32>
    %29 = vector.broadcast %24 : vector<16x1xf32> to vector<16x1024xf32>
    %30 = arith.addf %29, %28 : vector<16x1024xf32>
    %c1_31 = arith.constant 1 : index
    %c0_32 = arith.constant 0 : index
    %c0_33 = arith.constant 0 : index
    %31 = vector.load %arg9[%c1_31, %c0_32, %c0_33] : memref<3x16x16xf32, #tpu.memory_space<vmem>>, vector<1x16x16xf32>
    %32 = vector.shape_cast %31 : vector<1x16x16xf32> to vector<16x16xf32>
    %c0_34 = arith.constant 0 : index
    %c2 = arith.constant 2 : index
    %33 = vector.load %arg20[%c0_34, %c2] : memref<16x1152xf32, #tpu.memory_space<vmem>>, vector<16x1024xf32>
    %cst_35 = arith.constant dense<0.000000e+00> : vector<16x1024xf32>
    %34 = tpu.matmul %32, %33, %cst_35 {dimension_numbers = #tpu.dot_dimension_numbers<[1], [0], [0], [1], [0, 0, 1, 1], [], []>} : vector<16x16xf32>, vector<16x1024xf32>, vector<16x1024xf32> -> vector<16x1024xf32>
    %35 = arith.addf %30, %34 : vector<16x1024xf32>
    %c2_36 = arith.constant 2 : index
    %c0_37 = arith.constant 0 : index
    %c0_38 = arith.constant 0 : index
    %36 = vector.load %arg9[%c2_36, %c0_37, %c0_38] : memref<3x16x16xf32, #tpu.memory_space<vmem>>, vector<1x16x16xf32>
    %37 = vector.shape_cast %36 : vector<1x16x16xf32> to vector<16x16xf32>
    %c0_39 = arith.constant 0 : index
    %c3 = arith.constant 3 : index
    %38 = vector.load %arg20[%c0_39, %c3] : memref<16x1152xf32, #tpu.memory_space<vmem>>, vector<16x1024xf32>
    %cst_40 = arith.constant dense<0.000000e+00> : vector<16x1024xf32>
    %39 = tpu.matmul %37, %38, %cst_40 {dimension_numbers = #tpu.dot_dimension_numbers<[1], [0], [0], [1], [0, 0, 1, 1], [], []>} : vector<16x16xf32>, vector<16x1024xf32>, vector<16x1024xf32> -> vector<16x1024xf32>
    %40 = arith.addf %35, %39 : vector<16x1024xf32>
    %cst_41 = arith.constant 0.000000e+00 : f32
    %41 = vector.broadcast %cst_41 : f32 to vector<16x1024xf32>
    %42 = arith.maximumf %40, %41 : vector<16x1024xf32>
    %c0_42 = arith.constant 0 : index
    %c0_43 = arith.constant 0 : index
    %43 = vector.load %arg21[%c0_42, %c0_43] : memref<16x1152xf32, #tpu.memory_space<vmem>>, vector<16x1024xf32>
    tpu.vector_store %arg21[%c0_42, %c0_43], %42 {strides = array<i32>} : memref<16x1152xf32, #tpu.memory_space<vmem>>, vector<16x1024xf32>,
    %cst_44 = arith.constant 0.000000e+00 : f32
    %44 = vector.broadcast %cst_44 : f32 to vector<16x128xf32>
    %c0_45 = arith.constant 0 : index
    %c1024_46 = arith.constant 1024 : index
    %45 = vector.load %arg21[%c0_45, %c1024_46] : memref<16x1152xf32, #tpu.memory_space<vmem>>, vector<16x128xf32>
    tpu.vector_store %arg21[%c0_45, %c1024_46], %44 {strides = array<i32>} : memref<16x1152xf32, #tpu.memory_space<vmem>>, vector<16x128xf32>,
    %c0_47 = arith.constant 0 : index
    %c0_48 = arith.constant 0 : index
    %46 = vector.load %arg12[%c0_47, %c0_48] : memref<16x1xf32, #tpu.memory_space<vmem>>, vector<16x1xf32>
    %c0_49 = arith.constant 0 : index
    %c0_50 = arith.constant 0 : index
    %c0_51 = arith.constant 0 : index
    %47 = vector.load %arg11[%c0_49, %c0_50, %c0_51] : memref<3x16x16xf32, #tpu.memory_space<vmem>>, vector<1x16x16xf32>
    %48 = vector.shape_cast %47 : vector<1x16x16xf32> to vector<16x16xf32>
    %c0_52 = arith.constant 0 : index
    %c0_53 = arith.constant 0 : index
    %49 = vector.load %arg21[%c0_52, %c0_53] : memref<16x1152xf32, #tpu.memory_space<vmem>>, vector<16x1024xf32>
    %cst_54 = arith.constant dense<0.000000e+00> : vector<16x1024xf32>
    %50 = tpu.matmul %48, %49, %cst_54 {dimension_numbers = #tpu.dot_dimension_numbers<[1], [0], [0], [1], [0, 0, 1, 1], [], []>} : vector<16x16xf32>, vector<16x1024xf32>, vector<16x1024xf32> -> vector<16x1024xf32>
    %51 = vector.broadcast %46 : vector<16x1xf32> to vector<16x1024xf32>
    %52 = arith.addf %51, %50 : vector<16x1024xf32>
    %c1_55 = arith.constant 1 : index
    %c0_56 = arith.constant 0 : index
    %c0_57 = arith.constant 0 : index
    %53 = vector.load %arg11[%c1_55, %c0_56, %c0_57] : memref<3x16x16xf32, #tpu.memory_space<vmem>>, vector<1x16x16xf32>
    %54 = vector.shape_cast %53 : vector<1x16x16xf32> to vector<16x16xf32>
    %c0_58 = arith.constant 0 : index
    %c1_59 = arith.constant 1 : index
    %55 = vector.load %arg21[%c0_58, %c1_59] : memref<16x1152xf32, #tpu.memory_space<vmem>>, vector<16x1024xf32>
    %cst_60 = arith.constant dense<0.000000e+00> : vector<16x1024xf32>
    %56 = tpu.matmul %54, %55, %cst_60 {dimension_numbers = #tpu.dot_dimension_numbers<[1], [0], [0], [1], [0, 0, 1, 1], [], []>} : vector<16x16xf32>, vector<16x1024xf32>, vector<16x1024xf32> -> vector<16x1024xf32>
    %57 = arith.addf %52, %56 : vector<16x1024xf32>
    %c2_61 = arith.constant 2 : index
    %c0_62 = arith.constant 0 : index
    %c0_63 = arith.constant 0 : index
    %58 = vector.load %arg11[%c2_61, %c0_62, %c0_63] : memref<3x16x16xf32, #tpu.memory_space<vmem>>, vector<1x16x16xf32>
    %59 = vector.shape_cast %58 : vector<1x16x16xf32> to vector<16x16xf32>
    %c0_64 = arith.constant 0 : index
    %c2_65 = arith.constant 2 : index
    %60 = vector.load %arg21[%c0_64, %c2_65] : memref<16x1152xf32, #tpu.memory_space<vmem>>, vector<16x1024xf32>
    %cst_66 = arith.constant dense<0.000000e+00> : vector<16x1024xf32>
    %61 = tpu.matmul %59, %60, %cst_66 {dimension_numbers = #tpu.dot_dimension_numbers<[1], [0], [0], [1], [0, 0, 1, 1], [], []>} : vector<16x16xf32>, vector<16x1024xf32>, vector<16x1024xf32> -> vector<16x1024xf32>
    %62 = arith.addf %57, %61 : vector<16x1024xf32>
    %cst_67 = arith.constant 0.000000e+00 : f32
    %63 = vector.broadcast %cst_67 : f32 to vector<16x1024xf32>
    %64 = arith.maximumf %62, %63 : vector<16x1024xf32>
    %c0_68 = arith.constant 0 : index
    %c0_69 = arith.constant 0 : index
    %65 = vector.load %arg22[%c0_68, %c0_69] : memref<16x1152xf32, #tpu.memory_space<vmem>>, vector<16x1024xf32>
    tpu.vector_store %arg22[%c0_68, %c0_69], %64 {strides = array<i32>} : memref<16x1152xf32, #tpu.memory_space<vmem>>, vector<16x1024xf32>,
    %cst_70 = arith.constant 0.000000e+00 : f32
    %66 = vector.broadcast %cst_70 : f32 to vector<16x128xf32>
    %c0_71 = arith.constant 0 : index
    %c1024_72 = arith.constant 1024 : index
    %67 = vector.load %arg22[%c0_71, %c1024_72] : memref<16x1152xf32, #tpu.memory_space<vmem>>, vector<16x128xf32>
    tpu.vector_store %arg22[%c0_71, %c1024_72], %66 {strides = array<i32>} : memref<16x1152xf32, #tpu.memory_space<vmem>>, vector<16x128xf32>,
    %c0_73 = arith.constant 0 : index
    %c0_74 = arith.constant 0 : index
    %68 = vector.load %arg14[%c0_73, %c0_74] : memref<8x1xf32, #tpu.memory_space<vmem>>, vector<8x1xf32>
    %c0_75 = arith.constant 0 : index
    %c0_76 = arith.constant 0 : index
    %c0_77 = arith.constant 0 : index
    %69 = vector.load %arg13[%c0_75, %c0_76, %c0_77] : memref<2x8x16xf32, #tpu.memory_space<vmem>>, vector<1x8x16xf32>
    %70 = vector.shape_cast %69 : vector<1x8x16xf32> to vector<8x16xf32>
    %c0_78 = arith.constant 0 : index
    %c0_79 = arith.constant 0 : index
    %71 = vector.load %arg22[%c0_78, %c0_79] : memref<16x1152xf32, #tpu.memory_space<vmem>>, vector<16x1024xf32>
    %cst_80 = arith.constant dense<0.000000e+00> : vector<8x1024xf32>
    %72 = tpu.matmul %70, %71, %cst_80 {dimension_numbers = #tpu.dot_dimension_numbers<[1], [0], [0], [1], [0, 0, 1, 1], [], []>} : vector<8x16xf32>, vector<16x1024xf32>, vector<8x1024xf32> -> vector<8x1024xf32>
    %73 = vector.broadcast %68 : vector<8x1xf32> to vector<8x1024xf32>
    %74 = arith.addf %73, %72 : vector<8x1024xf32>
    %c1_81 = arith.constant 1 : index
    %c0_82 = arith.constant 0 : index
    %c0_83 = arith.constant 0 : index
    %75 = vector.load %arg13[%c1_81, %c0_82, %c0_83] : memref<2x8x16xf32, #tpu.memory_space<vmem>>, vector<1x8x16xf32>
    %76 = vector.shape_cast %75 : vector<1x8x16xf32> to vector<8x16xf32>
    %c0_84 = arith.constant 0 : index
    %c1_85 = arith.constant 1 : index
    %77 = vector.load %arg22[%c0_84, %c1_85] : memref<16x1152xf32, #tpu.memory_space<vmem>>, vector<16x1024xf32>
    %cst_86 = arith.constant dense<0.000000e+00> : vector<8x1024xf32>
    %78 = tpu.matmul %76, %77, %cst_86 {dimension_numbers = #tpu.dot_dimension_numbers<[1], [0], [0], [1], [0, 0, 1, 1], [], []>} : vector<8x16xf32>, vector<16x1024xf32>, vector<8x1024xf32> -> vector<8x1024xf32>
    %79 = arith.addf %74, %78 : vector<8x1024xf32>
    %cst_87 = arith.constant 0.000000e+00 : f32
    %80 = vector.broadcast %cst_87 : f32 to vector<8x1024xf32>
    %81 = arith.maximumf %79, %80 : vector<8x1024xf32>
    %c0_88 = arith.constant 0 : index
    %c0_89 = arith.constant 0 : index
    %82 = vector.load %arg3[%c0_88, %c0_89] : memref<8x1024xf32, #tpu.memory_space<vmem>>, vector<8x1024xf32>
    %cst_90 = arith.constant 0.000000e+00 : f32
    %83 = vector.broadcast %cst_90 : f32 to vector<8x32xf32>
    %84 = vector.extract_strided_slice %81 {offsets = [0, 0], sizes = [1, 1024], strides = [1, 1]} : vector<8x1024xf32> to vector<1x1024xf32>
    %85 = vector.broadcast %84 : vector<1x1024xf32> to vector<8x1024xf32>
    %86 = arith.mulf %82, %85 : vector<8x1024xf32>
    %c0_91 = arith.constant 0 : index
    %c0_92 = arith.constant 0 : index
    %c0_93 = arith.constant 0 : index
    %87 = vector.load %arg15[%c0_91, %c0_92, %c0_93] : memref<8x32x1024xf32, #tpu.memory_space<vmem>>, vector<1x32x1024xf32>
    %88 = vector.shape_cast %87 : vector<1x32x1024xf32> to vector<32x1024xf32>
    %cst_94 = arith.constant dense<0.000000e+00> : vector<8x32xf32>
    %89 = tpu.matmul %86, %88, %cst_94 {dimension_numbers = #tpu.dot_dimension_numbers<[1], [1], [0], [0], [0, 0, 1, 0], [], []>} : vector<8x1024xf32>, vector<32x1024xf32>, vector<8x32xf32> -> vector<8x32xf32>
    %90 = arith.addf %83, %89 : vector<8x32xf32>
    %91 = vector.extract_strided_slice %81 {offsets = [1, 0], sizes = [1, 1024], strides = [1, 1]} : vector<8x1024xf32> to vector<1x1024xf32>
    %92 = vector.broadcast %91 : vector<1x1024xf32> to vector<8x1024xf32>
    %93 = arith.mulf %82, %92 : vector<8x1024xf32>
    %c1_95 = arith.constant 1 : index
    %c0_96 = arith.constant 0 : index
    %c0_97 = arith.constant 0 : index
    %94 = vector.load %arg15[%c1_95, %c0_96, %c0_97] : memref<8x32x1024xf32, #tpu.memory_space<vmem>>, vector<1x32x1024xf32>
    %95 = vector.shape_cast %94 : vector<1x32x1024xf32> to vector<32x1024xf32>
    %cst_98 = arith.constant dense<0.000000e+00> : vector<8x32xf32>
    %96 = tpu.matmul %93, %95, %cst_98 {dimension_numbers = #tpu.dot_dimension_numbers<[1], [1], [0], [0], [0, 0, 1, 0], [], []>} : vector<8x1024xf32>, vector<32x1024xf32>, vector<8x32xf32> -> vector<8x32xf32>
    %97 = arith.addf %90, %96 : vector<8x32xf32>
    %98 = vector.extract_strided_slice %81 {offsets = [2, 0], sizes = [1, 1024], strides = [1, 1]} : vector<8x1024xf32> to vector<1x1024xf32>
    %99 = vector.broadcast %98 : vector<1x1024xf32> to vector<8x1024xf32>
    %100 = arith.mulf %82, %99 : vector<8x1024xf32>
    %c2_99 = arith.constant 2 : index
    %c0_100 = arith.constant 0 : index
    %c0_101 = arith.constant 0 : index
    %101 = vector.load %arg15[%c2_99, %c0_100, %c0_101] : memref<8x32x1024xf32, #tpu.memory_space<vmem>>, vector<1x32x1024xf32>
    %102 = vector.shape_cast %101 : vector<1x32x1024xf32> to vector<32x1024xf32>
    %cst_102 = arith.constant dense<0.000000e+00> : vector<8x32xf32>
    %103 = tpu.matmul %100, %102, %cst_102 {dimension_numbers = #tpu.dot_dimension_numbers<[1], [1], [0], [0], [0, 0, 1, 0], [], []>} : vector<8x1024xf32>, vector<32x1024xf32>, vector<8x32xf32> -> vector<8x32xf32>
    %104 = arith.addf %97, %103 : vector<8x32xf32>
    %105 = vector.extract_strided_slice %81 {offsets = [3, 0], sizes = [1, 1024], strides = [1, 1]} : vector<8x1024xf32> to vector<1x1024xf32>
    %106 = vector.broadcast %105 : vector<1x1024xf32> to vector<8x1024xf32>
    %107 = arith.mulf %82, %106 : vector<8x1024xf32>
    %c3_103 = arith.constant 3 : index
    %c0_104 = arith.constant 0 : index
    %c0_105 = arith.constant 0 : index
    %108 = vector.load %arg15[%c3_103, %c0_104, %c0_105] : memref<8x32x1024xf32, #tpu.memory_space<vmem>>, vector<1x32x1024xf32>
    %109 = vector.shape_cast %108 : vector<1x32x1024xf32> to vector<32x1024xf32>
    %cst_106 = arith.constant dense<0.000000e+00> : vector<8x32xf32>
    %110 = tpu.matmul %107, %109, %cst_106 {dimension_numbers = #tpu.dot_dimension_numbers<[1], [1], [0], [0], [0, 0, 1, 0], [], []>} : vector<8x1024xf32>, vector<32x1024xf32>, vector<8x32xf32> -> vector<8x32xf32>
    %111 = arith.addf %104, %110 : vector<8x32xf32>
    %112 = vector.extract_strided_slice %81 {offsets = [4, 0], sizes = [1, 1024], strides = [1, 1]} : vector<8x1024xf32> to vector<1x1024xf32>
    %113 = vector.broadcast %112 : vector<1x1024xf32> to vector<8x1024xf32>
    %114 = arith.mulf %82, %113 : vector<8x1024xf32>
    %c4 = arith.constant 4 : index
    %c0_107 = arith.constant 0 : index
    %c0_108 = arith.constant 0 : index
    %115 = vector.load %arg15[%c4, %c0_107, %c0_108] : memref<8x32x1024xf32, #tpu.memory_space<vmem>>, vector<1x32x1024xf32>
    %116 = vector.shape_cast %115 : vector<1x32x1024xf32> to vector<32x1024xf32>
    %cst_109 = arith.constant dense<0.000000e+00> : vector<8x32xf32>
    %117 = tpu.matmul %114, %116, %cst_109 {dimension_numbers = #tpu.dot_dimension_numbers<[1], [1], [0], [0], [0, 0, 1, 0], [], []>} : vector<8x1024xf32>, vector<32x1024xf32>, vector<8x32xf32> -> vector<8x32xf32>
    %118 = arith.addf %111, %117 : vector<8x32xf32>
    %119 = vector.extract_strided_slice %81 {offsets = [5, 0], sizes = [1, 1024], strides = [1, 1]} : vector<8x1024xf32> to vector<1x1024xf32>
    %120 = vector.broadcast %119 : vector<1x1024xf32> to vector<8x1024xf32>
    %121 = arith.mulf %82, %120 : vector<8x1024xf32>
    %c5 = arith.constant 5 : index
    %c0_110 = arith.constant 0 : index
    %c0_111 = arith.constant 0 : index
    %122 = vector.load %arg15[%c5, %c0_110, %c0_111] : memref<8x32x1024xf32, #tpu.memory_space<vmem>>, vector<1x32x1024xf32>
    %123 = vector.shape_cast %122 : vector<1x32x1024xf32> to vector<32x1024xf32>
    %cst_112 = arith.constant dense<0.000000e+00> : vector<8x32xf32>
    %124 = tpu.matmul %121, %123, %cst_112 {dimension_numbers = #tpu.dot_dimension_numbers<[1], [1], [0], [0], [0, 0, 1, 0], [], []>} : vector<8x1024xf32>, vector<32x1024xf32>, vector<8x32xf32> -> vector<8x32xf32>
    %125 = arith.addf %118, %124 : vector<8x32xf32>
    %126 = vector.extract_strided_slice %81 {offsets = [6, 0], sizes = [1, 1024], strides = [1, 1]} : vector<8x1024xf32> to vector<1x1024xf32>
    %127 = vector.broadcast %126 : vector<1x1024xf32> to vector<8x1024xf32>
    %128 = arith.mulf %82, %127 : vector<8x1024xf32>
    %c6 = arith.constant 6 : index
    %c0_113 = arith.constant 0 : index
    %c0_114 = arith.constant 0 : index
    %129 = vector.load %arg15[%c6, %c0_113, %c0_114] : memref<8x32x1024xf32, #tpu.memory_space<vmem>>, vector<1x32x1024xf32>
    %130 = vector.shape_cast %129 : vector<1x32x1024xf32> to vector<32x1024xf32>
    %cst_115 = arith.constant dense<0.000000e+00> : vector<8x32xf32>
    %131 = tpu.matmul %128, %130, %cst_115 {dimension_numbers = #tpu.dot_dimension_numbers<[1], [1], [0], [0], [0, 0, 1, 0], [], []>} : vector<8x1024xf32>, vector<32x1024xf32>, vector<8x32xf32> -> vector<8x32xf32>
    %132 = arith.addf %125, %131 : vector<8x32xf32>
    %133 = vector.extract_strided_slice %81 {offsets = [7, 0], sizes = [1, 1024], strides = [1, 1]} : vector<8x1024xf32> to vector<1x1024xf32>
    %134 = vector.broadcast %133 : vector<1x1024xf32> to vector<8x1024xf32>
    %135 = arith.mulf %82, %134 : vector<8x1024xf32>
    %c7 = arith.constant 7 : index
    %c0_116 = arith.constant 0 : index
    %c0_117 = arith.constant 0 : index
    %136 = vector.load %arg15[%c7, %c0_116, %c0_117] : memref<8x32x1024xf32, #tpu.memory_space<vmem>>, vector<1x32x1024xf32>
    %137 = vector.shape_cast %136 : vector<1x32x1024xf32> to vector<32x1024xf32>
    %cst_118 = arith.constant dense<0.000000e+00> : vector<8x32xf32>
    %138 = tpu.matmul %135, %137, %cst_118 {dimension_numbers = #tpu.dot_dimension_numbers<[1], [1], [0], [0], [0, 0, 1, 0], [], []>} : vector<8x1024xf32>, vector<32x1024xf32>, vector<8x32xf32> -> vector<8x32xf32>
    %139 = arith.addf %132, %138 : vector<8x32xf32>
    %c0_119 = arith.constant 0 : index
    %c0_120 = arith.constant 0 : index
    %140 = vector.load %arg16[%c0_119, %c0_120] : memref<1x32xf32, #tpu.memory_space<vmem>>, vector<1x32xf32>
    %141 = vector.broadcast %140 : vector<1x32xf32> to vector<8x32xf32>
    %142 = arith.addf %139, %141 : vector<8x32xf32>
    %cst_121 = arith.constant 0.000000e+00 : f32
    %143 = vector.broadcast %cst_121 : f32 to vector<8x32xf32>
    %144 = arith.maximumf %142, %143 : vector<8x32xf32>
    %c0_122 = arith.constant 0 : index
    %c0_123 = arith.constant 0 : index
    %145 = vector.load %arg17[%c0_122, %c0_123] : memref<32x4xf32, #tpu.memory_space<vmem>>, vector<32x4xf32>
    %cst_124 = arith.constant dense<0.000000e+00> : vector<8x4xf32>
    %146 = tpu.matmul %144, %145, %cst_124 {dimension_numbers = #tpu.dot_dimension_numbers<[1], [0], [0], [1], [0, 0, 1, 1], [], []>} : vector<8x32xf32>, vector<32x4xf32>, vector<8x4xf32> -> vector<8x4xf32>
    %c0_125 = arith.constant 0 : index
    %c0_126 = arith.constant 0 : index
    %147 = vector.load %arg18[%c0_125, %c0_126] : memref<1x4xf32, #tpu.memory_space<vmem>>, vector<1x4xf32>
    %148 = vector.broadcast %147 : vector<1x4xf32> to vector<8x4xf32>
    %149 = arith.addf %146, %148 : vector<8x4xf32>
    %c0_127 = arith.constant 0 : index
    %c0_128 = arith.constant 0 : index
    %150 = vector.load %arg19[%c0_127, %c0_128] : memref<8x4xf32, #tpu.memory_space<vmem>>, vector<8x4xf32>
    tpu.vector_store %arg19[%c0_127, %c0_128], %149 {strides = array<i32>} : memref<8x4xf32, #tpu.memory_space<vmem>>, vector<8x4xf32>,
    return
  }
  func.func @transform_0(%arg0: i32) -> (i32, i32) {
    %c0_i32 = arith.constant 0 : i32
    %c0_i32_0 = arith.constant 0 : i32
    return %c0_i32, %arg0 : i32, i32
  }
  func.func @transform_1(%arg0: i32) -> (i32, i32) {
    %c0_i32 = arith.constant 0 : i32
    %c0_i32_0 = arith.constant 0 : i32
    return %arg0, %c0_i32 : i32, i32
  }
  func.func @transform_2(%arg0: i32) -> (i32, i32) {
    %c0_i32 = arith.constant 0 : i32
    %c0_i32_0 = arith.constant 0 : i32
    %c0_i32_1 = arith.constant 0 : i32
    return %c0_i32, %c0_i32_0 : i32, i32
  }
  func.func @transform_3(%arg0: i32) -> (i32, i32) {
    %c0_i32 = arith.constant 0 : i32
    %c0_i32_0 = arith.constant 0 : i32
    %c0_i32_1 = arith.constant 0 : i32
    return %c0_i32, %c0_i32_0 : i32, i32
  }
  func.func @transform_4(%arg0: i32) -> (i32, i32) {
    %c0_i32 = arith.constant 0 : i32
    %c0_i32_0 = arith.constant 0 : i32
    %c0_i32_1 = arith.constant 0 : i32
    return %c0_i32, %c0_i32_0 : i32, i32
  }
  func.func @transform_5(%arg0: i32) -> (i32, i32) {
    %c0_i32 = arith.constant 0 : i32
    %c0_i32_0 = arith.constant 0 : i32
    %c0_i32_1 = arith.constant 0 : i32
    return %c0_i32, %c0_i32_0 : i32, i32
  }
  func.func @transform_6(%arg0: i32) -> (i32, i32) {
    %c0_i32 = arith.constant 0 : i32
    %c0_i32_0 = arith.constant 0 : i32
    %c0_i32_1 = arith.constant 0 : i32
    return %c0_i32, %c0_i32_0 : i32, i32
  }
  func.func @transform_7(%arg0: i32) -> (i32, i32) {
    %c0_i32 = arith.constant 0 : i32
    %c0_i32_0 = arith.constant 0 : i32
    %c0_i32_1 = arith.constant 0 : i32
    return %c0_i32, %c0_i32_0 : i32, i32
  }
  func.func @transform_8(%arg0: i32) -> (i32, i32, i32) {
    %c0_i32 = arith.constant 0 : i32
    %c0_i32_0 = arith.constant 0 : i32
    %c0_i32_1 = arith.constant 0 : i32
    %c0_i32_2 = arith.constant 0 : i32
    return %c0_i32, %c0_i32_0, %c0_i32_1 : i32, i32, i32
  }
  func.func @transform_9(%arg0: i32) -> (i32, i32) {
    %c0_i32 = arith.constant 0 : i32
    %c0_i32_0 = arith.constant 0 : i32
    %c0_i32_1 = arith.constant 0 : i32
    return %c0_i32, %c0_i32_0 : i32, i32
  }
  func.func @transform_10(%arg0: i32) -> (i32, i32, i32) {
    %c0_i32 = arith.constant 0 : i32
    %c0_i32_0 = arith.constant 0 : i32
    %c0_i32_1 = arith.constant 0 : i32
    %c0_i32_2 = arith.constant 0 : i32
    return %c0_i32, %c0_i32_0, %c0_i32_1 : i32, i32, i32
  }
  func.func @transform_11(%arg0: i32) -> (i32, i32) {
    %c0_i32 = arith.constant 0 : i32
    %c0_i32_0 = arith.constant 0 : i32
    %c0_i32_1 = arith.constant 0 : i32
    return %c0_i32, %c0_i32_0 : i32, i32
  }
  func.func @transform_12(%arg0: i32) -> (i32, i32, i32) {
    %c0_i32 = arith.constant 0 : i32
    %c0_i32_0 = arith.constant 0 : i32
    %c0_i32_1 = arith.constant 0 : i32
    %c0_i32_2 = arith.constant 0 : i32
    return %c0_i32, %c0_i32_0, %c0_i32_1 : i32, i32, i32
  }
  func.func @transform_13(%arg0: i32) -> (i32, i32) {
    %c0_i32 = arith.constant 0 : i32
    %c0_i32_0 = arith.constant 0 : i32
    %c0_i32_1 = arith.constant 0 : i32
    return %c0_i32, %c0_i32_0 : i32, i32
  }
  func.func @transform_14(%arg0: i32) -> (i32, i32, i32) {
    %c0_i32 = arith.constant 0 : i32
    %c0_i32_0 = arith.constant 0 : i32
    %c0_i32_1 = arith.constant 0 : i32
    %c0_i32_2 = arith.constant 0 : i32
    return %c0_i32, %c0_i32_0, %c0_i32_1 : i32, i32, i32
  }
  func.func @transform_15(%arg0: i32) -> (i32, i32) {
    %c0_i32 = arith.constant 0 : i32
    %c0_i32_0 = arith.constant 0 : i32
    %c0_i32_1 = arith.constant 0 : i32
    return %c0_i32, %c0_i32_0 : i32, i32
  }
  func.func @transform_16(%arg0: i32) -> (i32, i32) {
    %c0_i32 = arith.constant 0 : i32
    %c0_i32_0 = arith.constant 0 : i32
    %c0_i32_1 = arith.constant 0 : i32
    return %c0_i32, %c0_i32_0 : i32, i32
  }
  func.func @transform_17(%arg0: i32) -> (i32, i32) {
    %c0_i32 = arith.constant 0 : i32
    %c0_i32_0 = arith.constant 0 : i32
    %c0_i32_1 = arith.constant 0 : i32
    return %c0_i32, %c0_i32_0 : i32, i32
  }
  func.func @transform_18(%arg0: i32) -> (i32, i32) {
    %c0_i32 = arith.constant 0 : i32
    %c0_i32_0 = arith.constant 0 : i32
    return %arg0, %c0_i32 : i32, i32
  }
}

</mosaic_0001>

<llo_original>
// kernel: tpu_custom_call.1
$region0: #{tpu_custom_call.1}
  #allocation0 [shape = 'u32[]', space=smem, size = 0x4, offset = 0x4, fixed_abs, tag = 'smem constant byte address 0x4 - core index']
  #allocation1 [shape = 'u32[144,128]{1,0:T(1,128)}', space=vmem, size = 0x12000, scoped, tag = 'internal scratch']
  #allocation2 [shape = 'f32[16,1152]{1,0:T(8,128)}', space=vmem, size = 0x12000, scoped, tag = 'scratch operand']
  #allocation3 [shape = 'f32[16,1152]{1,0:T(8,128)}', space=vmem, size = 0x12000, scoped, tag = 'scratch operand']
  #allocation4 [shape = 'f32[16,1152]{1,0:T(8,128)}', space=vmem, size = 0x12000, scoped, tag = 'scratch operand']
  %s0 = inlined_call_operand.hbm [shape: f32[39,2048], index: 0, kind: input, shape index: {}]
  %s1 = inlined_call_operand.hbm [shape: f32[16,39], index: 1, kind: input, shape index: {}]
  %s2 = inlined_call_operand.vmem [shape: f32[8,1024], index: 2, kind: input, shape index: {}]
  %s3 = inlined_call_operand.hbm [shape: f32[16,39], index: 3, kind: input, shape index: {}]
  %s4 = inlined_call_operand.hbm [shape: f32[16,39], index: 4, kind: input, shape index: {}]
  %s5 = inlined_call_operand.vmem [shape: f32[16,1], index: 5, kind: input, shape index: {}]
  %s6 = inlined_call_operand.hbm [shape: f32[16,16], index: 6, kind: input, shape index: {}]
  %s7 = inlined_call_operand.vmem [shape: f32[16,1], index: 7, kind: input, shape index: {}]
  %s8 = inlined_call_operand.vmem [shape: f32[3,16,16], index: 8, kind: input, shape index: {}]
  %s9 = inlined_call_operand.vmem [shape: f32[16,1], index: 9, kind: input, shape index: {}]
  %s10 = inlined_call_operand.hbm [shape: f32[3,16,16], index: 10, kind: input, shape index: {}]
  %s11 = inlined_call_operand.vmem [shape: f32[16,1], index: 11, kind: input, shape index: {}]
  %s12 = inlined_call_operand.vmem [shape: f32[2,8,16], index: 12, kind: input, shape index: {}]
  %s13 = inlined_call_operand.vmem [shape: f32[8,1], index: 13, kind: input, shape index: {}]
  %s14 = inlined_call_operand.hbm [shape: f32[8,32,1024], index: 14, kind: input, shape index: {}]
  %s15 = inlined_call_operand.vmem [shape: f32[1,32], index: 15, kind: input, shape index: {}]
  %s16 = inlined_call_operand.vmem [shape: f32[32,4], index: 16, kind: input, shape index: {}]
  %s17 = inlined_call_operand.vmem [shape: f32[1,4], index: 17, kind: input, shape index: {}]
  %s18 = inlined_call_operand.vmem [shape: f32[16,4], index: 18, kind: output, shape index: {}]
  %s19 = sld [smem:[#allocation0]]
  $region133: #{tpu_custom_call.1} parent=0
    _
  %s21 = ssub.s32 1, %s19
  %s22 = scalar_select 0, %s21, %s19
  $region1: #{tpu_custom_call.1} parent=0
    #allocation5 [shape = 'u8[327680]{0}', space=vmem, size = 0x50000, scoped, tag = 'input window, operand 0']
    #allocation6 [shape = 's32[2]{0}', space=sflag, size = 0x8, scoped, tag = 'scoped memory for tpu_custom_call.1']
    #allocation7 [shape = 'u8[8192]{0}', space=vmem, size = 0x2000, scoped, tag = 'input window, operand 1']
    #allocation8 [shape = 's32[2]{0}', space=sflag, size = 0x8, scoped, tag = 'scoped memory for tpu_custom_call.1']
    #allocation9 [shape = 'u8[8192]{0}', space=vmem, size = 0x2000, scoped, tag = 'input window, operand 3, single buffered']
    #allocation10 [shape = 'u8[8192]{0}', space=vmem, size = 0x2000, scoped, tag = 'input window, operand 4, single buffered']
    #allocation11 [shape = 's32[1]{0}', space=sflag, size = 0x4, scoped, tag = 'scoped memory for tpu_custom_call.1']
    #allocation12 [shape = 'u8[8192]{0}', space=vmem, size = 0x2000, scoped, tag = 'input window, operand 6, single buffered']
    #allocation13 [shape = 'u8[24576]{0}', space=vmem, size = 0x6000, scoped, tag = 'input window, operand 10, single buffered']
    #allocation14 [shape = 's32[1]{0}', space=sflag, size = 0x4, scoped, tag = 'scoped memory for tpu_custom_call.1']
    #allocation15 [shape = 'u8[1048576]{0}', space=vmem, size = 0x100000, scoped, tag = 'input window, operand 14, single buffered']
    %23 = vsyncpa [#allocation6], 0
    %s24 = scalar_lea.sflag [#allocation6], 1
    %25 = vsyncpa %s24, 0
    %26 = vsyncpa [#allocation8], 0
    %s27 = scalar_lea.sflag [#allocation8], 1
    %28 = vsyncpa %s27, 0
    %29 = vsyncpa [#allocation11], 0
    %30 = vsyncpa [#allocation14], 0
    loop: start=0, step=1, limit=4
    $region2: #{tpu_custom_call.1} parent=1 // loop_pre_header
      _
    $region3: #{tpu_custom_call.1} parent=1 // loop_header
      %s32 = sphi 0, %s36
      %p33 = scmp.ge.s32.totalorder %s32, 4
      %s42 = sphi 0, %s44
      %s45 = sphi 0, %s42
      %s46 = sphi 0, %s45
      %s62 = sphi 0, %s46
      %s68 = sphi 0, %s70
      %s71 = sphi 0, %s68
      %s72 = sphi 0, %s71
      %s88 = sphi 0, %s72
      %s92 = sphi 0, %s92
      %s94 = sphi 0, %s92
      %s95 = sphi 0, %s94
      %s109 = sphi 0, %s95
      %s113 = sphi 0, %s113
      %s115 = sphi 0, %s113
      %s116 = sphi 0, %s115
      %s130 = sphi 0, %s116
      %s134 = sphi 0, %s134
      %s136 = sphi 0, %s134
      %s137 = sphi 0, %s136
      %s151 = sphi 0, %s137
      %s155 = sphi 0, %s155
      %s157 = sphi 0, %s155
      %s158 = sphi 0, %s157
      %s172 = sphi 0, %s158
      %s176 = sphi 0, %s176
      %s178 = sphi 0, %s176
      %s179 = sphi 0, %s178
      %s193 = sphi 0, %s179
      %s197 = sphi 0, %s197
      %s199 = sphi 0, %s197
      %s200 = sphi 0, %s199
      %s214 = sphi 0, %s200
      %s218 = sphi 0, %s218
      %s220 = sphi 0, %s218
      %s221 = sphi 0, %s220
      %s235 = sphi 0, %s221
      %s239 = sphi 0, %s239
      %s241 = sphi 0, %s239
      %s242 = sphi 0, %s241
      %s256 = sphi 0, %s242
      %s260 = sphi 0, %s260
      %s262 = sphi 0, %s260
      %s263 = sphi 0, %s262
      %s277 = sphi 0, %s263
      %s281 = sphi 0, %s281
      %s283 = sphi 0, %s281
      %s284 = sphi 0, %s283
      %s298 = sphi 0, %s284
      %s302 = sphi 0, %s302
      %s304 = sphi 0, %s302
      %s305 = sphi 0, %s304
      %s319 = sphi 0, %s305
      %s323 = sphi 0, %s323
      %s325 = sphi 0, %s323
      %s326 = sphi 0, %s325
      %s340 = sphi 0, %s326
      %s344 = sphi 0, %s344
      %s346 = sphi 0, %s344
      %s347 = sphi 0, %s346
      %s361 = sphi 0, %s347
      %s365 = sphi 0, %s365
      %s367 = sphi 0, %s365
      %s368 = sphi 0, %s367
      %s382 = sphi 0, %s368
      %s386 = sphi 0, %s386
      %s388 = sphi 0, %s386
      %s389 = sphi 0, %s388
      %s403 = sphi 0, %s389
      %s407 = sphi 0, %s407
      %s409 = sphi 0, %s407
      %s410 = sphi 0, %s409
      %s424 = sphi 0, %s410
      %s430 = sphi 0, %s432
      %s433 = sphi 0, %s430
      %s434 = sphi 0, %s433
      %s450 = sphi 0, %s434
    $region4: #{tpu_custom_call.1} parent=1 // loop_header_branch
      %35 = sbr.rel (%p33) target = $region8
    $region5: #{tpu_custom_call.1} parent=1 // loop_body
      %s37 = ssub.s32 %s32, 1
      %s38 = ssub.s32 %s32, 2
      %s39 = sadd.s32 %s32, 1
      %s40 = ssub.s32 %s32, %s39
      %p41 = scmp.eq.s32.totalorder %s40, 0
      %s43 = sadd.s32 %s42, 1
      %s44 = scalar_select %p41, %s42, %s43
      %p47 = pneg %p41
      %p48 = scmp.eq.s32.totalorder %s32, 1
      %p49 = por %p47, %p48
      %p50 = scmp.ne.s32.totalorder %s42, %s45
      %p51 = scmp.eq.s32.totalorder %s32, 0
      %p52 = por %p50, %p51
      %p53 = scmp.ne.s32.totalorder %s42, %s45
      %p54 = scmp.eq.s32.totalorder %s37, 1
      %p55 = por %p53, %p54
      %p56 = scmp.ne.s32.totalorder %s45, %s46
      %p57 = scmp.eq.s32.totalorder %s37, 0
      %p58 = por %p56, %p57
      %p59 = scmp.ne.s32.totalorder %s45, %s46
      %p60 = scmp.eq.s32.totalorder %s38, 1
      %p61 = por %p59, %p60
      %p63 = scmp.ne.s32.totalorder %s46, %s62
      %p64 = scmp.eq.s32.totalorder %s38, 0
      %p65 = por %p63, %p64
      %s66 = ssub.s32 %s32, %s39
      %p67 = scmp.eq.s32.totalorder %s66, 0
      %s69 = sadd.s32 %s68, 1
      %s70 = scalar_select %p67, %s68, %s69
      %p73 = pneg %p67
      %p74 = scmp.eq.s32.totalorder %s32, 1
      %p75 = por %p73, %p74
      %p76 = scmp.ne.s32.totalorder %s68, %s71
      %p77 = scmp.eq.s32.totalorder %s32, 0
      %p78 = por %p76, %p77
      %p79 = scmp.ne.s32.totalorder %s68, %s71
      %p80 = scmp.eq.s32.totalorder %s37, 1
      %p81 = por %p79, %p80
      %p82 = scmp.ne.s32.totalorder %s71, %s72
      %p83 = scmp.eq.s32.totalorder %s37, 0
      %p84 = por %p82, %p83
      %p85 = scmp.ne.s32.totalorder %s71, %s72
      %p86 = scmp.eq.s32.totalorder %s38, 1
      %p87 = por %p85, %p86
      %p89 = scmp.ne.s32.totalorder %s72, %s88
      %p90 = scmp.eq.s32.totalorder %s38, 0
      %p91 = por %p89, %p90
      %s93 = sadd.s32 %s92, 1
      %p96 = scmp.eq.s32.totalorder %s32, 1
      %p97 = scmp.ne.s32.totalorder %s92, %s94
      %p98 = scmp.eq.s32.totalorder %s32, 0
      %p99 = por %p97, %p98
      %p100 = scmp.ne.s32.totalorder %s92, %s94
      %p101 = scmp.eq.s32.totalorder %s37, 1
      %p102 = por %p100, %p101
      %p103 = scmp.ne.s32.totalorder %s94, %s95
      %p104 = scmp.eq.s32.totalorder %s37, 0
      %p105 = por %p103, %p104
      %p106 = scmp.ne.s32.totalorder %s94, %s95
      %p107 = scmp.eq.s32.totalorder %s38, 1
      %p108 = por %p106, %p107
      %p110 = scmp.ne.s32.totalorder %s95, %s109
      %p111 = scmp.eq.s32.totalorder %s38, 0
      %p112 = por %p110, %p111
      %s114 = sadd.s32 %s113, 1
      %p117 = scmp.eq.s32.totalorder %s32, 1
      %p118 = scmp.ne.s32.totalorder %s113, %s115
      %p119 = scmp.eq.s32.totalorder %s32, 0
      %p120 = por %p118, %p119
      %p121 = scmp.ne.s32.totalorder %s113, %s115
      %p122 = scmp.eq.s32.totalorder %s37, 1
      %p123 = por %p121, %p122
      %p124 = scmp.ne.s32.totalorder %s115, %s116
      %p125 = scmp.eq.s32.totalorder %s37, 0
      %p126 = por %p124, %p125
      %p127 = scmp.ne.s32.totalorder %s115, %s116
      %p128 = scmp.eq.s32.totalorder %s38, 1
      %p129 = por %p127, %p128
      %p131 = scmp.ne.s32.totalorder %s116, %s130
      %p132 = scmp.eq.s32.totalorder %s38, 0
      %p133 = por %p131, %p132
      %s135 = sadd.s32 %s134, 1
      %p138 = scmp.eq.s32.totalorder %s32, 1
      %p139 = scmp.ne.s32.totalorder %s134, %s136
      %p140 = scmp.eq.s32.totalorder %s32, 0
      %p141 = por %p139, %p140
      %p142 = scmp.ne.s32.totalorder %s134, %s136
      %p143 = scmp.eq.s32.totalorder %s37, 1
      %p144 = por %p142, %p143
      %p145 = scmp.ne.s32.totalorder %s136, %s137
      %p146 = scmp.eq.s32.totalorder %s37, 0
      %p147 = por %p145, %p146
      %p148 = scmp.ne.s32.totalorder %s136, %s137
      %p149 = scmp.eq.s32.totalorder %s38, 1
      %p150 = por %p148, %p149
      %p152 = scmp.ne.s32.totalorder %s137, %s151
      %p153 = scmp.eq.s32.totalorder %s38, 0
      %p154 = por %p152, %p153
      %s156 = sadd.s32 %s155, 1
      %p159 = scmp.eq.s32.totalorder %s32, 1
      %p160 = scmp.ne.s32.totalorder %s155, %s157
      %p161 = scmp.eq.s32.totalorder %s32, 0
      %p162 = por %p160, %p161
      %p163 = scmp.ne.s32.totalorder %s155, %s157
      %p164 = scmp.eq.s32.totalorder %s37, 1
      %p165 = por %p163, %p164
      %p166 = scmp.ne.s32.totalorder %s157, %s158
      %p167 = scmp.eq.s32.totalorder %s37, 0
      %p168 = por %p166, %p167
      %p169 = scmp.ne.s32.totalorder %s157, %s158
      %p170 = scmp.eq.s32.totalorder %s38, 1
      %p171 = por %p169, %p170
      %p173 = scmp.ne.s32.totalorder %s158, %s172
      %p174 = scmp.eq.s32.totalorder %s38, 0
      %p175 = por %p173, %p174
      %s177 = sadd.s32 %s176, 1
      %p180 = scmp.eq.s32.totalorder %s32, 1
      %p181 = scmp.ne.s32.totalorder %s176, %s178
      %p182 = scmp.eq.s32.totalorder %s32, 0
      %p183 = por %p181, %p182
      %p184 = scmp.ne.s32.totalorder %s176, %s178
      %p185 = scmp.eq.s32.totalorder %s37, 1
      %p186 = por %p184, %p185
      %p187 = scmp.ne.s32.totalorder %s178, %s179
      %p188 = scmp.eq.s32.totalorder %s37, 0
      %p189 = por %p187, %p188
      %p190 = scmp.ne.s32.totalorder %s178, %s179
      %p191 = scmp.eq.s32.totalorder %s38, 1
      %p192 = por %p190, %p191
      %p194 = scmp.ne.s32.totalorder %s179, %s193
      %p195 = scmp.eq.s32.totalorder %s38, 0
      %p196 = por %p194, %p195
      %s198 = sadd.s32 %s197, 1
      %p201 = scmp.eq.s32.totalorder %s32, 1
      %p202 = scmp.ne.s32.totalorder %s197, %s199
      %p203 = scmp.eq.s32.totalorder %s32, 0
      %p204 = por %p202, %p203
      %p205 = scmp.ne.s32.totalorder %s197, %s199
      %p206 = scmp.eq.s32.totalorder %s37, 1
      %p207 = por %p205, %p206
      %p208 = scmp.ne.s32.totalorder %s199, %s200
      %p209 = scmp.eq.s32.totalorder %s37, 0
      %p210 = por %p208, %p209
      %p211 = scmp.ne.s32.totalorder %s199, %s200
      %p212 = scmp.eq.s32.totalorder %s38, 1
      %p213 = por %p211, %p212
      %p215 = scmp.ne.s32.totalorder %s200, %s214
      %p216 = scmp.eq.s32.totalorder %s38, 0
      %p217 = por %p215, %p216
      %s219 = sadd.s32 %s218, 1
      %p222 = scmp.eq.s32.totalorder %s32, 1
      %p223 = scmp.ne.s32.totalorder %s218, %s220
      %p224 = scmp.eq.s32.totalorder %s32, 0
      %p225 = por %p223, %p224
      %p226 = scmp.ne.s32.totalorder %s218, %s220
      %p227 = scmp.eq.s32.totalorder %s37, 1
      %p228 = por %p226, %p227
      %p229 = scmp.ne.s32.totalorder %s220, %s221
      %p230 = scmp.eq.s32.totalorder %s37, 0
      %p231 = por %p229, %p230
      %p232 = scmp.ne.s32.totalorder %s220, %s221
      %p233 = scmp.eq.s32.totalorder %s38, 1
      %p234 = por %p232, %p233
      %p236 = scmp.ne.s32.totalorder %s221, %s235
      %p237 = scmp.eq.s32.totalorder %s38, 0
      %p238 = por %p236, %p237
      %s240 = sadd.s32 %s239, 1
      %p243 = scmp.eq.s32.totalorder %s32, 1
      %p244 = scmp.ne.s32.totalorder %s239, %s241
      %p245 = scmp.eq.s32.totalorder %s32, 0
      %p246 = por %p244, %p245
      %p247 = scmp.ne.s32.totalorder %s239, %s241
      %p248 = scmp.eq.s32.totalorder %s37, 1
      %p249 = por %p247, %p248
      %p250 = scmp.ne.s32.totalorder %s241, %s242
      %p251 = scmp.eq.s32.totalorder %s37, 0
      %p252 = por %p250, %p251
      %p253 = scmp.ne.s32.totalorder %s241, %s242
      %p254 = scmp.eq.s32.totalorder %s38, 1
      %p255 = por %p253, %p254
      %p257 = scmp.ne.s32.totalorder %s242, %s256
      %p258 = scmp.eq.s32.totalorder %s38, 0
      %p259 = por %p257, %p258
      %s261 = sadd.s32 %s260, 1
      %p264 = scmp.eq.s32.totalorder %s32, 1
      %p265 = scmp.ne.s32.totalorder %s260, %s262
      %p266 = scmp.eq.s32.totalorder %s32, 0
      %p267 = por %p265, %p266
      %p268 = scmp.ne.s32.totalorder %s260, %s262
      %p269 = scmp.eq.s32.totalorder %s37, 1
      %p270 = por %p268, %p269
      %p271 = scmp.ne.s32.totalorder %s262, %s263
      %p272 = scmp.eq.s32.totalorder %s37, 0
      %p273 = por %p271, %p272
      %p274 = scmp.ne.s32.totalorder %s262, %s263
      %p275 = scmp.eq.s32.totalorder %s38, 1
      %p276 = por %p274, %p275
      %p278 = scmp.ne.s32.totalorder %s263, %s277
      %p279 = scmp.eq.s32.totalorder %s38, 0
      %p280 = por %p278, %p279
      %s282 = sadd.s32 %s281, 1
      %p285 = scmp.eq.s32.totalorder %s32, 1
      %p286 = scmp.ne.s32.totalorder %s281, %s283
      %p287 = scmp.eq.s32.totalorder %s32, 0
      %p288 = por %p286, %p287
      %p289 = scmp.ne.s32.totalorder %s281, %s283
      %p290 = scmp.eq.s32.totalorder %s37, 1
      %p291 = por %p289, %p290
      %p292 = scmp.ne.s32.totalorder %s283, %s284
      %p293 = scmp.eq.s32.totalorder %s37, 0
      %p294 = por %p292, %p293
      %p295 = scmp.ne.s32.totalorder %s283, %s284
      %p296 = scmp.eq.s32.totalorder %s38, 1
      %p297 = por %p295, %p296
      %p299 = scmp.ne.s32.totalorder %s284, %s298
      %p300 = scmp.eq.s32.totalorder %s38, 0
      %p301 = por %p299, %p300
      %s303 = sadd.s32 %s302, 1
      %p306 = scmp.eq.s32.totalorder %s32, 1
      %p307 = scmp.ne.s32.totalorder %s302, %s304
      %p308 = scmp.eq.s32.totalorder %s32, 0
      %p309 = por %p307, %p308
      %p310 = scmp.ne.s32.totalorder %s302, %s304
      %p311 = scmp.eq.s32.totalorder %s37, 1
      %p312 = por %p310, %p311
      %p313 = scmp.ne.s32.totalorder %s304, %s305
      %p314 = scmp.eq.s32.totalorder %s37, 0
      %p315 = por %p313, %p314
      %p316 = scmp.ne.s32.totalorder %s304, %s305
      %p317 = scmp.eq.s32.totalorder %s38, 1
      %p318 = por %p316, %p317
      %p320 = scmp.ne.s32.totalorder %s305, %s319
      %p321 = scmp.eq.s32.totalorder %s38, 0
      %p322 = por %p320, %p321
      %s324 = sadd.s32 %s323, 1
      %p327 = scmp.eq.s32.totalorder %s32, 1
      %p328 = scmp.ne.s32.totalorder %s323, %s325
      %p329 = scmp.eq.s32.totalorder %s32, 0
      %p330 = por %p328, %p329
      %p331 = scmp.ne.s32.totalorder %s323, %s325
      %p332 = scmp.eq.s32.totalorder %s37, 1
      %p333 = por %p331, %p332
      %p334 = scmp.ne.s32.totalorder %s325, %s326
      %p335 = scmp.eq.s32.totalorder %s37, 0
      %p336 = por %p334, %p335
      %p337 = scmp.ne.s32.totalorder %s325, %s326
      %p338 = scmp.eq.s32.totalorder %s38, 1
      %p339 = por %p337, %p338
      %p341 = scmp.ne.s32.totalorder %s326, %s340
      %p342 = scmp.eq.s32.totalorder %s38, 0
      %p343 = por %p341, %p342
      %s345 = sadd.s32 %s344, 1
      %p348 = scmp.eq.s32.totalorder %s32, 1
      %p349 = scmp.ne.s32.totalorder %s344, %s346
      %p350 = scmp.eq.s32.totalorder %s32, 0
      %p351 = por %p349, %p350
      %p352 = scmp.ne.s32.totalorder %s344, %s346
      %p353 = scmp.eq.s32.totalorder %s37, 1
      %p354 = por %p352, %p353
      %p355 = scmp.ne.s32.totalorder %s346, %s347
      %p356 = scmp.eq.s32.totalorder %s37, 0
      %p357 = por %p355, %p356
      %p358 = scmp.ne.s32.totalorder %s346, %s347
      %p359 = scmp.eq.s32.totalorder %s38, 1
      %p360 = por %p358, %p359
      %p362 = scmp.ne.s32.totalorder %s347, %s361
      %p363 = scmp.eq.s32.totalorder %s38, 0
      %p364 = por %p362, %p363
      %s366 = sadd.s32 %s365, 1
      %p369 = scmp.eq.s32.totalorder %s32, 1
      %p370 = scmp.ne.s32.totalorder %s365, %s367
      %p371 = scmp.eq.s32.totalorder %s32, 0
      %p372 = por %p370, %p371
      %p373 = scmp.ne.s32.totalorder %s365, %s367
      %p374 = scmp.eq.s32.totalorder %s37, 1
      %p375 = por %p373, %p374
      %p376 = scmp.ne.s32.totalorder %s367, %s368
      %p377 = scmp.eq.s32.totalorder %s37, 0
      %p378 = por %p376, %p377
      %p379 = scmp.ne.s32.totalorder %s367, %s368
      %p380 = scmp.eq.s32.totalorder %s38, 1
      %p381 = por %p379, %p380
      %p383 = scmp.ne.s32.totalorder %s368, %s382
      %p384 = scmp.eq.s32.totalorder %s38, 0
      %p385 = por %p383, %p384
      %s387 = sadd.s32 %s386, 1
      %p390 = scmp.eq.s32.totalorder %s32, 1
      %p391 = scmp.ne.s32.totalorder %s386, %s388
      %p392 = scmp.eq.s32.totalorder %s32, 0
      %p393 = por %p391, %p392
      %p394 = scmp.ne.s32.totalorder %s386, %s388
      %p395 = scmp.eq.s32.totalorder %s37, 1
      %p396 = por %p394, %p395
      %p397 = scmp.ne.s32.totalorder %s388, %s389
      %p398 = scmp.eq.s32.totalorder %s37, 0
      %p399 = por %p397, %p398
      %p400 = scmp.ne.s32.totalorder %s388, %s389
      %p401 = scmp.eq.s32.totalorder %s38, 1
      %p402 = por %p400, %p401
      %p404 = scmp.ne.s32.totalorder %s389, %s403
      %p405 = scmp.eq.s32.totalorder %s38, 0
      %p406 = por %p404, %p405
      %s408 = sadd.s32 %s407, 1
      %p411 = scmp.eq.s32.totalorder %s32, 1
      %p412 = scmp.ne.s32.totalorder %s407, %s409
      %p413 = scmp.eq.s32.totalorder %s32, 0
      %p414 = por %p412, %p413
      %p415 = scmp.ne.s32.totalorder %s407, %s409
      %p416 = scmp.eq.s32.totalorder %s37, 1
      %p417 = por %p415, %p416
      %p418 = scmp.ne.s32.totalorder %s409, %s410
      %p419 = scmp.eq.s32.totalorder %s37, 0
      %p420 = por %p418, %p419
      %p421 = scmp.ne.s32.totalorder %s409, %s410
      %p422 = scmp.eq.s32.totalorder %s38, 1
      %p423 = por %p421, %p422
      %p425 = scmp.ne.s32.totalorder %s410, %s424
      %p426 = scmp.eq.s32.totalorder %s38, 0
      %p427 = por %p425, %p426
      %s428 = ssub.s32 %s32, %s39
      %p429 = scmp.eq.s32.totalorder %s428, 0
      %s431 = sadd.s32 %s430, 1
      %s432 = scalar_select %p429, %s430, %s431
      %p435 = pneg %p429
      %p436 = scmp.eq.s32.totalorder %s32, 1
      %p437 = por %p435, %p436
      %p438 = scmp.ne.s32.totalorder %s430, %s433
      %p439 = scmp.eq.s32.totalorder %s32, 0
      %p440 = por %p438, %p439
      %p441 = scmp.ne.s32.totalorder %s430, %s433
      %p442 = scmp.eq.s32.totalorder %s37, 1
      %p443 = por %p441, %p442
      %p444 = scmp.ne.s32.totalorder %s433, %s434
      %p445 = scmp.eq.s32.totalorder %s37, 0
      %p446 = por %p444, %p445
      %p447 = scmp.ne.s32.totalorder %s433, %s434
      %p448 = scmp.eq.s32.totalorder %s38, 1
      %p449 = por %p447, %p448
      %p451 = scmp.ne.s32.totalorder %s434, %s450
      %p452 = scmp.eq.s32.totalorder %s38, 0
      %p453 = por %p451, %p452
      %p454 = scmp.le.s32.totalorder 1, %s32
      %p455 = scmp.lt.s32.totalorder %s32, 3
      %p456 = pnand %p454, %p455
      %p457 = pneg %p456
      // Predicated region
      $region9: #{tpu_custom_call.1} parent=5 // pred_check
        _
      $region10: #{tpu_custom_call.1} parent=5 // pred_check_branch
        %459 = sbr.rel (%p456) target = $region12
      $region11: #{tpu_custom_call.1} parent=5 // pred_region
        %s460 = ssub.s32 %s32, 1
        // Predicated region
        $region13: #{tpu_custom_call.1} parent=11 // pred_check
          %p461 = pneg %p105
        $region14: #{tpu_custom_call.1} parent=11 // pred_check_branch
          %463 = sbr.rel (%p461) target = $region16
        $region15: #{tpu_custom_call.1} parent=11 // pred_region
          _
        $region16: #{tpu_custom_call.1} parent=11 // pred_fallthru
          _
        // Predicated region
        $region17: #{tpu_custom_call.1} parent=11 // pred_check
          %p464 = pneg %p126
        $region18: #{tpu_custom_call.1} parent=11 // pred_check_branch
          %466 = sbr.rel (%p464) target = $region20
        $region19: #{tpu_custom_call.1} parent=11 // pred_region
          %s468 = ssub.s32 256, 256
          %469 = vsyncadd [#allocation8], %s468
          %s470 = sshll.u32 [#allocation9], 4
          %s471 = int_to_ptr.vmem [resolvable:$true] %s470
          %476 = dma.hbm_to_vmem [thread:$0]  %s3, 256, %s471, [#allocation8], 128, 128, 8
        $region20: #{tpu_custom_call.1} parent=11 // pred_fallthru
          _
        // Predicated region
        $region21: #{tpu_custom_call.1} parent=11 // pred_check
          %p477 = pneg %p147
        $region22: #{tpu_custom_call.1} parent=11 // pred_check_branch
          %479 = sbr.rel (%p477) target = $region24
        $region23: #{tpu_custom_call.1} parent=11 // pred_region
          %s481 = ssub.s32 256, 256
          %482 = vsyncadd [#allocation11], %s481
          %s483 = sshll.u32 [#allocation10], 4
          %s484 = int_to_ptr.vmem [resolvable:$true] %s483
          %489 = dma.hbm_to_vmem [thread:$0]  %s4, 256, %s484, [#allocation11], 128, 128, 8
        $region24: #{tpu_custom_call.1} parent=11 // pred_fallthru
          _
        // Predicated region
        $region25: #{tpu_custom_call.1} parent=11 // pred_check
          %p490 = pneg %p168
        $region26: #{tpu_custom_call.1} parent=11 // pred_check_branch
          %492 = sbr.rel (%p490) target = $region28
        $region27: #{tpu_custom_call.1} parent=11 // pred_region
          _
        $region28: #{tpu_custom_call.1} parent=11 // pred_fallthru
          _
        // Predicated region
        $region29: #{tpu_custom_call.1} parent=11 // pred_check
          %p493 = pneg %p189
        $region30: #{tpu_custom_call.1} parent=11 // pred_check_branch
          %495 = sbr.rel (%p493) target = $region32
        $region31: #{tpu_custom_call.1} parent=11 // pred_region
          %s497 = ssub.s32 256, 256
          %498 = vsyncadd [#allocation11], %s497
          %s499 = sshll.u32 [#allocation12], 4
          %s500 = int_to_ptr.vmem [resolvable:$true] %s499
          %505 = dma.hbm_to_vmem [thread:$0]  %s6, 256, %s500, [#allocation11], 128, 128, 8
        $region32: #{tpu_custom_call.1} parent=11 // pred_fallthru
          _
        // Predicated region
        $region33: #{tpu_custom_call.1} parent=11 // pred_check
          %p506 = pneg %p210
        $region34: #{tpu_custom_call.1} parent=11 // pred_check_branch
          %508 = sbr.rel (%p506) target = $region36
        $region35: #{tpu_custom_call.1} parent=11 // pred_region
          _
        $region36: #{tpu_custom_call.1} parent=11 // pred_fallthru
          _
        // Predicated region
        $region37: #{tpu_custom_call.1} parent=11 // pred_check
          %p509 = pneg %p231
        $region38: #{tpu_custom_call.1} parent=11 // pred_check_branch
          %511 = sbr.rel (%p509) target = $region40
        $region39: #{tpu_custom_call.1} parent=11 // pred_region
          _
        $region40: #{tpu_custom_call.1} parent=11 // pred_fallthru
          _
        // Predicated region
        $region41: #{tpu_custom_call.1} parent=11 // pred_check
          %p512 = pneg %p252
        $region42: #{tpu_custom_call.1} parent=11 // pred_check_branch
          %514 = sbr.rel (%p512) target = $region44
        $region43: #{tpu_custom_call.1} parent=11 // pred_region
          _
        $region44: #{tpu_custom_call.1} parent=11 // pred_fallthru
          _
        // Predicated region
        $region45: #{tpu_custom_call.1} parent=11 // pred_check
          %p515 = pneg %p273
        $region46: #{tpu_custom_call.1} parent=11 // pred_check_branch
          %517 = sbr.rel (%p515) target = $region48
        $region47: #{tpu_custom_call.1} parent=11 // pred_region
          %s519 = ssub.s32 768, 768
          %520 = vsyncadd [#allocation14], %s519
          %s521 = sshll.u32 [#allocation13], 4
          %s522 = int_to_ptr.vmem [resolvable:$true] %s521
          %527 = dma.hbm_to_vmem [thread:$0]  %s10, 768, %s522, [#allocation14], 128, 128, 8
        $region48: #{tpu_custom_call.1} parent=11 // pred_fallthru
          _
        // Predicated region
        $region49: #{tpu_custom_call.1} parent=11 // pred_check
          %p528 = pneg %p294
        $region50: #{tpu_custom_call.1} parent=11 // pred_check_branch
          %530 = sbr.rel (%p528) target = $region52
        $region51: #{tpu_custom_call.1} parent=11 // pred_region
          _
        $region52: #{tpu_custom_call.1} parent=11 // pred_fallthru
          _
        // Predicated region
        $region53: #{tpu_custom_call.1} parent=11 // pred_check
          %p531 = pneg %p315
        $region54: #{tpu_custom_call.1} parent=11 // pred_check_branch
          %533 = sbr.rel (%p531) target = $region56
        $region55: #{tpu_custom_call.1} parent=11 // pred_region
          _
        $region56: #{tpu_custom_call.1} parent=11 // pred_fallthru
          _
        // Predicated region
        $region57: #{tpu_custom_call.1} parent=11 // pred_check
          %p534 = pneg %p336
        $region58: #{tpu_custom_call.1} parent=11 // pred_check_branch
          %536 = sbr.rel (%p534) target = $region60
        $region59: #{tpu_custom_call.1} parent=11 // pred_region
          _
        $region60: #{tpu_custom_call.1} parent=11 // pred_fallthru
          _
        // Predicated region
        $region61: #{tpu_custom_call.1} parent=11 // pred_check
          %p537 = pneg %p357
        $region62: #{tpu_custom_call.1} parent=11 // pred_check_branch
          %539 = sbr.rel (%p537) target = $region64
        $region63: #{tpu_custom_call.1} parent=11 // pred_region
          %s541 = ssub.s32 32768, 32768
          %542 = vsyncadd [#allocation14], %s541
          %s543 = sshll.u32 [#allocation15], 4
          %s544 = int_to_ptr.vmem [resolvable:$true] %s543
          %549 = dma.hbm_to_vmem [thread:$0]  %s14, 32768, %s544, [#allocation14], 1024, 1024, 64
        $region64: #{tpu_custom_call.1} parent=11 // pred_fallthru
          _
        // Predicated region
        $region65: #{tpu_custom_call.1} parent=11 // pred_check
          %p550 = pneg %p378
        $region66: #{tpu_custom_call.1} parent=11 // pred_check_branch
          %552 = sbr.rel (%p550) target = $region68
        $region67: #{tpu_custom_call.1} parent=11 // pred_region
          _
        $region68: #{tpu_custom_call.1} parent=11 // pred_fallthru
          _
        // Predicated region
        $region69: #{tpu_custom_call.1} parent=11 // pred_check
          %p553 = pneg %p399
        $region70: #{tpu_custom_call.1} parent=11 // pred_check_branch
          %555 = sbr.rel (%p553) target = $region72
        $region71: #{tpu_custom_call.1} parent=11 // pred_region
          _
        $region72: #{tpu_custom_call.1} parent=11 // pred_fallthru
          _
        // Predicated region
        $region73: #{tpu_custom_call.1} parent=11 // pred_check
          %p556 = pneg %p420
        $region74: #{tpu_custom_call.1} parent=11 // pred_check_branch
          %558 = sbr.rel (%p556) target = $region76
        $region75: #{tpu_custom_call.1} parent=11 // pred_region
          _
        $region76: #{tpu_custom_call.1} parent=11 // pred_fallthru
          _
      $region12: #{tpu_custom_call.1} parent=5 // pred_fallthru
        _
      %p559 = scmp.lt.s32.totalorder %s32, 2
      // Predicated region
      $region77: #{tpu_custom_call.1} parent=5 // pred_check
        %p560 = pneg %p559
      $region78: #{tpu_custom_call.1} parent=5 // pred_check_branch
        %562 = sbr.rel (%p560) target = $region80
      $region79: #{tpu_custom_call.1} parent=5 // pred_region
        // Predicated region
        $region81: #{tpu_custom_call.1} parent=79 // pred_check
          %p563 = pneg %p52
        $region82: #{tpu_custom_call.1} parent=79 // pred_check_branch
          %565 = sbr.rel (%p563) target = $region84
        $region83: #{tpu_custom_call.1} parent=79 // pred_region
          %s566 = sand.u32 %s42, 1
          %s567 = scalar_lea.sflag [#allocation6], %s566
          %s568 = sand.u32 %s42, 1
          %s569 = smul.addr %s568, 320
          %s570 = scalar_lea.vmem [#allocation5], %s569
          %s571 = smul.u32 8, %s32
          %s573 = ssub.s32 5120, 5120
          %574 = vsyncadd %s567, %s573
          %s575 = smul.addr %s571, 128
          %s576 = scalar_lea.hbm %s0, %s575
          %s577 = sshll.u32 %s570, 4
          %s578 = int_to_ptr.vmem [resolvable:$true] %s577
          %583 = dma.hbm_to_vmem [thread:$0]  %s576, 5120, %s578, %s567, 2048, 1024, 64
        $region84: #{tpu_custom_call.1} parent=79 // pred_fallthru
          _
        // Predicated region
        $region85: #{tpu_custom_call.1} parent=79 // pred_check
          %p584 = pneg %p78
        $region86: #{tpu_custom_call.1} parent=79 // pred_check_branch
          %586 = sbr.rel (%p584) target = $region88
        $region87: #{tpu_custom_call.1} parent=79 // pred_region
          %s587 = sand.u32 %s32, 1
          %s588 = scalar_lea.sflag [#allocation8], %s587
          %s589 = sand.u32 %s68, 1
          %s590 = smul.addr %s589, 8
          %s591 = scalar_lea.vmem [#allocation7], %s590
          %s593 = ssub.s32 128, 128
          %594 = vsyncadd %s588, %s593
          %s595 = smul.addr %s32, 128
          %s596 = scalar_lea.hbm %s1, %s595
          %s598 = sshll.u32 %s591, 4
          %s599 = int_to_ptr.vmem [resolvable:$true] %s598
          %601 = dma.hbm_to_vmem [thread:$0]  %s596, 128, %s599, %s588
        $region88: #{tpu_custom_call.1} parent=79 // pred_fallthru
          _
      $region80: #{tpu_custom_call.1} parent=5 // pred_fallthru
        _
      %p602 = scmp.le.s32.totalorder 1, %s32
      %p603 = scmp.lt.s32.totalorder %s32, 3
      %p604 = pnand %p602, %p603
      %p605 = pneg %p604
      // Predicated region
      $region89: #{tpu_custom_call.1} parent=5 // pred_check
        _
      $region90: #{tpu_custom_call.1} parent=5 // pred_check_branch
        %607 = sbr.rel (%p604) target = $region92
      $region91: #{tpu_custom_call.1} parent=5 // pred_region
        %s608 = ssub.s32 %s32, 1
        %s609 = sand.u32 %s45, 1
        %s610 = scalar_lea.sflag [#allocation6], %s609
        %s611 = sand.u32 %s45, 1
        %s612 = smul.addr %s611, 320
        %s613 = scalar_lea.vmem [#allocation5], %s612
        // Predicated region
        $region93: #{tpu_custom_call.1} parent=91 // pred_check
          %p614 = pneg %p58
        $region94: #{tpu_custom_call.1} parent=91 // pred_check_branch
          %616 = sbr.rel (%p614) target = $region96
        $region95: #{tpu_custom_call.1} parent=91 // pred_region
          %617 = dma.done %s610, 5120
        $region96: #{tpu_custom_call.1} parent=91 // pred_fallthru
          _
        %s618 = sand.u32 %s37, 1
        %s619 = scalar_lea.sflag [#allocation8], %s618
        %s620 = sand.u32 %s71, 1
        %s621 = smul.addr %s620, 8
        %s622 = scalar_lea.vmem [#allocation7], %s621
        // Predicated region
        $region97: #{tpu_custom_call.1} parent=91 // pred_check
          %p623 = pneg %p84
        $region98: #{tpu_custom_call.1} parent=91 // pred_check_branch
          %625 = sbr.rel (%p623) target = $region100
        $region99: #{tpu_custom_call.1} parent=91 // pred_region
          %626 = dma.done %s619, 128
        $region100: #{tpu_custom_call.1} parent=91 // pred_fallthru
          _
        // Predicated region
        $region101: #{tpu_custom_call.1} parent=91 // pred_check
          %p627 = pneg %p126
        $region102: #{tpu_custom_call.1} parent=91 // pred_check_branch
          %629 = sbr.rel (%p627) target = $region104
        $region103: #{tpu_custom_call.1} parent=91 // pred_region
          %630 = dma.done [#allocation8], 256
        $region104: #{tpu_custom_call.1} parent=91 // pred_fallthru
          _
        // Predicated region
        $region105: #{tpu_custom_call.1} parent=91 // pred_check
          %p631 = pneg %p147
        $region106: #{tpu_custom_call.1} parent=91 // pred_check_branch
          %633 = sbr.rel (%p631) target = $region108
        $region107: #{tpu_custom_call.1} parent=91 // pred_region
          %634 = dma.done [#allocation11], 256
        $region108: #{tpu_custom_call.1} parent=91 // pred_fallthru
          _
        // Predicated region
        $region109: #{tpu_custom_call.1} parent=91 // pred_check
          %p635 = pneg %p189
        $region110: #{tpu_custom_call.1} parent=91 // pred_check_branch
          %637 = sbr.rel (%p635) target = $region112
        $region111: #{tpu_custom_call.1} parent=91 // pred_region
          %638 = dma.done [#allocation11], 256
        $region112: #{tpu_custom_call.1} parent=91 // pred_fallthru
          _
        // Predicated region
        $region113: #{tpu_custom_call.1} parent=91 // pred_check
          %p639 = pneg %p273
        $region114: #{tpu_custom_call.1} parent=91 // pred_check_branch
          %641 = sbr.rel (%p639) target = $region116
        $region115: #{tpu_custom_call.1} parent=91 // pred_region
          %642 = dma.done [#allocation14], 768
        $region116: #{tpu_custom_call.1} parent=91 // pred_fallthru
          _
        // Predicated region
        $region117: #{tpu_custom_call.1} parent=91 // pred_check
          %p643 = pneg %p357
        $region118: #{tpu_custom_call.1} parent=91 // pred_check_branch
          %645 = sbr.rel (%p643) target = $region120
        $region119: #{tpu_custom_call.1} parent=91 // pred_region
          %646 = dma.done [#allocation14], 32768
        $region120: #{tpu_custom_call.1} parent=91 // pred_fallthru
          _
        %s647 = sand.u32 %s45, 1
        %s648 = scalar_lea.sflag [#allocation6], %s647
        %s649 = sand.u32 %s45, 1
        %s650 = smul.addr %s649, 320
        %s651 = scalar_lea.vmem [#allocation5], %s650
        %p652 = pneg %p58
        %p653 = pneg %p55
        %s654 = sand.u32 %s37, 1
        %s655 = scalar_lea.sflag [#allocation8], %s654
        %s656 = sand.u32 %s71, 1
        %s657 = smul.addr %s656, 8
        %s658 = scalar_lea.vmem [#allocation7], %s657
        %p659 = pneg %p84
        %p660 = pneg %p81
        %p661 = pneg %p105
        %p662 = pneg %p102
        %p663 = pneg %p126
        %p664 = pneg %p123
        %p665 = pneg %p147
        %p666 = pneg %p144
        %p667 = pneg %p168
        %p668 = pneg %p165
        %p669 = pneg %p189
        %p670 = pneg %p186
        %p671 = pneg %p210
        %p672 = pneg %p207
        %p673 = pneg %p231
        %p674 = pneg %p228
        %p675 = pneg %p252
        %p676 = pneg %p249
        %p677 = pneg %p273
        %p678 = pneg %p270
        %p679 = pneg %p294
        %p680 = pneg %p291
        %p681 = pneg %p315
        %p682 = pneg %p312
        %p683 = pneg %p336
        %p684 = pneg %p333
        %p685 = pneg %p357
        %p686 = pneg %p354
        %p687 = pneg %p378
        %p688 = pneg %p375
        %p689 = pneg %p399
        %p690 = pneg %p396
        %p691 = pneg %p420
        %p692 = pneg %p417
        %p693 = pneg %p446
        %p694 = pneg %p443
        %p695 = scmp.lt.s32.totalorder %s37, 1
        %s696 = scalar_select %p695, %s37, 1
        %s697 = smul.addr %s696, 8
        %s698 = scalar_lea.vmem %s18, %s697
        %s699 = smul.u32 8, %s37
        %p700 = scmp.lt.s32.totalorder %s37, 1
        %s701 = scalar_select %p700, %s37, 1
        %s702 = smul.addr %s701, 8
        %s703 = scalar_lea.vmem %s18, %s702
        %v704 = vld [vmem:[%s613] sm:$0xff]
        %v705 = vld [vmem:[%s613 + $0x8] sm:$0xff]
        %v706 = vld [vmem:[%s613 + $0x10] sm:$0xff]
        %v707 = vld [vmem:[%s613 + $0x18] sm:$0xff]
        %v708 = vld [vmem:[%s613 + $0x20] sm:$0xff]
        %v709 = vld [vmem:[%s613 + $0x28] sm:$0xff]
        %v710 = vld [vmem:[%s613 + $0x30] sm:$0xff]
        %v711 = vld [vmem:[%s613 + $0x38] sm:$0xff]
        %v712 = vld [vmem:[%s613 + $0x40] sm:$0xff]
        %v713 = vld [vmem:[%s613 + $0x48] sm:$0xff]
        %v714 = vld [vmem:[%s613 + $0x50] sm:$0xff]
        %v715 = vld [vmem:[%s613 + $0x58] sm:$0xff]
        %v716 = vld [vmem:[%s613 + $0x60] sm:$0xff]
        %v717 = vld [vmem:[%s613 + $0x68] sm:$0xff]
        %v718 = vld [vmem:[%s613 + $0x70] sm:$0xff]
        %v719 = vld [vmem:[%s613 + $0x78] sm:$0xff]
        %v720 = vld [vmem:[%s613 + $0x80] sm:$0xff]
        %v721 = vld [vmem:[%s613 + $0x88] sm:$0xff]
        %v722 = vld [vmem:[%s613 + $0x90] sm:$0xff]
        %v723 = vld [vmem:[%s613 + $0x98] sm:$0xff]
        %v724 = vld [vmem:[%s613 + $0xa0] sm:$0xff]
        %v725 = vld [vmem:[%s613 + $0xa8] sm:$0xff]
        %v726 = vld [vmem:[%s613 + $0xb0] sm:$0xff]
        %v727 = vld [vmem:[%s613 + $0xb8] sm:$0xff]
        %v728 = vld [vmem:[%s613 + $0xc0] sm:$0xff]
        %v729 = vld [vmem:[%s613 + $0xc8] sm:$0xff]
        %v730 = vld [vmem:[%s613 + $0xd0] sm:$0xff]
        %v731 = vld [vmem:[%s613 + $0xd8] sm:$0xff]
        %v732 = vld [vmem:[%s613 + $0xe0] sm:$0xff]
        %v733 = vld [vmem:[%s613 + $0xe8] sm:$0xff]
        %v734 = vld [vmem:[%s613 + $0xf0] sm:$0xff]
        %v735 = vld [vmem:[%s613 + $0xf8] sm:$0xff]
        %v736 = vld [vmem:[%s613 + $0x100] sm:$0x7f]
        %v737 = vld [vmem:[%s613 + $0x108] sm:$0x7f]
        %v738 = vld [vmem:[%s613 + $0x110] sm:$0x7f]
        %v739 = vld [vmem:[%s613 + $0x118] sm:$0x7f]
        %v740 = vld [vmem:[%s613 + $0x120] sm:$0x7f]
        %v741 = vld [vmem:[%s613 + $0x128] sm:$0x7f]
        %v742 = vld [vmem:[%s613 + $0x130] sm:$0x7f]
        %v743 = vld [vmem:[%s613 + $0x138] sm:$0x7f]
        %v744 = vld [vmem:[#allocation10] sm:$0xff]
        %v745 = vld [vmem:[#allocation10 + $0x8] sm:$0xff]
        %v746 = vld [vmem:[#allocation9] sm:$0xff]
        %v747 = vld [vmem:[#allocation9 + $0x8] sm:$0xff]
        %v748 = vld [vmem:[%s622] sm:$0xff]
        %vm749 = vcmask 318464
        %v751 = vsel %vm749, %v746, 0
        %v754 = vsel %vm749, %v747, 0
        %v757 = vsel %vm749, %v748, 0
        %759 = vmatprep.subr.mxu0 0.0
        %760 = vmatpush1.xpose.msra.mxu0 0.0
        %761 = vmatprep.subr.mxu0 0.0
        %762 = vmatpush1.xpose.msra.mxu0 0.0
        %763 = vmatprep.subr.mxu0 0.0
        %764 = vmatpush1.xpose.msra.mxu0 0.0
        %765 = vmatprep.subr.mxu0 0.0
        %766 = vmatpush1.xpose.msra.mxu0 0.0
        %767 = vmatprep.subr.mxu0 0.0
        %768 = vmatpush1.xpose.msra.mxu0 0.0
        %769 = vmatprep.subr.mxu0 0.0
        %770 = vmatpush1.xpose.msra.mxu0 0.0
        %771 = vmatprep.subr.mxu0 0.0
        %772 = vmatpush1.xpose.msra.mxu0 0.0
        %773 = vmatprep.subr.mxu0 0.0
        %774 = vmatpush1.xpose.msra.mxu0 0.0
        %775 = vmatprep.subr.mxu0 0.0
        %776 = vmatpush1.xpose.msra.mxu0 0.0
        %777 = vmatprep.subr.mxu0 0.0
        %778 = vmatpush1.xpose.msra.mxu0 0.0
        %779 = vmatprep.subr.mxu0 0.0
        %780 = vmatpush1.xpose.msra.mxu0 0.0
        %781 = vmatprep.subr.mxu0 0.0
        %782 = vmatpush1.xpose.msra.mxu0 0.0
        %783 = vmatprep.subr.mxu0 0.0
        %784 = vmatpush1.xpose.msra.mxu0 0.0
        %785 = vmatprep.subr.mxu0 0.0
        %786 = vmatpush1.xpose.msra.mxu0 0.0
        %787 = vmatprep.subr.mxu0 0.0
        %788 = vmatpush1.xpose.msra.mxu0 0.0
        %789 = vmatprep.subr.mxu0 0.0
        %790 = vmatpush1.xpose.msra.mxu0 %v757
        %791 = vmatprep.subr.mxu0 0.0
        %792 = vmatpush2.xpose.msra.mxu0 0.0
        %793 = vmatprep.subr.mxu0 0.0
        %794 = vmatpush2.xpose.msra.mxu0 0.0
        %795 = vmatprep.subr.mxu0 0.0
        %796 = vmatpush2.xpose.msra.mxu0 0.0
        %797 = vmatprep.subr.mxu0 0.0
        %798 = vmatpush2.xpose.msra.mxu0 0.0
        %799 = vmatprep.subr.mxu0 0.0
        %800 = vmatpush2.xpose.msra.mxu0 0.0
        %801 = vmatprep.subr.mxu0 0.0
        %802 = vmatpush2.xpose.msra.mxu0 0.0
        %803 = vmatprep.subr.mxu0 0.0
        %804 = vmatpush2.xpose.msra.mxu0 0.0
        %805 = vmatprep.subr.mxu0 0.0
        %806 = vmatpush2.xpose.msra.mxu0 0.0
        %807 = vmatprep.subr.mxu0 0.0
        %808 = vmatpush2.xpose.msra.mxu0 0.0
        %809 = vmatprep.subr.mxu0 0.0
        %810 = vmatpush2.xpose.msra.mxu0 0.0
        %811 = vmatprep.subr.mxu0 0.0
        %812 = vmatpush2.xpose.msra.mxu0 0.0
        %813 = vmatprep.subr.mxu0 0.0
        %814 = vmatpush2.xpose.msra.mxu0 0.0
        %815 = vmatprep.subr.mxu0 0.0
        %816 = vmatpush2.xpose.msra.mxu0 0.0
        %817 = vmatprep.subr.mxu0 0.0
        %818 = vmatpush2.xpose.msra.mxu0 0.0
        %819 = vmatprep.subr.mxu0 0.0
        %820 = vmatpush2.xpose.msra.mxu0 0.0
        %821 = vmatprep.subr.mxu0 0.0
        %822 = vmatpush2.xpose.msra.mxu0 0.0
        %823 = vmatprep.mubr.f32.mxu0 0.0
        %824 = vmatmul.mubr.f32.gmra.mxu0 %v751
        %v825 = vpop.f32.mrf.mxu0
        %v826 = vadd.f32 0.0, %v825
        %v827 = vpop.f32.mrf.mxu0
        %828 = vmatprep.mubr.f32.mxu0 0.0
        %829 = vmatmul.mubr.f32.gmra.mxu0 %v754
        %v830 = vpop.f32.mrf.mxu0
        %v831 = vadd.f32 0.0, %v830
        %v832 = vpop.f32.mrf.mxu0
        %833 = vdwg.mxu0
        %v834 = vld [vmem:[%s2] sm:$0xff]
        %v835 = vld [vmem:[%s2 + $0x8] sm:$0xff]
        %v836 = vld [vmem:[%s2 + $0x10] sm:$0xff]
        %v837 = vld [vmem:[%s2 + $0x18] sm:$0xff]
        %v838 = vld [vmem:[%s2 + $0x20] sm:$0xff]
        %v839 = vld [vmem:[%s2 + $0x28] sm:$0xff]
        %v840 = vld [vmem:[%s2 + $0x30] sm:$0xff]
        %v841 = vld [vmem:[%s2 + $0x38] sm:$0xff]
        %vm842 = vcmask 64512
        %v844 = vsel %vm842, %v826, 0
        %v847 = vsel %vm842, %v831, 0
        %849 = vmatprep.subr.mxu0 0.0
        %850 = vmatpush1.msra.mxu0 0.0
        %851 = vmatprep.subr.mxu0 0.0
        %852 = vmatpush1.msra.mxu0 0.0
        %853 = vmatprep.subr.mxu0 0.0
        %854 = vmatpush1.msra.mxu0 0.0
        %855 = vmatprep.subr.mxu0 0.0
        %856 = vmatpush1.msra.mxu0 0.0
        %857 = vmatprep.subr.mxu0 0.0
        %858 = vmatpush1.msra.mxu0 0.0
        %859 = vmatprep.subr.mxu0 0.0
        %860 = vmatpush1.msra.mxu0 0.0
        %861 = vmatprep.subr.mxu0 0.0
        %862 = vmatpush1.msra.mxu0 0.0
        %863 = vmatprep.subr.mxu0 0.0
        %864 = vmatpush1.msra.mxu0 0.0
        %865 = vmatprep.subr.mxu0 0.0
        %866 = vmatpush1.msra.mxu0 0.0
        %867 = vmatprep.subr.mxu0 0.0
        %868 = vmatpush1.msra.mxu0 0.0
        %869 = vmatprep.subr.mxu0 0.0
        %870 = vmatpush1.msra.mxu0 0.0
        %871 = vmatprep.subr.mxu0 0.0
        %872 = vmatpush1.msra.mxu0 0.0
        %873 = vmatprep.subr.mxu0 0.0
        %874 = vmatpush1.msra.mxu0 0.0
        %875 = vmatprep.subr.mxu0 0.0
        %876 = vmatpush1.msra.mxu0 0.0
        %877 = vmatprep.subr.mxu0 0.0
        %878 = vmatpush1.msra.mxu0 0.0
        %879 = vmatprep.subr.mxu0 %v835
        %880 = vmatpush1.msra.mxu0 %v834
        %881 = vmatprep.subr.mxu0 0.0
        %882 = vmatpush2.msra.mxu0 0.0
        %883 = vmatprep.subr.mxu0 0.0
        %884 = vmatpush2.msra.mxu0 0.0
        %885 = vmatprep.subr.mxu0 0.0
        %886 = vmatpush2.msra.mxu0 0.0
        %887 = vmatprep.subr.mxu0 0.0
        %888 = vmatpush2.msra.mxu0 0.0
        %889 = vmatprep.subr.mxu0 0.0
        %890 = vmatpush2.msra.mxu0 0.0
        %891 = vmatprep.subr.mxu0 0.0
        %892 = vmatpush2.msra.mxu0 0.0
        %893 = vmatprep.subr.mxu0 0.0
        %894 = vmatpush2.msra.mxu0 0.0
        %895 = vmatprep.subr.mxu0 0.0
        %896 = vmatpush2.msra.mxu0 0.0
        %897 = vmatprep.subr.mxu0 0.0
        %898 = vmatpush2.msra.mxu0 0.0
        %899 = vmatprep.subr.mxu0 0.0
        %900 = vmatpush2.msra.mxu0 0.0
        %901 = vmatprep.subr.mxu0 0.0
        %902 = vmatpush2.msra.mxu0 0.0
        %903 = vmatprep.subr.mxu0 0.0
        %904 = vmatpush2.msra.mxu0 0.0
        %905 = vmatprep.subr.mxu0 0.0
        %906 = vmatpush2.msra.mxu0 0.0
        %907 = vmatprep.subr.mxu0 0.0
        %908 = vmatpush2.msra.mxu0 0.0
        %909 = vmatprep.subr.mxu0 0.0
        %910 = vmatpush2.msra.mxu0 0.0
        %911 = vmatprep.subr.mxu0 0.0
        %912 = vmatpush2.msra.mxu0 0.0
        %913 = vmatprep.mubr.f32.mxu0 0.0
        %914 = vmatmul.mubr.f32.gmra.mxu0 %v844
        %v915 = vpop.f32.mrf.mxu0
        %v916 = vadd.f32 0.0, %v915
        %v917 = vpop.f32.mrf.mxu0
        %v918 = vadd.f32 0.0, %v917
        %919 = vmatprep.mubr.f32.mxu0 0.0
        %920 = vmatmul.mubr.f32.gmra.mxu0 %v847
        %v921 = vpop.f32.mrf.mxu0
        %v922 = vadd.f32 0.0, %v921
        %v923 = vpop.f32.mrf.mxu0
        %v924 = vadd.f32 0.0, %v923
        %925 = vdwg.mxu0
        %926 = vmatprep.subr.mxu0 0.0
        %927 = vmatpush1.msra.mxu0 0.0
        %928 = vmatprep.subr.mxu0 0.0
        %929 = vmatpush1.msra.mxu0 0.0
        %930 = vmatprep.subr.mxu0 0.0
        %931 = vmatpush1.msra.mxu0 0.0
        %932 = vmatprep.subr.mxu0 0.0
        %933 = vmatpush1.msra.mxu0 0.0
        %934 = vmatprep.subr.mxu0 0.0
        %935 = vmatpush1.msra.mxu0 0.0
        %936 = vmatprep.subr.mxu0 0.0
        %937 = vmatpush1.msra.mxu0 0.0
        %938 = vmatprep.subr.mxu0 0.0
        %939 = vmatpush1.msra.mxu0 0.0
        %940 = vmatprep.subr.mxu0 0.0
        %941 = vmatpush1.msra.mxu0 0.0
        %942 = vmatprep.subr.mxu0 0.0
        %943 = vmatpush1.msra.mxu0 0.0
        %944 = vmatprep.subr.mxu0 0.0
        %945 = vmatpush1.msra.mxu0 0.0
        %946 = vmatprep.subr.mxu0 0.0
        %947 = vmatpush1.msra.mxu0 0.0
        %948 = vmatprep.subr.mxu0 0.0
        %949 = vmatpush1.msra.mxu0 0.0
        %950 = vmatprep.subr.mxu0 0.0
        %951 = vmatpush1.msra.mxu0 0.0
        %952 = vmatprep.subr.mxu0 0.0
        %953 = vmatpush1.msra.mxu0 0.0
        %954 = vmatprep.subr.mxu0 0.0
        %955 = vmatpush1.msra.mxu0 0.0
        %956 = vmatprep.subr.mxu0 %v837
        %957 = vmatpush1.msra.mxu0 %v836
        %958 = vmatprep.subr.mxu0 0.0
        %959 = vmatpush2.msra.mxu0 0.0
        %960 = vmatprep.subr.mxu0 0.0
        %961 = vmatpush2.msra.mxu0 0.0
        %962 = vmatprep.subr.mxu0 0.0
        %963 = vmatpush2.msra.mxu0 0.0
        %964 = vmatprep.subr.mxu0 0.0
        %965 = vmatpush2.msra.mxu0 0.0
        %966 = vmatprep.subr.mxu0 0.0
        %967 = vmatpush2.msra.mxu0 0.0
        %968 = vmatprep.subr.mxu0 0.0
        %969 = vmatpush2.msra.mxu0 0.0
        %970 = vmatprep.subr.mxu0 0.0
        %971 = vmatpush2.msra.mxu0 0.0
        %972 = vmatprep.subr.mxu0 0.0
        %973 = vmatpush2.msra.mxu0 0.0
        %974 = vmatprep.subr.mxu0 0.0
        %975 = vmatpush2.msra.mxu0 0.0
        %976 = vmatprep.subr.mxu0 0.0
        %977 = vmatpush2.msra.mxu0 0.0
        %978 = vmatprep.subr.mxu0 0.0
        %979 = vmatpush2.msra.mxu0 0.0
        %980 = vmatprep.subr.mxu0 0.0
        %981 = vmatpush2.msra.mxu0 0.0
        %982 = vmatprep.subr.mxu0 0.0
        %983 = vmatpush2.msra.mxu0 0.0
        %984 = vmatprep.subr.mxu0 0.0
        %985 = vmatpush2.msra.mxu0 0.0
        %986 = vmatprep.subr.mxu0 0.0
        %987 = vmatpush2.msra.mxu0 0.0
        %988 = vmatprep.subr.mxu0 0.0
        %989 = vmatpush2.msra.mxu0 0.0
        %990 = vmatprep.mubr.f32.mxu0 0.0
        %991 = vmatmul.mubr.f32.gmra.mxu0 %v844
        %v992 = vpop.f32.mrf.mxu0
        %v993 = vadd.f32 0.0, %v992
        %v994 = vpop.f32.mrf.mxu0
        %v995 = vadd.f32 0.0, %v994
        %996 = vmatprep.mubr.f32.mxu0 0.0
        %997 = vmatmul.mubr.f32.gmra.mxu0 %v847
        %v998 = vpop.f32.mrf.mxu0
        %v999 = vadd.f32 0.0, %v998
        %v1000 = vpop.f32.mrf.mxu0
        %v1001 = vadd.f32 0.0, %v1000
        %1002 = vdwg.mxu0
        %1003 = vmatprep.subr.mxu0 0.0
        %1004 = vmatpush1.msra.mxu0 0.0
        %1005 = vmatprep.subr.mxu0 0.0
        %1006 = vmatpush1.msra.mxu0 0.0
        %1007 = vmatprep.subr.mxu0 0.0
        %1008 = vmatpush1.msra.mxu0 0.0
        %1009 = vmatprep.subr.mxu0 0.0
        %1010 = vmatpush1.msra.mxu0 0.0
        %1011 = vmatprep.subr.mxu0 0.0
        %1012 = vmatpush1.msra.mxu0 0.0
        %1013 = vmatprep.subr.mxu0 0.0
        %1014 = vmatpush1.msra.mxu0 0.0
        %1015 = vmatprep.subr.mxu0 0.0
        %1016 = vmatpush1.msra.mxu0 0.0
        %1017 = vmatprep.subr.mxu0 0.0
        %1018 = vmatpush1.msra.mxu0 0.0
        %1019 = vmatprep.subr.mxu0 0.0
        %1020 = vmatpush1.msra.mxu0 0.0
        %1021 = vmatprep.subr.mxu0 0.0
        %1022 = vmatpush1.msra.mxu0 0.0
        %1023 = vmatprep.subr.mxu0 0.0
        %1024 = vmatpush1.msra.mxu0 0.0
        %1025 = vmatprep.subr.mxu0 0.0
        %1026 = vmatpush1.msra.mxu0 0.0
        %1027 = vmatprep.subr.mxu0 0.0
        %1028 = vmatpush1.msra.mxu0 0.0
        %1029 = vmatprep.subr.mxu0 0.0
        %1030 = vmatpush1.msra.mxu0 0.0
        %1031 = vmatprep.subr.mxu0 0.0
        %1032 = vmatpush1.msra.mxu0 0.0
        %1033 = vmatprep.subr.mxu0 %v839
        %1034 = vmatpush1.msra.mxu0 %v838
        %1035 = vmatprep.subr.mxu0 0.0
        %1036 = vmatpush2.msra.mxu0 0.0
        %1037 = vmatprep.subr.mxu0 0.0
        %1038 = vmatpush2.msra.mxu0 0.0
        %1039 = vmatprep.subr.mxu0 0.0
        %1040 = vmatpush2.msra.mxu0 0.0
        %1041 = vmatprep.subr.mxu0 0.0
        %1042 = vmatpush2.msra.mxu0 0.0
        %1043 = vmatprep.subr.mxu0 0.0
        %1044 = vmatpush2.msra.mxu0 0.0
        %1045 = vmatprep.subr.mxu0 0.0
        %1046 = vmatpush2.msra.mxu0 0.0
        %1047 = vmatprep.subr.mxu0 0.0
        %1048 = vmatpush2.msra.mxu0 0.0
        %1049 = vmatprep.subr.mxu0 0.0
        %1050 = vmatpush2.msra.mxu0 0.0
        %1051 = vmatprep.subr.mxu0 0.0
        %1052 = vmatpush2.msra.mxu0 0.0
        %1053 = vmatprep.subr.mxu0 0.0
        %1054 = vmatpush2.msra.mxu0 0.0
        %1055 = vmatprep.subr.mxu0 0.0
        %1056 = vmatpush2.msra.mxu0 0.0
        %1057 = vmatprep.subr.mxu0 0.0
        %1058 = vmatpush2.msra.mxu0 0.0
        %1059 = vmatprep.subr.mxu0 0.0
        %1060 = vmatpush2.msra.mxu0 0.0
        %1061 = vmatprep.subr.mxu0 0.0
        %1062 = vmatpush2.msra.mxu0 0.0
        %1063 = vmatprep.subr.mxu0 0.0
        %1064 = vmatpush2.msra.mxu0 0.0
        %1065 = vmatprep.subr.mxu0 0.0
        %1066 = vmatpush2.msra.mxu0 0.0
        %1067 = vmatprep.mubr.f32.mxu0 0.0
        %1068 = vmatmul.mubr.f32.gmra.mxu0 %v844
        %v1069 = vpop.f32.mrf.mxu0
        %v1070 = vadd.f32 0.0, %v1069
        %v1071 = vpop.f32.mrf.mxu0
        %v1072 = vadd.f32 0.0, %v1071
        %1073 = vmatprep.mubr.f32.mxu0 0.0
        %1074 = vmatmul.mubr.f32.gmra.mxu0 %v847
        %v1075 = vpop.f32.mrf.mxu0
        %v1076 = vadd.f32 0.0, %v1075
        %v1077 = vpop.f32.mrf.mxu0
        %v1078 = vadd.f32 0.0, %v1077
        %1079 = vdwg.mxu0
        %1080 = vmatprep.subr.mxu0 0.0
        %1081 = vmatpush1.msra.mxu0 0.0
        %1082 = vmatprep.subr.mxu0 0.0
        %1083 = vmatpush1.msra.mxu0 0.0
        %1084 = vmatprep.subr.mxu0 0.0
        %1085 = vmatpush1.msra.mxu0 0.0
        %1086 = vmatprep.subr.mxu0 0.0
        %1087 = vmatpush1.msra.mxu0 0.0
        %1088 = vmatprep.subr.mxu0 0.0
        %1089 = vmatpush1.msra.mxu0 0.0
        %1090 = vmatprep.subr.mxu0 0.0
        %1091 = vmatpush1.msra.mxu0 0.0
        %1092 = vmatprep.subr.mxu0 0.0
        %1093 = vmatpush1.msra.mxu0 0.0
        %1094 = vmatprep.subr.mxu0 0.0
        %1095 = vmatpush1.msra.mxu0 0.0
        %1096 = vmatprep.subr.mxu0 0.0
        %1097 = vmatpush1.msra.mxu0 0.0
        %1098 = vmatprep.subr.mxu0 0.0
        %1099 = vmatpush1.msra.mxu0 0.0
        %1100 = vmatprep.subr.mxu0 0.0
        %1101 = vmatpush1.msra.mxu0 0.0
        %1102 = vmatprep.subr.mxu0 0.0
        %1103 = vmatpush1.msra.mxu0 0.0
        %1104 = vmatprep.subr.mxu0 0.0
        %1105 = vmatpush1.msra.mxu0 0.0
        %1106 = vmatprep.subr.mxu0 0.0
        %1107 = vmatpush1.msra.mxu0 0.0
        %1108 = vmatprep.subr.mxu0 0.0
        %1109 = vmatpush1.msra.mxu0 0.0
        %1110 = vmatprep.subr.mxu0 %v841
        %1111 = vmatpush1.msra.mxu0 %v840
        %1112 = vmatprep.subr.mxu0 0.0
        %1113 = vmatpush2.msra.mxu0 0.0
        %1114 = vmatprep.subr.mxu0 0.0
        %1115 = vmatpush2.msra.mxu0 0.0
        %1116 = vmatprep.subr.mxu0 0.0
        %1117 = vmatpush2.msra.mxu0 0.0
        %1118 = vmatprep.subr.mxu0 0.0
        %1119 = vmatpush2.msra.mxu0 0.0
        %1120 = vmatprep.subr.mxu0 0.0
        %1121 = vmatpush2.msra.mxu0 0.0
        %1122 = vmatprep.subr.mxu0 0.0
        %1123 = vmatpush2.msra.mxu0 0.0
        %1124 = vmatprep.subr.mxu0 0.0
        %1125 = vmatpush2.msra.mxu0 0.0
        %1126 = vmatprep.subr.mxu0 0.0
        %1127 = vmatpush2.msra.mxu0 0.0
        %1128 = vmatprep.subr.mxu0 0.0
        %1129 = vmatpush2.msra.mxu0 0.0
        %1130 = vmatprep.subr.mxu0 0.0
        %1131 = vmatpush2.msra.mxu0 0.0
        %1132 = vmatprep.subr.mxu0 0.0
        %1133 = vmatpush2.msra.mxu0 0.0
        %1134 = vmatprep.subr.mxu0 0.0
        %1135 = vmatpush2.msra.mxu0 0.0
        %1136 = vmatprep.subr.mxu0 0.0
        %1137 = vmatpush2.msra.mxu0 0.0
        %1138 = vmatprep.subr.mxu0 0.0
        %1139 = vmatpush2.msra.mxu0 0.0
        %1140 = vmatprep.subr.mxu0 0.0
        %1141 = vmatpush2.msra.mxu0 0.0
        %1142 = vmatprep.subr.mxu0 0.0
        %1143 = vmatpush2.msra.mxu0 0.0
        %1144 = vmatprep.mubr.f32.mxu0 0.0
        %1145 = vmatmul.mubr.f32.gmra.mxu0 %v844
        %v1146 = vpop.f32.mrf.mxu0
        %v1147 = vadd.f32 0.0, %v1146
        %v1148 = vpop.f32.mrf.mxu0
        %v1149 = vadd.f32 0.0, %v1148
        %1150 = vmatprep.mubr.f32.mxu0 0.0
        %1151 = vmatmul.mubr.f32.gmra.mxu0 %v847
        %v1152 = vpop.f32.mrf.mxu0
        %v1153 = vadd.f32 0.0, %v1152
        %v1154 = vpop.f32.mrf.mxu0
        %v1155 = vadd.f32 0.0, %v1154
        %1156 = vdwg.mxu0
        %v1158 = vsel %vm749, %v744, 0
        %v1161 = vsel %vm749, %v745, 0
        %vm1163 = vcmask 1046528
        %v1165 = vsel %vm1163, %v736, 0
        %v1168 = vsel %vm1163, %v737, 0
        %v1171 = vsel %vm1163, %v738, 0
        %v1174 = vsel %vm1163, %v739, 0
        %v1177 = vsel %vm1163, %v740, 0
        %v1180 = vsel %vm1163, %v741, 0
        %v1183 = vsel %vm1163, %v742, 0
        %v1186 = vsel %vm1163, %v743, 0
        %1188 = vmatprep.subr.mxu0 0.0
        %1189 = vmatpush1.msra.mxu0 0.0
        %1190 = vmatprep.subr.mxu0 0.0
        %1191 = vmatpush1.msra.mxu0 0.0
        %1192 = vmatprep.subr.mxu0 0.0
        %1193 = vmatpush1.msra.mxu0 0.0
        %1194 = vmatprep.subr.mxu0 0.0
        %1195 = vmatpush1.msra.mxu0 0.0
        %1196 = vmatprep.subr.mxu0 0.0
        %1197 = vmatpush1.msra.mxu0 0.0
        %1198 = vmatprep.subr.mxu0 0.0
        %1199 = vmatpush1.msra.mxu0 0.0
        %1200 = vmatprep.subr.mxu0 0.0
        %1201 = vmatpush1.msra.mxu0 0.0
        %1202 = vmatprep.subr.mxu0 0.0
        %1203 = vmatpush1.msra.mxu0 0.0
        %1204 = vmatprep.subr.mxu0 0.0
        %1205 = vmatpush1.msra.mxu0 0.0
        %1206 = vmatprep.subr.mxu0 0.0
        %1207 = vmatpush1.msra.mxu0 0.0
        %1208 = vmatprep.subr.mxu0 0.0
        %1209 = vmatpush1.msra.mxu0 0.0
        %1210 = vmatprep.subr.mxu0 %v1168
        %1211 = vmatpush1.msra.mxu0 %v1165
        %1212 = vmatprep.subr.mxu0 %v729
        %1213 = vmatpush1.msra.mxu0 %v728
        %1214 = vmatprep.subr.mxu0 %v721
        %1215 = vmatpush1.msra.mxu0 %v720
        %1216 = vmatprep.subr.mxu0 %v713
        %1217 = vmatpush1.msra.mxu0 %v712
        %1218 = vmatprep.subr.mxu0 %v705
        %1219 = vmatpush1.msra.mxu0 %v704
        %1220 = vmatprep.subr.mxu0 0.0
        %1221 = vmatpush2.msra.mxu0 0.0
        %1222 = vmatprep.subr.mxu0 0.0
        %1223 = vmatpush2.msra.mxu0 0.0
        %1224 = vmatprep.subr.mxu0 0.0
        %1225 = vmatpush2.msra.mxu0 0.0
        %1226 = vmatprep.subr.mxu0 0.0
        %1227 = vmatpush2.msra.mxu0 0.0
        %1228 = vmatprep.subr.mxu0 0.0
        %1229 = vmatpush2.msra.mxu0 0.0
        %1230 = vmatprep.subr.mxu0 0.0
        %1231 = vmatpush2.msra.mxu0 0.0
        %1232 = vmatprep.subr.mxu0 0.0
        %1233 = vmatpush2.msra.mxu0 0.0
        %1234 = vmatprep.subr.mxu0 0.0
        %1235 = vmatpush2.msra.mxu0 0.0
        %1236 = vmatprep.subr.mxu0 0.0
        %1237 = vmatpush2.msra.mxu0 0.0
        %1238 = vmatprep.subr.mxu0 0.0
        %1239 = vmatpush2.msra.mxu0 0.0
        %1240 = vmatprep.subr.mxu0 0.0
        %1241 = vmatpush2.msra.mxu0 0.0
        %1242 = vmatprep.subr.mxu0 0.0
        %1243 = vmatpush2.msra.mxu0 0.0
        %1244 = vmatprep.subr.mxu0 0.0
        %1245 = vmatpush2.msra.mxu0 0.0
        %1246 = vmatprep.subr.mxu0 0.0
        %1247 = vmatpush2.msra.mxu0 0.0
        %1248 = vmatprep.subr.mxu0 0.0
        %1249 = vmatpush2.msra.mxu0 0.0
        %1250 = vmatprep.subr.mxu0 0.0
        %1251 = vmatpush2.msra.mxu0 0.0
        %1252 = vmatprep.mubr.f32.mxu0 0.0
        %1253 = vmatmul.mubr.f32.gmra.mxu0 %v1158
        %v1254 = vpop.f32.mrf.mxu0
        %v1255 = vadd.f32 %v916, %v1254
        %v1256 = vpop.f32.mrf.mxu0
        %v1257 = vadd.f32 %v918, %v1256
        %1258 = vmatprep.mubr.f32.mxu0 0.0
        %1259 = vmatmul.mubr.f32.gmra.mxu0 %v1161
        %v1260 = vpop.f32.mrf.mxu0
        %v1261 = vadd.f32 %v922, %v1260
        %v1262 = vpop.f32.mrf.mxu0
        %v1263 = vadd.f32 %v924, %v1262
        %1264 = vdwg.mxu0
        %1265 = vmatprep.subr.mxu0 0.0
        %1266 = vmatpush1.msra.mxu0 0.0
        %1267 = vmatprep.subr.mxu0 0.0
        %1268 = vmatpush1.msra.mxu0 0.0
        %1269 = vmatprep.subr.mxu0 0.0
        %1270 = vmatpush1.msra.mxu0 0.0
        %1271 = vmatprep.subr.mxu0 0.0
        %1272 = vmatpush1.msra.mxu0 0.0
        %1273 = vmatprep.subr.mxu0 0.0
        %1274 = vmatpush1.msra.mxu0 0.0
        %1275 = vmatprep.subr.mxu0 0.0
        %1276 = vmatpush1.msra.mxu0 0.0
        %1277 = vmatprep.subr.mxu0 0.0
        %1278 = vmatpush1.msra.mxu0 0.0
        %1279 = vmatprep.subr.mxu0 0.0
        %1280 = vmatpush1.msra.mxu0 0.0
        %1281 = vmatprep.subr.mxu0 0.0
        %1282 = vmatpush1.msra.mxu0 0.0
        %1283 = vmatprep.subr.mxu0 0.0
        %1284 = vmatpush1.msra.mxu0 0.0
        %1285 = vmatprep.subr.mxu0 0.0
        %1286 = vmatpush1.msra.mxu0 0.0
        %1287 = vmatprep.subr.mxu0 %v1174
        %1288 = vmatpush1.msra.mxu0 %v1171
        %1289 = vmatprep.subr.mxu0 %v731
        %1290 = vmatpush1.msra.mxu0 %v730
        %1291 = vmatprep.subr.mxu0 %v723
        %1292 = vmatpush1.msra.mxu0 %v722
        %1293 = vmatprep.subr.mxu0 %v715
        %1294 = vmatpush1.msra.mxu0 %v714
        %1295 = vmatprep.subr.mxu0 %v707
        %1296 = vmatpush1.msra.mxu0 %v706
        %1297 = vmatprep.subr.mxu0 0.0
        %1298 = vmatpush2.msra.mxu0 0.0
        %1299 = vmatprep.subr.mxu0 0.0
        %1300 = vmatpush2.msra.mxu0 0.0
        %1301 = vmatprep.subr.mxu0 0.0
        %1302 = vmatpush2.msra.mxu0 0.0
        %1303 = vmatprep.subr.mxu0 0.0
        %1304 = vmatpush2.msra.mxu0 0.0
        %1305 = vmatprep.subr.mxu0 0.0
        %1306 = vmatpush2.msra.mxu0 0.0
        %1307 = vmatprep.subr.mxu0 0.0
        %1308 = vmatpush2.msra.mxu0 0.0
        %1309 = vmatprep.subr.mxu0 0.0
        %1310 = vmatpush2.msra.mxu0 0.0
        %1311 = vmatprep.subr.mxu0 0.0
        %1312 = vmatpush2.msra.mxu0 0.0
        %1313 = vmatprep.subr.mxu0 0.0
        %1314 = vmatpush2.msra.mxu0 0.0
        %1315 = vmatprep.subr.mxu0 0.0
        %1316 = vmatpush2.msra.mxu0 0.0
        %1317 = vmatprep.subr.mxu0 0.0
        %1318 = vmatpush2.msra.mxu0 0.0
        %1319 = vmatprep.subr.mxu0 0.0
        %1320 = vmatpush2.msra.mxu0 0.0
        %1321 = vmatprep.subr.mxu0 0.0
        %1322 = vmatpush2.msra.mxu0 0.0
        %1323 = vmatprep.subr.mxu0 0.0
        %1324 = vmatpush2.msra.mxu0 0.0
        %1325 = vmatprep.subr.mxu0 0.0
        %1326 = vmatpush2.msra.mxu0 0.0
        %1327 = vmatprep.subr.mxu0 0.0
        %1328 = vmatpush2.msra.mxu0 0.0
        %1329 = vmatprep.mubr.f32.mxu0 0.0
        %1330 = vmatmul.mubr.f32.gmra.mxu0 %v1158
        %v1331 = vpop.f32.mrf.mxu0
        %v1332 = vadd.f32 %v993, %v1331
        %v1333 = vpop.f32.mrf.mxu0
        %v1334 = vadd.f32 %v995, %v1333
        %1335 = vmatprep.mubr.f32.mxu0 0.0
        %1336 = vmatmul.mubr.f32.gmra.mxu0 %v1161
        %v1337 = vpop.f32.mrf.mxu0
        %v1338 = vadd.f32 %v999, %v1337
        %v1339 = vpop.f32.mrf.mxu0
        %v1340 = vadd.f32 %v1001, %v1339
        %1341 = vdwg.mxu0
        %1342 = vmatprep.subr.mxu0 0.0
        %1343 = vmatpush1.msra.mxu0 0.0
        %1344 = vmatprep.subr.mxu0 0.0
        %1345 = vmatpush1.msra.mxu0 0.0
        %1346 = vmatprep.subr.mxu0 0.0
        %1347 = vmatpush1.msra.mxu0 0.0
        %1348 = vmatprep.subr.mxu0 0.0
        %1349 = vmatpush1.msra.mxu0 0.0
        %1350 = vmatprep.subr.mxu0 0.0
        %1351 = vmatpush1.msra.mxu0 0.0
        %1352 = vmatprep.subr.mxu0 0.0
        %1353 = vmatpush1.msra.mxu0 0.0
        %1354 = vmatprep.subr.mxu0 0.0
        %1355 = vmatpush1.msra.mxu0 0.0
        %1356 = vmatprep.subr.mxu0 0.0
        %1357 = vmatpush1.msra.mxu0 0.0
        %1358 = vmatprep.subr.mxu0 0.0
        %1359 = vmatpush1.msra.mxu0 0.0
        %1360 = vmatprep.subr.mxu0 0.0
        %1361 = vmatpush1.msra.mxu0 0.0
        %1362 = vmatprep.subr.mxu0 0.0
        %1363 = vmatpush1.msra.mxu0 0.0
        %1364 = vmatprep.subr.mxu0 %v1180
        %1365 = vmatpush1.msra.mxu0 %v1177
        %1366 = vmatprep.subr.mxu0 %v733
        %1367 = vmatpush1.msra.mxu0 %v732
        %1368 = vmatprep.subr.mxu0 %v725
        %1369 = vmatpush1.msra.mxu0 %v724
        %1370 = vmatprep.subr.mxu0 %v717
        %1371 = vmatpush1.msra.mxu0 %v716
        %1372 = vmatprep.subr.mxu0 %v709
        %1373 = vmatpush1.msra.mxu0 %v708
        %1374 = vmatprep.subr.mxu0 0.0
        %1375 = vmatpush2.msra.mxu0 0.0
        %1376 = vmatprep.subr.mxu0 0.0
        %1377 = vmatpush2.msra.mxu0 0.0
        %1378 = vmatprep.subr.mxu0 0.0
        %1379 = vmatpush2.msra.mxu0 0.0
        %1380 = vmatprep.subr.mxu0 0.0
        %1381 = vmatpush2.msra.mxu0 0.0
        %1382 = vmatprep.subr.mxu0 0.0
        %1383 = vmatpush2.msra.mxu0 0.0
        %1384 = vmatprep.subr.mxu0 0.0
        %1385 = vmatpush2.msra.mxu0 0.0
        %1386 = vmatprep.subr.mxu0 0.0
        %1387 = vmatpush2.msra.mxu0 0.0
        %1388 = vmatprep.subr.mxu0 0.0
        %1389 = vmatpush2.msra.mxu0 0.0
        %1390 = vmatprep.subr.mxu0 0.0
        %1391 = vmatpush2.msra.mxu0 0.0
        %1392 = vmatprep.subr.mxu0 0.0
        %1393 = vmatpush2.msra.mxu0 0.0
        %1394 = vmatprep.subr.mxu0 0.0
        %1395 = vmatpush2.msra.mxu0 0.0
        %1396 = vmatprep.subr.mxu0 0.0
        %1397 = vmatpush2.msra.mxu0 0.0
        %1398 = vmatprep.subr.mxu0 0.0
        %1399 = vmatpush2.msra.mxu0 0.0
        %1400 = vmatprep.subr.mxu0 0.0
        %1401 = vmatpush2.msra.mxu0 0.0
        %1402 = vmatprep.subr.mxu0 0.0
        %1403 = vmatpush2.msra.mxu0 0.0
        %1404 = vmatprep.subr.mxu0 0.0
        %1405 = vmatpush2.msra.mxu0 0.0
        %1406 = vmatprep.mubr.f32.mxu0 0.0
        %1407 = vmatmul.mubr.f32.gmra.mxu0 %v1158
        %v1408 = vpop.f32.mrf.mxu0
        %v1409 = vadd.f32 %v1070, %v1408
        %v1410 = vpop.f32.mrf.mxu0
        %v1411 = vadd.f32 %v1072, %v1410
        %1412 = vmatprep.mubr.f32.mxu0 0.0
        %1413 = vmatmul.mubr.f32.gmra.mxu0 %v1161
        %v1414 = vpop.f32.mrf.mxu0
        %v1415 = vadd.f32 %v1076, %v1414
        %v1416 = vpop.f32.mrf.mxu0
        %v1417 = vadd.f32 %v1078, %v1416
        %1418 = vdwg.mxu0
        %1419 = vmatprep.subr.mxu0 0.0
        %1420 = vmatpush1.msra.mxu0 0.0
        %1421 = vmatprep.subr.mxu0 0.0
        %1422 = vmatpush1.msra.mxu0 0.0
        %1423 = vmatprep.subr.mxu0 0.0
        %1424 = vmatpush1.msra.mxu0 0.0
        %1425 = vmatprep.subr.mxu0 0.0
        %1426 = vmatpush1.msra.mxu0 0.0
        %1427 = vmatprep.subr.mxu0 0.0
        %1428 = vmatpush1.msra.mxu0 0.0
        %1429 = vmatprep.subr.mxu0 0.0
        %1430 = vmatpush1.msra.mxu0 0.0
        %1431 = vmatprep.subr.mxu0 0.0
        %1432 = vmatpush1.msra.mxu0 0.0
        %1433 = vmatprep.subr.mxu0 0.0
        %1434 = vmatpush1.msra.mxu0 0.0
        %1435 = vmatprep.subr.mxu0 0.0
        %1436 = vmatpush1.msra.mxu0 0.0
        %1437 = vmatprep.subr.mxu0 0.0
        %1438 = vmatpush1.msra.mxu0 0.0
        %1439 = vmatprep.subr.mxu0 0.0
        %1440 = vmatpush1.msra.mxu0 0.0
        %1441 = vmatprep.subr.mxu0 %v1186
        %1442 = vmatpush1.msra.mxu0 %v1183
        %1443 = vmatprep.subr.mxu0 %v735
        %1444 = vmatpush1.msra.mxu0 %v734
        %1445 = vmatprep.subr.mxu0 %v727
        %1446 = vmatpush1.msra.mxu0 %v726
        %1447 = vmatprep.subr.mxu0 %v719
        %1448 = vmatpush1.msra.mxu0 %v718
        %1449 = vmatprep.subr.mxu0 %v711
        %1450 = vmatpush1.msra.mxu0 %v710
        %1451 = vmatprep.subr.mxu0 0.0
        %1452 = vmatpush2.msra.mxu0 0.0
        %1453 = vmatprep.subr.mxu0 0.0
        %1454 = vmatpush2.msra.mxu0 0.0
        %1455 = vmatprep.subr.mxu0 0.0
        %1456 = vmatpush2.msra.mxu0 0.0
        %1457 = vmatprep.subr.mxu0 0.0
        %1458 = vmatpush2.msra.mxu0 0.0
        %1459 = vmatprep.subr.mxu0 0.0
        %1460 = vmatpush2.msra.mxu0 0.0
        %1461 = vmatprep.subr.mxu0 0.0
        %1462 = vmatpush2.msra.mxu0 0.0
        %1463 = vmatprep.subr.mxu0 0.0
        %1464 = vmatpush2.msra.mxu0 0.0
        %1465 = vmatprep.subr.mxu0 0.0
        %1466 = vmatpush2.msra.mxu0 0.0
        %1467 = vmatprep.subr.mxu0 0.0
        %1468 = vmatpush2.msra.mxu0 0.0
        %1469 = vmatprep.subr.mxu0 0.0
        %1470 = vmatpush2.msra.mxu0 0.0
        %1471 = vmatprep.subr.mxu0 0.0
        %1472 = vmatpush2.msra.mxu0 0.0
        %1473 = vmatprep.subr.mxu0 0.0
        %1474 = vmatpush2.msra.mxu0 0.0
        %1475 = vmatprep.subr.mxu0 0.0
        %1476 = vmatpush2.msra.mxu0 0.0
        %1477 = vmatprep.subr.mxu0 0.0
        %1478 = vmatpush2.msra.mxu0 0.0
        %1479 = vmatprep.subr.mxu0 0.0
        %1480 = vmatpush2.msra.mxu0 0.0
        %1481 = vmatprep.subr.mxu0 0.0
        %1482 = vmatpush2.msra.mxu0 0.0
        %1483 = vmatprep.mubr.f32.mxu0 0.0
        %1484 = vmatmul.mubr.f32.gmra.mxu0 %v1158
        %v1485 = vpop.f32.mrf.mxu0
        %v1486 = vadd.f32 %v1147, %v1485
        %v1487 = vpop.f32.mrf.mxu0
        %v1488 = vadd.f32 %v1149, %v1487
        %1489 = vmatprep.mubr.f32.mxu0 0.0
        %1490 = vmatmul.mubr.f32.gmra.mxu0 %v1161
        %v1491 = vpop.f32.mrf.mxu0
        %v1492 = vadd.f32 %v1153, %v1491
        %v1493 = vpop.f32.mrf.mxu0
        %v1494 = vadd.f32 %v1155, %v1493
        %1495 = vdwg.mxu0
        %v1496 = vld [vmem:[%s5] sm:$0xff]
        %v1497 = vld [vmem:[%s5 + $0x8] sm:$0xff]
        %1499 = vset.pattern.permute.xlu0 0
        %1500 = vperm.xlu0 %1499, %v1496
        %v1501 = vpop.permute.xlu0 %1500
        %1504 = vset.pattern.permute.xlu0 0
        %1505 = vperm.xlu0 %1504, %v1497
        %v1506 = vpop.permute.xlu0 %1505
        %v1508 = vadd.f32 %v1255, %v1501
        %v1509 = vadd.f32 %v1257, %v1501
        %v1510 = vadd.f32 %v1332, %v1501
        %v1511 = vadd.f32 %v1334, %v1501
        %v1512 = vadd.f32 %v1409, %v1501
        %v1513 = vadd.f32 %v1411, %v1501
        %v1514 = vadd.f32 %v1486, %v1501
        %v1515 = vadd.f32 %v1488, %v1501
        %v1516 = vadd.f32 %v1261, %v1506
        %v1517 = vadd.f32 %v1263, %v1506
        %v1518 = vadd.f32 %v1338, %v1506
        %v1519 = vadd.f32 %v1340, %v1506
        %v1520 = vadd.f32 %v1415, %v1506
        %v1521 = vadd.f32 %v1417, %v1506
        %v1522 = vadd.f32 %v1492, %v1506
        %v1523 = vadd.f32 %v1494, %v1506
        %v1524 = vmax.f32 %v1508, 0.0
        %v1525 = vmax.f32 %v1509, 0.0
        %v1526 = vmax.f32 %v1510, 0.0
        %v1527 = vmax.f32 %v1511, 0.0
        %v1528 = vmax.f32 %v1512, 0.0
        %v1529 = vmax.f32 %v1513, 0.0
        %v1530 = vmax.f32 %v1514, 0.0
        %v1531 = vmax.f32 %v1515, 0.0
        %v1532 = vmax.f32 %v1516, 0.0
        %v1533 = vmax.f32 %v1517, 0.0
        %v1534 = vmax.f32 %v1518, 0.0
        %v1535 = vmax.f32 %v1519, 0.0
        %v1536 = vmax.f32 %v1520, 0.0
        %v1537 = vmax.f32 %v1521, 0.0
        %v1538 = vmax.f32 %v1522, 0.0
        %v1539 = vmax.f32 %v1523, 0.0
        %v1540 = vld [vmem:[#allocation12] sm:$0xff]
        %v1541 = vld [vmem:[#allocation12 + $0x8] sm:$0xff]
        %v1542 = vld [vmem:[%s7] sm:$0xff]
        %v1543 = vld [vmem:[%s7 + $0x8] sm:$0xff]
        %1545 = vset.pattern.permute.xlu0 0
        %1546 = vperm.xlu0 %1545, %v1542
        %v1547 = vpop.permute.xlu0 %1546
        %1550 = vset.pattern.permute.xlu0 0
        %1551 = vperm.xlu0 %1550, %v1543
        %v1552 = vpop.permute.xlu0 %1551
        %vm1554 = vcmask 130048
        %v1556 = vsel %vm1554, %v1540, 0
        %v1559 = vsel %vm1554, %v1541, 0
        %1561 = vmatprep.subr.mxu0 0.0
        %1562 = vmatpush1.msra.mxu0 0.0
        %1563 = vmatprep.subr.mxu0 0.0
        %1564 = vmatpush1.msra.mxu0 0.0
        %1565 = vmatprep.subr.mxu0 0.0
        %1566 = vmatpush1.msra.mxu0 0.0
        %1567 = vmatprep.subr.mxu0 0.0
        %1568 = vmatpush1.msra.mxu0 0.0
        %1569 = vmatprep.subr.mxu0 0.0
        %1570 = vmatpush1.msra.mxu0 0.0
        %1571 = vmatprep.subr.mxu0 0.0
        %1572 = vmatpush1.msra.mxu0 0.0
        %1573 = vmatprep.subr.mxu0 0.0
        %1574 = vmatpush1.msra.mxu0 0.0
        %1575 = vmatprep.subr.mxu0 0.0
        %1576 = vmatpush1.msra.mxu0 0.0
        %1577 = vmatprep.subr.mxu0 0.0
        %1578 = vmatpush1.msra.mxu0 0.0
        %1579 = vmatprep.subr.mxu0 0.0
        %1580 = vmatpush1.msra.mxu0 0.0
        %1581 = vmatprep.subr.mxu0 0.0
        %1582 = vmatpush1.msra.mxu0 0.0
        %1583 = vmatprep.subr.mxu0 0.0
        %1584 = vmatpush1.msra.mxu0 0.0
        %1585 = vmatprep.subr.mxu0 0.0
        %1586 = vmatpush1.msra.mxu0 0.0
        %1587 = vmatprep.subr.mxu0 0.0
        %1588 = vmatpush1.msra.mxu0 0.0
        %1589 = vmatprep.subr.mxu0 %v1533
        %1590 = vmatpush1.msra.mxu0 %v1532
        %1591 = vmatprep.subr.mxu0 %v1525
        %1592 = vmatpush1.msra.mxu0 %v1524
        %1593 = vmatprep.subr.mxu0 0.0
        %1594 = vmatpush2.msra.mxu0 0.0
        %1595 = vmatprep.subr.mxu0 0.0
        %1596 = vmatpush2.msra.mxu0 0.0
        %1597 = vmatprep.subr.mxu0 0.0
        %1598 = vmatpush2.msra.mxu0 0.0
        %1599 = vmatprep.subr.mxu0 0.0
        %1600 = vmatpush2.msra.mxu0 0.0
        %1601 = vmatprep.subr.mxu0 0.0
        %1602 = vmatpush2.msra.mxu0 0.0
        %1603 = vmatprep.subr.mxu0 0.0
        %1604 = vmatpush2.msra.mxu0 0.0
        %1605 = vmatprep.subr.mxu0 0.0
        %1606 = vmatpush2.msra.mxu0 0.0
        %1607 = vmatprep.subr.mxu0 0.0
        %1608 = vmatpush2.msra.mxu0 0.0
        %1609 = vmatprep.subr.mxu0 0.0
        %1610 = vmatpush2.msra.mxu0 0.0
        %1611 = vmatprep.subr.mxu0 0.0
        %1612 = vmatpush2.msra.mxu0 0.0
        %1613 = vmatprep.subr.mxu0 0.0
        %1614 = vmatpush2.msra.mxu0 0.0
        %1615 = vmatprep.subr.mxu0 0.0
        %1616 = vmatpush2.msra.mxu0 0.0
        %1617 = vmatprep.subr.mxu0 0.0
        %1618 = vmatpush2.msra.mxu0 0.0
        %1619 = vmatprep.subr.mxu0 0.0
        %1620 = vmatpush2.msra.mxu0 0.0
        %1621 = vmatprep.subr.mxu0 0.0
        %1622 = vmatpush2.msra.mxu0 0.0
        %1623 = vmatprep.subr.mxu0 0.0
        %1624 = vmatpush2.msra.mxu0 0.0
        %1625 = vmatprep.mubr.f32.mxu0 0.0
        %1626 = vmatmul.mubr.f32.gmra.mxu0 %v1556
        %v1627 = vpop.f32.mrf.mxu0
        %v1628 = vadd.f32 %v1547, %v1627
        %v1629 = vpop.f32.mrf.mxu0
        %v1630 = vadd.f32 %v1547, %v1629
        %1631 = vmatprep.mubr.f32.mxu0 0.0
        %1632 = vmatmul.mubr.f32.gmra.mxu0 %v1559
        %v1633 = vpop.f32.mrf.mxu0
        %v1634 = vadd.f32 %v1552, %v1633
        %v1635 = vpop.f32.mrf.mxu0
        %v1636 = vadd.f32 %v1552, %v1635
        %1637 = vdwg.mxu0
        %1638 = vmatprep.subr.mxu0 0.0
        %1639 = vmatpush1.msra.mxu0 0.0
        %1640 = vmatprep.subr.mxu0 0.0
        %1641 = vmatpush1.msra.mxu0 0.0
        %1642 = vmatprep.subr.mxu0 0.0
        %1643 = vmatpush1.msra.mxu0 0.0
        %1644 = vmatprep.subr.mxu0 0.0
        %1645 = vmatpush1.msra.mxu0 0.0
        %1646 = vmatprep.subr.mxu0 0.0
        %1647 = vmatpush1.msra.mxu0 0.0
        %1648 = vmatprep.subr.mxu0 0.0
        %1649 = vmatpush1.msra.mxu0 0.0
        %1650 = vmatprep.subr.mxu0 0.0
        %1651 = vmatpush1.msra.mxu0 0.0
        %1652 = vmatprep.subr.mxu0 0.0
        %1653 = vmatpush1.msra.mxu0 0.0
        %1654 = vmatprep.subr.mxu0 0.0
        %1655 = vmatpush1.msra.mxu0 0.0
        %1656 = vmatprep.subr.mxu0 0.0
        %1657 = vmatpush1.msra.mxu0 0.0
        %1658 = vmatprep.subr.mxu0 0.0
        %1659 = vmatpush1.msra.mxu0 0.0
        %1660 = vmatprep.subr.mxu0 0.0
        %1661 = vmatpush1.msra.mxu0 0.0
        %1662 = vmatprep.subr.mxu0 0.0
        %1663 = vmatpush1.msra.mxu0 0.0
        %1664 = vmatprep.subr.mxu0 0.0
        %1665 = vmatpush1.msra.mxu0 0.0
        %1666 = vmatprep.subr.mxu0 %v1535
        %1667 = vmatpush1.msra.mxu0 %v1534
        %1668 = vmatprep.subr.mxu0 %v1527
        %1669 = vmatpush1.msra.mxu0 %v1526
        %1670 = vmatprep.subr.mxu0 0.0
        %1671 = vmatpush2.msra.mxu0 0.0
        %1672 = vmatprep.subr.mxu0 0.0
        %1673 = vmatpush2.msra.mxu0 0.0
        %1674 = vmatprep.subr.mxu0 0.0
        %1675 = vmatpush2.msra.mxu0 0.0
        %1676 = vmatprep.subr.mxu0 0.0
        %1677 = vmatpush2.msra.mxu0 0.0
        %1678 = vmatprep.subr.mxu0 0.0
        %1679 = vmatpush2.msra.mxu0 0.0
        %1680 = vmatprep.subr.mxu0 0.0
        %1681 = vmatpush2.msra.mxu0 0.0
        %1682 = vmatprep.subr.mxu0 0.0
        %1683 = vmatpush2.msra.mxu0 0.0
        %1684 = vmatprep.subr.mxu0 0.0
        %1685 = vmatpush2.msra.mxu0 0.0
        %1686 = vmatprep.subr.mxu0 0.0
        %1687 = vmatpush2.msra.mxu0 0.0
        %1688 = vmatprep.subr.mxu0 0.0
        %1689 = vmatpush2.msra.mxu0 0.0
        %1690 = vmatprep.subr.mxu0 0.0
        %1691 = vmatpush2.msra.mxu0 0.0
        %1692 = vmatprep.subr.mxu0 0.0
        %1693 = vmatpush2.msra.mxu0 0.0
        %1694 = vmatprep.subr.mxu0 0.0
        %1695 = vmatpush2.msra.mxu0 0.0
        %1696 = vmatprep.subr.mxu0 0.0
        %1697 = vmatpush2.msra.mxu0 0.0
        %1698 = vmatprep.subr.mxu0 0.0
        %1699 = vmatpush2.msra.mxu0 0.0
        %1700 = vmatprep.subr.mxu0 0.0
        %1701 = vmatpush2.msra.mxu0 0.0
        %1702 = vmatprep.mubr.f32.mxu0 0.0
        %1703 = vmatmul.mubr.f32.gmra.mxu0 %v1556
        %v1704 = vpop.f32.mrf.mxu0
        %v1705 = vadd.f32 %v1547, %v1704
        %v1706 = vpop.f32.mrf.mxu0
        %v1707 = vadd.f32 %v1547, %v1706
        %1708 = vmatprep.mubr.f32.mxu0 0.0
        %1709 = vmatmul.mubr.f32.gmra.mxu0 %v1559
        %v1710 = vpop.f32.mrf.mxu0
        %v1711 = vadd.f32 %v1552, %v1710
        %v1712 = vpop.f32.mrf.mxu0
        %v1713 = vadd.f32 %v1552, %v1712
        %1714 = vdwg.mxu0
        %1715 = vmatprep.subr.mxu0 0.0
        %1716 = vmatpush1.msra.mxu0 0.0
        %1717 = vmatprep.subr.mxu0 0.0
        %1718 = vmatpush1.msra.mxu0 0.0
        %1719 = vmatprep.subr.mxu0 0.0
        %1720 = vmatpush1.msra.mxu0 0.0
        %1721 = vmatprep.subr.mxu0 0.0
        %1722 = vmatpush1.msra.mxu0 0.0
        %1723 = vmatprep.subr.mxu0 0.0
        %1724 = vmatpush1.msra.mxu0 0.0
        %1725 = vmatprep.subr.mxu0 0.0
        %1726 = vmatpush1.msra.mxu0 0.0
        %1727 = vmatprep.subr.mxu0 0.0
        %1728 = vmatpush1.msra.mxu0 0.0
        %1729 = vmatprep.subr.mxu0 0.0
        %1730 = vmatpush1.msra.mxu0 0.0
        %1731 = vmatprep.subr.mxu0 0.0
        %1732 = vmatpush1.msra.mxu0 0.0
        %1733 = vmatprep.subr.mxu0 0.0
        %1734 = vmatpush1.msra.mxu0 0.0
        %1735 = vmatprep.subr.mxu0 0.0
        %1736 = vmatpush1.msra.mxu0 0.0
        %1737 = vmatprep.subr.mxu0 0.0
        %1738 = vmatpush1.msra.mxu0 0.0
        %1739 = vmatprep.subr.mxu0 0.0
        %1740 = vmatpush1.msra.mxu0 0.0
        %1741 = vmatprep.subr.mxu0 0.0
        %1742 = vmatpush1.msra.mxu0 0.0
        %1743 = vmatprep.subr.mxu0 %v1537
        %1744 = vmatpush1.msra.mxu0 %v1536
        %1745 = vmatprep.subr.mxu0 %v1529
        %1746 = vmatpush1.msra.mxu0 %v1528
        %1747 = vmatprep.subr.mxu0 0.0
        %1748 = vmatpush2.msra.mxu0 0.0
        %1749 = vmatprep.subr.mxu0 0.0
        %1750 = vmatpush2.msra.mxu0 0.0
        %1751 = vmatprep.subr.mxu0 0.0
        %1752 = vmatpush2.msra.mxu0 0.0
        %1753 = vmatprep.subr.mxu0 0.0
        %1754 = vmatpush2.msra.mxu0 0.0
        %1755 = vmatprep.subr.mxu0 0.0
        %1756 = vmatpush2.msra.mxu0 0.0
        %1757 = vmatprep.subr.mxu0 0.0
        %1758 = vmatpush2.msra.mxu0 0.0
        %1759 = vmatprep.subr.mxu0 0.0
        %1760 = vmatpush2.msra.mxu0 0.0
        %1761 = vmatprep.subr.mxu0 0.0
        %1762 = vmatpush2.msra.mxu0 0.0
        %1763 = vmatprep.subr.mxu0 0.0
        %1764 = vmatpush2.msra.mxu0 0.0
        %1765 = vmatprep.subr.mxu0 0.0
        %1766 = vmatpush2.msra.mxu0 0.0
        %1767 = vmatprep.subr.mxu0 0.0
        %1768 = vmatpush2.msra.mxu0 0.0
        %1769 = vmatprep.subr.mxu0 0.0
        %1770 = vmatpush2.msra.mxu0 0.0
        %1771 = vmatprep.subr.mxu0 0.0
        %1772 = vmatpush2.msra.mxu0 0.0
        %1773 = vmatprep.subr.mxu0 0.0
        %1774 = vmatpush2.msra.mxu0 0.0
        %1775 = vmatprep.subr.mxu0 0.0
        %1776 = vmatpush2.msra.mxu0 0.0
        %1777 = vmatprep.subr.mxu0 0.0
        %1778 = vmatpush2.msra.mxu0 0.0
        %1779 = vmatprep.mubr.f32.mxu0 0.0
        %1780 = vmatmul.mubr.f32.gmra.mxu0 %v1556
        %v1781 = vpop.f32.mrf.mxu0
        %v1782 = vadd.f32 %v1547, %v1781
        %v1783 = vpop.f32.mrf.mxu0
        %v1784 = vadd.f32 %v1547, %v1783
        %1785 = vmatprep.mubr.f32.mxu0 0.0
        %1786 = vmatmul.mubr.f32.gmra.mxu0 %v1559
        %v1787 = vpop.f32.mrf.mxu0
        %v1788 = vadd.f32 %v1552, %v1787
        %v1789 = vpop.f32.mrf.mxu0
        %v1790 = vadd.f32 %v1552, %v1789
        %1791 = vdwg.mxu0
        %1792 = vmatprep.subr.mxu0 0.0
        %1793 = vmatpush1.msra.mxu0 0.0
        %1794 = vmatprep.subr.mxu0 0.0
        %1795 = vmatpush1.msra.mxu0 0.0
        %1796 = vmatprep.subr.mxu0 0.0
        %1797 = vmatpush1.msra.mxu0 0.0
        %1798 = vmatprep.subr.mxu0 0.0
        %1799 = vmatpush1.msra.mxu0 0.0
        %1800 = vmatprep.subr.mxu0 0.0
        %1801 = vmatpush1.msra.mxu0 0.0
        %1802 = vmatprep.subr.mxu0 0.0
        %1803 = vmatpush1.msra.mxu0 0.0
        %1804 = vmatprep.subr.mxu0 0.0
        %1805 = vmatpush1.msra.mxu0 0.0
        %1806 = vmatprep.subr.mxu0 0.0
        %1807 = vmatpush1.msra.mxu0 0.0
        %1808 = vmatprep.subr.mxu0 0.0
        %1809 = vmatpush1.msra.mxu0 0.0
        %1810 = vmatprep.subr.mxu0 0.0
        %1811 = vmatpush1.msra.mxu0 0.0
        %1812 = vmatprep.subr.mxu0 0.0
        %1813 = vmatpush1.msra.mxu0 0.0
        %1814 = vmatprep.subr.mxu0 0.0
        %1815 = vmatpush1.msra.mxu0 0.0
        %1816 = vmatprep.subr.mxu0 0.0
        %1817 = vmatpush1.msra.mxu0 0.0
        %1818 = vmatprep.subr.mxu0 0.0
        %1819 = vmatpush1.msra.mxu0 0.0
        %1820 = vmatprep.subr.mxu0 %v1539
        %1821 = vmatpush1.msra.mxu0 %v1538
        %1822 = vmatprep.subr.mxu0 %v1531
        %1823 = vmatpush1.msra.mxu0 %v1530
        %1824 = vmatprep.subr.mxu0 0.0
        %1825 = vmatpush2.msra.mxu0 0.0
        %1826 = vmatprep.subr.mxu0 0.0
        %1827 = vmatpush2.msra.mxu0 0.0
        %1828 = vmatprep.subr.mxu0 0.0
        %1829 = vmatpush2.msra.mxu0 0.0
        %1830 = vmatprep.subr.mxu0 0.0
        %1831 = vmatpush2.msra.mxu0 0.0
        %1832 = vmatprep.subr.mxu0 0.0
        %1833 = vmatpush2.msra.mxu0 0.0
        %1834 = vmatprep.subr.mxu0 0.0
        %1835 = vmatpush2.msra.mxu0 0.0
        %1836 = vmatprep.subr.mxu0 0.0
        %1837 = vmatpush2.msra.mxu0 0.0
        %1838 = vmatprep.subr.mxu0 0.0
        %1839 = vmatpush2.msra.mxu0 0.0
        %1840 = vmatprep.subr.mxu0 0.0
        %1841 = vmatpush2.msra.mxu0 0.0
        %1842 = vmatprep.subr.mxu0 0.0
        %1843 = vmatpush2.msra.mxu0 0.0
        %1844 = vmatprep.subr.mxu0 0.0
        %1845 = vmatpush2.msra.mxu0 0.0
        %1846 = vmatprep.subr.mxu0 0.0
        %1847 = vmatpush2.msra.mxu0 0.0
        %1848 = vmatprep.subr.mxu0 0.0
        %1849 = vmatpush2.msra.mxu0 0.0
        %1850 = vmatprep.subr.mxu0 0.0
        %1851 = vmatpush2.msra.mxu0 0.0
        %1852 = vmatprep.subr.mxu0 0.0
        %1853 = vmatpush2.msra.mxu0 0.0
        %1854 = vmatprep.subr.mxu0 0.0
        %1855 = vmatpush2.msra.mxu0 0.0
        %1856 = vmatprep.mubr.f32.mxu0 0.0
        %1857 = vmatmul.mubr.f32.gmra.mxu0 %v1556
        %v1858 = vpop.f32.mrf.mxu0
        %v1859 = vadd.f32 %v1547, %v1858
        %v1860 = vpop.f32.mrf.mxu0
        %v1861 = vadd.f32 %v1547, %v1860
        %1862 = vmatprep.mubr.f32.mxu0 0.0
        %1863 = vmatmul.mubr.f32.gmra.mxu0 %v1559
        %v1864 = vpop.f32.mrf.mxu0
        %v1865 = vadd.f32 %v1552, %v1864
        %v1866 = vpop.f32.mrf.mxu0
        %v1867 = vadd.f32 %v1552, %v1866
        %1868 = vdwg.mxu0
        %v1869 = vmax.f32 %v1628, 0.0
        %v1870 = vmax.f32 %v1630, 0.0
        %v1871 = vmax.f32 %v1705, 0.0
        %v1872 = vmax.f32 %v1707, 0.0
        %v1873 = vmax.f32 %v1782, 0.0
        %v1874 = vmax.f32 %v1784, 0.0
        %v1875 = vmax.f32 %v1859, 0.0
        %v1876 = vmax.f32 %v1861, 0.0
        %v1877 = vmax.f32 %v1634, 0.0
        %v1878 = vmax.f32 %v1636, 0.0
        %v1879 = vmax.f32 %v1711, 0.0
        %v1880 = vmax.f32 %v1713, 0.0
        %v1881 = vmax.f32 %v1788, 0.0
        %v1882 = vmax.f32 %v1790, 0.0
        %v1883 = vmax.f32 %v1865, 0.0
        %v1884 = vmax.f32 %v1867, 0.0
        %1885 = vst [vmem:[#allocation2] sm:$0xff] %v1869
        %1886 = vst [vmem:[#allocation2 + $0x8] sm:$0xff] %v1870
        %1887 = vst [vmem:[#allocation2 + $0x10] sm:$0xff] %v1871
        %1888 = vst [vmem:[#allocation2 + $0x18] sm:$0xff] %v1872
        %1889 = vst [vmem:[#allocation2 + $0x20] sm:$0xff] %v1873
        %1890 = vst [vmem:[#allocation2 + $0x28] sm:$0xff] %v1874
        %1891 = vst [vmem:[#allocation2 + $0x30] sm:$0xff] %v1875
        %1892 = vst [vmem:[#allocation2 + $0x38] sm:$0xff] %v1876
        %1893 = vst [vmem:[#allocation2 + $0x48] sm:$0xff] %v1877
        %1894 = vst [vmem:[#allocation2 + $0x50] sm:$0xff] %v1878
        %1895 = vst [vmem:[#allocation2 + $0x58] sm:$0xff] %v1879
        %1896 = vst [vmem:[#allocation2 + $0x60] sm:$0xff] %v1880
        %1897 = vst [vmem:[#allocation2 + $0x68] sm:$0xff] %v1881
        %1898 = vst [vmem:[#allocation2 + $0x70] sm:$0xff] %v1882
        %1899 = vst [vmem:[#allocation2 + $0x78] sm:$0xff] %v1883
        %1900 = vst [vmem:[#allocation2 + $0x80] sm:$0xff] %v1884
        %1901 = vst [vmem:[#allocation2 + $0x40] sm:$0xff] 0.0
        %1902 = vst [vmem:[#allocation2 + $0x88] sm:$0xff] 0.0
        %v1903 = vld [vmem:[%s9] sm:$0xff]
        %v1904 = vld [vmem:[%s9 + $0x8] sm:$0xff]
        %v1905 = vld [vmem:[%s8] sm:$0xff]
        %v1906 = vld [vmem:[%s8 + $0x8] sm:$0xff]
        %v1907 = vld [vmem:[#allocation2] sm:$0xff]
        %v1908 = vld [vmem:[#allocation2 + $0x8] sm:$0xff]
        %v1909 = vld [vmem:[#allocation2 + $0x10] sm:$0xff]
        %v1910 = vld [vmem:[#allocation2 + $0x18] sm:$0xff]
        %v1911 = vld [vmem:[#allocation2 + $0x20] sm:$0xff]
        %v1912 = vld [vmem:[#allocation2 + $0x28] sm:$0xff]
        %v1913 = vld [vmem:[#allocation2 + $0x30] sm:$0xff]
        %v1914 = vld [vmem:[#allocation2 + $0x38] sm:$0xff]
        %v1915 = vld [vmem:[#allocation2 + $0x40] sm:$0xff]
        %v1916 = vld [vmem:[#allocation2 + $0x48] sm:$0xff]
        %v1917 = vld [vmem:[#allocation2 + $0x50] sm:$0xff]
        %v1918 = vld [vmem:[#allocation2 + $0x58] sm:$0xff]
        %v1919 = vld [vmem:[#allocation2 + $0x60] sm:$0xff]
        %v1920 = vld [vmem:[#allocation2 + $0x68] sm:$0xff]
        %v1921 = vld [vmem:[#allocation2 + $0x70] sm:$0xff]
        %v1922 = vld [vmem:[#allocation2 + $0x78] sm:$0xff]
        %v1923 = vld [vmem:[#allocation2 + $0x80] sm:$0xff]
        %v1924 = vld [vmem:[#allocation2 + $0x88] sm:$0xff]
        %1943 = vrot.lane.b32.xlu0 %v1907, 127
        %v1944 = vpop.permute.xlu0 %1943
        %1945 = vrot.lane.b32.xlu0 %v1908, 127
        %v1946 = vpop.permute.xlu0 %1945
        %1947 = vrot.lane.b32.xlu0 %v1909, 127
        %v1948 = vpop.permute.xlu0 %1947
        %1949 = vrot.lane.b32.xlu0 %v1910, 127
        %v1950 = vpop.permute.xlu0 %1949
        %1951 = vrot.lane.b32.xlu0 %v1911, 127
        %v1952 = vpop.permute.xlu0 %1951
        %1953 = vrot.lane.b32.xlu0 %v1912, 127
        %v1954 = vpop.permute.xlu0 %1953
        %1955 = vrot.lane.b32.xlu0 %v1913, 127
        %v1956 = vpop.permute.xlu0 %1955
        %1957 = vrot.lane.b32.xlu0 %v1914, 127
        %v1958 = vpop.permute.xlu0 %1957
        %1959 = vrot.lane.b32.xlu0 %v1915, 127
        %v1960 = vpop.permute.xlu0 %1959
        %1961 = vrot.lane.b32.xlu0 %v1916, 127
        %v1962 = vpop.permute.xlu0 %1961
        %1963 = vrot.lane.b32.xlu0 %v1917, 127
        %v1964 = vpop.permute.xlu0 %1963
        %1965 = vrot.lane.b32.xlu0 %v1918, 127
        %v1966 = vpop.permute.xlu0 %1965
        %1967 = vrot.lane.b32.xlu0 %v1919, 127
        %v1968 = vpop.permute.xlu0 %1967
        %1969 = vrot.lane.b32.xlu0 %v1920, 127
        %v1970 = vpop.permute.xlu0 %1969
        %1971 = vrot.lane.b32.xlu0 %v1921, 127
        %v1972 = vpop.permute.xlu0 %1971
        %1973 = vrot.lane.b32.xlu0 %v1922, 127
        %v1974 = vpop.permute.xlu0 %1973
        %1975 = vrot.lane.b32.xlu0 %v1923, 127
        %v1976 = vpop.permute.xlu0 %1975
        %1977 = vrot.lane.b32.xlu0 %v1924, 127
        %v1978 = vpop.permute.xlu0 %1977
        %vm1979 = vcmask 1039360
        %v1980 = vsel %vm1979, %v1944, %v1946
        %v1981 = vsel %vm1979, %v1946, %v1948
        %v1982 = vsel %vm1979, %v1948, %v1950
        %v1983 = vsel %vm1979, %v1950, %v1952
        %v1984 = vsel %vm1979, %v1952, %v1954
        %v1985 = vsel %vm1979, %v1954, %v1956
        %v1986 = vsel %vm1979, %v1956, %v1958
        %v1987 = vsel %vm1979, %v1958, %v1960
        %v1988 = vsel %vm1979, %v1962, %v1964
        %v1989 = vsel %vm1979, %v1964, %v1966
        %v1990 = vsel %vm1979, %v1966, %v1968
        %v1991 = vsel %vm1979, %v1968, %v1970
        %v1992 = vsel %vm1979, %v1970, %v1972
        %v1993 = vsel %vm1979, %v1972, %v1974
        %v1994 = vsel %vm1979, %v1974, %v1976
        %v1995 = vsel %vm1979, %v1976, %v1978
        %v2013 = vsel %vm1554, %v1905, 0
        %v2016 = vsel %vm1554, %v1906, 0
        %2018 = vmatprep.subr.mxu0 0.0
        %2019 = vmatpush1.msra.mxu0 0.0
        %2020 = vmatprep.subr.mxu0 0.0
        %2021 = vmatpush1.msra.mxu0 0.0
        %2022 = vmatprep.subr.mxu0 0.0
        %2023 = vmatpush1.msra.mxu0 0.0
        %2024 = vmatprep.subr.mxu0 0.0
        %2025 = vmatpush1.msra.mxu0 0.0
        %2026 = vmatprep.subr.mxu0 0.0
        %2027 = vmatpush1.msra.mxu0 0.0
        %2028 = vmatprep.subr.mxu0 0.0
        %2029 = vmatpush1.msra.mxu0 0.0
        %2030 = vmatprep.subr.mxu0 0.0
        %2031 = vmatpush1.msra.mxu0 0.0
        %2032 = vmatprep.subr.mxu0 0.0
        %2033 = vmatpush1.msra.mxu0 0.0
        %2034 = vmatprep.subr.mxu0 0.0
        %2035 = vmatpush1.msra.mxu0 0.0
        %2036 = vmatprep.subr.mxu0 0.0
        %2037 = vmatpush1.msra.mxu0 0.0
        %2038 = vmatprep.subr.mxu0 0.0
        %2039 = vmatpush1.msra.mxu0 0.0
        %2040 = vmatprep.subr.mxu0 0.0
        %2041 = vmatpush1.msra.mxu0 0.0
        %2042 = vmatprep.subr.mxu0 0.0
        %2043 = vmatpush1.msra.mxu0 0.0
        %2044 = vmatprep.subr.mxu0 0.0
        %2045 = vmatpush1.msra.mxu0 0.0
        %2046 = vmatprep.subr.mxu0 %v1989
        %2047 = vmatpush1.msra.mxu0 %v1988
        %2048 = vmatprep.subr.mxu0 %v1981
        %2049 = vmatpush1.msra.mxu0 %v1980
        %2050 = vmatprep.subr.mxu0 0.0
        %2051 = vmatpush2.msra.mxu0 0.0
        %2052 = vmatprep.subr.mxu0 0.0
        %2053 = vmatpush2.msra.mxu0 0.0
        %2054 = vmatprep.subr.mxu0 0.0
        %2055 = vmatpush2.msra.mxu0 0.0
        %2056 = vmatprep.subr.mxu0 0.0
        %2057 = vmatpush2.msra.mxu0 0.0
        %2058 = vmatprep.subr.mxu0 0.0
        %2059 = vmatpush2.msra.mxu0 0.0
        %2060 = vmatprep.subr.mxu0 0.0
        %2061 = vmatpush2.msra.mxu0 0.0
        %2062 = vmatprep.subr.mxu0 0.0
        %2063 = vmatpush2.msra.mxu0 0.0
        %2064 = vmatprep.subr.mxu0 0.0
        %2065 = vmatpush2.msra.mxu0 0.0
        %2066 = vmatprep.subr.mxu0 0.0
        %2067 = vmatpush2.msra.mxu0 0.0
        %2068 = vmatprep.subr.mxu0 0.0
        %2069 = vmatpush2.msra.mxu0 0.0
        %2070 = vmatprep.subr.mxu0 0.0
        %2071 = vmatpush2.msra.mxu0 0.0
        %2072 = vmatprep.subr.mxu0 0.0
        %2073 = vmatpush2.msra.mxu0 0.0
        %2074 = vmatprep.subr.mxu0 0.0
        %2075 = vmatpush2.msra.mxu0 0.0
        %2076 = vmatprep.subr.mxu0 0.0
        %2077 = vmatpush2.msra.mxu0 0.0
        %2078 = vmatprep.subr.mxu0 0.0
        %2079 = vmatpush2.msra.mxu0 0.0
        %2080 = vmatprep.subr.mxu0 0.0
        %2081 = vmatpush2.msra.mxu0 0.0
        %2082 = vmatprep.mubr.f32.mxu0 0.0
        %2083 = vmatmul.mubr.f32.gmra.mxu0 %v2013
        %v2084 = vpop.f32.mrf.mxu0
        %v2085 = vadd.f32 0.0, %v2084
        %v2086 = vpop.f32.mrf.mxu0
        %v2087 = vadd.f32 0.0, %v2086
        %2088 = vmatprep.mubr.f32.mxu0 0.0
        %2089 = vmatmul.mubr.f32.gmra.mxu0 %v2016
        %v2090 = vpop.f32.mrf.mxu0
        %v2091 = vadd.f32 0.0, %v2090
        %v2092 = vpop.f32.mrf.mxu0
        %v2093 = vadd.f32 0.0, %v2092
        %2094 = vdwg.mxu0
        %2095 = vmatprep.subr.mxu0 0.0
        %2096 = vmatpush1.msra.mxu0 0.0
        %2097 = vmatprep.subr.mxu0 0.0
        %2098 = vmatpush1.msra.mxu0 0.0
        %2099 = vmatprep.subr.mxu0 0.0
        %2100 = vmatpush1.msra.mxu0 0.0
        %2101 = vmatprep.subr.mxu0 0.0
        %2102 = vmatpush1.msra.mxu0 0.0
        %2103 = vmatprep.subr.mxu0 0.0
        %2104 = vmatpush1.msra.mxu0 0.0
        %2105 = vmatprep.subr.mxu0 0.0
        %2106 = vmatpush1.msra.mxu0 0.0
        %2107 = vmatprep.subr.mxu0 0.0
        %2108 = vmatpush1.msra.mxu0 0.0
        %2109 = vmatprep.subr.mxu0 0.0
        %2110 = vmatpush1.msra.mxu0 0.0
        %2111 = vmatprep.subr.mxu0 0.0
        %2112 = vmatpush1.msra.mxu0 0.0
        %2113 = vmatprep.subr.mxu0 0.0
        %2114 = vmatpush1.msra.mxu0 0.0
        %2115 = vmatprep.subr.mxu0 0.0
        %2116 = vmatpush1.msra.mxu0 0.0
        %2117 = vmatprep.subr.mxu0 0.0
        %2118 = vmatpush1.msra.mxu0 0.0
        %2119 = vmatprep.subr.mxu0 0.0
        %2120 = vmatpush1.msra.mxu0 0.0
        %2121 = vmatprep.subr.mxu0 0.0
        %2122 = vmatpush1.msra.mxu0 0.0
        %2123 = vmatprep.subr.mxu0 %v1991
        %2124 = vmatpush1.msra.mxu0 %v1990
        %2125 = vmatprep.subr.mxu0 %v1983
        %2126 = vmatpush1.msra.mxu0 %v1982
        %2127 = vmatprep.subr.mxu0 0.0
        %2128 = vmatpush2.msra.mxu0 0.0
        %2129 = vmatprep.subr.mxu0 0.0
        %2130 = vmatpush2.msra.mxu0 0.0
        %2131 = vmatprep.subr.mxu0 0.0
        %2132 = vmatpush2.msra.mxu0 0.0
        %2133 = vmatprep.subr.mxu0 0.0
        %2134 = vmatpush2.msra.mxu0 0.0
        %2135 = vmatprep.subr.mxu0 0.0
        %2136 = vmatpush2.msra.mxu0 0.0
        %2137 = vmatprep.subr.mxu0 0.0
        %2138 = vmatpush2.msra.mxu0 0.0
        %2139 = vmatprep.subr.mxu0 0.0
        %2140 = vmatpush2.msra.mxu0 0.0
        %2141 = vmatprep.subr.mxu0 0.0
        %2142 = vmatpush2.msra.mxu0 0.0
        %2143 = vmatprep.subr.mxu0 0.0
        %2144 = vmatpush2.msra.mxu0 0.0
        %2145 = vmatprep.subr.mxu0 0.0
        %2146 = vmatpush2.msra.mxu0 0.0
        %2147 = vmatprep.subr.mxu0 0.0
        %2148 = vmatpush2.msra.mxu0 0.0
        %2149 = vmatprep.subr.mxu0 0.0
        %2150 = vmatpush2.msra.mxu0 0.0
        %2151 = vmatprep.subr.mxu0 0.0
        %2152 = vmatpush2.msra.mxu0 0.0
        %2153 = vmatprep.subr.mxu0 0.0
        %2154 = vmatpush2.msra.mxu0 0.0
        %2155 = vmatprep.subr.mxu0 0.0
        %2156 = vmatpush2.msra.mxu0 0.0
        %2157 = vmatprep.subr.mxu0 0.0
        %2158 = vmatpush2.msra.mxu0 0.0
        %2159 = vmatprep.mubr.f32.mxu0 0.0
        %2160 = vmatmul.mubr.f32.gmra.mxu0 %v2013
        %v2161 = vpop.f32.mrf.mxu0
        %v2162 = vadd.f32 0.0, %v2161
        %v2163 = vpop.f32.mrf.mxu0
        %v2164 = vadd.f32 0.0, %v2163
        %2165 = vmatprep.mubr.f32.mxu0 0.0
        %2166 = vmatmul.mubr.f32.gmra.mxu0 %v2016
        %v2167 = vpop.f32.mrf.mxu0
        %v2168 = vadd.f32 0.0, %v2167
        %v2169 = vpop.f32.mrf.mxu0
        %v2170 = vadd.f32 0.0, %v2169
        %2171 = vdwg.mxu0
        %2172 = vmatprep.subr.mxu0 0.0
        %2173 = vmatpush1.msra.mxu0 0.0
        %2174 = vmatprep.subr.mxu0 0.0
        %2175 = vmatpush1.msra.mxu0 0.0
        %2176 = vmatprep.subr.mxu0 0.0
        %2177 = vmatpush1.msra.mxu0 0.0
        %2178 = vmatprep.subr.mxu0 0.0
        %2179 = vmatpush1.msra.mxu0 0.0
        %2180 = vmatprep.subr.mxu0 0.0
        %2181 = vmatpush1.msra.mxu0 0.0
        %2182 = vmatprep.subr.mxu0 0.0
        %2183 = vmatpush1.msra.mxu0 0.0
        %2184 = vmatprep.subr.mxu0 0.0
        %2185 = vmatpush1.msra.mxu0 0.0
        %2186 = vmatprep.subr.mxu0 0.0
        %2187 = vmatpush1.msra.mxu0 0.0
        %2188 = vmatprep.subr.mxu0 0.0
        %2189 = vmatpush1.msra.mxu0 0.0
        %2190 = vmatprep.subr.mxu0 0.0
        %2191 = vmatpush1.msra.mxu0 0.0
        %2192 = vmatprep.subr.mxu0 0.0
        %2193 = vmatpush1.msra.mxu0 0.0
        %2194 = vmatprep.subr.mxu0 0.0
        %2195 = vmatpush1.msra.mxu0 0.0
        %2196 = vmatprep.subr.mxu0 0.0
        %2197 = vmatpush1.msra.mxu0 0.0
        %2198 = vmatprep.subr.mxu0 0.0
        %2199 = vmatpush1.msra.mxu0 0.0
        %2200 = vmatprep.subr.mxu0 %v1993
        %2201 = vmatpush1.msra.mxu0 %v1992
        %2202 = vmatprep.subr.mxu0 %v1985
        %2203 = vmatpush1.msra.mxu0 %v1984
        %2204 = vmatprep.subr.mxu0 0.0
        %2205 = vmatpush2.msra.mxu0 0.0
        %2206 = vmatprep.subr.mxu0 0.0
        %2207 = vmatpush2.msra.mxu0 0.0
        %2208 = vmatprep.subr.mxu0 0.0
        %2209 = vmatpush2.msra.mxu0 0.0
        %2210 = vmatprep.subr.mxu0 0.0
        %2211 = vmatpush2.msra.mxu0 0.0
        %2212 = vmatprep.subr.mxu0 0.0
        %2213 = vmatpush2.msra.mxu0 0.0
        %2214 = vmatprep.subr.mxu0 0.0
        %2215 = vmatpush2.msra.mxu0 0.0
        %2216 = vmatprep.subr.mxu0 0.0
        %2217 = vmatpush2.msra.mxu0 0.0
        %2218 = vmatprep.subr.mxu0 0.0
        %2219 = vmatpush2.msra.mxu0 0.0
        %2220 = vmatprep.subr.mxu0 0.0
        %2221 = vmatpush2.msra.mxu0 0.0
        %2222 = vmatprep.subr.mxu0 0.0
        %2223 = vmatpush2.msra.mxu0 0.0
        %2224 = vmatprep.subr.mxu0 0.0
        %2225 = vmatpush2.msra.mxu0 0.0
        %2226 = vmatprep.subr.mxu0 0.0
        %2227 = vmatpush2.msra.mxu0 0.0
        %2228 = vmatprep.subr.mxu0 0.0
        %2229 = vmatpush2.msra.mxu0 0.0
        %2230 = vmatprep.subr.mxu0 0.0
        %2231 = vmatpush2.msra.mxu0 0.0
        %2232 = vmatprep.subr.mxu0 0.0
        %2233 = vmatpush2.msra.mxu0 0.0
        %2234 = vmatprep.subr.mxu0 0.0
        %2235 = vmatpush2.msra.mxu0 0.0
        %2236 = vmatprep.mubr.f32.mxu0 0.0
        %2237 = vmatmul.mubr.f32.gmra.mxu0 %v2013
        %v2238 = vpop.f32.mrf.mxu0
        %v2239 = vadd.f32 0.0, %v2238
        %v2240 = vpop.f32.mrf.mxu0
        %v2241 = vadd.f32 0.0, %v2240
        %2242 = vmatprep.mubr.f32.mxu0 0.0
        %2243 = vmatmul.mubr.f32.gmra.mxu0 %v2016
        %v2244 = vpop.f32.mrf.mxu0
        %v2245 = vadd.f32 0.0, %v2244
        %v2246 = vpop.f32.mrf.mxu0
        %v2247 = vadd.f32 0.0, %v2246
        %2248 = vdwg.mxu0
        %2249 = vmatprep.subr.mxu0 0.0
        %2250 = vmatpush1.msra.mxu0 0.0
        %2251 = vmatprep.subr.mxu0 0.0
        %2252 = vmatpush1.msra.mxu0 0.0
        %2253 = vmatprep.subr.mxu0 0.0
        %2254 = vmatpush1.msra.mxu0 0.0
        %2255 = vmatprep.subr.mxu0 0.0
        %2256 = vmatpush1.msra.mxu0 0.0
        %2257 = vmatprep.subr.mxu0 0.0
        %2258 = vmatpush1.msra.mxu0 0.0
        %2259 = vmatprep.subr.mxu0 0.0
        %2260 = vmatpush1.msra.mxu0 0.0
        %2261 = vmatprep.subr.mxu0 0.0
        %2262 = vmatpush1.msra.mxu0 0.0
        %2263 = vmatprep.subr.mxu0 0.0
        %2264 = vmatpush1.msra.mxu0 0.0
        %2265 = vmatprep.subr.mxu0 0.0
        %2266 = vmatpush1.msra.mxu0 0.0
        %2267 = vmatprep.subr.mxu0 0.0
        %2268 = vmatpush1.msra.mxu0 0.0
        %2269 = vmatprep.subr.mxu0 0.0
        %2270 = vmatpush1.msra.mxu0 0.0
        %2271 = vmatprep.subr.mxu0 0.0
        %2272 = vmatpush1.msra.mxu0 0.0
        %2273 = vmatprep.subr.mxu0 0.0
        %2274 = vmatpush1.msra.mxu0 0.0
        %2275 = vmatprep.subr.mxu0 0.0
        %2276 = vmatpush1.msra.mxu0 0.0
        %2277 = vmatprep.subr.mxu0 %v1995
        %2278 = vmatpush1.msra.mxu0 %v1994
        %2279 = vmatprep.subr.mxu0 %v1987
        %2280 = vmatpush1.msra.mxu0 %v1986
        %2281 = vmatprep.subr.mxu0 0.0
        %2282 = vmatpush2.msra.mxu0 0.0
        %2283 = vmatprep.subr.mxu0 0.0
        %2284 = vmatpush2.msra.mxu0 0.0
        %2285 = vmatprep.subr.mxu0 0.0
        %2286 = vmatpush2.msra.mxu0 0.0
        %2287 = vmatprep.subr.mxu0 0.0
        %2288 = vmatpush2.msra.mxu0 0.0
        %2289 = vmatprep.subr.mxu0 0.0
        %2290 = vmatpush2.msra.mxu0 0.0
        %2291 = vmatprep.subr.mxu0 0.0
        %2292 = vmatpush2.msra.mxu0 0.0
        %2293 = vmatprep.subr.mxu0 0.0
        %2294 = vmatpush2.msra.mxu0 0.0
        %2295 = vmatprep.subr.mxu0 0.0
        %2296 = vmatpush2.msra.mxu0 0.0
        %2297 = vmatprep.subr.mxu0 0.0
        %2298 = vmatpush2.msra.mxu0 0.0
        %2299 = vmatprep.subr.mxu0 0.0
        %2300 = vmatpush2.msra.mxu0 0.0
        %2301 = vmatprep.subr.mxu0 0.0
        %2302 = vmatpush2.msra.mxu0 0.0
        %2303 = vmatprep.subr.mxu0 0.0
        %2304 = vmatpush2.msra.mxu0 0.0
        %2305 = vmatprep.subr.mxu0 0.0
        %2306 = vmatpush2.msra.mxu0 0.0
        %2307 = vmatprep.subr.mxu0 0.0
        %2308 = vmatpush2.msra.mxu0 0.0
        %2309 = vmatprep.subr.mxu0 0.0
        %2310 = vmatpush2.msra.mxu0 0.0
        %2311 = vmatprep.subr.mxu0 0.0
        %2312 = vmatpush2.msra.mxu0 0.0
        %2313 = vmatprep.mubr.f32.mxu0 0.0
        %2314 = vmatmul.mubr.f32.gmra.mxu0 %v2013
        %v2315 = vpop.f32.mrf.mxu0
        %v2316 = vadd.f32 0.0, %v2315
        %v2317 = vpop.f32.mrf.mxu0
        %v2318 = vadd.f32 0.0, %v2317
        %2319 = vmatprep.mubr.f32.mxu0 0.0
        %2320 = vmatmul.mubr.f32.gmra.mxu0 %v2016
        %v2321 = vpop.f32.mrf.mxu0
        %v2322 = vadd.f32 0.0, %v2321
        %v2323 = vpop.f32.mrf.mxu0
        %v2324 = vadd.f32 0.0, %v2323
        %2325 = vdwg.mxu0
        %2327 = vset.pattern.permute.xlu0 0
        %2328 = vperm.xlu0 %2327, %v1903
        %v2329 = vpop.permute.xlu0 %2328
        %2332 = vset.pattern.permute.xlu0 0
        %2333 = vperm.xlu0 %2332, %v1904
        %v2334 = vpop.permute.xlu0 %2333
        %v2336 = vadd.f32 %v2329, %v2085
        %v2337 = vadd.f32 %v2329, %v2087
        %v2338 = vadd.f32 %v2329, %v2162
        %v2339 = vadd.f32 %v2329, %v2164
        %v2340 = vadd.f32 %v2329, %v2239
        %v2341 = vadd.f32 %v2329, %v2241
        %v2342 = vadd.f32 %v2329, %v2316
        %v2343 = vadd.f32 %v2329, %v2318
        %v2344 = vadd.f32 %v2334, %v2091
        %v2345 = vadd.f32 %v2334, %v2093
        %v2346 = vadd.f32 %v2334, %v2168
        %v2347 = vadd.f32 %v2334, %v2170
        %v2348 = vadd.f32 %v2334, %v2245
        %v2349 = vadd.f32 %v2334, %v2247
        %v2350 = vadd.f32 %v2334, %v2322
        %v2351 = vadd.f32 %v2334, %v2324
        %s2352 = scalar_lea.vmem %s8, 16
        %v2353 = vld [vmem:[%s2352] sm:$0xff]
        %v2354 = vld [vmem:[%s2352 + $0x8] sm:$0xff]
        %2355 = vrot.lane.b32.xlu0 %v1907, 126
        %v2356 = vpop.permute.xlu0 %2355
        %2357 = vrot.lane.b32.xlu0 %v1908, 126
        %v2358 = vpop.permute.xlu0 %2357
        %2359 = vrot.lane.b32.xlu0 %v1909, 126
        %v2360 = vpop.permute.xlu0 %2359
        %2361 = vrot.lane.b32.xlu0 %v1910, 126
        %v2362 = vpop.permute.xlu0 %2361
        %2363 = vrot.lane.b32.xlu0 %v1911, 126
        %v2364 = vpop.permute.xlu0 %2363
        %2365 = vrot.lane.b32.xlu0 %v1912, 126
        %v2366 = vpop.permute.xlu0 %2365
        %2367 = vrot.lane.b32.xlu0 %v1913, 126
        %v2368 = vpop.permute.xlu0 %2367
        %2369 = vrot.lane.b32.xlu0 %v1914, 126
        %v2370 = vpop.permute.xlu0 %2369
        %2371 = vrot.lane.b32.xlu0 %v1915, 126
        %v2372 = vpop.permute.xlu0 %2371
        %2373 = vrot.lane.b32.xlu0 %v1916, 126
        %v2374 = vpop.permute.xlu0 %2373
        %2375 = vrot.lane.b32.xlu0 %v1917, 126
        %v2376 = vpop.permute.xlu0 %2375
        %2377 = vrot.lane.b32.xlu0 %v1918, 126
        %v2378 = vpop.permute.xlu0 %2377
        %2379 = vrot.lane.b32.xlu0 %v1919, 126
        %v2380 = vpop.permute.xlu0 %2379
        %2381 = vrot.lane.b32.xlu0 %v1920, 126
        %v2382 = vpop.permute.xlu0 %2381
        %2383 = vrot.lane.b32.xlu0 %v1921, 126
        %v2384 = vpop.permute.xlu0 %2383
        %2385 = vrot.lane.b32.xlu0 %v1922, 126
        %v2386 = vpop.permute.xlu0 %2385
        %2387 = vrot.lane.b32.xlu0 %v1923, 126
        %v2388 = vpop.permute.xlu0 %2387
        %2389 = vrot.lane.b32.xlu0 %v1924, 126
        %v2390 = vpop.permute.xlu0 %2389
        %vm2391 = vcmask 1031168
        %v2392 = vsel %vm2391, %v2356, %v2358
        %v2393 = vsel %vm2391, %v2358, %v2360
        %v2394 = vsel %vm2391, %v2360, %v2362
        %v2395 = vsel %vm2391, %v2362, %v2364
        %v2396 = vsel %vm2391, %v2364, %v2366
        %v2397 = vsel %vm2391, %v2366, %v2368
        %v2398 = vsel %vm2391, %v2368, %v2370
        %v2399 = vsel %vm2391, %v2370, %v2372
        %v2400 = vsel %vm2391, %v2374, %v2376
        %v2401 = vsel %vm2391, %v2376, %v2378
        %v2402 = vsel %vm2391, %v2378, %v2380
        %v2403 = vsel %vm2391, %v2380, %v2382
        %v2404 = vsel %vm2391, %v2382, %v2384
        %v2405 = vsel %vm2391, %v2384, %v2386
        %v2406 = vsel %vm2391, %v2386, %v2388
        %v2407 = vsel %vm2391, %v2388, %v2390
        %v2425 = vsel %vm1554, %v2353, 0
        %v2428 = vsel %vm1554, %v2354, 0
        %2430 = vmatprep.subr.mxu0 0.0
        %2431 = vmatpush1.msra.mxu0 0.0
        %2432 = vmatprep.subr.mxu0 0.0
        %2433 = vmatpush1.msra.mxu0 0.0
        %2434 = vmatprep.subr.mxu0 0.0
        %2435 = vmatpush1.msra.mxu0 0.0
        %2436 = vmatprep.subr.mxu0 0.0
        %2437 = vmatpush1.msra.mxu0 0.0
        %2438 = vmatprep.subr.mxu0 0.0
        %2439 = vmatpush1.msra.mxu0 0.0
        %2440 = vmatprep.subr.mxu0 0.0
        %2441 = vmatpush1.msra.mxu0 0.0
        %2442 = vmatprep.subr.mxu0 0.0
        %2443 = vmatpush1.msra.mxu0 0.0
        %2444 = vmatprep.subr.mxu0 0.0
        %2445 = vmatpush1.msra.mxu0 0.0
        %2446 = vmatprep.subr.mxu0 0.0
        %2447 = vmatpush1.msra.mxu0 0.0
        %2448 = vmatprep.subr.mxu0 0.0
        %2449 = vmatpush1.msra.mxu0 0.0
        %2450 = vmatprep.subr.mxu0 0.0
        %2451 = vmatpush1.msra.mxu0 0.0
        %2452 = vmatprep.subr.mxu0 0.0
        %2453 = vmatpush1.msra.mxu0 0.0
        %2454 = vmatprep.subr.mxu0 0.0
        %2455 = vmatpush1.msra.mxu0 0.0
        %2456 = vmatprep.subr.mxu0 0.0
        %2457 = vmatpush1.msra.mxu0 0.0
        %2458 = vmatprep.subr.mxu0 %v2401
        %2459 = vmatpush1.msra.mxu0 %v2400
        %2460 = vmatprep.subr.mxu0 %v2393
        %2461 = vmatpush1.msra.mxu0 %v2392
        %2462 = vmatprep.subr.mxu0 0.0
        %2463 = vmatpush2.msra.mxu0 0.0
        %2464 = vmatprep.subr.mxu0 0.0
        %2465 = vmatpush2.msra.mxu0 0.0
        %2466 = vmatprep.subr.mxu0 0.0
        %2467 = vmatpush2.msra.mxu0 0.0
        %2468 = vmatprep.subr.mxu0 0.0
        %2469 = vmatpush2.msra.mxu0 0.0
        %2470 = vmatprep.subr.mxu0 0.0
        %2471 = vmatpush2.msra.mxu0 0.0
        %2472 = vmatprep.subr.mxu0 0.0
        %2473 = vmatpush2.msra.mxu0 0.0
        %2474 = vmatprep.subr.mxu0 0.0
        %2475 = vmatpush2.msra.mxu0 0.0
        %2476 = vmatprep.subr.mxu0 0.0
        %2477 = vmatpush2.msra.mxu0 0.0
        %2478 = vmatprep.subr.mxu0 0.0
        %2479 = vmatpush2.msra.mxu0 0.0
        %2480 = vmatprep.subr.mxu0 0.0
        %2481 = vmatpush2.msra.mxu0 0.0
        %2482 = vmatprep.subr.mxu0 0.0
        %2483 = vmatpush2.msra.mxu0 0.0
        %2484 = vmatprep.subr.mxu0 0.0
        %2485 = vmatpush2.msra.mxu0 0.0
        %2486 = vmatprep.subr.mxu0 0.0
        %2487 = vmatpush2.msra.mxu0 0.0
        %2488 = vmatprep.subr.mxu0 0.0
        %2489 = vmatpush2.msra.mxu0 0.0
        %2490 = vmatprep.subr.mxu0 0.0
        %2491 = vmatpush2.msra.mxu0 0.0
        %2492 = vmatprep.subr.mxu0 0.0
        %2493 = vmatpush2.msra.mxu0 0.0
        %2494 = vmatprep.mubr.f32.mxu0 0.0
        %2495 = vmatmul.mubr.f32.gmra.mxu0 %v2425
        %v2496 = vpop.f32.mrf.mxu0
        %v2497 = vadd.f32 0.0, %v2496
        %v2498 = vpop.f32.mrf.mxu0
        %v2499 = vadd.f32 0.0, %v2498
        %2500 = vmatprep.mubr.f32.mxu0 0.0
        %2501 = vmatmul.mubr.f32.gmra.mxu0 %v2428
        %v2502 = vpop.f32.mrf.mxu0
        %v2503 = vadd.f32 0.0, %v2502
        %v2504 = vpop.f32.mrf.mxu0
        %v2505 = vadd.f32 0.0, %v2504
        %2506 = vdwg.mxu0
        %2507 = vmatprep.subr.mxu0 0.0
        %2508 = vmatpush1.msra.mxu0 0.0
        %2509 = vmatprep.subr.mxu0 0.0
        %2510 = vmatpush1.msra.mxu0 0.0
        %2511 = vmatprep.subr.mxu0 0.0
        %2512 = vmatpush1.msra.mxu0 0.0
        %2513 = vmatprep.subr.mxu0 0.0
        %2514 = vmatpush1.msra.mxu0 0.0
        %2515 = vmatprep.subr.mxu0 0.0
        %2516 = vmatpush1.msra.mxu0 0.0
        %2517 = vmatprep.subr.mxu0 0.0
        %2518 = vmatpush1.msra.mxu0 0.0
        %2519 = vmatprep.subr.mxu0 0.0
        %2520 = vmatpush1.msra.mxu0 0.0
        %2521 = vmatprep.subr.mxu0 0.0
        %2522 = vmatpush1.msra.mxu0 0.0
        %2523 = vmatprep.subr.mxu0 0.0
        %2524 = vmatpush1.msra.mxu0 0.0
        %2525 = vmatprep.subr.mxu0 0.0
        %2526 = vmatpush1.msra.mxu0 0.0
        %2527 = vmatprep.subr.mxu0 0.0
        %2528 = vmatpush1.msra.mxu0 0.0
        %2529 = vmatprep.subr.mxu0 0.0
        %2530 = vmatpush1.msra.mxu0 0.0
        %2531 = vmatprep.subr.mxu0 0.0
        %2532 = vmatpush1.msra.mxu0 0.0
        %2533 = vmatprep.subr.mxu0 0.0
        %2534 = vmatpush1.msra.mxu0 0.0
        %2535 = vmatprep.subr.mxu0 %v2403
        %2536 = vmatpush1.msra.mxu0 %v2402
        %2537 = vmatprep.subr.mxu0 %v2395
        %2538 = vmatpush1.msra.mxu0 %v2394
        %2539 = vmatprep.subr.mxu0 0.0
        %2540 = vmatpush2.msra.mxu0 0.0
        %2541 = vmatprep.subr.mxu0 0.0
        %2542 = vmatpush2.msra.mxu0 0.0
        %2543 = vmatprep.subr.mxu0 0.0
        %2544 = vmatpush2.msra.mxu0 0.0
        %2545 = vmatprep.subr.mxu0 0.0
        %2546 = vmatpush2.msra.mxu0 0.0
        %2547 = vmatprep.subr.mxu0 0.0
        %2548 = vmatpush2.msra.mxu0 0.0
        %2549 = vmatprep.subr.mxu0 0.0
        %2550 = vmatpush2.msra.mxu0 0.0
        %2551 = vmatprep.subr.mxu0 0.0
        %2552 = vmatpush2.msra.mxu0 0.0
        %2553 = vmatprep.subr.mxu0 0.0
        %2554 = vmatpush2.msra.mxu0 0.0
        %2555 = vmatprep.subr.mxu0 0.0
        %2556 = vmatpush2.msra.mxu0 0.0
        %2557 = vmatprep.subr.mxu0 0.0
        %2558 = vmatpush2.msra.mxu0 0.0
        %2559 = vmatprep.subr.mxu0 0.0
        %2560 = vmatpush2.msra.mxu0 0.0
        %2561 = vmatprep.subr.mxu0 0.0
        %2562 = vmatpush2.msra.mxu0 0.0
        %2563 = vmatprep.subr.mxu0 0.0
        %2564 = vmatpush2.msra.mxu0 0.0
        %2565 = vmatprep.subr.mxu0 0.0
        %2566 = vmatpush2.msra.mxu0 0.0
        %2567 = vmatprep.subr.mxu0 0.0
        %2568 = vmatpush2.msra.mxu0 0.0
        %2569 = vmatprep.subr.mxu0 0.0
        %2570 = vmatpush2.msra.mxu0 0.0
        %2571 = vmatprep.mubr.f32.mxu0 0.0
        %2572 = vmatmul.mubr.f32.gmra.mxu0 %v2425
        %v2573 = vpop.f32.mrf.mxu0
        %v2574 = vadd.f32 0.0, %v2573
        %v2575 = vpop.f32.mrf.mxu0
        %v2576 = vadd.f32 0.0, %v2575
        %2577 = vmatprep.mubr.f32.mxu0 0.0
        %2578 = vmatmul.mubr.f32.gmra.mxu0 %v2428
        %v2579 = vpop.f32.mrf.mxu0
        %v2580 = vadd.f32 0.0, %v2579
        %v2581 = vpop.f32.mrf.mxu0
        %v2582 = vadd.f32 0.0, %v2581
        %2583 = vdwg.mxu0
        %2584 = vmatprep.subr.mxu0 0.0
        %2585 = vmatpush1.msra.mxu0 0.0
        %2586 = vmatprep.subr.mxu0 0.0
        %2587 = vmatpush1.msra.mxu0 0.0
        %2588 = vmatprep.subr.mxu0 0.0
        %2589 = vmatpush1.msra.mxu0 0.0
        %2590 = vmatprep.subr.mxu0 0.0
        %2591 = vmatpush1.msra.mxu0 0.0
        %2592 = vmatprep.subr.mxu0 0.0
        %2593 = vmatpush1.msra.mxu0 0.0
        %2594 = vmatprep.subr.mxu0 0.0
        %2595 = vmatpush1.msra.mxu0 0.0
        %2596 = vmatprep.subr.mxu0 0.0
        %2597 = vmatpush1.msra.mxu0 0.0
        %2598 = vmatprep.subr.mxu0 0.0
        %2599 = vmatpush1.msra.mxu0 0.0
        %2600 = vmatprep.subr.mxu0 0.0
        %2601 = vmatpush1.msra.mxu0 0.0
        %2602 = vmatprep.subr.mxu0 0.0
        %2603 = vmatpush1.msra.mxu0 0.0
        %2604 = vmatprep.subr.mxu0 0.0
        %2605 = vmatpush1.msra.mxu0 0.0
        %2606 = vmatprep.subr.mxu0 0.0
        %2607 = vmatpush1.msra.mxu0 0.0
        %2608 = vmatprep.subr.mxu0 0.0
        %2609 = vmatpush1.msra.mxu0 0.0
        %2610 = vmatprep.subr.mxu0 0.0
        %2611 = vmatpush1.msra.mxu0 0.0
        %2612 = vmatprep.subr.mxu0 %v2405
        %2613 = vmatpush1.msra.mxu0 %v2404
        %2614 = vmatprep.subr.mxu0 %v2397
        %2615 = vmatpush1.msra.mxu0 %v2396
        %2616 = vmatprep.subr.mxu0 0.0
        %2617 = vmatpush2.msra.mxu0 0.0
        %2618 = vmatprep.subr.mxu0 0.0
        %2619 = vmatpush2.msra.mxu0 0.0
        %2620 = vmatprep.subr.mxu0 0.0
        %2621 = vmatpush2.msra.mxu0 0.0
        %2622 = vmatprep.subr.mxu0 0.0
        %2623 = vmatpush2.msra.mxu0 0.0
        %2624 = vmatprep.subr.mxu0 0.0
        %2625 = vmatpush2.msra.mxu0 0.0
        %2626 = vmatprep.subr.mxu0 0.0
        %2627 = vmatpush2.msra.mxu0 0.0
        %2628 = vmatprep.subr.mxu0 0.0
        %2629 = vmatpush2.msra.mxu0 0.0
        %2630 = vmatprep.subr.mxu0 0.0
        %2631 = vmatpush2.msra.mxu0 0.0
        %2632 = vmatprep.subr.mxu0 0.0
        %2633 = vmatpush2.msra.mxu0 0.0
        %2634 = vmatprep.subr.mxu0 0.0
        %2635 = vmatpush2.msra.mxu0 0.0
        %2636 = vmatprep.subr.mxu0 0.0
        %2637 = vmatpush2.msra.mxu0 0.0
        %2638 = vmatprep.subr.mxu0 0.0
        %2639 = vmatpush2.msra.mxu0 0.0
        %2640 = vmatprep.subr.mxu0 0.0
        %2641 = vmatpush2.msra.mxu0 0.0
        %2642 = vmatprep.subr.mxu0 0.0
        %2643 = vmatpush2.msra.mxu0 0.0
        %2644 = vmatprep.subr.mxu0 0.0
        %2645 = vmatpush2.msra.mxu0 0.0
        %2646 = vmatprep.subr.mxu0 0.0
        %2647 = vmatpush2.msra.mxu0 0.0
        %2648 = vmatprep.mubr.f32.mxu0 0.0
        %2649 = vmatmul.mubr.f32.gmra.mxu0 %v2425
        %v2650 = vpop.f32.mrf.mxu0
        %v2651 = vadd.f32 0.0, %v2650
        %v2652 = vpop.f32.mrf.mxu0
        %v2653 = vadd.f32 0.0, %v2652
        %2654 = vmatprep.mubr.f32.mxu0 0.0
        %2655 = vmatmul.mubr.f32.gmra.mxu0 %v2428
        %v2656 = vpop.f32.mrf.mxu0
        %v2657 = vadd.f32 0.0, %v2656
        %v2658 = vpop.f32.mrf.mxu0
        %v2659 = vadd.f32 0.0, %v2658
        %2660 = vdwg.mxu0
        %2661 = vmatprep.subr.mxu0 0.0
        %2662 = vmatpush1.msra.mxu0 0.0
        %2663 = vmatprep.subr.mxu0 0.0
        %2664 = vmatpush1.msra.mxu0 0.0
        %2665 = vmatprep.subr.mxu0 0.0
        %2666 = vmatpush1.msra.mxu0 0.0
        %2667 = vmatprep.subr.mxu0 0.0
        %2668 = vmatpush1.msra.mxu0 0.0
        %2669 = vmatprep.subr.mxu0 0.0
        %2670 = vmatpush1.msra.mxu0 0.0
        %2671 = vmatprep.subr.mxu0 0.0
        %2672 = vmatpush1.msra.mxu0 0.0
        %2673 = vmatprep.subr.mxu0 0.0
        %2674 = vmatpush1.msra.mxu0 0.0
        %2675 = vmatprep.subr.mxu0 0.0
        %2676 = vmatpush1.msra.mxu0 0.0
        %2677 = vmatprep.subr.mxu0 0.0
        %2678 = vmatpush1.msra.mxu0 0.0
        %2679 = vmatprep.subr.mxu0 0.0
        %2680 = vmatpush1.msra.mxu0 0.0
        %2681 = vmatprep.subr.mxu0 0.0
        %2682 = vmatpush1.msra.mxu0 0.0
        %2683 = vmatprep.subr.mxu0 0.0
        %2684 = vmatpush1.msra.mxu0 0.0
        %2685 = vmatprep.subr.mxu0 0.0
        %2686 = vmatpush1.msra.mxu0 0.0
        %2687 = vmatprep.subr.mxu0 0.0
        %2688 = vmatpush1.msra.mxu0 0.0
        %2689 = vmatprep.subr.mxu0 %v2407
        %2690 = vmatpush1.msra.mxu0 %v2406
        %2691 = vmatprep.subr.mxu0 %v2399
        %2692 = vmatpush1.msra.mxu0 %v2398
        %2693 = vmatprep.subr.mxu0 0.0
        %2694 = vmatpush2.msra.mxu0 0.0
        %2695 = vmatprep.subr.mxu0 0.0
        %2696 = vmatpush2.msra.mxu0 0.0
        %2697 = vmatprep.subr.mxu0 0.0
        %2698 = vmatpush2.msra.mxu0 0.0
        %2699 = vmatprep.subr.mxu0 0.0
        %2700 = vmatpush2.msra.mxu0 0.0
        %2701 = vmatprep.subr.mxu0 0.0
        %2702 = vmatpush2.msra.mxu0 0.0
        %2703 = vmatprep.subr.mxu0 0.0
        %2704 = vmatpush2.msra.mxu0 0.0
        %2705 = vmatprep.subr.mxu0 0.0
        %2706 = vmatpush2.msra.mxu0 0.0
        %2707 = vmatprep.subr.mxu0 0.0
        %2708 = vmatpush2.msra.mxu0 0.0
        %2709 = vmatprep.subr.mxu0 0.0
        %2710 = vmatpush2.msra.mxu0 0.0
        %2711 = vmatprep.subr.mxu0 0.0
        %2712 = vmatpush2.msra.mxu0 0.0
        %2713 = vmatprep.subr.mxu0 0.0
        %2714 = vmatpush2.msra.mxu0 0.0
        %2715 = vmatprep.subr.mxu0 0.0
        %2716 = vmatpush2.msra.mxu0 0.0
        %2717 = vmatprep.subr.mxu0 0.0
        %2718 = vmatpush2.msra.mxu0 0.0
        %2719 = vmatprep.subr.mxu0 0.0
        %2720 = vmatpush2.msra.mxu0 0.0
        %2721 = vmatprep.subr.mxu0 0.0
        %2722 = vmatpush2.msra.mxu0 0.0
        %2723 = vmatprep.subr.mxu0 0.0
        %2724 = vmatpush2.msra.mxu0 0.0
        %2725 = vmatprep.mubr.f32.mxu0 0.0
        %2726 = vmatmul.mubr.f32.gmra.mxu0 %v2425
        %v2727 = vpop.f32.mrf.mxu0
        %v2728 = vadd.f32 0.0, %v2727
        %v2729 = vpop.f32.mrf.mxu0
        %v2730 = vadd.f32 0.0, %v2729
        %2731 = vmatprep.mubr.f32.mxu0 0.0
        %2732 = vmatmul.mubr.f32.gmra.mxu0 %v2428
        %v2733 = vpop.f32.mrf.mxu0
        %v2734 = vadd.f32 0.0, %v2733
        %v2735 = vpop.f32.mrf.mxu0
        %v2736 = vadd.f32 0.0, %v2735
        %2737 = vdwg.mxu0
        %v2738 = vadd.f32 %v2336, %v2497
        %v2739 = vadd.f32 %v2337, %v2499
        %v2740 = vadd.f32 %v2338, %v2574
        %v2741 = vadd.f32 %v2339, %v2576
        %v2742 = vadd.f32 %v2340, %v2651
        %v2743 = vadd.f32 %v2341, %v2653
        %v2744 = vadd.f32 %v2342, %v2728
        %v2745 = vadd.f32 %v2343, %v2730
        %v2746 = vadd.f32 %v2344, %v2503
        %v2747 = vadd.f32 %v2345, %v2505
        %v2748 = vadd.f32 %v2346, %v2580
        %v2749 = vadd.f32 %v2347, %v2582
        %v2750 = vadd.f32 %v2348, %v2657
        %v2751 = vadd.f32 %v2349, %v2659
        %v2752 = vadd.f32 %v2350, %v2734
        %v2753 = vadd.f32 %v2351, %v2736
        %s2754 = scalar_lea.vmem %s8, 32
        %v2755 = vld [vmem:[%s2754] sm:$0xff]
        %v2756 = vld [vmem:[%s2754 + $0x8] sm:$0xff]
        %2757 = vrot.lane.b32.xlu0 %v1907, 125
        %v2758 = vpop.permute.xlu0 %2757
        %2759 = vrot.lane.b32.xlu0 %v1908, 125
        %v2760 = vpop.permute.xlu0 %2759
        %2761 = vrot.lane.b32.xlu0 %v1909, 125
        %v2762 = vpop.permute.xlu0 %2761
        %2763 = vrot.lane.b32.xlu0 %v1910, 125
        %v2764 = vpop.permute.xlu0 %2763
        %2765 = vrot.lane.b32.xlu0 %v1911, 125
        %v2766 = vpop.permute.xlu0 %2765
        %2767 = vrot.lane.b32.xlu0 %v1912, 125
        %v2768 = vpop.permute.xlu0 %2767
        %2769 = vrot.lane.b32.xlu0 %v1913, 125
        %v2770 = vpop.permute.xlu0 %2769
        %2771 = vrot.lane.b32.xlu0 %v1914, 125
        %v2772 = vpop.permute.xlu0 %2771
        %2773 = vrot.lane.b32.xlu0 %v1915, 125
        %v2774 = vpop.permute.xlu0 %2773
        %2775 = vrot.lane.b32.xlu0 %v1916, 125
        %v2776 = vpop.permute.xlu0 %2775
        %2777 = vrot.lane.b32.xlu0 %v1917, 125
        %v2778 = vpop.permute.xlu0 %2777
        %2779 = vrot.lane.b32.xlu0 %v1918, 125
        %v2780 = vpop.permute.xlu0 %2779
        %2781 = vrot.lane.b32.xlu0 %v1919, 125
        %v2782 = vpop.permute.xlu0 %2781
        %2783 = vrot.lane.b32.xlu0 %v1920, 125
        %v2784 = vpop.permute.xlu0 %2783
        %2785 = vrot.lane.b32.xlu0 %v1921, 125
        %v2786 = vpop.permute.xlu0 %2785
        %2787 = vrot.lane.b32.xlu0 %v1922, 125
        %v2788 = vpop.permute.xlu0 %2787
        %2789 = vrot.lane.b32.xlu0 %v1923, 125
        %v2790 = vpop.permute.xlu0 %2789
        %2791 = vrot.lane.b32.xlu0 %v1924, 125
        %v2792 = vpop.permute.xlu0 %2791
        %vm2793 = vcmask 1022976
        %v2794 = vsel %vm2793, %v2758, %v2760
        %v2795 = vsel %vm2793, %v2760, %v2762
        %v2796 = vsel %vm2793, %v2762, %v2764
        %v2797 = vsel %vm2793, %v2764, %v2766
        %v2798 = vsel %vm2793, %v2766, %v2768
        %v2799 = vsel %vm2793, %v2768, %v2770
        %v2800 = vsel %vm2793, %v2770, %v2772
        %v2801 = vsel %vm2793, %v2772, %v2774
        %v2802 = vsel %vm2793, %v2776, %v2778
        %v2803 = vsel %vm2793, %v2778, %v2780
        %v2804 = vsel %vm2793, %v2780, %v2782
        %v2805 = vsel %vm2793, %v2782, %v2784
        %v2806 = vsel %vm2793, %v2784, %v2786
        %v2807 = vsel %vm2793, %v2786, %v2788
        %v2808 = vsel %vm2793, %v2788, %v2790
        %v2809 = vsel %vm2793, %v2790, %v2792
        %v2827 = vsel %vm1554, %v2755, 0
        %v2830 = vsel %vm1554, %v2756, 0
        %2832 = vmatprep.subr.mxu0 0.0
        %2833 = vmatpush1.msra.mxu0 0.0
        %2834 = vmatprep.subr.mxu0 0.0
        %2835 = vmatpush1.msra.mxu0 0.0
        %2836 = vmatprep.subr.mxu0 0.0
        %2837 = vmatpush1.msra.mxu0 0.0
        %2838 = vmatprep.subr.mxu0 0.0
        %2839 = vmatpush1.msra.mxu0 0.0
        %2840 = vmatprep.subr.mxu0 0.0
        %2841 = vmatpush1.msra.mxu0 0.0
        %2842 = vmatprep.subr.mxu0 0.0
        %2843 = vmatpush1.msra.mxu0 0.0
        %2844 = vmatprep.subr.mxu0 0.0
        %2845 = vmatpush1.msra.mxu0 0.0
        %2846 = vmatprep.subr.mxu0 0.0
        %2847 = vmatpush1.msra.mxu0 0.0
        %2848 = vmatprep.subr.mxu0 0.0
        %2849 = vmatpush1.msra.mxu0 0.0
        %2850 = vmatprep.subr.mxu0 0.0
        %2851 = vmatpush1.msra.mxu0 0.0
        %2852 = vmatprep.subr.mxu0 0.0
        %2853 = vmatpush1.msra.mxu0 0.0
        %2854 = vmatprep.subr.mxu0 0.0
        %2855 = vmatpush1.msra.mxu0 0.0
        %2856 = vmatprep.subr.mxu0 0.0
        %2857 = vmatpush1.msra.mxu0 0.0
        %2858 = vmatprep.subr.mxu0 0.0
        %2859 = vmatpush1.msra.mxu0 0.0
        %2860 = vmatprep.subr.mxu0 %v2803
        %2861 = vmatpush1.msra.mxu0 %v2802
        %2862 = vmatprep.subr.mxu0 %v2795
        %2863 = vmatpush1.msra.mxu0 %v2794
        %2864 = vmatprep.subr.mxu0 0.0
        %2865 = vmatpush2.msra.mxu0 0.0
        %2866 = vmatprep.subr.mxu0 0.0
        %2867 = vmatpush2.msra.mxu0 0.0
        %2868 = vmatprep.subr.mxu0 0.0
        %2869 = vmatpush2.msra.mxu0 0.0
        %2870 = vmatprep.subr.mxu0 0.0
        %2871 = vmatpush2.msra.mxu0 0.0
        %2872 = vmatprep.subr.mxu0 0.0
        %2873 = vmatpush2.msra.mxu0 0.0
        %2874 = vmatprep.subr.mxu0 0.0
        %2875 = vmatpush2.msra.mxu0 0.0
        %2876 = vmatprep.subr.mxu0 0.0
        %2877 = vmatpush2.msra.mxu0 0.0
        %2878 = vmatprep.subr.mxu0 0.0
        %2879 = vmatpush2.msra.mxu0 0.0
        %2880 = vmatprep.subr.mxu0 0.0
        %2881 = vmatpush2.msra.mxu0 0.0
        %2882 = vmatprep.subr.mxu0 0.0
        %2883 = vmatpush2.msra.mxu0 0.0
        %2884 = vmatprep.subr.mxu0 0.0
        %2885 = vmatpush2.msra.mxu0 0.0
        %2886 = vmatprep.subr.mxu0 0.0
        %2887 = vmatpush2.msra.mxu0 0.0
        %2888 = vmatprep.subr.mxu0 0.0
        %2889 = vmatpush2.msra.mxu0 0.0
        %2890 = vmatprep.subr.mxu0 0.0
        %2891 = vmatpush2.msra.mxu0 0.0
        %2892 = vmatprep.subr.mxu0 0.0
        %2893 = vmatpush2.msra.mxu0 0.0
        %2894 = vmatprep.subr.mxu0 0.0
        %2895 = vmatpush2.msra.mxu0 0.0
        %2896 = vmatprep.mubr.f32.mxu0 0.0
        %2897 = vmatmul.mubr.f32.gmra.mxu0 %v2827
        %v2898 = vpop.f32.mrf.mxu0
        %v2899 = vadd.f32 0.0, %v2898
        %v2900 = vpop.f32.mrf.mxu0
        %v2901 = vadd.f32 0.0, %v2900
        %2902 = vmatprep.mubr.f32.mxu0 0.0
        %2903 = vmatmul.mubr.f32.gmra.mxu0 %v2830
        %v2904 = vpop.f32.mrf.mxu0
        %v2905 = vadd.f32 0.0, %v2904
        %v2906 = vpop.f32.mrf.mxu0
        %v2907 = vadd.f32 0.0, %v2906
        %2908 = vdwg.mxu0
        %2909 = vmatprep.subr.mxu0 0.0
        %2910 = vmatpush1.msra.mxu0 0.0
        %2911 = vmatprep.subr.mxu0 0.0
        %2912 = vmatpush1.msra.mxu0 0.0
        %2913 = vmatprep.subr.mxu0 0.0
        %2914 = vmatpush1.msra.mxu0 0.0
        %2915 = vmatprep.subr.mxu0 0.0
        %2916 = vmatpush1.msra.mxu0 0.0
        %2917 = vmatprep.subr.mxu0 0.0
        %2918 = vmatpush1.msra.mxu0 0.0
        %2919 = vmatprep.subr.mxu0 0.0
        %2920 = vmatpush1.msra.mxu0 0.0
        %2921 = vmatprep.subr.mxu0 0.0
        %2922 = vmatpush1.msra.mxu0 0.0
        %2923 = vmatprep.subr.mxu0 0.0
        %2924 = vmatpush1.msra.mxu0 0.0
        %2925 = vmatprep.subr.mxu0 0.0
        %2926 = vmatpush1.msra.mxu0 0.0
        %2927 = vmatprep.subr.mxu0 0.0
        %2928 = vmatpush1.msra.mxu0 0.0
        %2929 = vmatprep.subr.mxu0 0.0
        %2930 = vmatpush1.msra.mxu0 0.0
        %2931 = vmatprep.subr.mxu0 0.0
        %2932 = vmatpush1.msra.mxu0 0.0
        %2933 = vmatprep.subr.mxu0 0.0
        %2934 = vmatpush1.msra.mxu0 0.0
        %2935 = vmatprep.subr.mxu0 0.0
        %2936 = vmatpush1.msra.mxu0 0.0
        %2937 = vmatprep.subr.mxu0 %v2805
        %2938 = vmatpush1.msra.mxu0 %v2804
        %2939 = vmatprep.subr.mxu0 %v2797
        %2940 = vmatpush1.msra.mxu0 %v2796
        %2941 = vmatprep.subr.mxu0 0.0
        %2942 = vmatpush2.msra.mxu0 0.0
        %2943 = vmatprep.subr.mxu0 0.0
        %2944 = vmatpush2.msra.mxu0 0.0
        %2945 = vmatprep.subr.mxu0 0.0
        %2946 = vmatpush2.msra.mxu0 0.0
        %2947 = vmatprep.subr.mxu0 0.0
        %2948 = vmatpush2.msra.mxu0 0.0
        %2949 = vmatprep.subr.mxu0 0.0
        %2950 = vmatpush2.msra.mxu0 0.0
        %2951 = vmatprep.subr.mxu0 0.0
        %2952 = vmatpush2.msra.mxu0 0.0
        %2953 = vmatprep.subr.mxu0 0.0
        %2954 = vmatpush2.msra.mxu0 0.0
        %2955 = vmatprep.subr.mxu0 0.0
        %2956 = vmatpush2.msra.mxu0 0.0
        %2957 = vmatprep.subr.mxu0 0.0
        %2958 = vmatpush2.msra.mxu0 0.0
        %2959 = vmatprep.subr.mxu0 0.0
        %2960 = vmatpush2.msra.mxu0 0.0
        %2961 = vmatprep.subr.mxu0 0.0
        %2962 = vmatpush2.msra.mxu0 0.0
        %2963 = vmatprep.subr.mxu0 0.0
        %2964 = vmatpush2.msra.mxu0 0.0
        %2965 = vmatprep.subr.mxu0 0.0
        %2966 = vmatpush2.msra.mxu0 0.0
        %2967 = vmatprep.subr.mxu0 0.0
        %2968 = vmatpush2.msra.mxu0 0.0
        %2969 = vmatprep.subr.mxu0 0.0
        %2970 = vmatpush2.msra.mxu0 0.0
        %2971 = vmatprep.subr.mxu0 0.0
        %2972 = vmatpush2.msra.mxu0 0.0
        %2973 = vmatprep.mubr.f32.mxu0 0.0
        %2974 = vmatmul.mubr.f32.gmra.mxu0 %v2827
        %v2975 = vpop.f32.mrf.mxu0
        %v2976 = vadd.f32 0.0, %v2975
        %v2977 = vpop.f32.mrf.mxu0
        %v2978 = vadd.f32 0.0, %v2977
        %2979 = vmatprep.mubr.f32.mxu0 0.0
        %2980 = vmatmul.mubr.f32.gmra.mxu0 %v2830
        %v2981 = vpop.f32.mrf.mxu0
        %v2982 = vadd.f32 0.0, %v2981
        %v2983 = vpop.f32.mrf.mxu0
        %v2984 = vadd.f32 0.0, %v2983
        %2985 = vdwg.mxu0
        %2986 = vmatprep.subr.mxu0 0.0
        %2987 = vmatpush1.msra.mxu0 0.0
        %2988 = vmatprep.subr.mxu0 0.0
        %2989 = vmatpush1.msra.mxu0 0.0
        %2990 = vmatprep.subr.mxu0 0.0
        %2991 = vmatpush1.msra.mxu0 0.0
        %2992 = vmatprep.subr.mxu0 0.0
        %2993 = vmatpush1.msra.mxu0 0.0
        %2994 = vmatprep.subr.mxu0 0.0
        %2995 = vmatpush1.msra.mxu0 0.0
        %2996 = vmatprep.subr.mxu0 0.0
        %2997 = vmatpush1.msra.mxu0 0.0
        %2998 = vmatprep.subr.mxu0 0.0
        %2999 = vmatpush1.msra.mxu0 0.0
        %3000 = vmatprep.subr.mxu0 0.0
        %3001 = vmatpush1.msra.mxu0 0.0
        %3002 = vmatprep.subr.mxu0 0.0
        %3003 = vmatpush1.msra.mxu0 0.0
        %3004 = vmatprep.subr.mxu0 0.0
        %3005 = vmatpush1.msra.mxu0 0.0
        %3006 = vmatprep.subr.mxu0 0.0
        %3007 = vmatpush1.msra.mxu0 0.0
        %3008 = vmatprep.subr.mxu0 0.0
        %3009 = vmatpush1.msra.mxu0 0.0
        %3010 = vmatprep.subr.mxu0 0.0
        %3011 = vmatpush1.msra.mxu0 0.0
        %3012 = vmatprep.subr.mxu0 0.0
        %3013 = vmatpush1.msra.mxu0 0.0
        %3014 = vmatprep.subr.mxu0 %v2807
        %3015 = vmatpush1.msra.mxu0 %v2806
        %3016 = vmatprep.subr.mxu0 %v2799
        %3017 = vmatpush1.msra.mxu0 %v2798
        %3018 = vmatprep.subr.mxu0 0.0
        %3019 = vmatpush2.msra.mxu0 0.0
        %3020 = vmatprep.subr.mxu0 0.0
        %3021 = vmatpush2.msra.mxu0 0.0
        %3022 = vmatprep.subr.mxu0 0.0
        %3023 = vmatpush2.msra.mxu0 0.0
        %3024 = vmatprep.subr.mxu0 0.0
        %3025 = vmatpush2.msra.mxu0 0.0
        %3026 = vmatprep.subr.mxu0 0.0
        %3027 = vmatpush2.msra.mxu0 0.0
        %3028 = vmatprep.subr.mxu0 0.0
        %3029 = vmatpush2.msra.mxu0 0.0
        %3030 = vmatprep.subr.mxu0 0.0
        %3031 = vmatpush2.msra.mxu0 0.0
        %3032 = vmatprep.subr.mxu0 0.0
        %3033 = vmatpush2.msra.mxu0 0.0
        %3034 = vmatprep.subr.mxu0 0.0
        %3035 = vmatpush2.msra.mxu0 0.0
        %3036 = vmatprep.subr.mxu0 0.0
        %3037 = vmatpush2.msra.mxu0 0.0
        %3038 = vmatprep.subr.mxu0 0.0
        %3039 = vmatpush2.msra.mxu0 0.0
        %3040 = vmatprep.subr.mxu0 0.0
        %3041 = vmatpush2.msra.mxu0 0.0
        %3042 = vmatprep.subr.mxu0 0.0
        %3043 = vmatpush2.msra.mxu0 0.0
        %3044 = vmatprep.subr.mxu0 0.0
        %3045 = vmatpush2.msra.mxu0 0.0
        %3046 = vmatprep.subr.mxu0 0.0
        %3047 = vmatpush2.msra.mxu0 0.0
        %3048 = vmatprep.subr.mxu0 0.0
        %3049 = vmatpush2.msra.mxu0 0.0
        %3050 = vmatprep.mubr.f32.mxu0 0.0
        %3051 = vmatmul.mubr.f32.gmra.mxu0 %v2827
        %v3052 = vpop.f32.mrf.mxu0
        %v3053 = vadd.f32 0.0, %v3052
        %v3054 = vpop.f32.mrf.mxu0
        %v3055 = vadd.f32 0.0, %v3054
        %3056 = vmatprep.mubr.f32.mxu0 0.0
        %3057 = vmatmul.mubr.f32.gmra.mxu0 %v2830
        %v3058 = vpop.f32.mrf.mxu0
        %v3059 = vadd.f32 0.0, %v3058
        %v3060 = vpop.f32.mrf.mxu0
        %v3061 = vadd.f32 0.0, %v3060
        %3062 = vdwg.mxu0
        %3063 = vmatprep.subr.mxu0 0.0
        %3064 = vmatpush1.msra.mxu0 0.0
        %3065 = vmatprep.subr.mxu0 0.0
        %3066 = vmatpush1.msra.mxu0 0.0
        %3067 = vmatprep.subr.mxu0 0.0
        %3068 = vmatpush1.msra.mxu0 0.0
        %3069 = vmatprep.subr.mxu0 0.0
        %3070 = vmatpush1.msra.mxu0 0.0
        %3071 = vmatprep.subr.mxu0 0.0
        %3072 = vmatpush1.msra.mxu0 0.0
        %3073 = vmatprep.subr.mxu0 0.0
        %3074 = vmatpush1.msra.mxu0 0.0
        %3075 = vmatprep.subr.mxu0 0.0
        %3076 = vmatpush1.msra.mxu0 0.0
        %3077 = vmatprep.subr.mxu0 0.0
        %3078 = vmatpush1.msra.mxu0 0.0
        %3079 = vmatprep.subr.mxu0 0.0
        %3080 = vmatpush1.msra.mxu0 0.0
        %3081 = vmatprep.subr.mxu0 0.0
        %3082 = vmatpush1.msra.mxu0 0.0
        %3083 = vmatprep.subr.mxu0 0.0
        %3084 = vmatpush1.msra.mxu0 0.0
        %3085 = vmatprep.subr.mxu0 0.0
        %3086 = vmatpush1.msra.mxu0 0.0
        %3087 = vmatprep.subr.mxu0 0.0
        %3088 = vmatpush1.msra.mxu0 0.0
        %3089 = vmatprep.subr.mxu0 0.0
        %3090 = vmatpush1.msra.mxu0 0.0
        %3091 = vmatprep.subr.mxu0 %v2809
        %3092 = vmatpush1.msra.mxu0 %v2808
        %3093 = vmatprep.subr.mxu0 %v2801
        %3094 = vmatpush1.msra.mxu0 %v2800
        %3095 = vmatprep.subr.mxu0 0.0
        %3096 = vmatpush2.msra.mxu0 0.0
        %3097 = vmatprep.subr.mxu0 0.0
        %3098 = vmatpush2.msra.mxu0 0.0
        %3099 = vmatprep.subr.mxu0 0.0
        %3100 = vmatpush2.msra.mxu0 0.0
        %3101 = vmatprep.subr.mxu0 0.0
        %3102 = vmatpush2.msra.mxu0 0.0
        %3103 = vmatprep.subr.mxu0 0.0
        %3104 = vmatpush2.msra.mxu0 0.0
        %3105 = vmatprep.subr.mxu0 0.0
        %3106 = vmatpush2.msra.mxu0 0.0
        %3107 = vmatprep.subr.mxu0 0.0
        %3108 = vmatpush2.msra.mxu0 0.0
        %3109 = vmatprep.subr.mxu0 0.0
        %3110 = vmatpush2.msra.mxu0 0.0
        %3111 = vmatprep.subr.mxu0 0.0
        %3112 = vmatpush2.msra.mxu0 0.0
        %3113 = vmatprep.subr.mxu0 0.0
        %3114 = vmatpush2.msra.mxu0 0.0
        %3115 = vmatprep.subr.mxu0 0.0
        %3116 = vmatpush2.msra.mxu0 0.0
        %3117 = vmatprep.subr.mxu0 0.0
        %3118 = vmatpush2.msra.mxu0 0.0
        %3119 = vmatprep.subr.mxu0 0.0
        %3120 = vmatpush2.msra.mxu0 0.0
        %3121 = vmatprep.subr.mxu0 0.0
        %3122 = vmatpush2.msra.mxu0 0.0
        %3123 = vmatprep.subr.mxu0 0.0
        %3124 = vmatpush2.msra.mxu0 0.0
        %3125 = vmatprep.subr.mxu0 0.0
        %3126 = vmatpush2.msra.mxu0 0.0
        %3127 = vmatprep.mubr.f32.mxu0 0.0
        %3128 = vmatmul.mubr.f32.gmra.mxu0 %v2827
        %v3129 = vpop.f32.mrf.mxu0
        %v3130 = vadd.f32 0.0, %v3129
        %v3131 = vpop.f32.mrf.mxu0
        %v3132 = vadd.f32 0.0, %v3131
        %3133 = vmatprep.mubr.f32.mxu0 0.0
        %3134 = vmatmul.mubr.f32.gmra.mxu0 %v2830
        %v3135 = vpop.f32.mrf.mxu0
        %v3136 = vadd.f32 0.0, %v3135
        %v3137 = vpop.f32.mrf.mxu0
        %v3138 = vadd.f32 0.0, %v3137
        %3139 = vdwg.mxu0
        %v3140 = vadd.f32 %v2738, %v2899
        %v3141 = vadd.f32 %v2739, %v2901
        %v3142 = vadd.f32 %v2740, %v2976
        %v3143 = vadd.f32 %v2741, %v2978
        %v3144 = vadd.f32 %v2742, %v3053
        %v3145 = vadd.f32 %v2743, %v3055
        %v3146 = vadd.f32 %v2744, %v3130
        %v3147 = vadd.f32 %v2745, %v3132
        %v3148 = vadd.f32 %v2746, %v2905
        %v3149 = vadd.f32 %v2747, %v2907
        %v3150 = vadd.f32 %v2748, %v2982
        %v3151 = vadd.f32 %v2749, %v2984
        %v3152 = vadd.f32 %v2750, %v3059
        %v3153 = vadd.f32 %v2751, %v3061
        %v3154 = vadd.f32 %v2752, %v3136
        %v3155 = vadd.f32 %v2753, %v3138
        %v3156 = vmax.f32 %v3140, 0.0
        %v3157 = vmax.f32 %v3141, 0.0
        %v3158 = vmax.f32 %v3142, 0.0
        %v3159 = vmax.f32 %v3143, 0.0
        %v3160 = vmax.f32 %v3144, 0.0
        %v3161 = vmax.f32 %v3145, 0.0
        %v3162 = vmax.f32 %v3146, 0.0
        %v3163 = vmax.f32 %v3147, 0.0
        %v3164 = vmax.f32 %v3148, 0.0
        %v3165 = vmax.f32 %v3149, 0.0
        %v3166 = vmax.f32 %v3150, 0.0
        %v3167 = vmax.f32 %v3151, 0.0
        %v3168 = vmax.f32 %v3152, 0.0
        %v3169 = vmax.f32 %v3153, 0.0
        %v3170 = vmax.f32 %v3154, 0.0
        %v3171 = vmax.f32 %v3155, 0.0
        %3172 = vst [vmem:[#allocation3] sm:$0xff] %v3156
        %3173 = vst [vmem:[#allocation3 + $0x8] sm:$0xff] %v3157
        %3174 = vst [vmem:[#allocation3 + $0x10] sm:$0xff] %v3158
        %3175 = vst [vmem:[#allocation3 + $0x18] sm:$0xff] %v3159
        %3176 = vst [vmem:[#allocation3 + $0x20] sm:$0xff] %v3160
        %3177 = vst [vmem:[#allocation3 + $0x28] sm:$0xff] %v3161
        %3178 = vst [vmem:[#allocation3 + $0x30] sm:$0xff] %v3162
        %3179 = vst [vmem:[#allocation3 + $0x38] sm:$0xff] %v3163
        %3180 = vst [vmem:[#allocation3 + $0x48] sm:$0xff] %v3164
        %3181 = vst [vmem:[#allocation3 + $0x50] sm:$0xff] %v3165
        %3182 = vst [vmem:[#allocation3 + $0x58] sm:$0xff] %v3166
        %3183 = vst [vmem:[#allocation3 + $0x60] sm:$0xff] %v3167
        %3184 = vst [vmem:[#allocation3 + $0x68] sm:$0xff] %v3168
        %3185 = vst [vmem:[#allocation3 + $0x70] sm:$0xff] %v3169
        %3186 = vst [vmem:[#allocation3 + $0x78] sm:$0xff] %v3170
        %3187 = vst [vmem:[#allocation3 + $0x80] sm:$0xff] %v3171
        %3188 = vst [vmem:[#allocation3 + $0x40] sm:$0xff] 0.0
        %3189 = vst [vmem:[#allocation3 + $0x88] sm:$0xff] 0.0
        %v3190 = vld [vmem:[%s11] sm:$0xff]
        %v3191 = vld [vmem:[%s11 + $0x8] sm:$0xff]
        %v3192 = vld [vmem:[#allocation13] sm:$0xff]
        %v3193 = vld [vmem:[#allocation13 + $0x8] sm:$0xff]
        %v3194 = vld [vmem:[#allocation3] sm:$0xff]
        %v3195 = vld [vmem:[#allocation3 + $0x8] sm:$0xff]
        %v3196 = vld [vmem:[#allocation3 + $0x10] sm:$0xff]
        %v3197 = vld [vmem:[#allocation3 + $0x18] sm:$0xff]
        %v3198 = vld [vmem:[#allocation3 + $0x20] sm:$0xff]
        %v3199 = vld [vmem:[#allocation3 + $0x28] sm:$0xff]
        %v3200 = vld [vmem:[#allocation3 + $0x30] sm:$0xff]
        %v3201 = vld [vmem:[#allocation3 + $0x38] sm:$0xff]
        %v3202 = vld [vmem:[#allocation3 + $0x48] sm:$0xff]
        %v3203 = vld [vmem:[#allocation3 + $0x50] sm:$0xff]
        %v3204 = vld [vmem:[#allocation3 + $0x58] sm:$0xff]
        %v3205 = vld [vmem:[#allocation3 + $0x60] sm:$0xff]
        %v3206 = vld [vmem:[#allocation3 + $0x68] sm:$0xff]
        %v3207 = vld [vmem:[#allocation3 + $0x70] sm:$0xff]
        %v3208 = vld [vmem:[#allocation3 + $0x78] sm:$0xff]
        %v3209 = vld [vmem:[#allocation3 + $0x80] sm:$0xff]
        %v3211 = vsel %vm1554, %v3192, 0
        %v3214 = vsel %vm1554, %v3193, 0
        %3216 = vmatprep.subr.mxu0 0.0
        %3217 = vmatpush1.msra.mxu0 0.0
        %3218 = vmatprep.subr.mxu0 0.0
        %3219 = vmatpush1.msra.mxu0 0.0
        %3220 = vmatprep.subr.mxu0 0.0
        %3221 = vmatpush1.msra.mxu0 0.0
        %3222 = vmatprep.subr.mxu0 0.0
        %3223 = vmatpush1.msra.mxu0 0.0
        %3224 = vmatprep.subr.mxu0 0.0
        %3225 = vmatpush1.msra.mxu0 0.0
        %3226 = vmatprep.subr.mxu0 0.0
        %3227 = vmatpush1.msra.mxu0 0.0
        %3228 = vmatprep.subr.mxu0 0.0
        %3229 = vmatpush1.msra.mxu0 0.0
        %3230 = vmatprep.subr.mxu0 0.0
        %3231 = vmatpush1.msra.mxu0 0.0
        %3232 = vmatprep.subr.mxu0 0.0
        %3233 = vmatpush1.msra.mxu0 0.0
        %3234 = vmatprep.subr.mxu0 0.0
        %3235 = vmatpush1.msra.mxu0 0.0
        %3236 = vmatprep.subr.mxu0 0.0
        %3237 = vmatpush1.msra.mxu0 0.0
        %3238 = vmatprep.subr.mxu0 0.0
        %3239 = vmatpush1.msra.mxu0 0.0
        %3240 = vmatprep.subr.mxu0 0.0
        %3241 = vmatpush1.msra.mxu0 0.0
        %3242 = vmatprep.subr.mxu0 0.0
        %3243 = vmatpush1.msra.mxu0 0.0
        %3244 = vmatprep.subr.mxu0 %v3203
        %3245 = vmatpush1.msra.mxu0 %v3202
        %3246 = vmatprep.subr.mxu0 %v3195
        %3247 = vmatpush1.msra.mxu0 %v3194
        %3248 = vmatprep.subr.mxu0 0.0
        %3249 = vmatpush2.msra.mxu0 0.0
        %3250 = vmatprep.subr.mxu0 0.0
        %3251 = vmatpush2.msra.mxu0 0.0
        %3252 = vmatprep.subr.mxu0 0.0
        %3253 = vmatpush2.msra.mxu0 0.0
        %3254 = vmatprep.subr.mxu0 0.0
        %3255 = vmatpush2.msra.mxu0 0.0
        %3256 = vmatprep.subr.mxu0 0.0
        %3257 = vmatpush2.msra.mxu0 0.0
        %3258 = vmatprep.subr.mxu0 0.0
        %3259 = vmatpush2.msra.mxu0 0.0
        %3260 = vmatprep.subr.mxu0 0.0
        %3261 = vmatpush2.msra.mxu0 0.0
        %3262 = vmatprep.subr.mxu0 0.0
        %3263 = vmatpush2.msra.mxu0 0.0
        %3264 = vmatprep.subr.mxu0 0.0
        %3265 = vmatpush2.msra.mxu0 0.0
        %3266 = vmatprep.subr.mxu0 0.0
        %3267 = vmatpush2.msra.mxu0 0.0
        %3268 = vmatprep.subr.mxu0 0.0
        %3269 = vmatpush2.msra.mxu0 0.0
        %3270 = vmatprep.subr.mxu0 0.0
        %3271 = vmatpush2.msra.mxu0 0.0
        %3272 = vmatprep.subr.mxu0 0.0
        %3273 = vmatpush2.msra.mxu0 0.0
        %3274 = vmatprep.subr.mxu0 0.0
        %3275 = vmatpush2.msra.mxu0 0.0
        %3276 = vmatprep.subr.mxu0 0.0
        %3277 = vmatpush2.msra.mxu0 0.0
        %3278 = vmatprep.subr.mxu0 0.0
        %3279 = vmatpush2.msra.mxu0 0.0
        %3280 = vmatprep.mubr.f32.mxu0 0.0
        %3281 = vmatmul.mubr.f32.gmra.mxu0 %v3211
        %v3282 = vpop.f32.mrf.mxu0
        %v3283 = vadd.f32 0.0, %v3282
        %v3284 = vpop.f32.mrf.mxu0
        %v3285 = vadd.f32 0.0, %v3284
        %3286 = vmatprep.mubr.f32.mxu0 0.0
        %3287 = vmatmul.mubr.f32.gmra.mxu0 %v3214
        %v3288 = vpop.f32.mrf.mxu0
        %v3289 = vadd.f32 0.0, %v3288
        %v3290 = vpop.f32.mrf.mxu0
        %v3291 = vadd.f32 0.0, %v3290
        %3292 = vdwg.mxu0
        %3293 = vmatprep.subr.mxu0 0.0
        %3294 = vmatpush1.msra.mxu0 0.0
        %3295 = vmatprep.subr.mxu0 0.0
        %3296 = vmatpush1.msra.mxu0 0.0
        %3297 = vmatprep.subr.mxu0 0.0
        %3298 = vmatpush1.msra.mxu0 0.0
        %3299 = vmatprep.subr.mxu0 0.0
        %3300 = vmatpush1.msra.mxu0 0.0
        %3301 = vmatprep.subr.mxu0 0.0
        %3302 = vmatpush1.msra.mxu0 0.0
        %3303 = vmatprep.subr.mxu0 0.0
        %3304 = vmatpush1.msra.mxu0 0.0
        %3305 = vmatprep.subr.mxu0 0.0
        %3306 = vmatpush1.msra.mxu0 0.0
        %3307 = vmatprep.subr.mxu0 0.0
        %3308 = vmatpush1.msra.mxu0 0.0
        %3309 = vmatprep.subr.mxu0 0.0
        %3310 = vmatpush1.msra.mxu0 0.0
        %3311 = vmatprep.subr.mxu0 0.0
        %3312 = vmatpush1.msra.mxu0 0.0
        %3313 = vmatprep.subr.mxu0 0.0
        %3314 = vmatpush1.msra.mxu0 0.0
        %3315 = vmatprep.subr.mxu0 0.0
        %3316 = vmatpush1.msra.mxu0 0.0
        %3317 = vmatprep.subr.mxu0 0.0
        %3318 = vmatpush1.msra.mxu0 0.0
        %3319 = vmatprep.subr.mxu0 0.0
        %3320 = vmatpush1.msra.mxu0 0.0
        %3321 = vmatprep.subr.mxu0 %v3205
        %3322 = vmatpush1.msra.mxu0 %v3204
        %3323 = vmatprep.subr.mxu0 %v3197
        %3324 = vmatpush1.msra.mxu0 %v3196
        %3325 = vmatprep.subr.mxu0 0.0
        %3326 = vmatpush2.msra.mxu0 0.0
        %3327 = vmatprep.subr.mxu0 0.0
        %3328 = vmatpush2.msra.mxu0 0.0
        %3329 = vmatprep.subr.mxu0 0.0
        %3330 = vmatpush2.msra.mxu0 0.0
        %3331 = vmatprep.subr.mxu0 0.0
        %3332 = vmatpush2.msra.mxu0 0.0
        %3333 = vmatprep.subr.mxu0 0.0
        %3334 = vmatpush2.msra.mxu0 0.0
        %3335 = vmatprep.subr.mxu0 0.0
        %3336 = vmatpush2.msra.mxu0 0.0
        %3337 = vmatprep.subr.mxu0 0.0
        %3338 = vmatpush2.msra.mxu0 0.0
        %3339 = vmatprep.subr.mxu0 0.0
        %3340 = vmatpush2.msra.mxu0 0.0
        %3341 = vmatprep.subr.mxu0 0.0
        %3342 = vmatpush2.msra.mxu0 0.0
        %3343 = vmatprep.subr.mxu0 0.0
        %3344 = vmatpush2.msra.mxu0 0.0
        %3345 = vmatprep.subr.mxu0 0.0
        %3346 = vmatpush2.msra.mxu0 0.0
        %3347 = vmatprep.subr.mxu0 0.0
        %3348 = vmatpush2.msra.mxu0 0.0
        %3349 = vmatprep.subr.mxu0 0.0
        %3350 = vmatpush2.msra.mxu0 0.0
        %3351 = vmatprep.subr.mxu0 0.0
        %3352 = vmatpush2.msra.mxu0 0.0
        %3353 = vmatprep.subr.mxu0 0.0
        %3354 = vmatpush2.msra.mxu0 0.0
        %3355 = vmatprep.subr.mxu0 0.0
        %3356 = vmatpush2.msra.mxu0 0.0
        %3357 = vmatprep.mubr.f32.mxu0 0.0
        %3358 = vmatmul.mubr.f32.gmra.mxu0 %v3211
        %v3359 = vpop.f32.mrf.mxu0
        %v3360 = vadd.f32 0.0, %v3359
        %v3361 = vpop.f32.mrf.mxu0
        %v3362 = vadd.f32 0.0, %v3361
        %3363 = vmatprep.mubr.f32.mxu0 0.0
        %3364 = vmatmul.mubr.f32.gmra.mxu0 %v3214
        %v3365 = vpop.f32.mrf.mxu0
        %v3366 = vadd.f32 0.0, %v3365
        %v3367 = vpop.f32.mrf.mxu0
        %v3368 = vadd.f32 0.0, %v3367
        %3369 = vdwg.mxu0
        %3370 = vmatprep.subr.mxu0 0.0
        %3371 = vmatpush1.msra.mxu0 0.0
        %3372 = vmatprep.subr.mxu0 0.0
        %3373 = vmatpush1.msra.mxu0 0.0
        %3374 = vmatprep.subr.mxu0 0.0
        %3375 = vmatpush1.msra.mxu0 0.0
        %3376 = vmatprep.subr.mxu0 0.0
        %3377 = vmatpush1.msra.mxu0 0.0
        %3378 = vmatprep.subr.mxu0 0.0
        %3379 = vmatpush1.msra.mxu0 0.0
        %3380 = vmatprep.subr.mxu0 0.0
        %3381 = vmatpush1.msra.mxu0 0.0
        %3382 = vmatprep.subr.mxu0 0.0
        %3383 = vmatpush1.msra.mxu0 0.0
        %3384 = vmatprep.subr.mxu0 0.0
        %3385 = vmatpush1.msra.mxu0 0.0
        %3386 = vmatprep.subr.mxu0 0.0
        %3387 = vmatpush1.msra.mxu0 0.0
        %3388 = vmatprep.subr.mxu0 0.0
        %3389 = vmatpush1.msra.mxu0 0.0
        %3390 = vmatprep.subr.mxu0 0.0
        %3391 = vmatpush1.msra.mxu0 0.0
        %3392 = vmatprep.subr.mxu0 0.0
        %3393 = vmatpush1.msra.mxu0 0.0
        %3394 = vmatprep.subr.mxu0 0.0
        %3395 = vmatpush1.msra.mxu0 0.0
        %3396 = vmatprep.subr.mxu0 0.0
        %3397 = vmatpush1.msra.mxu0 0.0
        %3398 = vmatprep.subr.mxu0 %v3207
        %3399 = vmatpush1.msra.mxu0 %v3206
        %3400 = vmatprep.subr.mxu0 %v3199
        %3401 = vmatpush1.msra.mxu0 %v3198
        %3402 = vmatprep.subr.mxu0 0.0
        %3403 = vmatpush2.msra.mxu0 0.0
        %3404 = vmatprep.subr.mxu0 0.0
        %3405 = vmatpush2.msra.mxu0 0.0
        %3406 = vmatprep.subr.mxu0 0.0
        %3407 = vmatpush2.msra.mxu0 0.0
        %3408 = vmatprep.subr.mxu0 0.0
        %3409 = vmatpush2.msra.mxu0 0.0
        %3410 = vmatprep.subr.mxu0 0.0
        %3411 = vmatpush2.msra.mxu0 0.0
        %3412 = vmatprep.subr.mxu0 0.0
        %3413 = vmatpush2.msra.mxu0 0.0
        %3414 = vmatprep.subr.mxu0 0.0
        %3415 = vmatpush2.msra.mxu0 0.0
        %3416 = vmatprep.subr.mxu0 0.0
        %3417 = vmatpush2.msra.mxu0 0.0
        %3418 = vmatprep.subr.mxu0 0.0
        %3419 = vmatpush2.msra.mxu0 0.0
        %3420 = vmatprep.subr.mxu0 0.0
        %3421 = vmatpush2.msra.mxu0 0.0
        %3422 = vmatprep.subr.mxu0 0.0
        %3423 = vmatpush2.msra.mxu0 0.0
        %3424 = vmatprep.subr.mxu0 0.0
        %3425 = vmatpush2.msra.mxu0 0.0
        %3426 = vmatprep.subr.mxu0 0.0
        %3427 = vmatpush2.msra.mxu0 0.0
        %3428 = vmatprep.subr.mxu0 0.0
        %3429 = vmatpush2.msra.mxu0 0.0
        %3430 = vmatprep.subr.mxu0 0.0
        %3431 = vmatpush2.msra.mxu0 0.0
        %3432 = vmatprep.subr.mxu0 0.0
        %3433 = vmatpush2.msra.mxu0 0.0
        %3434 = vmatprep.mubr.f32.mxu0 0.0
        %3435 = vmatmul.mubr.f32.gmra.mxu0 %v3211
        %v3436 = vpop.f32.mrf.mxu0
        %v3437 = vadd.f32 0.0, %v3436
        %v3438 = vpop.f32.mrf.mxu0
        %v3439 = vadd.f32 0.0, %v3438
        %3440 = vmatprep.mubr.f32.mxu0 0.0
        %3441 = vmatmul.mubr.f32.gmra.mxu0 %v3214
        %v3442 = vpop.f32.mrf.mxu0
        %v3443 = vadd.f32 0.0, %v3442
        %v3444 = vpop.f32.mrf.mxu0
        %v3445 = vadd.f32 0.0, %v3444
        %3446 = vdwg.mxu0
        %3447 = vmatprep.subr.mxu0 0.0
        %3448 = vmatpush1.msra.mxu0 0.0
        %3449 = vmatprep.subr.mxu0 0.0
        %3450 = vmatpush1.msra.mxu0 0.0
        %3451 = vmatprep.subr.mxu0 0.0
        %3452 = vmatpush1.msra.mxu0 0.0
        %3453 = vmatprep.subr.mxu0 0.0
        %3454 = vmatpush1.msra.mxu0 0.0
        %3455 = vmatprep.subr.mxu0 0.0
        %3456 = vmatpush1.msra.mxu0 0.0
        %3457 = vmatprep.subr.mxu0 0.0
        %3458 = vmatpush1.msra.mxu0 0.0
        %3459 = vmatprep.subr.mxu0 0.0
        %3460 = vmatpush1.msra.mxu0 0.0
        %3461 = vmatprep.subr.mxu0 0.0
        %3462 = vmatpush1.msra.mxu0 0.0
        %3463 = vmatprep.subr.mxu0 0.0
        %3464 = vmatpush1.msra.mxu0 0.0
        %3465 = vmatprep.subr.mxu0 0.0
        %3466 = vmatpush1.msra.mxu0 0.0
        %3467 = vmatprep.subr.mxu0 0.0
        %3468 = vmatpush1.msra.mxu0 0.0
        %3469 = vmatprep.subr.mxu0 0.0
        %3470 = vmatpush1.msra.mxu0 0.0
        %3471 = vmatprep.subr.mxu0 0.0
        %3472 = vmatpush1.msra.mxu0 0.0
        %3473 = vmatprep.subr.mxu0 0.0
        %3474 = vmatpush1.msra.mxu0 0.0
        %3475 = vmatprep.subr.mxu0 %v3209
        %3476 = vmatpush1.msra.mxu0 %v3208
        %3477 = vmatprep.subr.mxu0 %v3201
        %3478 = vmatpush1.msra.mxu0 %v3200
        %3479 = vmatprep.subr.mxu0 0.0
        %3480 = vmatpush2.msra.mxu0 0.0
        %3481 = vmatprep.subr.mxu0 0.0
        %3482 = vmatpush2.msra.mxu0 0.0
        %3483 = vmatprep.subr.mxu0 0.0
        %3484 = vmatpush2.msra.mxu0 0.0
        %3485 = vmatprep.subr.mxu0 0.0
        %3486 = vmatpush2.msra.mxu0 0.0
        %3487 = vmatprep.subr.mxu0 0.0
        %3488 = vmatpush2.msra.mxu0 0.0
        %3489 = vmatprep.subr.mxu0 0.0
        %3490 = vmatpush2.msra.mxu0 0.0
        %3491 = vmatprep.subr.mxu0 0.0
        %3492 = vmatpush2.msra.mxu0 0.0
        %3493 = vmatprep.subr.mxu0 0.0
        %3494 = vmatpush2.msra.mxu0 0.0
        %3495 = vmatprep.subr.mxu0 0.0
        %3496 = vmatpush2.msra.mxu0 0.0
        %3497 = vmatprep.subr.mxu0 0.0
        %3498 = vmatpush2.msra.mxu0 0.0
        %3499 = vmatprep.subr.mxu0 0.0
        %3500 = vmatpush2.msra.mxu0 0.0
        %3501 = vmatprep.subr.mxu0 0.0
        %3502 = vmatpush2.msra.mxu0 0.0
        %3503 = vmatprep.subr.mxu0 0.0
        %3504 = vmatpush2.msra.mxu0 0.0
        %3505 = vmatprep.subr.mxu0 0.0
        %3506 = vmatpush2.msra.mxu0 0.0
        %3507 = vmatprep.subr.mxu0 0.0
        %3508 = vmatpush2.msra.mxu0 0.0
        %3509 = vmatprep.subr.mxu0 0.0
        %3510 = vmatpush2.msra.mxu0 0.0
        %3511 = vmatprep.mubr.f32.mxu0 0.0
        %3512 = vmatmul.mubr.f32.gmra.mxu0 %v3211
        %v3513 = vpop.f32.mrf.mxu0
        %v3514 = vadd.f32 0.0, %v3513
        %v3515 = vpop.f32.mrf.mxu0
        %v3516 = vadd.f32 0.0, %v3515
        %3517 = vmatprep.mubr.f32.mxu0 0.0
        %3518 = vmatmul.mubr.f32.gmra.mxu0 %v3214
        %v3519 = vpop.f32.mrf.mxu0
        %v3520 = vadd.f32 0.0, %v3519
        %v3521 = vpop.f32.mrf.mxu0
        %v3522 = vadd.f32 0.0, %v3521
        %3523 = vdwg.mxu0
        %3525 = vset.pattern.permute.xlu0 0
        %3526 = vperm.xlu0 %3525, %v3190
        %v3527 = vpop.permute.xlu0 %3526
        %3530 = vset.pattern.permute.xlu0 0
        %3531 = vperm.xlu0 %3530, %v3191
        %v3532 = vpop.permute.xlu0 %3531
        %v3534 = vadd.f32 %v3527, %v3283
        %v3535 = vadd.f32 %v3527, %v3285
        %v3536 = vadd.f32 %v3527, %v3360
        %v3537 = vadd.f32 %v3527, %v3362
        %v3538 = vadd.f32 %v3527, %v3437
        %v3539 = vadd.f32 %v3527, %v3439
        %v3540 = vadd.f32 %v3527, %v3514
        %v3541 = vadd.f32 %v3527, %v3516
        %v3542 = vadd.f32 %v3532, %v3289
        %v3543 = vadd.f32 %v3532, %v3291
        %v3544 = vadd.f32 %v3532, %v3366
        %v3545 = vadd.f32 %v3532, %v3368
        %v3546 = vadd.f32 %v3532, %v3443
        %v3547 = vadd.f32 %v3532, %v3445
        %v3548 = vadd.f32 %v3532, %v3520
        %v3549 = vadd.f32 %v3532, %v3522
        %s3550 = scalar_lea.vmem [#allocation13], 16
        %v3551 = vld [vmem:[%s3550] sm:$0xff]
        %v3552 = vld [vmem:[%s3550 + $0x8] sm:$0xff]
        %v3553 = vld [vmem:[#allocation3] sm:$0xff]
        %v3554 = vld [vmem:[#allocation3 + $0x8] sm:$0xff]
        %v3555 = vld [vmem:[#allocation3 + $0x10] sm:$0xff]
        %v3556 = vld [vmem:[#allocation3 + $0x18] sm:$0xff]
        %v3557 = vld [vmem:[#allocation3 + $0x20] sm:$0xff]
        %v3558 = vld [vmem:[#allocation3 + $0x28] sm:$0xff]
        %v3559 = vld [vmem:[#allocation3 + $0x30] sm:$0xff]
        %v3560 = vld [vmem:[#allocation3 + $0x38] sm:$0xff]
        %v3561 = vld [vmem:[#allocation3 + $0x40] sm:$0xff]
        %v3562 = vld [vmem:[#allocation3 + $0x48] sm:$0xff]
        %v3563 = vld [vmem:[#allocation3 + $0x50] sm:$0xff]
        %v3564 = vld [vmem:[#allocation3 + $0x58] sm:$0xff]
        %v3565 = vld [vmem:[#allocation3 + $0x60] sm:$0xff]
        %v3566 = vld [vmem:[#allocation3 + $0x68] sm:$0xff]
        %v3567 = vld [vmem:[#allocation3 + $0x70] sm:$0xff]
        %v3568 = vld [vmem:[#allocation3 + $0x78] sm:$0xff]
        %v3569 = vld [vmem:[#allocation3 + $0x80] sm:$0xff]
        %v3570 = vld [vmem:[#allocation3 + $0x88] sm:$0xff]
        %3589 = vrot.lane.b32.xlu0 %v3553, 127
        %v3590 = vpop.permute.xlu0 %3589
        %3591 = vrot.lane.b32.xlu0 %v3554, 127
        %v3592 = vpop.permute.xlu0 %3591
        %3593 = vrot.lane.b32.xlu0 %v3555, 127
        %v3594 = vpop.permute.xlu0 %3593
        %3595 = vrot.lane.b32.xlu0 %v3556, 127
        %v3596 = vpop.permute.xlu0 %3595
        %3597 = vrot.lane.b32.xlu0 %v3557, 127
        %v3598 = vpop.permute.xlu0 %3597
        %3599 = vrot.lane.b32.xlu0 %v3558, 127
        %v3600 = vpop.permute.xlu0 %3599
        %3601 = vrot.lane.b32.xlu0 %v3559, 127
        %v3602 = vpop.permute.xlu0 %3601
        %3603 = vrot.lane.b32.xlu0 %v3560, 127
        %v3604 = vpop.permute.xlu0 %3603
        %3605 = vrot.lane.b32.xlu0 %v3561, 127
        %v3606 = vpop.permute.xlu0 %3605
        %3607 = vrot.lane.b32.xlu0 %v3562, 127
        %v3608 = vpop.permute.xlu0 %3607
        %3609 = vrot.lane.b32.xlu0 %v3563, 127
        %v3610 = vpop.permute.xlu0 %3609
        %3611 = vrot.lane.b32.xlu0 %v3564, 127
        %v3612 = vpop.permute.xlu0 %3611
        %3613 = vrot.lane.b32.xlu0 %v3565, 127
        %v3614 = vpop.permute.xlu0 %3613
        %3615 = vrot.lane.b32.xlu0 %v3566, 127
        %v3616 = vpop.permute.xlu0 %3615
        %3617 = vrot.lane.b32.xlu0 %v3567, 127
        %v3618 = vpop.permute.xlu0 %3617
        %3619 = vrot.lane.b32.xlu0 %v3568, 127
        %v3620 = vpop.permute.xlu0 %3619
        %3621 = vrot.lane.b32.xlu0 %v3569, 127
        %v3622 = vpop.permute.xlu0 %3621
        %3623 = vrot.lane.b32.xlu0 %v3570, 127
        %v3624 = vpop.permute.xlu0 %3623
        %v3625 = vsel %vm1979, %v3590, %v3592
        %v3626 = vsel %vm1979, %v3592, %v3594
        %v3627 = vsel %vm1979, %v3594, %v3596
        %v3628 = vsel %vm1979, %v3596, %v3598
        %v3629 = vsel %vm1979, %v3598, %v3600
        %v3630 = vsel %vm1979, %v3600, %v3602
        %v3631 = vsel %vm1979, %v3602, %v3604
        %v3632 = vsel %vm1979, %v3604, %v3606
        %v3633 = vsel %vm1979, %v3608, %v3610
        %v3634 = vsel %vm1979, %v3610, %v3612
        %v3635 = vsel %vm1979, %v3612, %v3614
        %v3636 = vsel %vm1979, %v3614, %v3616
        %v3637 = vsel %vm1979, %v3616, %v3618
        %v3638 = vsel %vm1979, %v3618, %v3620
        %v3639 = vsel %vm1979, %v3620, %v3622
        %v3640 = vsel %vm1979, %v3622, %v3624
        %v3658 = vsel %vm1554, %v3551, 0
        %v3661 = vsel %vm1554, %v3552, 0
        %3663 = vmatprep.subr.mxu0 0.0
        %3664 = vmatpush1.msra.mxu0 0.0
        %3665 = vmatprep.subr.mxu0 0.0
        %3666 = vmatpush1.msra.mxu0 0.0
        %3667 = vmatprep.subr.mxu0 0.0
        %3668 = vmatpush1.msra.mxu0 0.0
        %3669 = vmatprep.subr.mxu0 0.0
        %3670 = vmatpush1.msra.mxu0 0.0
        %3671 = vmatprep.subr.mxu0 0.0
        %3672 = vmatpush1.msra.mxu0 0.0
        %3673 = vmatprep.subr.mxu0 0.0
        %3674 = vmatpush1.msra.mxu0 0.0
        %3675 = vmatprep.subr.mxu0 0.0
        %3676 = vmatpush1.msra.mxu0 0.0
        %3677 = vmatprep.subr.mxu0 0.0
        %3678 = vmatpush1.msra.mxu0 0.0
        %3679 = vmatprep.subr.mxu0 0.0
        %3680 = vmatpush1.msra.mxu0 0.0
        %3681 = vmatprep.subr.mxu0 0.0
        %3682 = vmatpush1.msra.mxu0 0.0
        %3683 = vmatprep.subr.mxu0 0.0
        %3684 = vmatpush1.msra.mxu0 0.0
        %3685 = vmatprep.subr.mxu0 0.0
        %3686 = vmatpush1.msra.mxu0 0.0
        %3687 = vmatprep.subr.mxu0 0.0
        %3688 = vmatpush1.msra.mxu0 0.0
        %3689 = vmatprep.subr.mxu0 0.0
        %3690 = vmatpush1.msra.mxu0 0.0
        %3691 = vmatprep.subr.mxu0 %v3634
        %3692 = vmatpush1.msra.mxu0 %v3633
        %3693 = vmatprep.subr.mxu0 %v3626
        %3694 = vmatpush1.msra.mxu0 %v3625
        %3695 = vmatprep.subr.mxu0 0.0
        %3696 = vmatpush2.msra.mxu0 0.0
        %3697 = vmatprep.subr.mxu0 0.0
        %3698 = vmatpush2.msra.mxu0 0.0
        %3699 = vmatprep.subr.mxu0 0.0
        %3700 = vmatpush2.msra.mxu0 0.0
        %3701 = vmatprep.subr.mxu0 0.0
        %3702 = vmatpush2.msra.mxu0 0.0
        %3703 = vmatprep.subr.mxu0 0.0
        %3704 = vmatpush2.msra.mxu0 0.0
        %3705 = vmatprep.subr.mxu0 0.0
        %3706 = vmatpush2.msra.mxu0 0.0
        %3707 = vmatprep.subr.mxu0 0.0
        %3708 = vmatpush2.msra.mxu0 0.0
        %3709 = vmatprep.subr.mxu0 0.0
        %3710 = vmatpush2.msra.mxu0 0.0
        %3711 = vmatprep.subr.mxu0 0.0
        %3712 = vmatpush2.msra.mxu0 0.0
        %3713 = vmatprep.subr.mxu0 0.0
        %3714 = vmatpush2.msra.mxu0 0.0
        %3715 = vmatprep.subr.mxu0 0.0
        %3716 = vmatpush2.msra.mxu0 0.0
        %3717 = vmatprep.subr.mxu0 0.0
        %3718 = vmatpush2.msra.mxu0 0.0
        %3719 = vmatprep.subr.mxu0 0.0
        %3720 = vmatpush2.msra.mxu0 0.0
        %3721 = vmatprep.subr.mxu0 0.0
        %3722 = vmatpush2.msra.mxu0 0.0
        %3723 = vmatprep.subr.mxu0 0.0
        %3724 = vmatpush2.msra.mxu0 0.0
        %3725 = vmatprep.subr.mxu0 0.0
        %3726 = vmatpush2.msra.mxu0 0.0
        %3727 = vmatprep.mubr.f32.mxu0 0.0
        %3728 = vmatmul.mubr.f32.gmra.mxu0 %v3658
        %v3729 = vpop.f32.mrf.mxu0
        %v3730 = vadd.f32 0.0, %v3729
        %v3731 = vpop.f32.mrf.mxu0
        %v3732 = vadd.f32 0.0, %v3731
        %3733 = vmatprep.mubr.f32.mxu0 0.0
        %3734 = vmatmul.mubr.f32.gmra.mxu0 %v3661
        %v3735 = vpop.f32.mrf.mxu0
        %v3736 = vadd.f32 0.0, %v3735
        %v3737 = vpop.f32.mrf.mxu0
        %v3738 = vadd.f32 0.0, %v3737
        %3739 = vdwg.mxu0
        %3740 = vmatprep.subr.mxu0 0.0
        %3741 = vmatpush1.msra.mxu0 0.0
        %3742 = vmatprep.subr.mxu0 0.0
        %3743 = vmatpush1.msra.mxu0 0.0
        %3744 = vmatprep.subr.mxu0 0.0
        %3745 = vmatpush1.msra.mxu0 0.0
        %3746 = vmatprep.subr.mxu0 0.0
        %3747 = vmatpush1.msra.mxu0 0.0
        %3748 = vmatprep.subr.mxu0 0.0
        %3749 = vmatpush1.msra.mxu0 0.0
        %3750 = vmatprep.subr.mxu0 0.0
        %3751 = vmatpush1.msra.mxu0 0.0
        %3752 = vmatprep.subr.mxu0 0.0
        %3753 = vmatpush1.msra.mxu0 0.0
        %3754 = vmatprep.subr.mxu0 0.0
        %3755 = vmatpush1.msra.mxu0 0.0
        %3756 = vmatprep.subr.mxu0 0.0
        %3757 = vmatpush1.msra.mxu0 0.0
        %3758 = vmatprep.subr.mxu0 0.0
        %3759 = vmatpush1.msra.mxu0 0.0
        %3760 = vmatprep.subr.mxu0 0.0
        %3761 = vmatpush1.msra.mxu0 0.0
        %3762 = vmatprep.subr.mxu0 0.0
        %3763 = vmatpush1.msra.mxu0 0.0
        %3764 = vmatprep.subr.mxu0 0.0
        %3765 = vmatpush1.msra.mxu0 0.0
        %3766 = vmatprep.subr.mxu0 0.0
        %3767 = vmatpush1.msra.mxu0 0.0
        %3768 = vmatprep.subr.mxu0 %v3636
        %3769 = vmatpush1.msra.mxu0 %v3635
        %3770 = vmatprep.subr.mxu0 %v3628
        %3771 = vmatpush1.msra.mxu0 %v3627
        %3772 = vmatprep.subr.mxu0 0.0
        %3773 = vmatpush2.msra.mxu0 0.0
        %3774 = vmatprep.subr.mxu0 0.0
        %3775 = vmatpush2.msra.mxu0 0.0
        %3776 = vmatprep.subr.mxu0 0.0
        %3777 = vmatpush2.msra.mxu0 0.0
        %3778 = vmatprep.subr.mxu0 0.0
        %3779 = vmatpush2.msra.mxu0 0.0
        %3780 = vmatprep.subr.mxu0 0.0
        %3781 = vmatpush2.msra.mxu0 0.0
        %3782 = vmatprep.subr.mxu0 0.0
        %3783 = vmatpush2.msra.mxu0 0.0
        %3784 = vmatprep.subr.mxu0 0.0
        %3785 = vmatpush2.msra.mxu0 0.0
        %3786 = vmatprep.subr.mxu0 0.0
        %3787 = vmatpush2.msra.mxu0 0.0
        %3788 = vmatprep.subr.mxu0 0.0
        %3789 = vmatpush2.msra.mxu0 0.0
        %3790 = vmatprep.subr.mxu0 0.0
        %3791 = vmatpush2.msra.mxu0 0.0
        %3792 = vmatprep.subr.mxu0 0.0
        %3793 = vmatpush2.msra.mxu0 0.0
        %3794 = vmatprep.subr.mxu0 0.0
        %3795 = vmatpush2.msra.mxu0 0.0
        %3796 = vmatprep.subr.mxu0 0.0
        %3797 = vmatpush2.msra.mxu0 0.0
        %3798 = vmatprep.subr.mxu0 0.0
        %3799 = vmatpush2.msra.mxu0 0.0
        %3800 = vmatprep.subr.mxu0 0.0
        %3801 = vmatpush2.msra.mxu0 0.0
        %3802 = vmatprep.subr.mxu0 0.0
        %3803 = vmatpush2.msra.mxu0 0.0
        %3804 = vmatprep.mubr.f32.mxu0 0.0
        %3805 = vmatmul.mubr.f32.gmra.mxu0 %v3658
        %v3806 = vpop.f32.mrf.mxu0
        %v3807 = vadd.f32 0.0, %v3806
        %v3808 = vpop.f32.mrf.mxu0
        %v3809 = vadd.f32 0.0, %v3808
        %3810 = vmatprep.mubr.f32.mxu0 0.0
        %3811 = vmatmul.mubr.f32.gmra.mxu0 %v3661
        %v3812 = vpop.f32.mrf.mxu0
        %v3813 = vadd.f32 0.0, %v3812
        %v3814 = vpop.f32.mrf.mxu0
        %v3815 = vadd.f32 0.0, %v3814
        %3816 = vdwg.mxu0
        %3817 = vmatprep.subr.mxu0 0.0
        %3818 = vmatpush1.msra.mxu0 0.0
        %3819 = vmatprep.subr.mxu0 0.0
        %3820 = vmatpush1.msra.mxu0 0.0
        %3821 = vmatprep.subr.mxu0 0.0
        %3822 = vmatpush1.msra.mxu0 0.0
        %3823 = vmatprep.subr.mxu0 0.0
        %3824 = vmatpush1.msra.mxu0 0.0
        %3825 = vmatprep.subr.mxu0 0.0
        %3826 = vmatpush1.msra.mxu0 0.0
        %3827 = vmatprep.subr.mxu0 0.0
        %3828 = vmatpush1.msra.mxu0 0.0
        %3829 = vmatprep.subr.mxu0 0.0
        %3830 = vmatpush1.msra.mxu0 0.0
        %3831 = vmatprep.subr.mxu0 0.0
        %3832 = vmatpush1.msra.mxu0 0.0
        %3833 = vmatprep.subr.mxu0 0.0
        %3834 = vmatpush1.msra.mxu0 0.0
        %3835 = vmatprep.subr.mxu0 0.0
        %3836 = vmatpush1.msra.mxu0 0.0
        %3837 = vmatprep.subr.mxu0 0.0
        %3838 = vmatpush1.msra.mxu0 0.0
        %3839 = vmatprep.subr.mxu0 0.0
        %3840 = vmatpush1.msra.mxu0 0.0
        %3841 = vmatprep.subr.mxu0 0.0
        %3842 = vmatpush1.msra.mxu0 0.0
        %3843 = vmatprep.subr.mxu0 0.0
        %3844 = vmatpush1.msra.mxu0 0.0
        %3845 = vmatprep.subr.mxu0 %v3638
        %3846 = vmatpush1.msra.mxu0 %v3637
        %3847 = vmatprep.subr.mxu0 %v3630
        %3848 = vmatpush1.msra.mxu0 %v3629
        %3849 = vmatprep.subr.mxu0 0.0
        %3850 = vmatpush2.msra.mxu0 0.0
        %3851 = vmatprep.subr.mxu0 0.0
        %3852 = vmatpush2.msra.mxu0 0.0
        %3853 = vmatprep.subr.mxu0 0.0
        %3854 = vmatpush2.msra.mxu0 0.0
        %3855 = vmatprep.subr.mxu0 0.0
        %3856 = vmatpush2.msra.mxu0 0.0
        %3857 = vmatprep.subr.mxu0 0.0
        %3858 = vmatpush2.msra.mxu0 0.0
        %3859 = vmatprep.subr.mxu0 0.0
        %3860 = vmatpush2.msra.mxu0 0.0
        %3861 = vmatprep.subr.mxu0 0.0
        %3862 = vmatpush2.msra.mxu0 0.0
        %3863 = vmatprep.subr.mxu0 0.0
        %3864 = vmatpush2.msra.mxu0 0.0
        %3865 = vmatprep.subr.mxu0 0.0
        %3866 = vmatpush2.msra.mxu0 0.0
        %3867 = vmatprep.subr.mxu0 0.0
        %3868 = vmatpush2.msra.mxu0 0.0
        %3869 = vmatprep.subr.mxu0 0.0
        %3870 = vmatpush2.msra.mxu0 0.0
        %3871 = vmatprep.subr.mxu0 0.0
        %3872 = vmatpush2.msra.mxu0 0.0
        %3873 = vmatprep.subr.mxu0 0.0
        %3874 = vmatpush2.msra.mxu0 0.0
        %3875 = vmatprep.subr.mxu0 0.0
        %3876 = vmatpush2.msra.mxu0 0.0
        %3877 = vmatprep.subr.mxu0 0.0
        %3878 = vmatpush2.msra.mxu0 0.0
        %3879 = vmatprep.subr.mxu0 0.0
        %3880 = vmatpush2.msra.mxu0 0.0
        %3881 = vmatprep.mubr.f32.mxu0 0.0
        %3882 = vmatmul.mubr.f32.gmra.mxu0 %v3658
        %v3883 = vpop.f32.mrf.mxu0
        %v3884 = vadd.f32 0.0, %v3883
        %v3885 = vpop.f32.mrf.mxu0
        %v3886 = vadd.f32 0.0, %v3885
        %3887 = vmatprep.mubr.f32.mxu0 0.0
        %3888 = vmatmul.mubr.f32.gmra.mxu0 %v3661
        %v3889 = vpop.f32.mrf.mxu0
        %v3890 = vadd.f32 0.0, %v3889
        %v3891 = vpop.f32.mrf.mxu0
        %v3892 = vadd.f32 0.0, %v3891
        %3893 = vdwg.mxu0
        %3894 = vmatprep.subr.mxu0 0.0
        %3895 = vmatpush1.msra.mxu0 0.0
        %3896 = vmatprep.subr.mxu0 0.0
        %3897 = vmatpush1.msra.mxu0 0.0
        %3898 = vmatprep.subr.mxu0 0.0
        %3899 = vmatpush1.msra.mxu0 0.0
        %3900 = vmatprep.subr.mxu0 0.0
        %3901 = vmatpush1.msra.mxu0 0.0
        %3902 = vmatprep.subr.mxu0 0.0
        %3903 = vmatpush1.msra.mxu0 0.0
        %3904 = vmatprep.subr.mxu0 0.0
        %3905 = vmatpush1.msra.mxu0 0.0
        %3906 = vmatprep.subr.mxu0 0.0
        %3907 = vmatpush1.msra.mxu0 0.0
        %3908 = vmatprep.subr.mxu0 0.0
        %3909 = vmatpush1.msra.mxu0 0.0
        %3910 = vmatprep.subr.mxu0 0.0
        %3911 = vmatpush1.msra.mxu0 0.0
        %3912 = vmatprep.subr.mxu0 0.0
        %3913 = vmatpush1.msra.mxu0 0.0
        %3914 = vmatprep.subr.mxu0 0.0
        %3915 = vmatpush1.msra.mxu0 0.0
        %3916 = vmatprep.subr.mxu0 0.0
        %3917 = vmatpush1.msra.mxu0 0.0
        %3918 = vmatprep.subr.mxu0 0.0
        %3919 = vmatpush1.msra.mxu0 0.0
        %3920 = vmatprep.subr.mxu0 0.0
        %3921 = vmatpush1.msra.mxu0 0.0
        %3922 = vmatprep.subr.mxu0 %v3640
        %3923 = vmatpush1.msra.mxu0 %v3639
        %3924 = vmatprep.subr.mxu0 %v3632
        %3925 = vmatpush1.msra.mxu0 %v3631
        %3926 = vmatprep.subr.mxu0 0.0
        %3927 = vmatpush2.msra.mxu0 0.0
        %3928 = vmatprep.subr.mxu0 0.0
        %3929 = vmatpush2.msra.mxu0 0.0
        %3930 = vmatprep.subr.mxu0 0.0
        %3931 = vmatpush2.msra.mxu0 0.0
        %3932 = vmatprep.subr.mxu0 0.0
        %3933 = vmatpush2.msra.mxu0 0.0
        %3934 = vmatprep.subr.mxu0 0.0
        %3935 = vmatpush2.msra.mxu0 0.0
        %3936 = vmatprep.subr.mxu0 0.0
        %3937 = vmatpush2.msra.mxu0 0.0
        %3938 = vmatprep.subr.mxu0 0.0
        %3939 = vmatpush2.msra.mxu0 0.0
        %3940 = vmatprep.subr.mxu0 0.0
        %3941 = vmatpush2.msra.mxu0 0.0
        %3942 = vmatprep.subr.mxu0 0.0
        %3943 = vmatpush2.msra.mxu0 0.0
        %3944 = vmatprep.subr.mxu0 0.0
        %3945 = vmatpush2.msra.mxu0 0.0
        %3946 = vmatprep.subr.mxu0 0.0
        %3947 = vmatpush2.msra.mxu0 0.0
        %3948 = vmatprep.subr.mxu0 0.0
        %3949 = vmatpush2.msra.mxu0 0.0
        %3950 = vmatprep.subr.mxu0 0.0
        %3951 = vmatpush2.msra.mxu0 0.0
        %3952 = vmatprep.subr.mxu0 0.0
        %3953 = vmatpush2.msra.mxu0 0.0
        %3954 = vmatprep.subr.mxu0 0.0
        %3955 = vmatpush2.msra.mxu0 0.0
        %3956 = vmatprep.subr.mxu0 0.0
        %3957 = vmatpush2.msra.mxu0 0.0
        %3958 = vmatprep.mubr.f32.mxu0 0.0
        %3959 = vmatmul.mubr.f32.gmra.mxu0 %v3658
        %v3960 = vpop.f32.mrf.mxu0
        %v3961 = vadd.f32 0.0, %v3960
        %v3962 = vpop.f32.mrf.mxu0
        %v3963 = vadd.f32 0.0, %v3962
        %3964 = vmatprep.mubr.f32.mxu0 0.0
        %3965 = vmatmul.mubr.f32.gmra.mxu0 %v3661
        %v3966 = vpop.f32.mrf.mxu0
        %v3967 = vadd.f32 0.0, %v3966
        %v3968 = vpop.f32.mrf.mxu0
        %v3969 = vadd.f32 0.0, %v3968
        %3970 = vdwg.mxu0
        %v3971 = vadd.f32 %v3534, %v3730
        %v3972 = vadd.f32 %v3535, %v3732
        %v3973 = vadd.f32 %v3536, %v3807
        %v3974 = vadd.f32 %v3537, %v3809
        %v3975 = vadd.f32 %v3538, %v3884
        %v3976 = vadd.f32 %v3539, %v3886
        %v3977 = vadd.f32 %v3540, %v3961
        %v3978 = vadd.f32 %v3541, %v3963
        %v3979 = vadd.f32 %v3542, %v3736
        %v3980 = vadd.f32 %v3543, %v3738
        %v3981 = vadd.f32 %v3544, %v3813
        %v3982 = vadd.f32 %v3545, %v3815
        %v3983 = vadd.f32 %v3546, %v3890
        %v3984 = vadd.f32 %v3547, %v3892
        %v3985 = vadd.f32 %v3548, %v3967
        %v3986 = vadd.f32 %v3549, %v3969
        %s3987 = scalar_lea.vmem [#allocation13], 32
        %v3988 = vld [vmem:[%s3987] sm:$0xff]
        %v3989 = vld [vmem:[%s3987 + $0x8] sm:$0xff]
        %3990 = vrot.lane.b32.xlu0 %v3553, 126
        %v3991 = vpop.permute.xlu0 %3990
        %3992 = vrot.lane.b32.xlu0 %v3554, 126
        %v3993 = vpop.permute.xlu0 %3992
        %3994 = vrot.lane.b32.xlu0 %v3555, 126
        %v3995 = vpop.permute.xlu0 %3994
        %3996 = vrot.lane.b32.xlu0 %v3556, 126
        %v3997 = vpop.permute.xlu0 %3996
        %3998 = vrot.lane.b32.xlu0 %v3557, 126
        %v3999 = vpop.permute.xlu0 %3998
        %4000 = vrot.lane.b32.xlu0 %v3558, 126
        %v4001 = vpop.permute.xlu0 %4000
        %4002 = vrot.lane.b32.xlu0 %v3559, 126
        %v4003 = vpop.permute.xlu0 %4002
        %4004 = vrot.lane.b32.xlu0 %v3560, 126
        %v4005 = vpop.permute.xlu0 %4004
        %4006 = vrot.lane.b32.xlu0 %v3561, 126
        %v4007 = vpop.permute.xlu0 %4006
        %4008 = vrot.lane.b32.xlu0 %v3562, 126
        %v4009 = vpop.permute.xlu0 %4008
        %4010 = vrot.lane.b32.xlu0 %v3563, 126
        %v4011 = vpop.permute.xlu0 %4010
        %4012 = vrot.lane.b32.xlu0 %v3564, 126
        %v4013 = vpop.permute.xlu0 %4012
        %4014 = vrot.lane.b32.xlu0 %v3565, 126
        %v4015 = vpop.permute.xlu0 %4014
        %4016 = vrot.lane.b32.xlu0 %v3566, 126
        %v4017 = vpop.permute.xlu0 %4016
        %4018 = vrot.lane.b32.xlu0 %v3567, 126
        %v4019 = vpop.permute.xlu0 %4018
        %4020 = vrot.lane.b32.xlu0 %v3568, 126
        %v4021 = vpop.permute.xlu0 %4020
        %4022 = vrot.lane.b32.xlu0 %v3569, 126
        %v4023 = vpop.permute.xlu0 %4022
        %4024 = vrot.lane.b32.xlu0 %v3570, 126
        %v4025 = vpop.permute.xlu0 %4024
        %v4026 = vsel %vm2391, %v3991, %v3993
        %v4027 = vsel %vm2391, %v3993, %v3995
        %v4028 = vsel %vm2391, %v3995, %v3997
        %v4029 = vsel %vm2391, %v3997, %v3999
        %v4030 = vsel %vm2391, %v3999, %v4001
        %v4031 = vsel %vm2391, %v4001, %v4003
        %v4032 = vsel %vm2391, %v4003, %v4005
        %v4033 = vsel %vm2391, %v4005, %v4007
        %v4034 = vsel %vm2391, %v4009, %v4011
        %v4035 = vsel %vm2391, %v4011, %v4013
        %v4036 = vsel %vm2391, %v4013, %v4015
        %v4037 = vsel %vm2391, %v4015, %v4017
        %v4038 = vsel %vm2391, %v4017, %v4019
        %v4039 = vsel %vm2391, %v4019, %v4021
        %v4040 = vsel %vm2391, %v4021, %v4023
        %v4041 = vsel %vm2391, %v4023, %v4025
        %v4059 = vsel %vm1554, %v3988, 0
        %v4062 = vsel %vm1554, %v3989, 0
        %4064 = vmatprep.subr.mxu0 0.0
        %4065 = vmatpush1.msra.mxu0 0.0
        %4066 = vmatprep.subr.mxu0 0.0
        %4067 = vmatpush1.msra.mxu0 0.0
        %4068 = vmatprep.subr.mxu0 0.0
        %4069 = vmatpush1.msra.mxu0 0.0
        %4070 = vmatprep.subr.mxu0 0.0
        %4071 = vmatpush1.msra.mxu0 0.0
        %4072 = vmatprep.subr.mxu0 0.0
        %4073 = vmatpush1.msra.mxu0 0.0
        %4074 = vmatprep.subr.mxu0 0.0
        %4075 = vmatpush1.msra.mxu0 0.0
        %4076 = vmatprep.subr.mxu0 0.0
        %4077 = vmatpush1.msra.mxu0 0.0
        %4078 = vmatprep.subr.mxu0 0.0
        %4079 = vmatpush1.msra.mxu0 0.0
        %4080 = vmatprep.subr.mxu0 0.0
        %4081 = vmatpush1.msra.mxu0 0.0
        %4082 = vmatprep.subr.mxu0 0.0
        %4083 = vmatpush1.msra.mxu0 0.0
        %4084 = vmatprep.subr.mxu0 0.0
        %4085 = vmatpush1.msra.mxu0 0.0
        %4086 = vmatprep.subr.mxu0 0.0
        %4087 = vmatpush1.msra.mxu0 0.0
        %4088 = vmatprep.subr.mxu0 0.0
        %4089 = vmatpush1.msra.mxu0 0.0
        %4090 = vmatprep.subr.mxu0 0.0
        %4091 = vmatpush1.msra.mxu0 0.0
        %4092 = vmatprep.subr.mxu0 %v4035
        %4093 = vmatpush1.msra.mxu0 %v4034
        %4094 = vmatprep.subr.mxu0 %v4027
        %4095 = vmatpush1.msra.mxu0 %v4026
        %4096 = vmatprep.subr.mxu0 0.0
        %4097 = vmatpush2.msra.mxu0 0.0
        %4098 = vmatprep.subr.mxu0 0.0
        %4099 = vmatpush2.msra.mxu0 0.0
        %4100 = vmatprep.subr.mxu0 0.0
        %4101 = vmatpush2.msra.mxu0 0.0
        %4102 = vmatprep.subr.mxu0 0.0
        %4103 = vmatpush2.msra.mxu0 0.0
        %4104 = vmatprep.subr.mxu0 0.0
        %4105 = vmatpush2.msra.mxu0 0.0
        %4106 = vmatprep.subr.mxu0 0.0
        %4107 = vmatpush2.msra.mxu0 0.0
        %4108 = vmatprep.subr.mxu0 0.0
        %4109 = vmatpush2.msra.mxu0 0.0
        %4110 = vmatprep.subr.mxu0 0.0
        %4111 = vmatpush2.msra.mxu0 0.0
        %4112 = vmatprep.subr.mxu0 0.0
        %4113 = vmatpush2.msra.mxu0 0.0
        %4114 = vmatprep.subr.mxu0 0.0
        %4115 = vmatpush2.msra.mxu0 0.0
        %4116 = vmatprep.subr.mxu0 0.0
        %4117 = vmatpush2.msra.mxu0 0.0
        %4118 = vmatprep.subr.mxu0 0.0
        %4119 = vmatpush2.msra.mxu0 0.0
        %4120 = vmatprep.subr.mxu0 0.0
        %4121 = vmatpush2.msra.mxu0 0.0
        %4122 = vmatprep.subr.mxu0 0.0
        %4123 = vmatpush2.msra.mxu0 0.0
        %4124 = vmatprep.subr.mxu0 0.0
        %4125 = vmatpush2.msra.mxu0 0.0
        %4126 = vmatprep.subr.mxu0 0.0
        %4127 = vmatpush2.msra.mxu0 0.0
        %4128 = vmatprep.mubr.f32.mxu0 0.0
        %4129 = vmatmul.mubr.f32.gmra.mxu0 %v4059
        %v4130 = vpop.f32.mrf.mxu0
        %v4131 = vadd.f32 0.0, %v4130
        %v4132 = vpop.f32.mrf.mxu0
        %v4133 = vadd.f32 0.0, %v4132
        %4134 = vmatprep.mubr.f32.mxu0 0.0
        %4135 = vmatmul.mubr.f32.gmra.mxu0 %v4062
        %v4136 = vpop.f32.mrf.mxu0
        %v4137 = vadd.f32 0.0, %v4136
        %v4138 = vpop.f32.mrf.mxu0
        %v4139 = vadd.f32 0.0, %v4138
        %4140 = vdwg.mxu0
        %4141 = vmatprep.subr.mxu0 0.0
        %4142 = vmatpush1.msra.mxu0 0.0
        %4143 = vmatprep.subr.mxu0 0.0
        %4144 = vmatpush1.msra.mxu0 0.0
        %4145 = vmatprep.subr.mxu0 0.0
        %4146 = vmatpush1.msra.mxu0 0.0
        %4147 = vmatprep.subr.mxu0 0.0
        %4148 = vmatpush1.msra.mxu0 0.0
        %4149 = vmatprep.subr.mxu0 0.0
        %4150 = vmatpush1.msra.mxu0 0.0
        %4151 = vmatprep.subr.mxu0 0.0
        %4152 = vmatpush1.msra.mxu0 0.0
        %4153 = vmatprep.subr.mxu0 0.0
        %4154 = vmatpush1.msra.mxu0 0.0
        %4155 = vmatprep.subr.mxu0 0.0
        %4156 = vmatpush1.msra.mxu0 0.0
        %4157 = vmatprep.subr.mxu0 0.0
        %4158 = vmatpush1.msra.mxu0 0.0
        %4159 = vmatprep.subr.mxu0 0.0
        %4160 = vmatpush1.msra.mxu0 0.0
        %4161 = vmatprep.subr.mxu0 0.0
        %4162 = vmatpush1.msra.mxu0 0.0
        %4163 = vmatprep.subr.mxu0 0.0
        %4164 = vmatpush1.msra.mxu0 0.0
        %4165 = vmatprep.subr.mxu0 0.0
        %4166 = vmatpush1.msra.mxu0 0.0
        %4167 = vmatprep.subr.mxu0 0.0
        %4168 = vmatpush1.msra.mxu0 0.0
        %4169 = vmatprep.subr.mxu0 %v4037
        %4170 = vmatpush1.msra.mxu0 %v4036
        %4171 = vmatprep.subr.mxu0 %v4029
        %4172 = vmatpush1.msra.mxu0 %v4028
        %4173 = vmatprep.subr.mxu0 0.0
        %4174 = vmatpush2.msra.mxu0 0.0
        %4175 = vmatprep.subr.mxu0 0.0
        %4176 = vmatpush2.msra.mxu0 0.0
        %4177 = vmatprep.subr.mxu0 0.0
        %4178 = vmatpush2.msra.mxu0 0.0
        %4179 = vmatprep.subr.mxu0 0.0
        %4180 = vmatpush2.msra.mxu0 0.0
        %4181 = vmatprep.subr.mxu0 0.0
        %4182 = vmatpush2.msra.mxu0 0.0
        %4183 = vmatprep.subr.mxu0 0.0
        %4184 = vmatpush2.msra.mxu0 0.0
        %4185 = vmatprep.subr.mxu0 0.0
        %4186 = vmatpush2.msra.mxu0 0.0
        %4187 = vmatprep.subr.mxu0 0.0
        %4188 = vmatpush2.msra.mxu0 0.0
        %4189 = vmatprep.subr.mxu0 0.0
        %4190 = vmatpush2.msra.mxu0 0.0
        %4191 = vmatprep.subr.mxu0 0.0
        %4192 = vmatpush2.msra.mxu0 0.0
        %4193 = vmatprep.subr.mxu0 0.0
        %4194 = vmatpush2.msra.mxu0 0.0
        %4195 = vmatprep.subr.mxu0 0.0
        %4196 = vmatpush2.msra.mxu0 0.0
        %4197 = vmatprep.subr.mxu0 0.0
        %4198 = vmatpush2.msra.mxu0 0.0
        %4199 = vmatprep.subr.mxu0 0.0
        %4200 = vmatpush2.msra.mxu0 0.0
        %4201 = vmatprep.subr.mxu0 0.0
        %4202 = vmatpush2.msra.mxu0 0.0
        %4203 = vmatprep.subr.mxu0 0.0
        %4204 = vmatpush2.msra.mxu0 0.0
        %4205 = vmatprep.mubr.f32.mxu0 0.0
        %4206 = vmatmul.mubr.f32.gmra.mxu0 %v4059
        %v4207 = vpop.f32.mrf.mxu0
        %v4208 = vadd.f32 0.0, %v4207
        %v4209 = vpop.f32.mrf.mxu0
        %v4210 = vadd.f32 0.0, %v4209
        %4211 = vmatprep.mubr.f32.mxu0 0.0
        %4212 = vmatmul.mubr.f32.gmra.mxu0 %v4062
        %v4213 = vpop.f32.mrf.mxu0
        %v4214 = vadd.f32 0.0, %v4213
        %v4215 = vpop.f32.mrf.mxu0
        %v4216 = vadd.f32 0.0, %v4215
        %4217 = vdwg.mxu0
        %4218 = vmatprep.subr.mxu0 0.0
        %4219 = vmatpush1.msra.mxu0 0.0
        %4220 = vmatprep.subr.mxu0 0.0
        %4221 = vmatpush1.msra.mxu0 0.0
        %4222 = vmatprep.subr.mxu0 0.0
        %4223 = vmatpush1.msra.mxu0 0.0
        %4224 = vmatprep.subr.mxu0 0.0
        %4225 = vmatpush1.msra.mxu0 0.0
        %4226 = vmatprep.subr.mxu0 0.0
        %4227 = vmatpush1.msra.mxu0 0.0
        %4228 = vmatprep.subr.mxu0 0.0
        %4229 = vmatpush1.msra.mxu0 0.0
        %4230 = vmatprep.subr.mxu0 0.0
        %4231 = vmatpush1.msra.mxu0 0.0
        %4232 = vmatprep.subr.mxu0 0.0
        %4233 = vmatpush1.msra.mxu0 0.0
        %4234 = vmatprep.subr.mxu0 0.0
        %4235 = vmatpush1.msra.mxu0 0.0
        %4236 = vmatprep.subr.mxu0 0.0
        %4237 = vmatpush1.msra.mxu0 0.0
        %4238 = vmatprep.subr.mxu0 0.0
        %4239 = vmatpush1.msra.mxu0 0.0
        %4240 = vmatprep.subr.mxu0 0.0
        %4241 = vmatpush1.msra.mxu0 0.0
        %4242 = vmatprep.subr.mxu0 0.0
        %4243 = vmatpush1.msra.mxu0 0.0
        %4244 = vmatprep.subr.mxu0 0.0
        %4245 = vmatpush1.msra.mxu0 0.0
        %4246 = vmatprep.subr.mxu0 %v4039
        %4247 = vmatpush1.msra.mxu0 %v4038
        %4248 = vmatprep.subr.mxu0 %v4031
        %4249 = vmatpush1.msra.mxu0 %v4030
        %4250 = vmatprep.subr.mxu0 0.0
        %4251 = vmatpush2.msra.mxu0 0.0
        %4252 = vmatprep.subr.mxu0 0.0
        %4253 = vmatpush2.msra.mxu0 0.0
        %4254 = vmatprep.subr.mxu0 0.0
        %4255 = vmatpush2.msra.mxu0 0.0
        %4256 = vmatprep.subr.mxu0 0.0
        %4257 = vmatpush2.msra.mxu0 0.0
        %4258 = vmatprep.subr.mxu0 0.0
        %4259 = vmatpush2.msra.mxu0 0.0
        %4260 = vmatprep.subr.mxu0 0.0
        %4261 = vmatpush2.msra.mxu0 0.0
        %4262 = vmatprep.subr.mxu0 0.0
        %4263 = vmatpush2.msra.mxu0 0.0
        %4264 = vmatprep.subr.mxu0 0.0
        %4265 = vmatpush2.msra.mxu0 0.0
        %4266 = vmatprep.subr.mxu0 0.0
        %4267 = vmatpush2.msra.mxu0 0.0
        %4268 = vmatprep.subr.mxu0 0.0
        %4269 = vmatpush2.msra.mxu0 0.0
        %4270 = vmatprep.subr.mxu0 0.0
        %4271 = vmatpush2.msra.mxu0 0.0
        %4272 = vmatprep.subr.mxu0 0.0
        %4273 = vmatpush2.msra.mxu0 0.0
        %4274 = vmatprep.subr.mxu0 0.0
        %4275 = vmatpush2.msra.mxu0 0.0
        %4276 = vmatprep.subr.mxu0 0.0
        %4277 = vmatpush2.msra.mxu0 0.0
        %4278 = vmatprep.subr.mxu0 0.0
        %4279 = vmatpush2.msra.mxu0 0.0
        %4280 = vmatprep.subr.mxu0 0.0
        %4281 = vmatpush2.msra.mxu0 0.0
        %4282 = vmatprep.mubr.f32.mxu0 0.0
        %4283 = vmatmul.mubr.f32.gmra.mxu0 %v4059
        %v4284 = vpop.f32.mrf.mxu0
        %v4285 = vadd.f32 0.0, %v4284
        %v4286 = vpop.f32.mrf.mxu0
        %v4287 = vadd.f32 0.0, %v4286
        %4288 = vmatprep.mubr.f32.mxu0 0.0
        %4289 = vmatmul.mubr.f32.gmra.mxu0 %v4062
        %v4290 = vpop.f32.mrf.mxu0
        %v4291 = vadd.f32 0.0, %v4290
        %v4292 = vpop.f32.mrf.mxu0
        %v4293 = vadd.f32 0.0, %v4292
        %4294 = vdwg.mxu0
        %4295 = vmatprep.subr.mxu0 0.0
        %4296 = vmatpush1.msra.mxu0 0.0
        %4297 = vmatprep.subr.mxu0 0.0
        %4298 = vmatpush1.msra.mxu0 0.0
        %4299 = vmatprep.subr.mxu0 0.0
        %4300 = vmatpush1.msra.mxu0 0.0
        %4301 = vmatprep.subr.mxu0 0.0
        %4302 = vmatpush1.msra.mxu0 0.0
        %4303 = vmatprep.subr.mxu0 0.0
        %4304 = vmatpush1.msra.mxu0 0.0
        %4305 = vmatprep.subr.mxu0 0.0
        %4306 = vmatpush1.msra.mxu0 0.0
        %4307 = vmatprep.subr.mxu0 0.0
        %4308 = vmatpush1.msra.mxu0 0.0
        %4309 = vmatprep.subr.mxu0 0.0
        %4310 = vmatpush1.msra.mxu0 0.0
        %4311 = vmatprep.subr.mxu0 0.0
        %4312 = vmatpush1.msra.mxu0 0.0
        %4313 = vmatprep.subr.mxu0 0.0
        %4314 = vmatpush1.msra.mxu0 0.0
        %4315 = vmatprep.subr.mxu0 0.0
        %4316 = vmatpush1.msra.mxu0 0.0
        %4317 = vmatprep.subr.mxu0 0.0
        %4318 = vmatpush1.msra.mxu0 0.0
        %4319 = vmatprep.subr.mxu0 0.0
        %4320 = vmatpush1.msra.mxu0 0.0
        %4321 = vmatprep.subr.mxu0 0.0
        %4322 = vmatpush1.msra.mxu0 0.0
        %4323 = vmatprep.subr.mxu0 %v4041
        %4324 = vmatpush1.msra.mxu0 %v4040
        %4325 = vmatprep.subr.mxu0 %v4033
        %4326 = vmatpush1.msra.mxu0 %v4032
        %4327 = vmatprep.subr.mxu0 0.0
        %4328 = vmatpush2.msra.mxu0 0.0
        %4329 = vmatprep.subr.mxu0 0.0
        %4330 = vmatpush2.msra.mxu0 0.0
        %4331 = vmatprep.subr.mxu0 0.0
        %4332 = vmatpush2.msra.mxu0 0.0
        %4333 = vmatprep.subr.mxu0 0.0
        %4334 = vmatpush2.msra.mxu0 0.0
        %4335 = vmatprep.subr.mxu0 0.0
        %4336 = vmatpush2.msra.mxu0 0.0
        %4337 = vmatprep.subr.mxu0 0.0
        %4338 = vmatpush2.msra.mxu0 0.0
        %4339 = vmatprep.subr.mxu0 0.0
        %4340 = vmatpush2.msra.mxu0 0.0
        %4341 = vmatprep.subr.mxu0 0.0
        %4342 = vmatpush2.msra.mxu0 0.0
        %4343 = vmatprep.subr.mxu0 0.0
        %4344 = vmatpush2.msra.mxu0 0.0
        %4345 = vmatprep.subr.mxu0 0.0
        %4346 = vmatpush2.msra.mxu0 0.0
        %4347 = vmatprep.subr.mxu0 0.0
        %4348 = vmatpush2.msra.mxu0 0.0
        %4349 = vmatprep.subr.mxu0 0.0
        %4350 = vmatpush2.msra.mxu0 0.0
        %4351 = vmatprep.subr.mxu0 0.0
        %4352 = vmatpush2.msra.mxu0 0.0
        %4353 = vmatprep.subr.mxu0 0.0
        %4354 = vmatpush2.msra.mxu0 0.0
        %4355 = vmatprep.subr.mxu0 0.0
        %4356 = vmatpush2.msra.mxu0 0.0
        %4357 = vmatprep.subr.mxu0 0.0
        %4358 = vmatpush2.msra.mxu0 0.0
        %4359 = vmatprep.mubr.f32.mxu0 0.0
        %4360 = vmatmul.mubr.f32.gmra.mxu0 %v4059
        %v4361 = vpop.f32.mrf.mxu0
        %v4362 = vadd.f32 0.0, %v4361
        %v4363 = vpop.f32.mrf.mxu0
        %v4364 = vadd.f32 0.0, %v4363
        %4365 = vmatprep.mubr.f32.mxu0 0.0
        %4366 = vmatmul.mubr.f32.gmra.mxu0 %v4062
        %v4367 = vpop.f32.mrf.mxu0
        %v4368 = vadd.f32 0.0, %v4367
        %v4369 = vpop.f32.mrf.mxu0
        %v4370 = vadd.f32 0.0, %v4369
        %4371 = vdwg.mxu0
        %v4372 = vadd.f32 %v3971, %v4131
        %v4373 = vadd.f32 %v3972, %v4133
        %v4374 = vadd.f32 %v3973, %v4208
        %v4375 = vadd.f32 %v3974, %v4210
        %v4376 = vadd.f32 %v3975, %v4285
        %v4377 = vadd.f32 %v3976, %v4287
        %v4378 = vadd.f32 %v3977, %v4362
        %v4379 = vadd.f32 %v3978, %v4364
        %v4380 = vadd.f32 %v3979, %v4137
        %v4381 = vadd.f32 %v3980, %v4139
        %v4382 = vadd.f32 %v3981, %v4214
        %v4383 = vadd.f32 %v3982, %v4216
        %v4384 = vadd.f32 %v3983, %v4291
        %v4385 = vadd.f32 %v3984, %v4293
        %v4386 = vadd.f32 %v3985, %v4368
        %v4387 = vadd.f32 %v3986, %v4370
        %v4388 = vmax.f32 %v4372, 0.0
        %v4389 = vmax.f32 %v4373, 0.0
        %v4390 = vmax.f32 %v4374, 0.0
        %v4391 = vmax.f32 %v4375, 0.0
        %v4392 = vmax.f32 %v4376, 0.0
        %v4393 = vmax.f32 %v4377, 0.0
        %v4394 = vmax.f32 %v4378, 0.0
        %v4395 = vmax.f32 %v4379, 0.0
        %v4396 = vmax.f32 %v4380, 0.0
        %v4397 = vmax.f32 %v4381, 0.0
        %v4398 = vmax.f32 %v4382, 0.0
        %v4399 = vmax.f32 %v4383, 0.0
        %v4400 = vmax.f32 %v4384, 0.0
        %v4401 = vmax.f32 %v4385, 0.0
        %v4402 = vmax.f32 %v4386, 0.0
        %v4403 = vmax.f32 %v4387, 0.0
        %4404 = vst [vmem:[#allocation4] sm:$0xff] %v4388
        %4405 = vst [vmem:[#allocation4 + $0x8] sm:$0xff] %v4389
        %4406 = vst [vmem:[#allocation4 + $0x10] sm:$0xff] %v4390
        %4407 = vst [vmem:[#allocation4 + $0x18] sm:$0xff] %v4391
        %4408 = vst [vmem:[#allocation4 + $0x20] sm:$0xff] %v4392
        %4409 = vst [vmem:[#allocation4 + $0x28] sm:$0xff] %v4393
        %4410 = vst [vmem:[#allocation4 + $0x30] sm:$0xff] %v4394
        %4411 = vst [vmem:[#allocation4 + $0x38] sm:$0xff] %v4395
        %4412 = vst [vmem:[#allocation4 + $0x48] sm:$0xff] %v4396
        %4413 = vst [vmem:[#allocation4 + $0x50] sm:$0xff] %v4397
        %4414 = vst [vmem:[#allocation4 + $0x58] sm:$0xff] %v4398
        %4415 = vst [vmem:[#allocation4 + $0x60] sm:$0xff] %v4399
        %4416 = vst [vmem:[#allocation4 + $0x68] sm:$0xff] %v4400
        %4417 = vst [vmem:[#allocation4 + $0x70] sm:$0xff] %v4401
        %4418 = vst [vmem:[#allocation4 + $0x78] sm:$0xff] %v4402
        %4419 = vst [vmem:[#allocation4 + $0x80] sm:$0xff] %v4403
        %4420 = vst [vmem:[#allocation4 + $0x40] sm:$0xff] 0.0
        %4421 = vst [vmem:[#allocation4 + $0x88] sm:$0xff] 0.0
        %v4422 = vld [vmem:[%s13] sm:$0xff]
        %v4423 = vld [vmem:[%s12] sm:$0xff]
        %v4424 = vld [vmem:[#allocation4] sm:$0xff]
        %v4425 = vld [vmem:[#allocation4 + $0x8] sm:$0xff]
        %v4426 = vld [vmem:[#allocation4 + $0x10] sm:$0xff]
        %v4427 = vld [vmem:[#allocation4 + $0x18] sm:$0xff]
        %v4428 = vld [vmem:[#allocation4 + $0x20] sm:$0xff]
        %v4429 = vld [vmem:[#allocation4 + $0x28] sm:$0xff]
        %v4430 = vld [vmem:[#allocation4 + $0x30] sm:$0xff]
        %v4431 = vld [vmem:[#allocation4 + $0x38] sm:$0xff]
        %v4432 = vld [vmem:[#allocation4 + $0x48] sm:$0xff]
        %v4433 = vld [vmem:[#allocation4 + $0x50] sm:$0xff]
        %v4434 = vld [vmem:[#allocation4 + $0x58] sm:$0xff]
        %v4435 = vld [vmem:[#allocation4 + $0x60] sm:$0xff]
        %v4436 = vld [vmem:[#allocation4 + $0x68] sm:$0xff]
        %v4437 = vld [vmem:[#allocation4 + $0x70] sm:$0xff]
        %v4438 = vld [vmem:[#allocation4 + $0x78] sm:$0xff]
        %v4439 = vld [vmem:[#allocation4 + $0x80] sm:$0xff]
        %v4441 = vsel %vm1554, %v4423, 0
        %4443 = vmatprep.subr.mxu0 0.0
        %4444 = vmatpush1.msra.mxu0 0.0
        %4445 = vmatprep.subr.mxu0 0.0
        %4446 = vmatpush1.msra.mxu0 0.0
        %4447 = vmatprep.subr.mxu0 0.0
        %4448 = vmatpush1.msra.mxu0 0.0
        %4449 = vmatprep.subr.mxu0 0.0
        %4450 = vmatpush1.msra.mxu0 0.0
        %4451 = vmatprep.subr.mxu0 0.0
        %4452 = vmatpush1.msra.mxu0 0.0
        %4453 = vmatprep.subr.mxu0 0.0
        %4454 = vmatpush1.msra.mxu0 0.0
        %4455 = vmatprep.subr.mxu0 0.0
        %4456 = vmatpush1.msra.mxu0 0.0
        %4457 = vmatprep.subr.mxu0 0.0
        %4458 = vmatpush1.msra.mxu0 0.0
        %4459 = vmatprep.subr.mxu0 0.0
        %4460 = vmatpush1.msra.mxu0 0.0
        %4461 = vmatprep.subr.mxu0 0.0
        %4462 = vmatpush1.msra.mxu0 0.0
        %4463 = vmatprep.subr.mxu0 0.0
        %4464 = vmatpush1.msra.mxu0 0.0
        %4465 = vmatprep.subr.mxu0 0.0
        %4466 = vmatpush1.msra.mxu0 0.0
        %4467 = vmatprep.subr.mxu0 0.0
        %4468 = vmatpush1.msra.mxu0 0.0
        %4469 = vmatprep.subr.mxu0 0.0
        %4470 = vmatpush1.msra.mxu0 0.0
        %4471 = vmatprep.subr.mxu0 %v4433
        %4472 = vmatpush1.msra.mxu0 %v4432
        %4473 = vmatprep.subr.mxu0 %v4425
        %4474 = vmatpush1.msra.mxu0 %v4424
        %4475 = vmatprep.subr.mxu0 0.0
        %4476 = vmatpush2.msra.mxu0 0.0
        %4477 = vmatprep.subr.mxu0 0.0
        %4478 = vmatpush2.msra.mxu0 0.0
        %4479 = vmatprep.subr.mxu0 0.0
        %4480 = vmatpush2.msra.mxu0 0.0
        %4481 = vmatprep.subr.mxu0 0.0
        %4482 = vmatpush2.msra.mxu0 0.0
        %4483 = vmatprep.subr.mxu0 0.0
        %4484 = vmatpush2.msra.mxu0 0.0
        %4485 = vmatprep.subr.mxu0 0.0
        %4486 = vmatpush2.msra.mxu0 0.0
        %4487 = vmatprep.subr.mxu0 0.0
        %4488 = vmatpush2.msra.mxu0 0.0
        %4489 = vmatprep.subr.mxu0 0.0
        %4490 = vmatpush2.msra.mxu0 0.0
        %4491 = vmatprep.subr.mxu0 0.0
        %4492 = vmatpush2.msra.mxu0 0.0
        %4493 = vmatprep.subr.mxu0 0.0
        %4494 = vmatpush2.msra.mxu0 0.0
        %4495 = vmatprep.subr.mxu0 0.0
        %4496 = vmatpush2.msra.mxu0 0.0
        %4497 = vmatprep.subr.mxu0 0.0
        %4498 = vmatpush2.msra.mxu0 0.0
        %4499 = vmatprep.subr.mxu0 0.0
        %4500 = vmatpush2.msra.mxu0 0.0
        %4501 = vmatprep.subr.mxu0 0.0
        %4502 = vmatpush2.msra.mxu0 0.0
        %4503 = vmatprep.subr.mxu0 0.0
        %4504 = vmatpush2.msra.mxu0 0.0
        %4505 = vmatprep.subr.mxu0 0.0
        %4506 = vmatpush2.msra.mxu0 0.0
        %4507 = vmatprep.mubr.f32.mxu0 0.0
        %4508 = vmatmul.mubr.f32.gmra.mxu0 %v4441
        %v4509 = vpop.f32.mrf.mxu0
        %v4510 = vadd.f32 0.0, %v4509
        %v4511 = vpop.f32.mrf.mxu0
        %v4512 = vadd.f32 0.0, %v4511
        %4513 = vdwg.mxu0
        %4514 = vmatprep.subr.mxu0 0.0
        %4515 = vmatpush1.msra.mxu0 0.0
        %4516 = vmatprep.subr.mxu0 0.0
        %4517 = vmatpush1.msra.mxu0 0.0
        %4518 = vmatprep.subr.mxu0 0.0
        %4519 = vmatpush1.msra.mxu0 0.0
        %4520 = vmatprep.subr.mxu0 0.0
        %4521 = vmatpush1.msra.mxu0 0.0
        %4522 = vmatprep.subr.mxu0 0.0
        %4523 = vmatpush1.msra.mxu0 0.0
        %4524 = vmatprep.subr.mxu0 0.0
        %4525 = vmatpush1.msra.mxu0 0.0
        %4526 = vmatprep.subr.mxu0 0.0
        %4527 = vmatpush1.msra.mxu0 0.0
        %4528 = vmatprep.subr.mxu0 0.0
        %4529 = vmatpush1.msra.mxu0 0.0
        %4530 = vmatprep.subr.mxu0 0.0
        %4531 = vmatpush1.msra.mxu0 0.0
        %4532 = vmatprep.subr.mxu0 0.0
        %4533 = vmatpush1.msra.mxu0 0.0
        %4534 = vmatprep.subr.mxu0 0.0
        %4535 = vmatpush1.msra.mxu0 0.0
        %4536 = vmatprep.subr.mxu0 0.0
        %4537 = vmatpush1.msra.mxu0 0.0
        %4538 = vmatprep.subr.mxu0 0.0
        %4539 = vmatpush1.msra.mxu0 0.0
        %4540 = vmatprep.subr.mxu0 0.0
        %4541 = vmatpush1.msra.mxu0 0.0
        %4542 = vmatprep.subr.mxu0 %v4435
        %4543 = vmatpush1.msra.mxu0 %v4434
        %4544 = vmatprep.subr.mxu0 %v4427
        %4545 = vmatpush1.msra.mxu0 %v4426
        %4546 = vmatprep.subr.mxu0 0.0
        %4547 = vmatpush2.msra.mxu0 0.0
        %4548 = vmatprep.subr.mxu0 0.0
        %4549 = vmatpush2.msra.mxu0 0.0
        %4550 = vmatprep.subr.mxu0 0.0
        %4551 = vmatpush2.msra.mxu0 0.0
        %4552 = vmatprep.subr.mxu0 0.0
        %4553 = vmatpush2.msra.mxu0 0.0
        %4554 = vmatprep.subr.mxu0 0.0
        %4555 = vmatpush2.msra.mxu0 0.0
        %4556 = vmatprep.subr.mxu0 0.0
        %4557 = vmatpush2.msra.mxu0 0.0
        %4558 = vmatprep.subr.mxu0 0.0
        %4559 = vmatpush2.msra.mxu0 0.0
        %4560 = vmatprep.subr.mxu0 0.0
        %4561 = vmatpush2.msra.mxu0 0.0
        %4562 = vmatprep.subr.mxu0 0.0
        %4563 = vmatpush2.msra.mxu0 0.0
        %4564 = vmatprep.subr.mxu0 0.0
        %4565 = vmatpush2.msra.mxu0 0.0
        %4566 = vmatprep.subr.mxu0 0.0
        %4567 = vmatpush2.msra.mxu0 0.0
        %4568 = vmatprep.subr.mxu0 0.0
        %4569 = vmatpush2.msra.mxu0 0.0
        %4570 = vmatprep.subr.mxu0 0.0
        %4571 = vmatpush2.msra.mxu0 0.0
        %4572 = vmatprep.subr.mxu0 0.0
        %4573 = vmatpush2.msra.mxu0 0.0
        %4574 = vmatprep.subr.mxu0 0.0
        %4575 = vmatpush2.msra.mxu0 0.0
        %4576 = vmatprep.subr.mxu0 0.0
        %4577 = vmatpush2.msra.mxu0 0.0
        %4578 = vmatprep.mubr.f32.mxu0 0.0
        %4579 = vmatmul.mubr.f32.gmra.mxu0 %v4441
        %v4580 = vpop.f32.mrf.mxu0
        %v4581 = vadd.f32 0.0, %v4580
        %v4582 = vpop.f32.mrf.mxu0
        %v4583 = vadd.f32 0.0, %v4582
        %4584 = vdwg.mxu0
        %4585 = vmatprep.subr.mxu0 0.0
        %4586 = vmatpush1.msra.mxu0 0.0
        %4587 = vmatprep.subr.mxu0 0.0
        %4588 = vmatpush1.msra.mxu0 0.0
        %4589 = vmatprep.subr.mxu0 0.0
        %4590 = vmatpush1.msra.mxu0 0.0
        %4591 = vmatprep.subr.mxu0 0.0
        %4592 = vmatpush1.msra.mxu0 0.0
        %4593 = vmatprep.subr.mxu0 0.0
        %4594 = vmatpush1.msra.mxu0 0.0
        %4595 = vmatprep.subr.mxu0 0.0
        %4596 = vmatpush1.msra.mxu0 0.0
        %4597 = vmatprep.subr.mxu0 0.0
        %4598 = vmatpush1.msra.mxu0 0.0
        %4599 = vmatprep.subr.mxu0 0.0
        %4600 = vmatpush1.msra.mxu0 0.0
        %4601 = vmatprep.subr.mxu0 0.0
        %4602 = vmatpush1.msra.mxu0 0.0
        %4603 = vmatprep.subr.mxu0 0.0
        %4604 = vmatpush1.msra.mxu0 0.0
        %4605 = vmatprep.subr.mxu0 0.0
        %4606 = vmatpush1.msra.mxu0 0.0
        %4607 = vmatprep.subr.mxu0 0.0
        %4608 = vmatpush1.msra.mxu0 0.0
        %4609 = vmatprep.subr.mxu0 0.0
        %4610 = vmatpush1.msra.mxu0 0.0
        %4611 = vmatprep.subr.mxu0 0.0
        %4612 = vmatpush1.msra.mxu0 0.0
        %4613 = vmatprep.subr.mxu0 %v4437
        %4614 = vmatpush1.msra.mxu0 %v4436
        %4615 = vmatprep.subr.mxu0 %v4429
        %4616 = vmatpush1.msra.mxu0 %v4428
        %4617 = vmatprep.subr.mxu0 0.0
        %4618 = vmatpush2.msra.mxu0 0.0
        %4619 = vmatprep.subr.mxu0 0.0
        %4620 = vmatpush2.msra.mxu0 0.0
        %4621 = vmatprep.subr.mxu0 0.0
        %4622 = vmatpush2.msra.mxu0 0.0
        %4623 = vmatprep.subr.mxu0 0.0
        %4624 = vmatpush2.msra.mxu0 0.0
        %4625 = vmatprep.subr.mxu0 0.0
        %4626 = vmatpush2.msra.mxu0 0.0
        %4627 = vmatprep.subr.mxu0 0.0
        %4628 = vmatpush2.msra.mxu0 0.0
        %4629 = vmatprep.subr.mxu0 0.0
        %4630 = vmatpush2.msra.mxu0 0.0
        %4631 = vmatprep.subr.mxu0 0.0
        %4632 = vmatpush2.msra.mxu0 0.0
        %4633 = vmatprep.subr.mxu0 0.0
        %4634 = vmatpush2.msra.mxu0 0.0
        %4635 = vmatprep.subr.mxu0 0.0
        %4636 = vmatpush2.msra.mxu0 0.0
        %4637 = vmatprep.subr.mxu0 0.0
        %4638 = vmatpush2.msra.mxu0 0.0
        %4639 = vmatprep.subr.mxu0 0.0
        %4640 = vmatpush2.msra.mxu0 0.0
        %4641 = vmatprep.subr.mxu0 0.0
        %4642 = vmatpush2.msra.mxu0 0.0
        %4643 = vmatprep.subr.mxu0 0.0
        %4644 = vmatpush2.msra.mxu0 0.0
        %4645 = vmatprep.subr.mxu0 0.0
        %4646 = vmatpush2.msra.mxu0 0.0
        %4647 = vmatprep.subr.mxu0 0.0
        %4648 = vmatpush2.msra.mxu0 0.0
        %4649 = vmatprep.mubr.f32.mxu0 0.0
        %4650 = vmatmul.mubr.f32.gmra.mxu0 %v4441
        %v4651 = vpop.f32.mrf.mxu0
        %v4652 = vadd.f32 0.0, %v4651
        %v4653 = vpop.f32.mrf.mxu0
        %v4654 = vadd.f32 0.0, %v4653
        %4655 = vdwg.mxu0
        %4656 = vmatprep.subr.mxu0 0.0
        %4657 = vmatpush1.msra.mxu0 0.0
        %4658 = vmatprep.subr.mxu0 0.0
        %4659 = vmatpush1.msra.mxu0 0.0
        %4660 = vmatprep.subr.mxu0 0.0
        %4661 = vmatpush1.msra.mxu0 0.0
        %4662 = vmatprep.subr.mxu0 0.0
        %4663 = vmatpush1.msra.mxu0 0.0
        %4664 = vmatprep.subr.mxu0 0.0
        %4665 = vmatpush1.msra.mxu0 0.0
        %4666 = vmatprep.subr.mxu0 0.0
        %4667 = vmatpush1.msra.mxu0 0.0
        %4668 = vmatprep.subr.mxu0 0.0
        %4669 = vmatpush1.msra.mxu0 0.0
        %4670 = vmatprep.subr.mxu0 0.0
        %4671 = vmatpush1.msra.mxu0 0.0
        %4672 = vmatprep.subr.mxu0 0.0
        %4673 = vmatpush1.msra.mxu0 0.0
        %4674 = vmatprep.subr.mxu0 0.0
        %4675 = vmatpush1.msra.mxu0 0.0
        %4676 = vmatprep.subr.mxu0 0.0
        %4677 = vmatpush1.msra.mxu0 0.0
        %4678 = vmatprep.subr.mxu0 0.0
        %4679 = vmatpush1.msra.mxu0 0.0
        %4680 = vmatprep.subr.mxu0 0.0
        %4681 = vmatpush1.msra.mxu0 0.0
        %4682 = vmatprep.subr.mxu0 0.0
        %4683 = vmatpush1.msra.mxu0 0.0
        %4684 = vmatprep.subr.mxu0 %v4439
        %4685 = vmatpush1.msra.mxu0 %v4438
        %4686 = vmatprep.subr.mxu0 %v4431
        %4687 = vmatpush1.msra.mxu0 %v4430
        %4688 = vmatprep.subr.mxu0 0.0
        %4689 = vmatpush2.msra.mxu0 0.0
        %4690 = vmatprep.subr.mxu0 0.0
        %4691 = vmatpush2.msra.mxu0 0.0
        %4692 = vmatprep.subr.mxu0 0.0
        %4693 = vmatpush2.msra.mxu0 0.0
        %4694 = vmatprep.subr.mxu0 0.0
        %4695 = vmatpush2.msra.mxu0 0.0
        %4696 = vmatprep.subr.mxu0 0.0
        %4697 = vmatpush2.msra.mxu0 0.0
        %4698 = vmatprep.subr.mxu0 0.0
        %4699 = vmatpush2.msra.mxu0 0.0
        %4700 = vmatprep.subr.mxu0 0.0
        %4701 = vmatpush2.msra.mxu0 0.0
        %4702 = vmatprep.subr.mxu0 0.0
        %4703 = vmatpush2.msra.mxu0 0.0
        %4704 = vmatprep.subr.mxu0 0.0
        %4705 = vmatpush2.msra.mxu0 0.0
        %4706 = vmatprep.subr.mxu0 0.0
        %4707 = vmatpush2.msra.mxu0 0.0
        %4708 = vmatprep.subr.mxu0 0.0
        %4709 = vmatpush2.msra.mxu0 0.0
        %4710 = vmatprep.subr.mxu0 0.0
        %4711 = vmatpush2.msra.mxu0 0.0
        %4712 = vmatprep.subr.mxu0 0.0
        %4713 = vmatpush2.msra.mxu0 0.0
        %4714 = vmatprep.subr.mxu0 0.0
        %4715 = vmatpush2.msra.mxu0 0.0
        %4716 = vmatprep.subr.mxu0 0.0
        %4717 = vmatpush2.msra.mxu0 0.0
        %4718 = vmatprep.subr.mxu0 0.0
        %4719 = vmatpush2.msra.mxu0 0.0
        %4720 = vmatprep.mubr.f32.mxu0 0.0
        %4721 = vmatmul.mubr.f32.gmra.mxu0 %v4441
        %v4722 = vpop.f32.mrf.mxu0
        %v4723 = vadd.f32 0.0, %v4722
        %v4724 = vpop.f32.mrf.mxu0
        %v4725 = vadd.f32 0.0, %v4724
        %4726 = vdwg.mxu0
        %4728 = vset.pattern.permute.xlu0 0
        %4729 = vperm.xlu0 %4728, %v4422
        %v4730 = vpop.permute.xlu0 %4729
        %v4732 = vadd.f32 %v4730, %v4510
        %v4733 = vadd.f32 %v4730, %v4512
        %v4734 = vadd.f32 %v4730, %v4581
        %v4735 = vadd.f32 %v4730, %v4583
        %v4736 = vadd.f32 %v4730, %v4652
        %v4737 = vadd.f32 %v4730, %v4654
        %v4738 = vadd.f32 %v4730, %v4723
        %v4739 = vadd.f32 %v4730, %v4725
        %s4740 = scalar_lea.vmem %s12, 8
        %v4741 = vld [vmem:[%s4740] sm:$0xff]
        %v4742 = vld [vmem:[#allocation4] sm:$0xff]
        %v4743 = vld [vmem:[#allocation4 + $0x8] sm:$0xff]
        %v4744 = vld [vmem:[#allocation4 + $0x10] sm:$0xff]
        %v4745 = vld [vmem:[#allocation4 + $0x18] sm:$0xff]
        %v4746 = vld [vmem:[#allocation4 + $0x20] sm:$0xff]
        %v4747 = vld [vmem:[#allocation4 + $0x28] sm:$0xff]
        %v4748 = vld [vmem:[#allocation4 + $0x30] sm:$0xff]
        %v4749 = vld [vmem:[#allocation4 + $0x38] sm:$0xff]
        %v4750 = vld [vmem:[#allocation4 + $0x40] sm:$0xff]
        %v4751 = vld [vmem:[#allocation4 + $0x48] sm:$0xff]
        %v4752 = vld [vmem:[#allocation4 + $0x50] sm:$0xff]
        %v4753 = vld [vmem:[#allocation4 + $0x58] sm:$0xff]
        %v4754 = vld [vmem:[#allocation4 + $0x60] sm:$0xff]
        %v4755 = vld [vmem:[#allocation4 + $0x68] sm:$0xff]
        %v4756 = vld [vmem:[#allocation4 + $0x70] sm:$0xff]
        %v4757 = vld [vmem:[#allocation4 + $0x78] sm:$0xff]
        %v4758 = vld [vmem:[#allocation4 + $0x80] sm:$0xff]
        %v4759 = vld [vmem:[#allocation4 + $0x88] sm:$0xff]
        %4778 = vrot.lane.b32.xlu0 %v4742, 127
        %v4779 = vpop.permute.xlu0 %4778
        %4780 = vrot.lane.b32.xlu0 %v4743, 127
        %v4781 = vpop.permute.xlu0 %4780
        %4782 = vrot.lane.b32.xlu0 %v4744, 127
        %v4783 = vpop.permute.xlu0 %4782
        %4784 = vrot.lane.b32.xlu0 %v4745, 127
        %v4785 = vpop.permute.xlu0 %4784
        %4786 = vrot.lane.b32.xlu0 %v4746, 127
        %v4787 = vpop.permute.xlu0 %4786
        %4788 = vrot.lane.b32.xlu0 %v4747, 127
        %v4789 = vpop.permute.xlu0 %4788
        %4790 = vrot.lane.b32.xlu0 %v4748, 127
        %v4791 = vpop.permute.xlu0 %4790
        %4792 = vrot.lane.b32.xlu0 %v4749, 127
        %v4793 = vpop.permute.xlu0 %4792
        %4794 = vrot.lane.b32.xlu0 %v4750, 127
        %v4795 = vpop.permute.xlu0 %4794
        %4796 = vrot.lane.b32.xlu0 %v4751, 127
        %v4797 = vpop.permute.xlu0 %4796
        %4798 = vrot.lane.b32.xlu0 %v4752, 127
        %v4799 = vpop.permute.xlu0 %4798
        %4800 = vrot.lane.b32.xlu0 %v4753, 127
        %v4801 = vpop.permute.xlu0 %4800
        %4802 = vrot.lane.b32.xlu0 %v4754, 127
        %v4803 = vpop.permute.xlu0 %4802
        %4804 = vrot.lane.b32.xlu0 %v4755, 127
        %v4805 = vpop.permute.xlu0 %4804
        %4806 = vrot.lane.b32.xlu0 %v4756, 127
        %v4807 = vpop.permute.xlu0 %4806
        %4808 = vrot.lane.b32.xlu0 %v4757, 127
        %v4809 = vpop.permute.xlu0 %4808
        %4810 = vrot.lane.b32.xlu0 %v4758, 127
        %v4811 = vpop.permute.xlu0 %4810
        %4812 = vrot.lane.b32.xlu0 %v4759, 127
        %v4813 = vpop.permute.xlu0 %4812
        %v4814 = vsel %vm1979, %v4779, %v4781
        %v4815 = vsel %vm1979, %v4781, %v4783
        %v4816 = vsel %vm1979, %v4783, %v4785
        %v4817 = vsel %vm1979, %v4785, %v4787
        %v4818 = vsel %vm1979, %v4787, %v4789
        %v4819 = vsel %vm1979, %v4789, %v4791
        %v4820 = vsel %vm1979, %v4791, %v4793
        %v4821 = vsel %vm1979, %v4793, %v4795
        %v4822 = vsel %vm1979, %v4797, %v4799
        %v4823 = vsel %vm1979, %v4799, %v4801
        %v4824 = vsel %vm1979, %v4801, %v4803
        %v4825 = vsel %vm1979, %v4803, %v4805
        %v4826 = vsel %vm1979, %v4805, %v4807
        %v4827 = vsel %vm1979, %v4807, %v4809
        %v4828 = vsel %vm1979, %v4809, %v4811
        %v4829 = vsel %vm1979, %v4811, %v4813
        %v4847 = vsel %vm1554, %v4741, 0
        %4849 = vmatprep.subr.mxu0 0.0
        %4850 = vmatpush1.msra.mxu0 0.0
        %4851 = vmatprep.subr.mxu0 0.0
        %4852 = vmatpush1.msra.mxu0 0.0
        %4853 = vmatprep.subr.mxu0 0.0
        %4854 = vmatpush1.msra.mxu0 0.0
        %4855 = vmatprep.subr.mxu0 0.0
        %4856 = vmatpush1.msra.mxu0 0.0
        %4857 = vmatprep.subr.mxu0 0.0
        %4858 = vmatpush1.msra.mxu0 0.0
        %4859 = vmatprep.subr.mxu0 0.0
        %4860 = vmatpush1.msra.mxu0 0.0
        %4861 = vmatprep.subr.mxu0 0.0
        %4862 = vmatpush1.msra.mxu0 0.0
        %4863 = vmatprep.subr.mxu0 0.0
        %4864 = vmatpush1.msra.mxu0 0.0
        %4865 = vmatprep.subr.mxu0 0.0
        %4866 = vmatpush1.msra.mxu0 0.0
        %4867 = vmatprep.subr.mxu0 0.0
        %4868 = vmatpush1.msra.mxu0 0.0
        %4869 = vmatprep.subr.mxu0 0.0
        %4870 = vmatpush1.msra.mxu0 0.0
        %4871 = vmatprep.subr.mxu0 0.0
        %4872 = vmatpush1.msra.mxu0 0.0
        %4873 = vmatprep.subr.mxu0 0.0
        %4874 = vmatpush1.msra.mxu0 0.0
        %4875 = vmatprep.subr.mxu0 0.0
        %4876 = vmatpush1.msra.mxu0 0.0
        %4877 = vmatprep.subr.mxu0 %v4823
        %4878 = vmatpush1.msra.mxu0 %v4822
        %4879 = vmatprep.subr.mxu0 %v4815
        %4880 = vmatpush1.msra.mxu0 %v4814
        %4881 = vmatprep.subr.mxu0 0.0
        %4882 = vmatpush2.msra.mxu0 0.0
        %4883 = vmatprep.subr.mxu0 0.0
        %4884 = vmatpush2.msra.mxu0 0.0
        %4885 = vmatprep.subr.mxu0 0.0
        %4886 = vmatpush2.msra.mxu0 0.0
        %4887 = vmatprep.subr.mxu0 0.0
        %4888 = vmatpush2.msra.mxu0 0.0
        %4889 = vmatprep.subr.mxu0 0.0
        %4890 = vmatpush2.msra.mxu0 0.0
        %4891 = vmatprep.subr.mxu0 0.0
        %4892 = vmatpush2.msra.mxu0 0.0
        %4893 = vmatprep.subr.mxu0 0.0
        %4894 = vmatpush2.msra.mxu0 0.0
        %4895 = vmatprep.subr.mxu0 0.0
        %4896 = vmatpush2.msra.mxu0 0.0
        %4897 = vmatprep.subr.mxu0 0.0
        %4898 = vmatpush2.msra.mxu0 0.0
        %4899 = vmatprep.subr.mxu0 0.0
        %4900 = vmatpush2.msra.mxu0 0.0
        %4901 = vmatprep.subr.mxu0 0.0
        %4902 = vmatpush2.msra.mxu0 0.0
        %4903 = vmatprep.subr.mxu0 0.0
        %4904 = vmatpush2.msra.mxu0 0.0
        %4905 = vmatprep.subr.mxu0 0.0
        %4906 = vmatpush2.msra.mxu0 0.0
        %4907 = vmatprep.subr.mxu0 0.0
        %4908 = vmatpush2.msra.mxu0 0.0
        %4909 = vmatprep.subr.mxu0 0.0
        %4910 = vmatpush2.msra.mxu0 0.0
        %4911 = vmatprep.subr.mxu0 0.0
        %4912 = vmatpush2.msra.mxu0 0.0
        %4913 = vmatprep.mubr.f32.mxu0 0.0
        %4914 = vmatmul.mubr.f32.gmra.mxu0 %v4847
        %v4915 = vpop.f32.mrf.mxu0
        %v4916 = vadd.f32 0.0, %v4915
        %v4917 = vpop.f32.mrf.mxu0
        %v4918 = vadd.f32 0.0, %v4917
        %4919 = vdwg.mxu0
        %4920 = vmatprep.subr.mxu0 0.0
        %4921 = vmatpush1.msra.mxu0 0.0
        %4922 = vmatprep.subr.mxu0 0.0
        %4923 = vmatpush1.msra.mxu0 0.0
        %4924 = vmatprep.subr.mxu0 0.0
        %4925 = vmatpush1.msra.mxu0 0.0
        %4926 = vmatprep.subr.mxu0 0.0
        %4927 = vmatpush1.msra.mxu0 0.0
        %4928 = vmatprep.subr.mxu0 0.0
        %4929 = vmatpush1.msra.mxu0 0.0
        %4930 = vmatprep.subr.mxu0 0.0
        %4931 = vmatpush1.msra.mxu0 0.0
        %4932 = vmatprep.subr.mxu0 0.0
        %4933 = vmatpush1.msra.mxu0 0.0
        %4934 = vmatprep.subr.mxu0 0.0
        %4935 = vmatpush1.msra.mxu0 0.0
        %4936 = vmatprep.subr.mxu0 0.0
        %4937 = vmatpush1.msra.mxu0 0.0
        %4938 = vmatprep.subr.mxu0 0.0
        %4939 = vmatpush1.msra.mxu0 0.0
        %4940 = vmatprep.subr.mxu0 0.0
        %4941 = vmatpush1.msra.mxu0 0.0
        %4942 = vmatprep.subr.mxu0 0.0
        %4943 = vmatpush1.msra.mxu0 0.0
        %4944 = vmatprep.subr.mxu0 0.0
        %4945 = vmatpush1.msra.mxu0 0.0
        %4946 = vmatprep.subr.mxu0 0.0
        %4947 = vmatpush1.msra.mxu0 0.0
        %4948 = vmatprep.subr.mxu0 %v4825
        %4949 = vmatpush1.msra.mxu0 %v4824
        %4950 = vmatprep.subr.mxu0 %v4817
        %4951 = vmatpush1.msra.mxu0 %v4816
        %4952 = vmatprep.subr.mxu0 0.0
        %4953 = vmatpush2.msra.mxu0 0.0
        %4954 = vmatprep.subr.mxu0 0.0
        %4955 = vmatpush2.msra.mxu0 0.0
        %4956 = vmatprep.subr.mxu0 0.0
        %4957 = vmatpush2.msra.mxu0 0.0
        %4958 = vmatprep.subr.mxu0 0.0
        %4959 = vmatpush2.msra.mxu0 0.0
        %4960 = vmatprep.subr.mxu0 0.0
        %4961 = vmatpush2.msra.mxu0 0.0
        %4962 = vmatprep.subr.mxu0 0.0
        %4963 = vmatpush2.msra.mxu0 0.0
        %4964 = vmatprep.subr.mxu0 0.0
        %4965 = vmatpush2.msra.mxu0 0.0
        %4966 = vmatprep.subr.mxu0 0.0
        %4967 = vmatpush2.msra.mxu0 0.0
        %4968 = vmatprep.subr.mxu0 0.0
        %4969 = vmatpush2.msra.mxu0 0.0
        %4970 = vmatprep.subr.mxu0 0.0
        %4971 = vmatpush2.msra.mxu0 0.0
        %4972 = vmatprep.subr.mxu0 0.0
        %4973 = vmatpush2.msra.mxu0 0.0
        %4974 = vmatprep.subr.mxu0 0.0
        %4975 = vmatpush2.msra.mxu0 0.0
        %4976 = vmatprep.subr.mxu0 0.0
        %4977 = vmatpush2.msra.mxu0 0.0
        %4978 = vmatprep.subr.mxu0 0.0
        %4979 = vmatpush2.msra.mxu0 0.0
        %4980 = vmatprep.subr.mxu0 0.0
        %4981 = vmatpush2.msra.mxu0 0.0
        %4982 = vmatprep.subr.mxu0 0.0
        %4983 = vmatpush2.msra.mxu0 0.0
        %4984 = vmatprep.mubr.f32.mxu0 0.0
        %4985 = vmatmul.mubr.f32.gmra.mxu0 %v4847
        %v4986 = vpop.f32.mrf.mxu0
        %v4987 = vadd.f32 0.0, %v4986
        %v4988 = vpop.f32.mrf.mxu0
        %v4989 = vadd.f32 0.0, %v4988
        %4990 = vdwg.mxu0
        %4991 = vmatprep.subr.mxu0 0.0
        %4992 = vmatpush1.msra.mxu0 0.0
        %4993 = vmatprep.subr.mxu0 0.0
        %4994 = vmatpush1.msra.mxu0 0.0
        %4995 = vmatprep.subr.mxu0 0.0
        %4996 = vmatpush1.msra.mxu0 0.0
        %4997 = vmatprep.subr.mxu0 0.0
        %4998 = vmatpush1.msra.mxu0 0.0
        %4999 = vmatprep.subr.mxu0 0.0
        %5000 = vmatpush1.msra.mxu0 0.0
        %5001 = vmatprep.subr.mxu0 0.0
        %5002 = vmatpush1.msra.mxu0 0.0
        %5003 = vmatprep.subr.mxu0 0.0
        %5004 = vmatpush1.msra.mxu0 0.0
        %5005 = vmatprep.subr.mxu0 0.0
        %5006 = vmatpush1.msra.mxu0 0.0
        %5007 = vmatprep.subr.mxu0 0.0
        %5008 = vmatpush1.msra.mxu0 0.0
        %5009 = vmatprep.subr.mxu0 0.0
        %5010 = vmatpush1.msra.mxu0 0.0
        %5011 = vmatprep.subr.mxu0 0.0
        %5012 = vmatpush1.msra.mxu0 0.0
        %5013 = vmatprep.subr.mxu0 0.0
        %5014 = vmatpush1.msra.mxu0 0.0
        %5015 = vmatprep.subr.mxu0 0.0
        %5016 = vmatpush1.msra.mxu0 0.0
        %5017 = vmatprep.subr.mxu0 0.0
        %5018 = vmatpush1.msra.mxu0 0.0
        %5019 = vmatprep.subr.mxu0 %v4827
        %5020 = vmatpush1.msra.mxu0 %v4826
        %5021 = vmatprep.subr.mxu0 %v4819
        %5022 = vmatpush1.msra.mxu0 %v4818
        %5023 = vmatprep.subr.mxu0 0.0
        %5024 = vmatpush2.msra.mxu0 0.0
        %5025 = vmatprep.subr.mxu0 0.0
        %5026 = vmatpush2.msra.mxu0 0.0
        %5027 = vmatprep.subr.mxu0 0.0
        %5028 = vmatpush2.msra.mxu0 0.0
        %5029 = vmatprep.subr.mxu0 0.0
        %5030 = vmatpush2.msra.mxu0 0.0
        %5031 = vmatprep.subr.mxu0 0.0
        %5032 = vmatpush2.msra.mxu0 0.0
        %5033 = vmatprep.subr.mxu0 0.0
        %5034 = vmatpush2.msra.mxu0 0.0
        %5035 = vmatprep.subr.mxu0 0.0
        %5036 = vmatpush2.msra.mxu0 0.0
        %5037 = vmatprep.subr.mxu0 0.0
        %5038 = vmatpush2.msra.mxu0 0.0
        %5039 = vmatprep.subr.mxu0 0.0
        %5040 = vmatpush2.msra.mxu0 0.0
        %5041 = vmatprep.subr.mxu0 0.0
        %5042 = vmatpush2.msra.mxu0 0.0
        %5043 = vmatprep.subr.mxu0 0.0
        %5044 = vmatpush2.msra.mxu0 0.0
        %5045 = vmatprep.subr.mxu0 0.0
        %5046 = vmatpush2.msra.mxu0 0.0
        %5047 = vmatprep.subr.mxu0 0.0
        %5048 = vmatpush2.msra.mxu0 0.0
        %5049 = vmatprep.subr.mxu0 0.0
        %5050 = vmatpush2.msra.mxu0 0.0
        %5051 = vmatprep.subr.mxu0 0.0
        %5052 = vmatpush2.msra.mxu0 0.0
        %5053 = vmatprep.subr.mxu0 0.0
        %5054 = vmatpush2.msra.mxu0 0.0
        %5055 = vmatprep.mubr.f32.mxu0 0.0
        %5056 = vmatmul.mubr.f32.gmra.mxu0 %v4847
        %v5057 = vpop.f32.mrf.mxu0
        %v5058 = vadd.f32 0.0, %v5057
        %v5059 = vpop.f32.mrf.mxu0
        %v5060 = vadd.f32 0.0, %v5059
        %5061 = vdwg.mxu0
        %5062 = vmatprep.subr.mxu0 0.0
        %5063 = vmatpush1.msra.mxu0 0.0
        %5064 = vmatprep.subr.mxu0 0.0
        %5065 = vmatpush1.msra.mxu0 0.0
        %5066 = vmatprep.subr.mxu0 0.0
        %5067 = vmatpush1.msra.mxu0 0.0
        %5068 = vmatprep.subr.mxu0 0.0
        %5069 = vmatpush1.msra.mxu0 0.0
        %5070 = vmatprep.subr.mxu0 0.0
        %5071 = vmatpush1.msra.mxu0 0.0
        %5072 = vmatprep.subr.mxu0 0.0
        %5073 = vmatpush1.msra.mxu0 0.0
        %5074 = vmatprep.subr.mxu0 0.0
        %5075 = vmatpush1.msra.mxu0 0.0
        %5076 = vmatprep.subr.mxu0 0.0
        %5077 = vmatpush1.msra.mxu0 0.0
        %5078 = vmatprep.subr.mxu0 0.0
        %5079 = vmatpush1.msra.mxu0 0.0
        %5080 = vmatprep.subr.mxu0 0.0
        %5081 = vmatpush1.msra.mxu0 0.0
        %5082 = vmatprep.subr.mxu0 0.0
        %5083 = vmatpush1.msra.mxu0 0.0
        %5084 = vmatprep.subr.mxu0 0.0
        %5085 = vmatpush1.msra.mxu0 0.0
        %5086 = vmatprep.subr.mxu0 0.0
        %5087 = vmatpush1.msra.mxu0 0.0
        %5088 = vmatprep.subr.mxu0 0.0
        %5089 = vmatpush1.msra.mxu0 0.0
        %5090 = vmatprep.subr.mxu0 %v4829
        %5091 = vmatpush1.msra.mxu0 %v4828
        %5092 = vmatprep.subr.mxu0 %v4821
        %5093 = vmatpush1.msra.mxu0 %v4820
        %5094 = vmatprep.subr.mxu0 0.0
        %5095 = vmatpush2.msra.mxu0 0.0
        %5096 = vmatprep.subr.mxu0 0.0
        %5097 = vmatpush2.msra.mxu0 0.0
        %5098 = vmatprep.subr.mxu0 0.0
        %5099 = vmatpush2.msra.mxu0 0.0
        %5100 = vmatprep.subr.mxu0 0.0
        %5101 = vmatpush2.msra.mxu0 0.0
        %5102 = vmatprep.subr.mxu0 0.0
        %5103 = vmatpush2.msra.mxu0 0.0
        %5104 = vmatprep.subr.mxu0 0.0
        %5105 = vmatpush2.msra.mxu0 0.0
        %5106 = vmatprep.subr.mxu0 0.0
        %5107 = vmatpush2.msra.mxu0 0.0
        %5108 = vmatprep.subr.mxu0 0.0
        %5109 = vmatpush2.msra.mxu0 0.0
        %5110 = vmatprep.subr.mxu0 0.0
        %5111 = vmatpush2.msra.mxu0 0.0
        %5112 = vmatprep.subr.mxu0 0.0
        %5113 = vmatpush2.msra.mxu0 0.0
        %5114 = vmatprep.subr.mxu0 0.0
        %5115 = vmatpush2.msra.mxu0 0.0
        %5116 = vmatprep.subr.mxu0 0.0
        %5117 = vmatpush2.msra.mxu0 0.0
        %5118 = vmatprep.subr.mxu0 0.0
        %5119 = vmatpush2.msra.mxu0 0.0
        %5120 = vmatprep.subr.mxu0 0.0
        %5121 = vmatpush2.msra.mxu0 0.0
        %5122 = vmatprep.subr.mxu0 0.0
        %5123 = vmatpush2.msra.mxu0 0.0
        %5124 = vmatprep.subr.mxu0 0.0
        %5125 = vmatpush2.msra.mxu0 0.0
        %5126 = vmatprep.mubr.f32.mxu0 0.0
        %5127 = vmatmul.mubr.f32.gmra.mxu0 %v4847
        %v5128 = vpop.f32.mrf.mxu0
        %v5129 = vadd.f32 0.0, %v5128
        %v5130 = vpop.f32.mrf.mxu0
        %v5131 = vadd.f32 0.0, %v5130
        %5132 = vdwg.mxu0
        %v5133 = vadd.f32 %v4732, %v4916
        %v5134 = vadd.f32 %v4733, %v4918
        %v5135 = vadd.f32 %v4734, %v4987
        %v5136 = vadd.f32 %v4735, %v4989
        %v5137 = vadd.f32 %v4736, %v5058
        %v5138 = vadd.f32 %v4737, %v5060
        %v5139 = vadd.f32 %v4738, %v5129
        %v5140 = vadd.f32 %v4739, %v5131
        %v5141 = vmax.f32 %v5133, 0.0
        %v5142 = vmax.f32 %v5134, 0.0
        %v5143 = vmax.f32 %v5135, 0.0
        %v5144 = vmax.f32 %v5136, 0.0
        %v5145 = vmax.f32 %v5137, 0.0
        %v5146 = vmax.f32 %v5138, 0.0
        %v5147 = vmax.f32 %v5139, 0.0
        %v5148 = vmax.f32 %v5140, 0.0
        %v5149 = vld [vmem:[%s2] sm:$0xff]
        %v5150 = vld [vmem:[%s2 + $0x8] sm:$0xff]
        %v5151 = vld [vmem:[%s2 + $0x10] sm:$0xff]
        %v5152 = vld [vmem:[%s2 + $0x18] sm:$0xff]
        %v5153 = vld [vmem:[%s2 + $0x20] sm:$0xff]
        %v5154 = vld [vmem:[%s2 + $0x28] sm:$0xff]
        %v5155 = vld [vmem:[%s2 + $0x30] sm:$0xff]
        %v5156 = vld [vmem:[%s2 + $0x38] sm:$0xff]
        %v5157 = vlaneseq
        %v5158 = vshrl.u32 %v5157, 7
        %v5159 = vsub.s32 0, %v5158
        %v5160 = vrot.slane %v5141, %v5159
        %v5161 = vlaneseq
        %v5162 = vshrl.u32 %v5161, 7
        %v5163 = vsub.s32 0, %v5162
        %v5164 = vrot.slane %v5142, %v5163
        %v5165 = vlaneseq
        %v5166 = vshrl.u32 %v5165, 7
        %v5167 = vsub.s32 0, %v5166
        %v5168 = vrot.slane %v5143, %v5167
        %v5169 = vlaneseq
        %v5170 = vshrl.u32 %v5169, 7
        %v5171 = vsub.s32 0, %v5170
        %v5172 = vrot.slane %v5144, %v5171
        %v5173 = vlaneseq
        %v5174 = vshrl.u32 %v5173, 7
        %v5175 = vsub.s32 0, %v5174
        %v5176 = vrot.slane %v5145, %v5175
        %v5177 = vlaneseq
        %v5178 = vshrl.u32 %v5177, 7
        %v5179 = vsub.s32 0, %v5178
        %v5180 = vrot.slane %v5146, %v5179
        %v5181 = vlaneseq
        %v5182 = vshrl.u32 %v5181, 7
        %v5183 = vsub.s32 0, %v5182
        %v5184 = vrot.slane %v5147, %v5183
        %v5185 = vlaneseq
        %v5186 = vshrl.u32 %v5185, 7
        %v5187 = vsub.s32 0, %v5186
        %v5188 = vrot.slane %v5148, %v5187
        %v5189 = vmul.f32 %v5149, %v5160
        %v5190 = vmul.f32 %v5150, %v5164
        %v5191 = vmul.f32 %v5151, %v5168
        %v5192 = vmul.f32 %v5152, %v5172
        %v5193 = vmul.f32 %v5153, %v5176
        %v5194 = vmul.f32 %v5154, %v5180
        %v5195 = vmul.f32 %v5155, %v5184
        %v5196 = vmul.f32 %v5156, %v5188
        %v5197 = vld [vmem:[#allocation15] sm:$0xff]
        %v5198 = vld [vmem:[#allocation15 + $0x8] sm:$0xff]
        %v5199 = vld [vmem:[#allocation15 + $0x10] sm:$0xff]
        %v5200 = vld [vmem:[#allocation15 + $0x18] sm:$0xff]
        %v5201 = vld [vmem:[#allocation15 + $0x20] sm:$0xff]
        %v5202 = vld [vmem:[#allocation15 + $0x28] sm:$0xff]
        %v5203 = vld [vmem:[#allocation15 + $0x30] sm:$0xff]
        %v5204 = vld [vmem:[#allocation15 + $0x38] sm:$0xff]
        %v5205 = vld [vmem:[#allocation15 + $0x40] sm:$0xff]
        %v5206 = vld [vmem:[#allocation15 + $0x48] sm:$0xff]
        %v5207 = vld [vmem:[#allocation15 + $0x50] sm:$0xff]
        %v5208 = vld [vmem:[#allocation15 + $0x58] sm:$0xff]
        %v5209 = vld [vmem:[#allocation15 + $0x60] sm:$0xff]
        %v5210 = vld [vmem:[#allocation15 + $0x68] sm:$0xff]
        %v5211 = vld [vmem:[#allocation15 + $0x70] sm:$0xff]
        %v5212 = vld [vmem:[#allocation15 + $0x78] sm:$0xff]
        %v5213 = vld [vmem:[#allocation15 + $0x80] sm:$0xff]
        %v5214 = vld [vmem:[#allocation15 + $0x88] sm:$0xff]
        %v5215 = vld [vmem:[#allocation15 + $0x90] sm:$0xff]
        %v5216 = vld [vmem:[#allocation15 + $0x98] sm:$0xff]
        %v5217 = vld [vmem:[#allocation15 + $0xa0] sm:$0xff]
        %v5218 = vld [vmem:[#allocation15 + $0xa8] sm:$0xff]
        %v5219 = vld [vmem:[#allocation15 + $0xb0] sm:$0xff]
        %v5220 = vld [vmem:[#allocation15 + $0xb8] sm:$0xff]
        %v5221 = vld [vmem:[#allocation15 + $0xc0] sm:$0xff]
        %v5222 = vld [vmem:[#allocation15 + $0xc8] sm:$0xff]
        %v5223 = vld [vmem:[#allocation15 + $0xd0] sm:$0xff]
        %v5224 = vld [vmem:[#allocation15 + $0xd8] sm:$0xff]
        %v5225 = vld [vmem:[#allocation15 + $0xe0] sm:$0xff]
        %v5226 = vld [vmem:[#allocation15 + $0xe8] sm:$0xff]
        %v5227 = vld [vmem:[#allocation15 + $0xf0] sm:$0xff]
        %v5228 = vld [vmem:[#allocation15 + $0xf8] sm:$0xff]
        %v5229 = vlaneseq
        %v5230 = vshrl.u32 %v5229, 7
        %v5231 = vsub.s32 1, %v5230
        %v5232 = vrot.slane %v5141, %v5231
        %v5233 = vlaneseq
        %v5234 = vshrl.u32 %v5233, 7
        %v5235 = vsub.s32 1, %v5234
        %v5236 = vrot.slane %v5142, %v5235
        %v5237 = vlaneseq
        %v5238 = vshrl.u32 %v5237, 7
        %v5239 = vsub.s32 1, %v5238
        %v5240 = vrot.slane %v5143, %v5239
        %v5241 = vlaneseq
        %v5242 = vshrl.u32 %v5241, 7
        %v5243 = vsub.s32 1, %v5242
        %v5244 = vrot.slane %v5144, %v5243
        %v5245 = vlaneseq
        %v5246 = vshrl.u32 %v5245, 7
        %v5247 = vsub.s32 1, %v5246
        %v5248 = vrot.slane %v5145, %v5247
        %v5249 = vlaneseq
        %v5250 = vshrl.u32 %v5249, 7
        %v5251 = vsub.s32 1, %v5250
        %v5252 = vrot.slane %v5146, %v5251
        %v5253 = vlaneseq
        %v5254 = vshrl.u32 %v5253, 7
        %v5255 = vsub.s32 1, %v5254
        %v5256 = vrot.slane %v5147, %v5255
        %v5257 = vlaneseq
        %v5258 = vshrl.u32 %v5257, 7
        %v5259 = vsub.s32 1, %v5258
        %v5260 = vrot.slane %v5148, %v5259
        %v5261 = vmul.f32 %v5149, %v5232
        %v5262 = vmul.f32 %v5150, %v5236
        %v5263 = vmul.f32 %v5151, %v5240
        %v5264 = vmul.f32 %v5152, %v5244
        %v5265 = vmul.f32 %v5153, %v5248
        %v5266 = vmul.f32 %v5154, %v5252
        %v5267 = vmul.f32 %v5155, %v5256
        %v5268 = vmul.f32 %v5156, %v5260
        %s5269 = scalar_lea.vmem [#allocation15], 256
        %v5270 = vld [vmem:[%s5269] sm:$0xff]
        %v5271 = vld [vmem:[%s5269 + $0x8] sm:$0xff]
        %v5272 = vld [vmem:[%s5269 + $0x10] sm:$0xff]
        %v5273 = vld [vmem:[%s5269 + $0x18] sm:$0xff]
        %v5274 = vld [vmem:[%s5269 + $0x20] sm:$0xff]
        %v5275 = vld [vmem:[%s5269 + $0x28] sm:$0xff]
        %v5276 = vld [vmem:[%s5269 + $0x30] sm:$0xff]
        %v5277 = vld [vmem:[%s5269 + $0x38] sm:$0xff]
        %v5278 = vld [vmem:[%s5269 + $0x40] sm:$0xff]
        %v5279 = vld [vmem:[%s5269 + $0x48] sm:$0xff]
        %v5280 = vld [vmem:[%s5269 + $0x50] sm:$0xff]
        %v5281 = vld [vmem:[%s5269 + $0x58] sm:$0xff]
        %v5282 = vld [vmem:[%s5269 + $0x60] sm:$0xff]
        %v5283 = vld [vmem:[%s5269 + $0x68] sm:$0xff]
        %v5284 = vld [vmem:[%s5269 + $0x70] sm:$0xff]
        %v5285 = vld [vmem:[%s5269 + $0x78] sm:$0xff]
        %v5286 = vld [vmem:[%s5269 + $0x80] sm:$0xff]
        %v5287 = vld [vmem:[%s5269 + $0x88] sm:$0xff]
        %v5288 = vld [vmem:[%s5269 + $0x90] sm:$0xff]
        %v5289 = vld [vmem:[%s5269 + $0x98] sm:$0xff]
        %v5290 = vld [vmem:[%s5269 + $0xa0] sm:$0xff]
        %v5291 = vld [vmem:[%s5269 + $0xa8] sm:$0xff]
        %v5292 = vld [vmem:[%s5269 + $0xb0] sm:$0xff]
        %v5293 = vld [vmem:[%s5269 + $0xb8] sm:$0xff]
        %v5294 = vld [vmem:[%s5269 + $0xc0] sm:$0xff]
        %v5295 = vld [vmem:[%s5269 + $0xc8] sm:$0xff]
        %v5296 = vld [vmem:[%s5269 + $0xd0] sm:$0xff]
        %v5297 = vld [vmem:[%s5269 + $0xd8] sm:$0xff]
        %v5298 = vld [vmem:[%s5269 + $0xe0] sm:$0xff]
        %v5299 = vld [vmem:[%s5269 + $0xe8] sm:$0xff]
        %v5300 = vld [vmem:[%s5269 + $0xf0] sm:$0xff]
        %v5301 = vld [vmem:[%s5269 + $0xf8] sm:$0xff]
        %5302 = vmatprep.subr.mxu0 0.0
        %5303 = vmatpush1.xpose.msra.mxu0 0.0
        %5304 = vmatprep.subr.mxu0 0.0
        %5305 = vmatpush1.xpose.msra.mxu0 0.0
        %5306 = vmatprep.subr.mxu0 0.0
        %5307 = vmatpush1.xpose.msra.mxu0 0.0
        %5308 = vmatprep.subr.mxu0 0.0
        %5309 = vmatpush1.xpose.msra.mxu0 0.0
        %5310 = vmatprep.subr.mxu0 0.0
        %5311 = vmatpush1.xpose.msra.mxu0 0.0
        %5312 = vmatprep.subr.mxu0 0.0
        %5313 = vmatpush1.xpose.msra.mxu0 0.0
        %5314 = vmatprep.subr.mxu0 0.0
        %5315 = vmatpush1.xpose.msra.mxu0 0.0
        %5316 = vmatprep.subr.mxu0 0.0
        %5317 = vmatpush1.xpose.msra.mxu0 0.0
        %5318 = vmatprep.subr.mxu0 0.0
        %5319 = vmatpush1.xpose.msra.mxu0 0.0
        %5320 = vmatprep.subr.mxu0 0.0
        %5321 = vmatpush1.xpose.msra.mxu0 0.0
        %5322 = vmatprep.subr.mxu0 0.0
        %5323 = vmatpush1.xpose.msra.mxu0 0.0
        %5324 = vmatprep.subr.mxu0 0.0
        %5325 = vmatpush1.xpose.msra.mxu0 0.0
        %5326 = vmatprep.subr.mxu0 %v5295
        %5327 = vmatpush1.xpose.msra.mxu0 %v5294
        %5328 = vmatprep.subr.mxu0 %v5287
        %5329 = vmatpush1.xpose.msra.mxu0 %v5286
        %5330 = vmatprep.subr.mxu0 %v5279
        %5331 = vmatpush1.xpose.msra.mxu0 %v5278
        %5332 = vmatprep.subr.mxu0 %v5271
        %5333 = vmatpush1.xpose.msra.mxu0 %v5270
        %5334 = vmatprep.subr.mxu0 0.0
        %5335 = vmatpush2.xpose.msra.mxu0 0.0
        %5336 = vmatprep.subr.mxu0 0.0
        %5337 = vmatpush2.xpose.msra.mxu0 0.0
        %5338 = vmatprep.subr.mxu0 0.0
        %5339 = vmatpush2.xpose.msra.mxu0 0.0
        %5340 = vmatprep.subr.mxu0 0.0
        %5341 = vmatpush2.xpose.msra.mxu0 0.0
        %5342 = vmatprep.subr.mxu0 0.0
        %5343 = vmatpush2.xpose.msra.mxu0 0.0
        %5344 = vmatprep.subr.mxu0 0.0
        %5345 = vmatpush2.xpose.msra.mxu0 0.0
        %5346 = vmatprep.subr.mxu0 0.0
        %5347 = vmatpush2.xpose.msra.mxu0 0.0
        %5348 = vmatprep.subr.mxu0 0.0
        %5349 = vmatpush2.xpose.msra.mxu0 0.0
        %5350 = vmatprep.subr.mxu0 0.0
        %5351 = vmatpush2.xpose.msra.mxu0 0.0
        %5352 = vmatprep.subr.mxu0 0.0
        %5353 = vmatpush2.xpose.msra.mxu0 0.0
        %5354 = vmatprep.subr.mxu0 0.0
        %5355 = vmatpush2.xpose.msra.mxu0 0.0
        %5356 = vmatprep.subr.mxu0 0.0
        %5357 = vmatpush2.xpose.msra.mxu0 0.0
        %5358 = vmatprep.subr.mxu0 0.0
        %5359 = vmatpush2.xpose.msra.mxu0 0.0
        %5360 = vmatprep.subr.mxu0 0.0
        %5361 = vmatpush2.xpose.msra.mxu0 0.0
        %5362 = vmatprep.subr.mxu0 0.0
        %5363 = vmatpush2.xpose.msra.mxu0 0.0
        %5364 = vmatprep.subr.mxu0 0.0
        %5365 = vmatpush2.xpose.msra.mxu0 0.0
        %5366 = vmatprep.mubr.f32.mxu0 %v5262
        %5367 = vmatmul.mubr.f32.gmra.mxu0 %v5261
        %v5368 = vpop.f32.mrf.mxu0
        %v5369 = vadd.f32 0.0, %v5368
        %v5370 = vpop.f32.mrf.mxu0
        %5371 = vdwg.mxu0
        %5372 = vmatprep.subr.mxu0 0.0
        %5373 = vmatpush1.xpose.msra.mxu0 0.0
        %5374 = vmatprep.subr.mxu0 0.0
        %5375 = vmatpush1.xpose.msra.mxu0 0.0
        %5376 = vmatprep.subr.mxu0 0.0
        %5377 = vmatpush1.xpose.msra.mxu0 0.0
        %5378 = vmatprep.subr.mxu0 0.0
        %5379 = vmatpush1.xpose.msra.mxu0 0.0
        %5380 = vmatprep.subr.mxu0 0.0
        %5381 = vmatpush1.xpose.msra.mxu0 0.0
        %5382 = vmatprep.subr.mxu0 0.0
        %5383 = vmatpush1.xpose.msra.mxu0 0.0
        %5384 = vmatprep.subr.mxu0 0.0
        %5385 = vmatpush1.xpose.msra.mxu0 0.0
        %5386 = vmatprep.subr.mxu0 0.0
        %5387 = vmatpush1.xpose.msra.mxu0 0.0
        %5388 = vmatprep.subr.mxu0 0.0
        %5389 = vmatpush1.xpose.msra.mxu0 0.0
        %5390 = vmatprep.subr.mxu0 0.0
        %5391 = vmatpush1.xpose.msra.mxu0 0.0
        %5392 = vmatprep.subr.mxu0 0.0
        %5393 = vmatpush1.xpose.msra.mxu0 0.0
        %5394 = vmatprep.subr.mxu0 0.0
        %5395 = vmatpush1.xpose.msra.mxu0 0.0
        %5396 = vmatprep.subr.mxu0 %v5297
        %5397 = vmatpush1.xpose.msra.mxu0 %v5296
        %5398 = vmatprep.subr.mxu0 %v5289
        %5399 = vmatpush1.xpose.msra.mxu0 %v5288
        %5400 = vmatprep.subr.mxu0 %v5281
        %5401 = vmatpush1.xpose.msra.mxu0 %v5280
        %5402 = vmatprep.subr.mxu0 %v5273
        %5403 = vmatpush1.xpose.msra.mxu0 %v5272
        %5404 = vmatprep.subr.mxu0 0.0
        %5405 = vmatpush2.xpose.msra.mxu0 0.0
        %5406 = vmatprep.subr.mxu0 0.0
        %5407 = vmatpush2.xpose.msra.mxu0 0.0
        %5408 = vmatprep.subr.mxu0 0.0
        %5409 = vmatpush2.xpose.msra.mxu0 0.0
        %5410 = vmatprep.subr.mxu0 0.0
        %5411 = vmatpush2.xpose.msra.mxu0 0.0
        %5412 = vmatprep.subr.mxu0 0.0
        %5413 = vmatpush2.xpose.msra.mxu0 0.0
        %5414 = vmatprep.subr.mxu0 0.0
        %5415 = vmatpush2.xpose.msra.mxu0 0.0
        %5416 = vmatprep.subr.mxu0 0.0
        %5417 = vmatpush2.xpose.msra.mxu0 0.0
        %5418 = vmatprep.subr.mxu0 0.0
        %5419 = vmatpush2.xpose.msra.mxu0 0.0
        %5420 = vmatprep.subr.mxu0 0.0
        %5421 = vmatpush2.xpose.msra.mxu0 0.0
        %5422 = vmatprep.subr.mxu0 0.0
        %5423 = vmatpush2.xpose.msra.mxu0 0.0
        %5424 = vmatprep.subr.mxu0 0.0
        %5425 = vmatpush2.xpose.msra.mxu0 0.0
        %5426 = vmatprep.subr.mxu0 0.0
        %5427 = vmatpush2.xpose.msra.mxu0 0.0
        %5428 = vmatprep.subr.mxu0 0.0
        %5429 = vmatpush2.xpose.msra.mxu0 0.0
        %5430 = vmatprep.subr.mxu0 0.0
        %5431 = vmatpush2.xpose.msra.mxu0 0.0
        %5432 = vmatprep.subr.mxu0 0.0
        %5433 = vmatpush2.xpose.msra.mxu0 0.0
        %5434 = vmatprep.subr.mxu0 0.0
        %5435 = vmatpush2.xpose.msra.mxu0 0.0
        %5436 = vmatprep.mubr.f32.mxu0 %v5264
        %5437 = vmatmul.mubr.f32.gmra.mxu0 %v5263
        %v5438 = vpop.f32.mrf.mxu0
        %v5439 = vadd.f32 %v5369, %v5438
        %v5440 = vpop.f32.mrf.mxu0
        %5441 = vdwg.mxu0
        %5442 = vmatprep.subr.mxu0 0.0
        %5443 = vmatpush1.xpose.msra.mxu0 0.0
        %5444 = vmatprep.subr.mxu0 0.0
        %5445 = vmatpush1.xpose.msra.mxu0 0.0
        %5446 = vmatprep.subr.mxu0 0.0
        %5447 = vmatpush1.xpose.msra.mxu0 0.0
        %5448 = vmatprep.subr.mxu0 0.0
        %5449 = vmatpush1.xpose.msra.mxu0 0.0
        %5450 = vmatprep.subr.mxu0 0.0
        %5451 = vmatpush1.xpose.msra.mxu0 0.0
        %5452 = vmatprep.subr.mxu0 0.0
        %5453 = vmatpush1.xpose.msra.mxu0 0.0
        %5454 = vmatprep.subr.mxu0 0.0
        %5455 = vmatpush1.xpose.msra.mxu0 0.0
        %5456 = vmatprep.subr.mxu0 0.0
        %5457 = vmatpush1.xpose.msra.mxu0 0.0
        %5458 = vmatprep.subr.mxu0 0.0
        %5459 = vmatpush1.xpose.msra.mxu0 0.0
        %5460 = vmatprep.subr.mxu0 0.0
        %5461 = vmatpush1.xpose.msra.mxu0 0.0
        %5462 = vmatprep.subr.mxu0 0.0
        %5463 = vmatpush1.xpose.msra.mxu0 0.0
        %5464 = vmatprep.subr.mxu0 0.0
        %5465 = vmatpush1.xpose.msra.mxu0 0.0
        %5466 = vmatprep.subr.mxu0 %v5299
        %5467 = vmatpush1.xpose.msra.mxu0 %v5298
        %5468 = vmatprep.subr.mxu0 %v5291
        %5469 = vmatpush1.xpose.msra.mxu0 %v5290
        %5470 = vmatprep.subr.mxu0 %v5283
        %5471 = vmatpush1.xpose.msra.mxu0 %v5282
        %5472 = vmatprep.subr.mxu0 %v5275
        %5473 = vmatpush1.xpose.msra.mxu0 %v5274
        %5474 = vmatprep.subr.mxu0 0.0
        %5475 = vmatpush2.xpose.msra.mxu0 0.0
        %5476 = vmatprep.subr.mxu0 0.0
        %5477 = vmatpush2.xpose.msra.mxu0 0.0
        %5478 = vmatprep.subr.mxu0 0.0
        %5479 = vmatpush2.xpose.msra.mxu0 0.0
        %5480 = vmatprep.subr.mxu0 0.0
        %5481 = vmatpush2.xpose.msra.mxu0 0.0
        %5482 = vmatprep.subr.mxu0 0.0
        %5483 = vmatpush2.xpose.msra.mxu0 0.0
        %5484 = vmatprep.subr.mxu0 0.0
        %5485 = vmatpush2.xpose.msra.mxu0 0.0
        %5486 = vmatprep.subr.mxu0 0.0
        %5487 = vmatpush2.xpose.msra.mxu0 0.0
        %5488 = vmatprep.subr.mxu0 0.0
        %5489 = vmatpush2.xpose.msra.mxu0 0.0
        %5490 = vmatprep.subr.mxu0 0.0
        %5491 = vmatpush2.xpose.msra.mxu0 0.0
        %5492 = vmatprep.subr.mxu0 0.0
        %5493 = vmatpush2.xpose.msra.mxu0 0.0
        %5494 = vmatprep.subr.mxu0 0.0
        %5495 = vmatpush2.xpose.msra.mxu0 0.0
        %5496 = vmatprep.subr.mxu0 0.0
        %5497 = vmatpush2.xpose.msra.mxu0 0.0
        %5498 = vmatprep.subr.mxu0 0.0
        %5499 = vmatpush2.xpose.msra.mxu0 0.0
        %5500 = vmatprep.subr.mxu0 0.0
        %5501 = vmatpush2.xpose.msra.mxu0 0.0
        %5502 = vmatprep.subr.mxu0 0.0
        %5503 = vmatpush2.xpose.msra.mxu0 0.0
        %5504 = vmatprep.subr.mxu0 0.0
        %5505 = vmatpush2.xpose.msra.mxu0 0.0
        %5506 = vmatprep.mubr.f32.mxu0 %v5266
        %5507 = vmatmul.mubr.f32.gmra.mxu0 %v5265
        %v5508 = vpop.f32.mrf.mxu0
        %v5509 = vadd.f32 %v5439, %v5508
        %v5510 = vpop.f32.mrf.mxu0
        %5511 = vdwg.mxu0
        %5512 = vmatprep.subr.mxu0 0.0
        %5513 = vmatpush1.xpose.msra.mxu0 0.0
        %5514 = vmatprep.subr.mxu0 0.0
        %5515 = vmatpush1.xpose.msra.mxu0 0.0
        %5516 = vmatprep.subr.mxu0 0.0
        %5517 = vmatpush1.xpose.msra.mxu0 0.0
        %5518 = vmatprep.subr.mxu0 0.0
        %5519 = vmatpush1.xpose.msra.mxu0 0.0
        %5520 = vmatprep.subr.mxu0 0.0
        %5521 = vmatpush1.xpose.msra.mxu0 0.0
        %5522 = vmatprep.subr.mxu0 0.0
        %5523 = vmatpush1.xpose.msra.mxu0 0.0
        %5524 = vmatprep.subr.mxu0 0.0
        %5525 = vmatpush1.xpose.msra.mxu0 0.0
        %5526 = vmatprep.subr.mxu0 0.0
        %5527 = vmatpush1.xpose.msra.mxu0 0.0
        %5528 = vmatprep.subr.mxu0 0.0
        %5529 = vmatpush1.xpose.msra.mxu0 0.0
        %5530 = vmatprep.subr.mxu0 0.0
        %5531 = vmatpush1.xpose.msra.mxu0 0.0
        %5532 = vmatprep.subr.mxu0 0.0
        %5533 = vmatpush1.xpose.msra.mxu0 0.0
        %5534 = vmatprep.subr.mxu0 0.0
        %5535 = vmatpush1.xpose.msra.mxu0 0.0
        %5536 = vmatprep.subr.mxu0 %v5301
        %5537 = vmatpush1.xpose.msra.mxu0 %v5300
        %5538 = vmatprep.subr.mxu0 %v5293
        %5539 = vmatpush1.xpose.msra.mxu0 %v5292
        %5540 = vmatprep.subr.mxu0 %v5285
        %5541 = vmatpush1.xpose.msra.mxu0 %v5284
        %5542 = vmatprep.subr.mxu0 %v5277
        %5543 = vmatpush1.xpose.msra.mxu0 %v5276
        %5544 = vmatprep.subr.mxu0 0.0
        %5545 = vmatpush2.xpose.msra.mxu0 0.0
        %5546 = vmatprep.subr.mxu0 0.0
        %5547 = vmatpush2.xpose.msra.mxu0 0.0
        %5548 = vmatprep.subr.mxu0 0.0
        %5549 = vmatpush2.xpose.msra.mxu0 0.0
        %5550 = vmatprep.subr.mxu0 0.0
        %5551 = vmatpush2.xpose.msra.mxu0 0.0
        %5552 = vmatprep.subr.mxu0 0.0
        %5553 = vmatpush2.xpose.msra.mxu0 0.0
        %5554 = vmatprep.subr.mxu0 0.0
        %5555 = vmatpush2.xpose.msra.mxu0 0.0
        %5556 = vmatprep.subr.mxu0 0.0
        %5557 = vmatpush2.xpose.msra.mxu0 0.0
        %5558 = vmatprep.subr.mxu0 0.0
        %5559 = vmatpush2.xpose.msra.mxu0 0.0
        %5560 = vmatprep.subr.mxu0 0.0
        %5561 = vmatpush2.xpose.msra.mxu0 0.0
        %5562 = vmatprep.subr.mxu0 0.0
        %5563 = vmatpush2.xpose.msra.mxu0 0.0
        %5564 = vmatprep.subr.mxu0 0.0
        %5565 = vmatpush2.xpose.msra.mxu0 0.0
        %5566 = vmatprep.subr.mxu0 0.0
        %5567 = vmatpush2.xpose.msra.mxu0 0.0
        %5568 = vmatprep.subr.mxu0 0.0
        %5569 = vmatpush2.xpose.msra.mxu0 0.0
        %5570 = vmatprep.subr.mxu0 0.0
        %5571 = vmatpush2.xpose.msra.mxu0 0.0
        %5572 = vmatprep.subr.mxu0 0.0
        %5573 = vmatpush2.xpose.msra.mxu0 0.0
        %5574 = vmatprep.subr.mxu0 0.0
        %5575 = vmatpush2.xpose.msra.mxu0 0.0
        %5576 = vmatprep.mubr.f32.mxu0 %v5268
        %5577 = vmatmul.mubr.f32.gmra.mxu0 %v5267
        %v5578 = vpop.f32.mrf.mxu0
        %v5579 = vadd.f32 %v5509, %v5578
        %v5580 = vpop.f32.mrf.mxu0
        %5581 = vdwg.mxu0
        %5582 = vmatprep.subr.mxu0 0.0
        %5583 = vmatpush1.xpose.msra.mxu0 0.0
        %5584 = vmatprep.subr.mxu0 0.0
        %5585 = vmatpush1.xpose.msra.mxu0 0.0
        %5586 = vmatprep.subr.mxu0 0.0
        %5587 = vmatpush1.xpose.msra.mxu0 0.0
        %5588 = vmatprep.subr.mxu0 0.0
        %5589 = vmatpush1.xpose.msra.mxu0 0.0
        %5590 = vmatprep.subr.mxu0 0.0
        %5591 = vmatpush1.xpose.msra.mxu0 0.0
        %5592 = vmatprep.subr.mxu0 0.0
        %5593 = vmatpush1.xpose.msra.mxu0 0.0
        %5594 = vmatprep.subr.mxu0 0.0
        %5595 = vmatpush1.xpose.msra.mxu0 0.0
        %5596 = vmatprep.subr.mxu0 0.0
        %5597 = vmatpush1.xpose.msra.mxu0 0.0
        %5598 = vmatprep.subr.mxu0 0.0
        %5599 = vmatpush1.xpose.msra.mxu0 0.0
        %5600 = vmatprep.subr.mxu0 0.0
        %5601 = vmatpush1.xpose.msra.mxu0 0.0
        %5602 = vmatprep.subr.mxu0 0.0
        %5603 = vmatpush1.xpose.msra.mxu0 0.0
        %5604 = vmatprep.subr.mxu0 0.0
        %5605 = vmatpush1.xpose.msra.mxu0 0.0
        %5606 = vmatprep.subr.mxu0 %v5222
        %5607 = vmatpush1.xpose.msra.mxu0 %v5221
        %5608 = vmatprep.subr.mxu0 %v5214
        %5609 = vmatpush1.xpose.msra.mxu0 %v5213
        %5610 = vmatprep.subr.mxu0 %v5206
        %5611 = vmatpush1.xpose.msra.mxu0 %v5205
        %5612 = vmatprep.subr.mxu0 %v5198
        %5613 = vmatpush1.xpose.msra.mxu0 %v5197
        %5614 = vmatprep.subr.mxu0 0.0
        %5615 = vmatpush2.xpose.msra.mxu0 0.0
        %5616 = vmatprep.subr.mxu0 0.0
        %5617 = vmatpush2.xpose.msra.mxu0 0.0
        %5618 = vmatprep.subr.mxu0 0.0
        %5619 = vmatpush2.xpose.msra.mxu0 0.0
        %5620 = vmatprep.subr.mxu0 0.0
        %5621 = vmatpush2.xpose.msra.mxu0 0.0
        %5622 = vmatprep.subr.mxu0 0.0
        %5623 = vmatpush2.xpose.msra.mxu0 0.0
        %5624 = vmatprep.subr.mxu0 0.0
        %5625 = vmatpush2.xpose.msra.mxu0 0.0
        %5626 = vmatprep.subr.mxu0 0.0
        %5627 = vmatpush2.xpose.msra.mxu0 0.0
        %5628 = vmatprep.subr.mxu0 0.0
        %5629 = vmatpush2.xpose.msra.mxu0 0.0
        %5630 = vmatprep.subr.mxu0 0.0
        %5631 = vmatpush2.xpose.msra.mxu0 0.0
        %5632 = vmatprep.subr.mxu0 0.0
        %5633 = vmatpush2.xpose.msra.mxu0 0.0
        %5634 = vmatprep.subr.mxu0 0.0
        %5635 = vmatpush2.xpose.msra.mxu0 0.0
        %5636 = vmatprep.subr.mxu0 0.0
        %5637 = vmatpush2.xpose.msra.mxu0 0.0
        %5638 = vmatprep.subr.mxu0 0.0
        %5639 = vmatpush2.xpose.msra.mxu0 0.0
        %5640 = vmatprep.subr.mxu0 0.0
        %5641 = vmatpush2.xpose.msra.mxu0 0.0
        %5642 = vmatprep.subr.mxu0 0.0
        %5643 = vmatpush2.xpose.msra.mxu0 0.0
        %5644 = vmatprep.subr.mxu0 0.0
        %5645 = vmatpush2.xpose.msra.mxu0 0.0
        %5646 = vmatprep.mubr.f32.mxu0 %v5190
        %5647 = vmatmul.mubr.f32.gmra.mxu0 %v5189
        %v5648 = vpop.f32.mrf.mxu0
        %v5649 = vadd.f32 %v5579, %v5648
        %v5650 = vpop.f32.mrf.mxu0
        %5651 = vdwg.mxu0
        %5652 = vmatprep.subr.mxu0 0.0
        %5653 = vmatpush1.xpose.msra.mxu0 0.0
        %5654 = vmatprep.subr.mxu0 0.0
        %5655 = vmatpush1.xpose.msra.mxu0 0.0
        %5656 = vmatprep.subr.mxu0 0.0
        %5657 = vmatpush1.xpose.msra.mxu0 0.0
        %5658 = vmatprep.subr.mxu0 0.0
        %5659 = vmatpush1.xpose.msra.mxu0 0.0
        %5660 = vmatprep.subr.mxu0 0.0
        %5661 = vmatpush1.xpose.msra.mxu0 0.0
        %5662 = vmatprep.subr.mxu0 0.0
        %5663 = vmatpush1.xpose.msra.mxu0 0.0
        %5664 = vmatprep.subr.mxu0 0.0
        %5665 = vmatpush1.xpose.msra.mxu0 0.0
        %5666 = vmatprep.subr.mxu0 0.0
        %5667 = vmatpush1.xpose.msra.mxu0 0.0
        %5668 = vmatprep.subr.mxu0 0.0
        %5669 = vmatpush1.xpose.msra.mxu0 0.0
        %5670 = vmatprep.subr.mxu0 0.0
        %5671 = vmatpush1.xpose.msra.mxu0 0.0
        %5672 = vmatprep.subr.mxu0 0.0
        %5673 = vmatpush1.xpose.msra.mxu0 0.0
        %5674 = vmatprep.subr.mxu0 0.0
        %5675 = vmatpush1.xpose.msra.mxu0 0.0
        %5676 = vmatprep.subr.mxu0 %v5224
        %5677 = vmatpush1.xpose.msra.mxu0 %v5223
        %5678 = vmatprep.subr.mxu0 %v5216
        %5679 = vmatpush1.xpose.msra.mxu0 %v5215
        %5680 = vmatprep.subr.mxu0 %v5208
        %5681 = vmatpush1.xpose.msra.mxu0 %v5207
        %5682 = vmatprep.subr.mxu0 %v5200
        %5683 = vmatpush1.xpose.msra.mxu0 %v5199
        %5684 = vmatprep.subr.mxu0 0.0
        %5685 = vmatpush2.xpose.msra.mxu0 0.0
        %5686 = vmatprep.subr.mxu0 0.0
        %5687 = vmatpush2.xpose.msra.mxu0 0.0
        %5688 = vmatprep.subr.mxu0 0.0
        %5689 = vmatpush2.xpose.msra.mxu0 0.0
        %5690 = vmatprep.subr.mxu0 0.0
        %5691 = vmatpush2.xpose.msra.mxu0 0.0
        %5692 = vmatprep.subr.mxu0 0.0
        %5693 = vmatpush2.xpose.msra.mxu0 0.0
        %5694 = vmatprep.subr.mxu0 0.0
        %5695 = vmatpush2.xpose.msra.mxu0 0.0
        %5696 = vmatprep.subr.mxu0 0.0
        %5697 = vmatpush2.xpose.msra.mxu0 0.0
        %5698 = vmatprep.subr.mxu0 0.0
        %5699 = vmatpush2.xpose.msra.mxu0 0.0
        %5700 = vmatprep.subr.mxu0 0.0
        %5701 = vmatpush2.xpose.msra.mxu0 0.0
        %5702 = vmatprep.subr.mxu0 0.0
        %5703 = vmatpush2.xpose.msra.mxu0 0.0
        %5704 = vmatprep.subr.mxu0 0.0
        %5705 = vmatpush2.xpose.msra.mxu0 0.0
        %5706 = vmatprep.subr.mxu0 0.0
        %5707 = vmatpush2.xpose.msra.mxu0 0.0
        %5708 = vmatprep.subr.mxu0 0.0
        %5709 = vmatpush2.xpose.msra.mxu0 0.0
        %5710 = vmatprep.subr.mxu0 0.0
        %5711 = vmatpush2.xpose.msra.mxu0 0.0
        %5712 = vmatprep.subr.mxu0 0.0
        %5713 = vmatpush2.xpose.msra.mxu0 0.0
        %5714 = vmatprep.subr.mxu0 0.0
        %5715 = vmatpush2.xpose.msra.mxu0 0.0
        %5716 = vmatprep.mubr.f32.mxu0 %v5192
        %5717 = vmatmul.mubr.f32.gmra.mxu0 %v5191
        %v5718 = vpop.f32.mrf.mxu0
        %v5719 = vadd.f32 %v5649, %v5718
        %v5720 = vpop.f32.mrf.mxu0
        %5721 = vdwg.mxu0
        %5722 = vmatprep.subr.mxu0 0.0
        %5723 = vmatpush1.xpose.msra.mxu0 0.0
        %5724 = vmatprep.subr.mxu0 0.0
        %5725 = vmatpush1.xpose.msra.mxu0 0.0
        %5726 = vmatprep.subr.mxu0 0.0
        %5727 = vmatpush1.xpose.msra.mxu0 0.0
        %5728 = vmatprep.subr.mxu0 0.0
        %5729 = vmatpush1.xpose.msra.mxu0 0.0
        %5730 = vmatprep.subr.mxu0 0.0
        %5731 = vmatpush1.xpose.msra.mxu0 0.0
        %5732 = vmatprep.subr.mxu0 0.0
        %5733 = vmatpush1.xpose.msra.mxu0 0.0
        %5734 = vmatprep.subr.mxu0 0.0
        %5735 = vmatpush1.xpose.msra.mxu0 0.0
        %5736 = vmatprep.subr.mxu0 0.0
        %5737 = vmatpush1.xpose.msra.mxu0 0.0
        %5738 = vmatprep.subr.mxu0 0.0
        %5739 = vmatpush1.xpose.msra.mxu0 0.0
        %5740 = vmatprep.subr.mxu0 0.0
        %5741 = vmatpush1.xpose.msra.mxu0 0.0
        %5742 = vmatprep.subr.mxu0 0.0
        %5743 = vmatpush1.xpose.msra.mxu0 0.0
        %5744 = vmatprep.subr.mxu0 0.0
        %5745 = vmatpush1.xpose.msra.mxu0 0.0
        %5746 = vmatprep.subr.mxu0 %v5226
        %5747 = vmatpush1.xpose.msra.mxu0 %v5225
        %5748 = vmatprep.subr.mxu0 %v5218
        %5749 = vmatpush1.xpose.msra.mxu0 %v5217
        %5750 = vmatprep.subr.mxu0 %v5210
        %5751 = vmatpush1.xpose.msra.mxu0 %v5209
        %5752 = vmatprep.subr.mxu0 %v5202
        %5753 = vmatpush1.xpose.msra.mxu0 %v5201
        %5754 = vmatprep.subr.mxu0 0.0
        %5755 = vmatpush2.xpose.msra.mxu0 0.0
        %5756 = vmatprep.subr.mxu0 0.0
        %5757 = vmatpush2.xpose.msra.mxu0 0.0
        %5758 = vmatprep.subr.mxu0 0.0
        %5759 = vmatpush2.xpose.msra.mxu0 0.0
        %5760 = vmatprep.subr.mxu0 0.0
        %5761 = vmatpush2.xpose.msra.mxu0 0.0
        %5762 = vmatprep.subr.mxu0 0.0
        %5763 = vmatpush2.xpose.msra.mxu0 0.0
        %5764 = vmatprep.subr.mxu0 0.0
        %5765 = vmatpush2.xpose.msra.mxu0 0.0
        %5766 = vmatprep.subr.mxu0 0.0
        %5767 = vmatpush2.xpose.msra.mxu0 0.0
        %5768 = vmatprep.subr.mxu0 0.0
        %5769 = vmatpush2.xpose.msra.mxu0 0.0
        %5770 = vmatprep.subr.mxu0 0.0
        %5771 = vmatpush2.xpose.msra.mxu0 0.0
        %5772 = vmatprep.subr.mxu0 0.0
        %5773 = vmatpush2.xpose.msra.mxu0 0.0
        %5774 = vmatprep.subr.mxu0 0.0
        %5775 = vmatpush2.xpose.msra.mxu0 0.0
        %5776 = vmatprep.subr.mxu0 0.0
        %5777 = vmatpush2.xpose.msra.mxu0 0.0
        %5778 = vmatprep.subr.mxu0 0.0
        %5779 = vmatpush2.xpose.msra.mxu0 0.0
        %5780 = vmatprep.subr.mxu0 0.0
        %5781 = vmatpush2.xpose.msra.mxu0 0.0
        %5782 = vmatprep.subr.mxu0 0.0
        %5783 = vmatpush2.xpose.msra.mxu0 0.0
        %5784 = vmatprep.subr.mxu0 0.0
        %5785 = vmatpush2.xpose.msra.mxu0 0.0
        %5786 = vmatprep.mubr.f32.mxu0 %v5194
        %5787 = vmatmul.mubr.f32.gmra.mxu0 %v5193
        %v5788 = vpop.f32.mrf.mxu0
        %v5789 = vadd.f32 %v5719, %v5788
        %v5790 = vpop.f32.mrf.mxu0
        %5791 = vdwg.mxu0
        %5792 = vmatprep.subr.mxu0 0.0
        %5793 = vmatpush1.xpose.msra.mxu0 0.0
        %5794 = vmatprep.subr.mxu0 0.0
        %5795 = vmatpush1.xpose.msra.mxu0 0.0
        %5796 = vmatprep.subr.mxu0 0.0
        %5797 = vmatpush1.xpose.msra.mxu0 0.0
        %5798 = vmatprep.subr.mxu0 0.0
        %5799 = vmatpush1.xpose.msra.mxu0 0.0
        %5800 = vmatprep.subr.mxu0 0.0
        %5801 = vmatpush1.xpose.msra.mxu0 0.0
        %5802 = vmatprep.subr.mxu0 0.0
        %5803 = vmatpush1.xpose.msra.mxu0 0.0
        %5804 = vmatprep.subr.mxu0 0.0
        %5805 = vmatpush1.xpose.msra.mxu0 0.0
        %5806 = vmatprep.subr.mxu0 0.0
        %5807 = vmatpush1.xpose.msra.mxu0 0.0
        %5808 = vmatprep.subr.mxu0 0.0
        %5809 = vmatpush1.xpose.msra.mxu0 0.0
        %5810 = vmatprep.subr.mxu0 0.0
        %5811 = vmatpush1.xpose.msra.mxu0 0.0
        %5812 = vmatprep.subr.mxu0 0.0
        %5813 = vmatpush1.xpose.msra.mxu0 0.0
        %5814 = vmatprep.subr.mxu0 0.0
        %5815 = vmatpush1.xpose.msra.mxu0 0.0
        %5816 = vmatprep.subr.mxu0 %v5228
        %5817 = vmatpush1.xpose.msra.mxu0 %v5227
        %5818 = vmatprep.subr.mxu0 %v5220
        %5819 = vmatpush1.xpose.msra.mxu0 %v5219
        %5820 = vmatprep.subr.mxu0 %v5212
        %5821 = vmatpush1.xpose.msra.mxu0 %v5211
        %5822 = vmatprep.subr.mxu0 %v5204
        %5823 = vmatpush1.xpose.msra.mxu0 %v5203
        %5824 = vmatprep.subr.mxu0 0.0
        %5825 = vmatpush2.xpose.msra.mxu0 0.0
        %5826 = vmatprep.subr.mxu0 0.0
        %5827 = vmatpush2.xpose.msra.mxu0 0.0
        %5828 = vmatprep.subr.mxu0 0.0
        %5829 = vmatpush2.xpose.msra.mxu0 0.0
        %5830 = vmatprep.subr.mxu0 0.0
        %5831 = vmatpush2.xpose.msra.mxu0 0.0
        %5832 = vmatprep.subr.mxu0 0.0
        %5833 = vmatpush2.xpose.msra.mxu0 0.0
        %5834 = vmatprep.subr.mxu0 0.0
        %5835 = vmatpush2.xpose.msra.mxu0 0.0
        %5836 = vmatprep.subr.mxu0 0.0
        %5837 = vmatpush2.xpose.msra.mxu0 0.0
        %5838 = vmatprep.subr.mxu0 0.0
        %5839 = vmatpush2.xpose.msra.mxu0 0.0
        %5840 = vmatprep.subr.mxu0 0.0
        %5841 = vmatpush2.xpose.msra.mxu0 0.0
        %5842 = vmatprep.subr.mxu0 0.0
        %5843 = vmatpush2.xpose.msra.mxu0 0.0
        %5844 = vmatprep.subr.mxu0 0.0
        %5845 = vmatpush2.xpose.msra.mxu0 0.0
        %5846 = vmatprep.subr.mxu0 0.0
        %5847 = vmatpush2.xpose.msra.mxu0 0.0
        %5848 = vmatprep.subr.mxu0 0.0
        %5849 = vmatpush2.xpose.msra.mxu0 0.0
        %5850 = vmatprep.subr.mxu0 0.0
        %5851 = vmatpush2.xpose.msra.mxu0 0.0
        %5852 = vmatprep.subr.mxu0 0.0
        %5853 = vmatpush2.xpose.msra.mxu0 0.0
        %5854 = vmatprep.subr.mxu0 0.0
        %5855 = vmatpush2.xpose.msra.mxu0 0.0
        %5856 = vmatprep.mubr.f32.mxu0 %v5196
        %5857 = vmatmul.mubr.f32.gmra.mxu0 %v5195
        %v5858 = vpop.f32.mrf.mxu0
        %v5859 = vadd.f32 %v5789, %v5858
        %v5860 = vpop.f32.mrf.mxu0
        %5861 = vdwg.mxu0
        %v5862 = vlaneseq
        %v5863 = vshrl.u32 %v5862, 7
        %v5864 = vsub.s32 2, %v5863
        %v5865 = vrot.slane %v5141, %v5864
        %v5866 = vlaneseq
        %v5867 = vshrl.u32 %v5866, 7
        %v5868 = vsub.s32 2, %v5867
        %v5869 = vrot.slane %v5142, %v5868
        %v5870 = vlaneseq
        %v5871 = vshrl.u32 %v5870, 7
        %v5872 = vsub.s32 2, %v5871
        %v5873 = vrot.slane %v5143, %v5872
        %v5874 = vlaneseq
        %v5875 = vshrl.u32 %v5874, 7
        %v5876 = vsub.s32 2, %v5875
        %v5877 = vrot.slane %v5144, %v5876
        %v5878 = vlaneseq
        %v5879 = vshrl.u32 %v5878, 7
        %v5880 = vsub.s32 2, %v5879
        %v5881 = vrot.slane %v5145, %v5880
        %v5882 = vlaneseq
        %v5883 = vshrl.u32 %v5882, 7
        %v5884 = vsub.s32 2, %v5883
        %v5885 = vrot.slane %v5146, %v5884
        %v5886 = vlaneseq
        %v5887 = vshrl.u32 %v5886, 7
        %v5888 = vsub.s32 2, %v5887
        %v5889 = vrot.slane %v5147, %v5888
        %v5890 = vlaneseq
        %v5891 = vshrl.u32 %v5890, 7
        %v5892 = vsub.s32 2, %v5891
        %v5893 = vrot.slane %v5148, %v5892
        %v5894 = vmul.f32 %v5149, %v5865
        %v5895 = vmul.f32 %v5150, %v5869
        %v5896 = vmul.f32 %v5151, %v5873
        %v5897 = vmul.f32 %v5152, %v5877
        %v5898 = vmul.f32 %v5153, %v5881
        %v5899 = vmul.f32 %v5154, %v5885
        %v5900 = vmul.f32 %v5155, %v5889
        %v5901 = vmul.f32 %v5156, %v5893
        %s5902 = scalar_lea.vmem [#allocation15], 512
        %v5903 = vld [vmem:[%s5902] sm:$0xff]
        %v5904 = vld [vmem:[%s5902 + $0x8] sm:$0xff]
        %v5905 = vld [vmem:[%s5902 + $0x10] sm:$0xff]
        %v5906 = vld [vmem:[%s5902 + $0x18] sm:$0xff]
        %v5907 = vld [vmem:[%s5902 + $0x20] sm:$0xff]
        %v5908 = vld [vmem:[%s5902 + $0x28] sm:$0xff]
        %v5909 = vld [vmem:[%s5902 + $0x30] sm:$0xff]
        %v5910 = vld [vmem:[%s5902 + $0x38] sm:$0xff]
        %v5911 = vld [vmem:[%s5902 + $0x40] sm:$0xff]
        %v5912 = vld [vmem:[%s5902 + $0x48] sm:$0xff]
        %v5913 = vld [vmem:[%s5902 + $0x50] sm:$0xff]
        %v5914 = vld [vmem:[%s5902 + $0x58] sm:$0xff]
        %v5915 = vld [vmem:[%s5902 + $0x60] sm:$0xff]
        %v5916 = vld [vmem:[%s5902 + $0x68] sm:$0xff]
        %v5917 = vld [vmem:[%s5902 + $0x70] sm:$0xff]
        %v5918 = vld [vmem:[%s5902 + $0x78] sm:$0xff]
        %v5919 = vld [vmem:[%s5902 + $0x80] sm:$0xff]
        %v5920 = vld [vmem:[%s5902 + $0x88] sm:$0xff]
        %v5921 = vld [vmem:[%s5902 + $0x90] sm:$0xff]
        %v5922 = vld [vmem:[%s5902 + $0x98] sm:$0xff]
        %v5923 = vld [vmem:[%s5902 + $0xa0] sm:$0xff]
        %v5924 = vld [vmem:[%s5902 + $0xa8] sm:$0xff]
        %v5925 = vld [vmem:[%s5902 + $0xb0] sm:$0xff]
        %v5926 = vld [vmem:[%s5902 + $0xb8] sm:$0xff]
        %v5927 = vld [vmem:[%s5902 + $0xc0] sm:$0xff]
        %v5928 = vld [vmem:[%s5902 + $0xc8] sm:$0xff]
        %v5929 = vld [vmem:[%s5902 + $0xd0] sm:$0xff]
        %v5930 = vld [vmem:[%s5902 + $0xd8] sm:$0xff]
        %v5931 = vld [vmem:[%s5902 + $0xe0] sm:$0xff]
        %v5932 = vld [vmem:[%s5902 + $0xe8] sm:$0xff]
        %v5933 = vld [vmem:[%s5902 + $0xf0] sm:$0xff]
        %v5934 = vld [vmem:[%s5902 + $0xf8] sm:$0xff]
        %5935 = vmatprep.subr.mxu0 0.0
        %5936 = vmatpush1.xpose.msra.mxu0 0.0
        %5937 = vmatprep.subr.mxu0 0.0
        %5938 = vmatpush1.xpose.msra.mxu0 0.0
        %5939 = vmatprep.subr.mxu0 0.0
        %5940 = vmatpush1.xpose.msra.mxu0 0.0
        %5941 = vmatprep.subr.mxu0 0.0
        %5942 = vmatpush1.xpose.msra.mxu0 0.0
        %5943 = vmatprep.subr.mxu0 0.0
        %5944 = vmatpush1.xpose.msra.mxu0 0.0
        %5945 = vmatprep.subr.mxu0 0.0
        %5946 = vmatpush1.xpose.msra.mxu0 0.0
        %5947 = vmatprep.subr.mxu0 0.0
        %5948 = vmatpush1.xpose.msra.mxu0 0.0
        %5949 = vmatprep.subr.mxu0 0.0
        %5950 = vmatpush1.xpose.msra.mxu0 0.0
        %5951 = vmatprep.subr.mxu0 0.0
        %5952 = vmatpush1.xpose.msra.mxu0 0.0
        %5953 = vmatprep.subr.mxu0 0.0
        %5954 = vmatpush1.xpose.msra.mxu0 0.0
        %5955 = vmatprep.subr.mxu0 0.0
        %5956 = vmatpush1.xpose.msra.mxu0 0.0
        %5957 = vmatprep.subr.mxu0 0.0
        %5958 = vmatpush1.xpose.msra.mxu0 0.0
        %5959 = vmatprep.subr.mxu0 %v5928
        %5960 = vmatpush1.xpose.msra.mxu0 %v5927
        %5961 = vmatprep.subr.mxu0 %v5920
        %5962 = vmatpush1.xpose.msra.mxu0 %v5919
        %5963 = vmatprep.subr.mxu0 %v5912
        %5964 = vmatpush1.xpose.msra.mxu0 %v5911
        %5965 = vmatprep.subr.mxu0 %v5904
        %5966 = vmatpush1.xpose.msra.mxu0 %v5903
        %5967 = vmatprep.subr.mxu0 0.0
        %5968 = vmatpush2.xpose.msra.mxu0 0.0
        %5969 = vmatprep.subr.mxu0 0.0
        %5970 = vmatpush2.xpose.msra.mxu0 0.0
        %5971 = vmatprep.subr.mxu0 0.0
        %5972 = vmatpush2.xpose.msra.mxu0 0.0
        %5973 = vmatprep.subr.mxu0 0.0
        %5974 = vmatpush2.xpose.msra.mxu0 0.0
        %5975 = vmatprep.subr.mxu0 0.0
        %5976 = vmatpush2.xpose.msra.mxu0 0.0
        %5977 = vmatprep.subr.mxu0 0.0
        %5978 = vmatpush2.xpose.msra.mxu0 0.0
        %5979 = vmatprep.subr.mxu0 0.0
        %5980 = vmatpush2.xpose.msra.mxu0 0.0
        %5981 = vmatprep.subr.mxu0 0.0
        %5982 = vmatpush2.xpose.msra.mxu0 0.0
        %5983 = vmatprep.subr.mxu0 0.0
        %5984 = vmatpush2.xpose.msra.mxu0 0.0
        %5985 = vmatprep.subr.mxu0 0.0
        %5986 = vmatpush2.xpose.msra.mxu0 0.0
        %5987 = vmatprep.subr.mxu0 0.0
        %5988 = vmatpush2.xpose.msra.mxu0 0.0
        %5989 = vmatprep.subr.mxu0 0.0
        %5990 = vmatpush2.xpose.msra.mxu0 0.0
        %5991 = vmatprep.subr.mxu0 0.0
        %5992 = vmatpush2.xpose.msra.mxu0 0.0
        %5993 = vmatprep.subr.mxu0 0.0
        %5994 = vmatpush2.xpose.msra.mxu0 0.0
        %5995 = vmatprep.subr.mxu0 0.0
        %5996 = vmatpush2.xpose.msra.mxu0 0.0
        %5997 = vmatprep.subr.mxu0 0.0
        %5998 = vmatpush2.xpose.msra.mxu0 0.0
        %5999 = vmatprep.mubr.f32.mxu0 %v5895
        %6000 = vmatmul.mubr.f32.gmra.mxu0 %v5894
        %v6001 = vpop.f32.mrf.mxu0
        %v6002 = vadd.f32 0.0, %v6001
        %v6003 = vpop.f32.mrf.mxu0
        %6004 = vdwg.mxu0
        %6005 = vmatprep.subr.mxu0 0.0
        %6006 = vmatpush1.xpose.msra.mxu0 0.0
        %6007 = vmatprep.subr.mxu0 0.0
        %6008 = vmatpush1.xpose.msra.mxu0 0.0
        %6009 = vmatprep.subr.mxu0 0.0
        %6010 = vmatpush1.xpose.msra.mxu0 0.0
        %6011 = vmatprep.subr.mxu0 0.0
        %6012 = vmatpush1.xpose.msra.mxu0 0.0
        %6013 = vmatprep.subr.mxu0 0.0
        %6014 = vmatpush1.xpose.msra.mxu0 0.0
        %6015 = vmatprep.subr.mxu0 0.0
        %6016 = vmatpush1.xpose.msra.mxu0 0.0
        %6017 = vmatprep.subr.mxu0 0.0
        %6018 = vmatpush1.xpose.msra.mxu0 0.0
        %6019 = vmatprep.subr.mxu0 0.0
        %6020 = vmatpush1.xpose.msra.mxu0 0.0
        %6021 = vmatprep.subr.mxu0 0.0
        %6022 = vmatpush1.xpose.msra.mxu0 0.0
        %6023 = vmatprep.subr.mxu0 0.0
        %6024 = vmatpush1.xpose.msra.mxu0 0.0
        %6025 = vmatprep.subr.mxu0 0.0
        %6026 = vmatpush1.xpose.msra.mxu0 0.0
        %6027 = vmatprep.subr.mxu0 0.0
        %6028 = vmatpush1.xpose.msra.mxu0 0.0
        %6029 = vmatprep.subr.mxu0 %v5930
        %6030 = vmatpush1.xpose.msra.mxu0 %v5929
        %6031 = vmatprep.subr.mxu0 %v5922
        %6032 = vmatpush1.xpose.msra.mxu0 %v5921
        %6033 = vmatprep.subr.mxu0 %v5914
        %6034 = vmatpush1.xpose.msra.mxu0 %v5913
        %6035 = vmatprep.subr.mxu0 %v5906
        %6036 = vmatpush1.xpose.msra.mxu0 %v5905
        %6037 = vmatprep.subr.mxu0 0.0
        %6038 = vmatpush2.xpose.msra.mxu0 0.0
        %6039 = vmatprep.subr.mxu0 0.0
        %6040 = vmatpush2.xpose.msra.mxu0 0.0
        %6041 = vmatprep.subr.mxu0 0.0
        %6042 = vmatpush2.xpose.msra.mxu0 0.0
        %6043 = vmatprep.subr.mxu0 0.0
        %6044 = vmatpush2.xpose.msra.mxu0 0.0
        %6045 = vmatprep.subr.mxu0 0.0
        %6046 = vmatpush2.xpose.msra.mxu0 0.0
        %6047 = vmatprep.subr.mxu0 0.0
        %6048 = vmatpush2.xpose.msra.mxu0 0.0
        %6049 = vmatprep.subr.mxu0 0.0
        %6050 = vmatpush2.xpose.msra.mxu0 0.0
        %6051 = vmatprep.subr.mxu0 0.0
        %6052 = vmatpush2.xpose.msra.mxu0 0.0
        %6053 = vmatprep.subr.mxu0 0.0
        %6054 = vmatpush2.xpose.msra.mxu0 0.0
        %6055 = vmatprep.subr.mxu0 0.0
        %6056 = vmatpush2.xpose.msra.mxu0 0.0
        %6057 = vmatprep.subr.mxu0 0.0
        %6058 = vmatpush2.xpose.msra.mxu0 0.0
        %6059 = vmatprep.subr.mxu0 0.0
        %6060 = vmatpush2.xpose.msra.mxu0 0.0
        %6061 = vmatprep.subr.mxu0 0.0
        %6062 = vmatpush2.xpose.msra.mxu0 0.0
        %6063 = vmatprep.subr.mxu0 0.0
        %6064 = vmatpush2.xpose.msra.mxu0 0.0
        %6065 = vmatprep.subr.mxu0 0.0
        %6066 = vmatpush2.xpose.msra.mxu0 0.0
        %6067 = vmatprep.subr.mxu0 0.0
        %6068 = vmatpush2.xpose.msra.mxu0 0.0
        %6069 = vmatprep.mubr.f32.mxu0 %v5897
        %6070 = vmatmul.mubr.f32.gmra.mxu0 %v5896
        %v6071 = vpop.f32.mrf.mxu0
        %v6072 = vadd.f32 %v6002, %v6071
        %v6073 = vpop.f32.mrf.mxu0
        %6074 = vdwg.mxu0
        %6075 = vmatprep.subr.mxu0 0.0
        %6076 = vmatpush1.xpose.msra.mxu0 0.0
        %6077 = vmatprep.subr.mxu0 0.0
        %6078 = vmatpush1.xpose.msra.mxu0 0.0
        %6079 = vmatprep.subr.mxu0 0.0
        %6080 = vmatpush1.xpose.msra.mxu0 0.0
        %6081 = vmatprep.subr.mxu0 0.0
        %6082 = vmatpush1.xpose.msra.mxu0 0.0
        %6083 = vmatprep.subr.mxu0 0.0
        %6084 = vmatpush1.xpose.msra.mxu0 0.0
        %6085 = vmatprep.subr.mxu0 0.0
        %6086 = vmatpush1.xpose.msra.mxu0 0.0
        %6087 = vmatprep.subr.mxu0 0.0
        %6088 = vmatpush1.xpose.msra.mxu0 0.0
        %6089 = vmatprep.subr.mxu0 0.0
        %6090 = vmatpush1.xpose.msra.mxu0 0.0
        %6091 = vmatprep.subr.mxu0 0.0
        %6092 = vmatpush1.xpose.msra.mxu0 0.0
        %6093 = vmatprep.subr.mxu0 0.0
        %6094 = vmatpush1.xpose.msra.mxu0 0.0
        %6095 = vmatprep.subr.mxu0 0.0
        %6096 = vmatpush1.xpose.msra.mxu0 0.0
        %6097 = vmatprep.subr.mxu0 0.0
        %6098 = vmatpush1.xpose.msra.mxu0 0.0
        %6099 = vmatprep.subr.mxu0 %v5932
        %6100 = vmatpush1.xpose.msra.mxu0 %v5931
        %6101 = vmatprep.subr.mxu0 %v5924
        %6102 = vmatpush1.xpose.msra.mxu0 %v5923
        %6103 = vmatprep.subr.mxu0 %v5916
        %6104 = vmatpush1.xpose.msra.mxu0 %v5915
        %6105 = vmatprep.subr.mxu0 %v5908
        %6106 = vmatpush1.xpose.msra.mxu0 %v5907
        %6107 = vmatprep.subr.mxu0 0.0
        %6108 = vmatpush2.xpose.msra.mxu0 0.0
        %6109 = vmatprep.subr.mxu0 0.0
        %6110 = vmatpush2.xpose.msra.mxu0 0.0
        %6111 = vmatprep.subr.mxu0 0.0
        %6112 = vmatpush2.xpose.msra.mxu0 0.0
        %6113 = vmatprep.subr.mxu0 0.0
        %6114 = vmatpush2.xpose.msra.mxu0 0.0
        %6115 = vmatprep.subr.mxu0 0.0
        %6116 = vmatpush2.xpose.msra.mxu0 0.0
        %6117 = vmatprep.subr.mxu0 0.0
        %6118 = vmatpush2.xpose.msra.mxu0 0.0
        %6119 = vmatprep.subr.mxu0 0.0
        %6120 = vmatpush2.xpose.msra.mxu0 0.0
        %6121 = vmatprep.subr.mxu0 0.0
        %6122 = vmatpush2.xpose.msra.mxu0 0.0
        %6123 = vmatprep.subr.mxu0 0.0
        %6124 = vmatpush2.xpose.msra.mxu0 0.0
        %6125 = vmatprep.subr.mxu0 0.0
        %6126 = vmatpush2.xpose.msra.mxu0 0.0
        %6127 = vmatprep.subr.mxu0 0.0
        %6128 = vmatpush2.xpose.msra.mxu0 0.0
        %6129 = vmatprep.subr.mxu0 0.0
        %6130 = vmatpush2.xpose.msra.mxu0 0.0
        %6131 = vmatprep.subr.mxu0 0.0
        %6132 = vmatpush2.xpose.msra.mxu0 0.0
        %6133 = vmatprep.subr.mxu0 0.0
        %6134 = vmatpush2.xpose.msra.mxu0 0.0
        %6135 = vmatprep.subr.mxu0 0.0
        %6136 = vmatpush2.xpose.msra.mxu0 0.0
        %6137 = vmatprep.subr.mxu0 0.0
        %6138 = vmatpush2.xpose.msra.mxu0 0.0
        %6139 = vmatprep.mubr.f32.mxu0 %v5899
        %6140 = vmatmul.mubr.f32.gmra.mxu0 %v5898
        %v6141 = vpop.f32.mrf.mxu0
        %v6142 = vadd.f32 %v6072, %v6141
        %v6143 = vpop.f32.mrf.mxu0
        %6144 = vdwg.mxu0
        %6145 = vmatprep.subr.mxu0 0.0
        %6146 = vmatpush1.xpose.msra.mxu0 0.0
        %6147 = vmatprep.subr.mxu0 0.0
        %6148 = vmatpush1.xpose.msra.mxu0 0.0
        %6149 = vmatprep.subr.mxu0 0.0
        %6150 = vmatpush1.xpose.msra.mxu0 0.0
        %6151 = vmatprep.subr.mxu0 0.0
        %6152 = vmatpush1.xpose.msra.mxu0 0.0
        %6153 = vmatprep.subr.mxu0 0.0
        %6154 = vmatpush1.xpose.msra.mxu0 0.0
        %6155 = vmatprep.subr.mxu0 0.0
        %6156 = vmatpush1.xpose.msra.mxu0 0.0
        %6157 = vmatprep.subr.mxu0 0.0
        %6158 = vmatpush1.xpose.msra.mxu0 0.0
        %6159 = vmatprep.subr.mxu0 0.0
        %6160 = vmatpush1.xpose.msra.mxu0 0.0
        %6161 = vmatprep.subr.mxu0 0.0
        %6162 = vmatpush1.xpose.msra.mxu0 0.0
        %6163 = vmatprep.subr.mxu0 0.0
        %6164 = vmatpush1.xpose.msra.mxu0 0.0
        %6165 = vmatprep.subr.mxu0 0.0
        %6166 = vmatpush1.xpose.msra.mxu0 0.0
        %6167 = vmatprep.subr.mxu0 0.0
        %6168 = vmatpush1.xpose.msra.mxu0 0.0
        %6169 = vmatprep.subr.mxu0 %v5934
        %6170 = vmatpush1.xpose.msra.mxu0 %v5933
        %6171 = vmatprep.subr.mxu0 %v5926
        %6172 = vmatpush1.xpose.msra.mxu0 %v5925
        %6173 = vmatprep.subr.mxu0 %v5918
        %6174 = vmatpush1.xpose.msra.mxu0 %v5917
        %6175 = vmatprep.subr.mxu0 %v5910
        %6176 = vmatpush1.xpose.msra.mxu0 %v5909
        %6177 = vmatprep.subr.mxu0 0.0
        %6178 = vmatpush2.xpose.msra.mxu0 0.0
        %6179 = vmatprep.subr.mxu0 0.0
        %6180 = vmatpush2.xpose.msra.mxu0 0.0
        %6181 = vmatprep.subr.mxu0 0.0
        %6182 = vmatpush2.xpose.msra.mxu0 0.0
        %6183 = vmatprep.subr.mxu0 0.0
        %6184 = vmatpush2.xpose.msra.mxu0 0.0
        %6185 = vmatprep.subr.mxu0 0.0
        %6186 = vmatpush2.xpose.msra.mxu0 0.0
        %6187 = vmatprep.subr.mxu0 0.0
        %6188 = vmatpush2.xpose.msra.mxu0 0.0
        %6189 = vmatprep.subr.mxu0 0.0
        %6190 = vmatpush2.xpose.msra.mxu0 0.0
        %6191 = vmatprep.subr.mxu0 0.0
        %6192 = vmatpush2.xpose.msra.mxu0 0.0
        %6193 = vmatprep.subr.mxu0 0.0
        %6194 = vmatpush2.xpose.msra.mxu0 0.0
        %6195 = vmatprep.subr.mxu0 0.0
        %6196 = vmatpush2.xpose.msra.mxu0 0.0
        %6197 = vmatprep.subr.mxu0 0.0
        %6198 = vmatpush2.xpose.msra.mxu0 0.0
        %6199 = vmatprep.subr.mxu0 0.0
        %6200 = vmatpush2.xpose.msra.mxu0 0.0
        %6201 = vmatprep.subr.mxu0 0.0
        %6202 = vmatpush2.xpose.msra.mxu0 0.0
        %6203 = vmatprep.subr.mxu0 0.0
        %6204 = vmatpush2.xpose.msra.mxu0 0.0
        %6205 = vmatprep.subr.mxu0 0.0
        %6206 = vmatpush2.xpose.msra.mxu0 0.0
        %6207 = vmatprep.subr.mxu0 0.0
        %6208 = vmatpush2.xpose.msra.mxu0 0.0
        %6209 = vmatprep.mubr.f32.mxu0 %v5901
        %6210 = vmatmul.mubr.f32.gmra.mxu0 %v5900
        %v6211 = vpop.f32.mrf.mxu0
        %v6212 = vadd.f32 %v6142, %v6211
        %v6213 = vpop.f32.mrf.mxu0
        %6214 = vdwg.mxu0
        %v6215 = vadd.f32 %v5859, %v6212
        %v6216 = vlaneseq
        %v6217 = vshrl.u32 %v6216, 7
        %v6218 = vsub.s32 3, %v6217
        %v6219 = vrot.slane %v5141, %v6218
        %v6220 = vlaneseq
        %v6221 = vshrl.u32 %v6220, 7
        %v6222 = vsub.s32 3, %v6221
        %v6223 = vrot.slane %v5142, %v6222
        %v6224 = vlaneseq
        %v6225 = vshrl.u32 %v6224, 7
        %v6226 = vsub.s32 3, %v6225
        %v6227 = vrot.slane %v5143, %v6226
        %v6228 = vlaneseq
        %v6229 = vshrl.u32 %v6228, 7
        %v6230 = vsub.s32 3, %v6229
        %v6231 = vrot.slane %v5144, %v6230
        %v6232 = vlaneseq
        %v6233 = vshrl.u32 %v6232, 7
        %v6234 = vsub.s32 3, %v6233
        %v6235 = vrot.slane %v5145, %v6234
        %v6236 = vlaneseq
        %v6237 = vshrl.u32 %v6236, 7
        %v6238 = vsub.s32 3, %v6237
        %v6239 = vrot.slane %v5146, %v6238
        %v6240 = vlaneseq
        %v6241 = vshrl.u32 %v6240, 7
        %v6242 = vsub.s32 3, %v6241
        %v6243 = vrot.slane %v5147, %v6242
        %v6244 = vlaneseq
        %v6245 = vshrl.u32 %v6244, 7
        %v6246 = vsub.s32 3, %v6245
        %v6247 = vrot.slane %v5148, %v6246
        %v6248 = vmul.f32 %v5149, %v6219
        %v6249 = vmul.f32 %v5150, %v6223
        %v6250 = vmul.f32 %v5151, %v6227
        %v6251 = vmul.f32 %v5152, %v6231
        %v6252 = vmul.f32 %v5153, %v6235
        %v6253 = vmul.f32 %v5154, %v6239
        %v6254 = vmul.f32 %v5155, %v6243
        %v6255 = vmul.f32 %v5156, %v6247
        %s6256 = scalar_lea.vmem [#allocation15], 768
        %v6257 = vld [vmem:[%s6256] sm:$0xff]
        %v6258 = vld [vmem:[%s6256 + $0x8] sm:$0xff]
        %v6259 = vld [vmem:[%s6256 + $0x10] sm:$0xff]
        %v6260 = vld [vmem:[%s6256 + $0x18] sm:$0xff]
        %v6261 = vld [vmem:[%s6256 + $0x20] sm:$0xff]
        %v6262 = vld [vmem:[%s6256 + $0x28] sm:$0xff]
        %v6263 = vld [vmem:[%s6256 + $0x30] sm:$0xff]
        %v6264 = vld [vmem:[%s6256 + $0x38] sm:$0xff]
        %v6265 = vld [vmem:[%s6256 + $0x40] sm:$0xff]
        %v6266 = vld [vmem:[%s6256 + $0x48] sm:$0xff]
        %v6267 = vld [vmem:[%s6256 + $0x50] sm:$0xff]
        %v6268 = vld [vmem:[%s6256 + $0x58] sm:$0xff]
        %v6269 = vld [vmem:[%s6256 + $0x60] sm:$0xff]
        %v6270 = vld [vmem:[%s6256 + $0x68] sm:$0xff]
        %v6271 = vld [vmem:[%s6256 + $0x70] sm:$0xff]
        %v6272 = vld [vmem:[%s6256 + $0x78] sm:$0xff]
        %v6273 = vld [vmem:[%s6256 + $0x80] sm:$0xff]
        %v6274 = vld [vmem:[%s6256 + $0x88] sm:$0xff]
        %v6275 = vld [vmem:[%s6256 + $0x90] sm:$0xff]
        %v6276 = vld [vmem:[%s6256 + $0x98] sm:$0xff]
        %v6277 = vld [vmem:[%s6256 + $0xa0] sm:$0xff]
        %v6278 = vld [vmem:[%s6256 + $0xa8] sm:$0xff]
        %v6279 = vld [vmem:[%s6256 + $0xb0] sm:$0xff]
        %v6280 = vld [vmem:[%s6256 + $0xb8] sm:$0xff]
        %v6281 = vld [vmem:[%s6256 + $0xc0] sm:$0xff]
        %v6282 = vld [vmem:[%s6256 + $0xc8] sm:$0xff]
        %v6283 = vld [vmem:[%s6256 + $0xd0] sm:$0xff]
        %v6284 = vld [vmem:[%s6256 + $0xd8] sm:$0xff]
        %v6285 = vld [vmem:[%s6256 + $0xe0] sm:$0xff]
        %v6286 = vld [vmem:[%s6256 + $0xe8] sm:$0xff]
        %v6287 = vld [vmem:[%s6256 + $0xf0] sm:$0xff]
        %v6288 = vld [vmem:[%s6256 + $0xf8] sm:$0xff]
        %6289 = vmatprep.subr.mxu0 0.0
        %6290 = vmatpush1.xpose.msra.mxu0 0.0
        %6291 = vmatprep.subr.mxu0 0.0
        %6292 = vmatpush1.xpose.msra.mxu0 0.0
        %6293 = vmatprep.subr.mxu0 0.0
        %6294 = vmatpush1.xpose.msra.mxu0 0.0
        %6295 = vmatprep.subr.mxu0 0.0
        %6296 = vmatpush1.xpose.msra.mxu0 0.0
        %6297 = vmatprep.subr.mxu0 0.0
        %6298 = vmatpush1.xpose.msra.mxu0 0.0
        %6299 = vmatprep.subr.mxu0 0.0
        %6300 = vmatpush1.xpose.msra.mxu0 0.0
        %6301 = vmatprep.subr.mxu0 0.0
        %6302 = vmatpush1.xpose.msra.mxu0 0.0
        %6303 = vmatprep.subr.mxu0 0.0
        %6304 = vmatpush1.xpose.msra.mxu0 0.0
        %6305 = vmatprep.subr.mxu0 0.0
        %6306 = vmatpush1.xpose.msra.mxu0 0.0
        %6307 = vmatprep.subr.mxu0 0.0
        %6308 = vmatpush1.xpose.msra.mxu0 0.0
        %6309 = vmatprep.subr.mxu0 0.0
        %6310 = vmatpush1.xpose.msra.mxu0 0.0
        %6311 = vmatprep.subr.mxu0 0.0
        %6312 = vmatpush1.xpose.msra.mxu0 0.0
        %6313 = vmatprep.subr.mxu0 %v6282
        %6314 = vmatpush1.xpose.msra.mxu0 %v6281
        %6315 = vmatprep.subr.mxu0 %v6274
        %6316 = vmatpush1.xpose.msra.mxu0 %v6273
        %6317 = vmatprep.subr.mxu0 %v6266
        %6318 = vmatpush1.xpose.msra.mxu0 %v6265
        %6319 = vmatprep.subr.mxu0 %v6258
        %6320 = vmatpush1.xpose.msra.mxu0 %v6257
        %6321 = vmatprep.subr.mxu0 0.0
        %6322 = vmatpush2.xpose.msra.mxu0 0.0
        %6323 = vmatprep.subr.mxu0 0.0
        %6324 = vmatpush2.xpose.msra.mxu0 0.0
        %6325 = vmatprep.subr.mxu0 0.0
        %6326 = vmatpush2.xpose.msra.mxu0 0.0
        %6327 = vmatprep.subr.mxu0 0.0
        %6328 = vmatpush2.xpose.msra.mxu0 0.0
        %6329 = vmatprep.subr.mxu0 0.0
        %6330 = vmatpush2.xpose.msra.mxu0 0.0
        %6331 = vmatprep.subr.mxu0 0.0
        %6332 = vmatpush2.xpose.msra.mxu0 0.0
        %6333 = vmatprep.subr.mxu0 0.0
        %6334 = vmatpush2.xpose.msra.mxu0 0.0
        %6335 = vmatprep.subr.mxu0 0.0
        %6336 = vmatpush2.xpose.msra.mxu0 0.0
        %6337 = vmatprep.subr.mxu0 0.0
        %6338 = vmatpush2.xpose.msra.mxu0 0.0
        %6339 = vmatprep.subr.mxu0 0.0
        %6340 = vmatpush2.xpose.msra.mxu0 0.0
        %6341 = vmatprep.subr.mxu0 0.0
        %6342 = vmatpush2.xpose.msra.mxu0 0.0
        %6343 = vmatprep.subr.mxu0 0.0
        %6344 = vmatpush2.xpose.msra.mxu0 0.0
        %6345 = vmatprep.subr.mxu0 0.0
        %6346 = vmatpush2.xpose.msra.mxu0 0.0
        %6347 = vmatprep.subr.mxu0 0.0
        %6348 = vmatpush2.xpose.msra.mxu0 0.0
        %6349 = vmatprep.subr.mxu0 0.0
        %6350 = vmatpush2.xpose.msra.mxu0 0.0
        %6351 = vmatprep.subr.mxu0 0.0
        %6352 = vmatpush2.xpose.msra.mxu0 0.0
        %6353 = vmatprep.mubr.f32.mxu0 %v6249
        %6354 = vmatmul.mubr.f32.gmra.mxu0 %v6248
        %v6355 = vpop.f32.mrf.mxu0
        %v6356 = vadd.f32 0.0, %v6355
        %v6357 = vpop.f32.mrf.mxu0
        %6358 = vdwg.mxu0
        %6359 = vmatprep.subr.mxu0 0.0
        %6360 = vmatpush1.xpose.msra.mxu0 0.0
        %6361 = vmatprep.subr.mxu0 0.0
        %6362 = vmatpush1.xpose.msra.mxu0 0.0
        %6363 = vmatprep.subr.mxu0 0.0
        %6364 = vmatpush1.xpose.msra.mxu0 0.0
        %6365 = vmatprep.subr.mxu0 0.0
        %6366 = vmatpush1.xpose.msra.mxu0 0.0
        %6367 = vmatprep.subr.mxu0 0.0
        %6368 = vmatpush1.xpose.msra.mxu0 0.0
        %6369 = vmatprep.subr.mxu0 0.0
        %6370 = vmatpush1.xpose.msra.mxu0 0.0
        %6371 = vmatprep.subr.mxu0 0.0
        %6372 = vmatpush1.xpose.msra.mxu0 0.0
        %6373 = vmatprep.subr.mxu0 0.0
        %6374 = vmatpush1.xpose.msra.mxu0 0.0
        %6375 = vmatprep.subr.mxu0 0.0
        %6376 = vmatpush1.xpose.msra.mxu0 0.0
        %6377 = vmatprep.subr.mxu0 0.0
        %6378 = vmatpush1.xpose.msra.mxu0 0.0
        %6379 = vmatprep.subr.mxu0 0.0
        %6380 = vmatpush1.xpose.msra.mxu0 0.0
        %6381 = vmatprep.subr.mxu0 0.0
        %6382 = vmatpush1.xpose.msra.mxu0 0.0
        %6383 = vmatprep.subr.mxu0 %v6284
        %6384 = vmatpush1.xpose.msra.mxu0 %v6283
        %6385 = vmatprep.subr.mxu0 %v6276
        %6386 = vmatpush1.xpose.msra.mxu0 %v6275
        %6387 = vmatprep.subr.mxu0 %v6268
        %6388 = vmatpush1.xpose.msra.mxu0 %v6267
        %6389 = vmatprep.subr.mxu0 %v6260
        %6390 = vmatpush1.xpose.msra.mxu0 %v6259
        %6391 = vmatprep.subr.mxu0 0.0
        %6392 = vmatpush2.xpose.msra.mxu0 0.0
        %6393 = vmatprep.subr.mxu0 0.0
        %6394 = vmatpush2.xpose.msra.mxu0 0.0
        %6395 = vmatprep.subr.mxu0 0.0
        %6396 = vmatpush2.xpose.msra.mxu0 0.0
        %6397 = vmatprep.subr.mxu0 0.0
        %6398 = vmatpush2.xpose.msra.mxu0 0.0
        %6399 = vmatprep.subr.mxu0 0.0
        %6400 = vmatpush2.xpose.msra.mxu0 0.0
        %6401 = vmatprep.subr.mxu0 0.0
        %6402 = vmatpush2.xpose.msra.mxu0 0.0
        %6403 = vmatprep.subr.mxu0 0.0
        %6404 = vmatpush2.xpose.msra.mxu0 0.0
        %6405 = vmatprep.subr.mxu0 0.0
        %6406 = vmatpush2.xpose.msra.mxu0 0.0
        %6407 = vmatprep.subr.mxu0 0.0
        %6408 = vmatpush2.xpose.msra.mxu0 0.0
        %6409 = vmatprep.subr.mxu0 0.0
        %6410 = vmatpush2.xpose.msra.mxu0 0.0
        %6411 = vmatprep.subr.mxu0 0.0
        %6412 = vmatpush2.xpose.msra.mxu0 0.0
        %6413 = vmatprep.subr.mxu0 0.0
        %6414 = vmatpush2.xpose.msra.mxu0 0.0
        %6415 = vmatprep.subr.mxu0 0.0
        %6416 = vmatpush2.xpose.msra.mxu0 0.0
        %6417 = vmatprep.subr.mxu0 0.0
        %6418 = vmatpush2.xpose.msra.mxu0 0.0
        %6419 = vmatprep.subr.mxu0 0.0
        %6420 = vmatpush2.xpose.msra.mxu0 0.0
        %6421 = vmatprep.subr.mxu0 0.0
        %6422 = vmatpush2.xpose.msra.mxu0 0.0
        %6423 = vmatprep.mubr.f32.mxu0 %v6251
        %6424 = vmatmul.mubr.f32.gmra.mxu0 %v6250
        %v6425 = vpop.f32.mrf.mxu0
        %v6426 = vadd.f32 %v6356, %v6425
        %v6427 = vpop.f32.mrf.mxu0
        %6428 = vdwg.mxu0
        %6429 = vmatprep.subr.mxu0 0.0
        %6430 = vmatpush1.xpose.msra.mxu0 0.0
        %6431 = vmatprep.subr.mxu0 0.0
        %6432 = vmatpush1.xpose.msra.mxu0 0.0
        %6433 = vmatprep.subr.mxu0 0.0
        %6434 = vmatpush1.xpose.msra.mxu0 0.0
        %6435 = vmatprep.subr.mxu0 0.0
        %6436 = vmatpush1.xpose.msra.mxu0 0.0
        %6437 = vmatprep.subr.mxu0 0.0
        %6438 = vmatpush1.xpose.msra.mxu0 0.0
        %6439 = vmatprep.subr.mxu0 0.0
        %6440 = vmatpush1.xpose.msra.mxu0 0.0
        %6441 = vmatprep.subr.mxu0 0.0
        %6442 = vmatpush1.xpose.msra.mxu0 0.0
        %6443 = vmatprep.subr.mxu0 0.0
        %6444 = vmatpush1.xpose.msra.mxu0 0.0
        %6445 = vmatprep.subr.mxu0 0.0
        %6446 = vmatpush1.xpose.msra.mxu0 0.0
        %6447 = vmatprep.subr.mxu0 0.0
        %6448 = vmatpush1.xpose.msra.mxu0 0.0
        %6449 = vmatprep.subr.mxu0 0.0
        %6450 = vmatpush1.xpose.msra.mxu0 0.0
        %6451 = vmatprep.subr.mxu0 0.0
        %6452 = vmatpush1.xpose.msra.mxu0 0.0
        %6453 = vmatprep.subr.mxu0 %v6286
        %6454 = vmatpush1.xpose.msra.mxu0 %v6285
        %6455 = vmatprep.subr.mxu0 %v6278
        %6456 = vmatpush1.xpose.msra.mxu0 %v6277
        %6457 = vmatprep.subr.mxu0 %v6270
        %6458 = vmatpush1.xpose.msra.mxu0 %v6269
        %6459 = vmatprep.subr.mxu0 %v6262
        %6460 = vmatpush1.xpose.msra.mxu0 %v6261
        %6461 = vmatprep.subr.mxu0 0.0
        %6462 = vmatpush2.xpose.msra.mxu0 0.0
        %6463 = vmatprep.subr.mxu0 0.0
        %6464 = vmatpush2.xpose.msra.mxu0 0.0
        %6465 = vmatprep.subr.mxu0 0.0
        %6466 = vmatpush2.xpose.msra.mxu0 0.0
        %6467 = vmatprep.subr.mxu0 0.0
        %6468 = vmatpush2.xpose.msra.mxu0 0.0
        %6469 = vmatprep.subr.mxu0 0.0
        %6470 = vmatpush2.xpose.msra.mxu0 0.0
        %6471 = vmatprep.subr.mxu0 0.0
        %6472 = vmatpush2.xpose.msra.mxu0 0.0
        %6473 = vmatprep.subr.mxu0 0.0
        %6474 = vmatpush2.xpose.msra.mxu0 0.0
        %6475 = vmatprep.subr.mxu0 0.0
        %6476 = vmatpush2.xpose.msra.mxu0 0.0
        %6477 = vmatprep.subr.mxu0 0.0
        %6478 = vmatpush2.xpose.msra.mxu0 0.0
        %6479 = vmatprep.subr.mxu0 0.0
        %6480 = vmatpush2.xpose.msra.mxu0 0.0
        %6481 = vmatprep.subr.mxu0 0.0
        %6482 = vmatpush2.xpose.msra.mxu0 0.0
        %6483 = vmatprep.subr.mxu0 0.0
        %6484 = vmatpush2.xpose.msra.mxu0 0.0
        %6485 = vmatprep.subr.mxu0 0.0
        %6486 = vmatpush2.xpose.msra.mxu0 0.0
        %6487 = vmatprep.subr.mxu0 0.0
        %6488 = vmatpush2.xpose.msra.mxu0 0.0
        %6489 = vmatprep.subr.mxu0 0.0
        %6490 = vmatpush2.xpose.msra.mxu0 0.0
        %6491 = vmatprep.subr.mxu0 0.0
        %6492 = vmatpush2.xpose.msra.mxu0 0.0
        %6493 = vmatprep.mubr.f32.mxu0 %v6253
        %6494 = vmatmul.mubr.f32.gmra.mxu0 %v6252
        %v6495 = vpop.f32.mrf.mxu0
        %v6496 = vadd.f32 %v6426, %v6495
        %v6497 = vpop.f32.mrf.mxu0
        %6498 = vdwg.mxu0
        %6499 = vmatprep.subr.mxu0 0.0
        %6500 = vmatpush1.xpose.msra.mxu0 0.0
        %6501 = vmatprep.subr.mxu0 0.0
        %6502 = vmatpush1.xpose.msra.mxu0 0.0
        %6503 = vmatprep.subr.mxu0 0.0
        %6504 = vmatpush1.xpose.msra.mxu0 0.0
        %6505 = vmatprep.subr.mxu0 0.0
        %6506 = vmatpush1.xpose.msra.mxu0 0.0
        %6507 = vmatprep.subr.mxu0 0.0
        %6508 = vmatpush1.xpose.msra.mxu0 0.0
        %6509 = vmatprep.subr.mxu0 0.0
        %6510 = vmatpush1.xpose.msra.mxu0 0.0
        %6511 = vmatprep.subr.mxu0 0.0
        %6512 = vmatpush1.xpose.msra.mxu0 0.0
        %6513 = vmatprep.subr.mxu0 0.0
        %6514 = vmatpush1.xpose.msra.mxu0 0.0
        %6515 = vmatprep.subr.mxu0 0.0
        %6516 = vmatpush1.xpose.msra.mxu0 0.0
        %6517 = vmatprep.subr.mxu0 0.0
        %6518 = vmatpush1.xpose.msra.mxu0 0.0
        %6519 = vmatprep.subr.mxu0 0.0
        %6520 = vmatpush1.xpose.msra.mxu0 0.0
        %6521 = vmatprep.subr.mxu0 0.0
        %6522 = vmatpush1.xpose.msra.mxu0 0.0
        %6523 = vmatprep.subr.mxu0 %v6288
        %6524 = vmatpush1.xpose.msra.mxu0 %v6287
        %6525 = vmatprep.subr.mxu0 %v6280
        %6526 = vmatpush1.xpose.msra.mxu0 %v6279
        %6527 = vmatprep.subr.mxu0 %v6272
        %6528 = vmatpush1.xpose.msra.mxu0 %v6271
        %6529 = vmatprep.subr.mxu0 %v6264
        %6530 = vmatpush1.xpose.msra.mxu0 %v6263
        %6531 = vmatprep.subr.mxu0 0.0
        %6532 = vmatpush2.xpose.msra.mxu0 0.0
        %6533 = vmatprep.subr.mxu0 0.0
        %6534 = vmatpush2.xpose.msra.mxu0 0.0
        %6535 = vmatprep.subr.mxu0 0.0
        %6536 = vmatpush2.xpose.msra.mxu0 0.0
        %6537 = vmatprep.subr.mxu0 0.0
        %6538 = vmatpush2.xpose.msra.mxu0 0.0
        %6539 = vmatprep.subr.mxu0 0.0
        %6540 = vmatpush2.xpose.msra.mxu0 0.0
        %6541 = vmatprep.subr.mxu0 0.0
        %6542 = vmatpush2.xpose.msra.mxu0 0.0
        %6543 = vmatprep.subr.mxu0 0.0
        %6544 = vmatpush2.xpose.msra.mxu0 0.0
        %6545 = vmatprep.subr.mxu0 0.0
        %6546 = vmatpush2.xpose.msra.mxu0 0.0
        %6547 = vmatprep.subr.mxu0 0.0
        %6548 = vmatpush2.xpose.msra.mxu0 0.0
        %6549 = vmatprep.subr.mxu0 0.0
        %6550 = vmatpush2.xpose.msra.mxu0 0.0
        %6551 = vmatprep.subr.mxu0 0.0
        %6552 = vmatpush2.xpose.msra.mxu0 0.0
        %6553 = vmatprep.subr.mxu0 0.0
        %6554 = vmatpush2.xpose.msra.mxu0 0.0
        %6555 = vmatprep.subr.mxu0 0.0
        %6556 = vmatpush2.xpose.msra.mxu0 0.0
        %6557 = vmatprep.subr.mxu0 0.0
        %6558 = vmatpush2.xpose.msra.mxu0 0.0
        %6559 = vmatprep.subr.mxu0 0.0
        %6560 = vmatpush2.xpose.msra.mxu0 0.0
        %6561 = vmatprep.subr.mxu0 0.0
        %6562 = vmatpush2.xpose.msra.mxu0 0.0
        %6563 = vmatprep.mubr.f32.mxu0 %v6255
        %6564 = vmatmul.mubr.f32.gmra.mxu0 %v6254
        %v6565 = vpop.f32.mrf.mxu0
        %v6566 = vadd.f32 %v6496, %v6565
        %v6567 = vpop.f32.mrf.mxu0
        %6568 = vdwg.mxu0
        %v6569 = vadd.f32 %v6215, %v6566
        %v6570 = vlaneseq
        %v6571 = vshrl.u32 %v6570, 7
        %v6572 = vsub.s32 4, %v6571
        %v6573 = vrot.slane %v5141, %v6572
        %v6574 = vlaneseq
        %v6575 = vshrl.u32 %v6574, 7
        %v6576 = vsub.s32 4, %v6575
        %v6577 = vrot.slane %v5142, %v6576
        %v6578 = vlaneseq
        %v6579 = vshrl.u32 %v6578, 7
        %v6580 = vsub.s32 4, %v6579
        %v6581 = vrot.slane %v5143, %v6580
        %v6582 = vlaneseq
        %v6583 = vshrl.u32 %v6582, 7
        %v6584 = vsub.s32 4, %v6583
        %v6585 = vrot.slane %v5144, %v6584
        %v6586 = vlaneseq
        %v6587 = vshrl.u32 %v6586, 7
        %v6588 = vsub.s32 4, %v6587
        %v6589 = vrot.slane %v5145, %v6588
        %v6590 = vlaneseq
        %v6591 = vshrl.u32 %v6590, 7
        %v6592 = vsub.s32 4, %v6591
        %v6593 = vrot.slane %v5146, %v6592
        %v6594 = vlaneseq
        %v6595 = vshrl.u32 %v6594, 7
        %v6596 = vsub.s32 4, %v6595
        %v6597 = vrot.slane %v5147, %v6596
        %v6598 = vlaneseq
        %v6599 = vshrl.u32 %v6598, 7
        %v6600 = vsub.s32 4, %v6599
        %v6601 = vrot.slane %v5148, %v6600
        %v6602 = vmul.f32 %v5149, %v6573
        %v6603 = vmul.f32 %v5150, %v6577
        %v6604 = vmul.f32 %v5151, %v6581
        %v6605 = vmul.f32 %v5152, %v6585
        %v6606 = vmul.f32 %v5153, %v6589
        %v6607 = vmul.f32 %v5154, %v6593
        %v6608 = vmul.f32 %v5155, %v6597
        %v6609 = vmul.f32 %v5156, %v6601
        %s6610 = scalar_lea.vmem [#allocation15], 1024
        %v6611 = vld [vmem:[%s6610] sm:$0xff]
        %v6612 = vld [vmem:[%s6610 + $0x8] sm:$0xff]
        %v6613 = vld [vmem:[%s6610 + $0x10] sm:$0xff]
        %v6614 = vld [vmem:[%s6610 + $0x18] sm:$0xff]
        %v6615 = vld [vmem:[%s6610 + $0x20] sm:$0xff]
        %v6616 = vld [vmem:[%s6610 + $0x28] sm:$0xff]
        %v6617 = vld [vmem:[%s6610 + $0x30] sm:$0xff]
        %v6618 = vld [vmem:[%s6610 + $0x38] sm:$0xff]
        %v6619 = vld [vmem:[%s6610 + $0x40] sm:$0xff]
        %v6620 = vld [vmem:[%s6610 + $0x48] sm:$0xff]
        %v6621 = vld [vmem:[%s6610 + $0x50] sm:$0xff]
        %v6622 = vld [vmem:[%s6610 + $0x58] sm:$0xff]
        %v6623 = vld [vmem:[%s6610 + $0x60] sm:$0xff]
        %v6624 = vld [vmem:[%s6610 + $0x68] sm:$0xff]
        %v6625 = vld [vmem:[%s6610 + $0x70] sm:$0xff]
        %v6626 = vld [vmem:[%s6610 + $0x78] sm:$0xff]
        %v6627 = vld [vmem:[%s6610 + $0x80] sm:$0xff]
        %v6628 = vld [vmem:[%s6610 + $0x88] sm:$0xff]
        %v6629 = vld [vmem:[%s6610 + $0x90] sm:$0xff]
        %v6630 = vld [vmem:[%s6610 + $0x98] sm:$0xff]
        %v6631 = vld [vmem:[%s6610 + $0xa0] sm:$0xff]
        %v6632 = vld [vmem:[%s6610 + $0xa8] sm:$0xff]
        %v6633 = vld [vmem:[%s6610 + $0xb0] sm:$0xff]
        %v6634 = vld [vmem:[%s6610 + $0xb8] sm:$0xff]
        %v6635 = vld [vmem:[%s6610 + $0xc0] sm:$0xff]
        %v6636 = vld [vmem:[%s6610 + $0xc8] sm:$0xff]
        %v6637 = vld [vmem:[%s6610 + $0xd0] sm:$0xff]
        %v6638 = vld [vmem:[%s6610 + $0xd8] sm:$0xff]
        %v6639 = vld [vmem:[%s6610 + $0xe0] sm:$0xff]
        %v6640 = vld [vmem:[%s6610 + $0xe8] sm:$0xff]
        %v6641 = vld [vmem:[%s6610 + $0xf0] sm:$0xff]
        %v6642 = vld [vmem:[%s6610 + $0xf8] sm:$0xff]
        %6643 = vmatprep.subr.mxu0 0.0
        %6644 = vmatpush1.xpose.msra.mxu0 0.0
        %6645 = vmatprep.subr.mxu0 0.0
        %6646 = vmatpush1.xpose.msra.mxu0 0.0
        %6647 = vmatprep.subr.mxu0 0.0
        %6648 = vmatpush1.xpose.msra.mxu0 0.0
        %6649 = vmatprep.subr.mxu0 0.0
        %6650 = vmatpush1.xpose.msra.mxu0 0.0
        %6651 = vmatprep.subr.mxu0 0.0
        %6652 = vmatpush1.xpose.msra.mxu0 0.0
        %6653 = vmatprep.subr.mxu0 0.0
        %6654 = vmatpush1.xpose.msra.mxu0 0.0
        %6655 = vmatprep.subr.mxu0 0.0
        %6656 = vmatpush1.xpose.msra.mxu0 0.0
        %6657 = vmatprep.subr.mxu0 0.0
        %6658 = vmatpush1.xpose.msra.mxu0 0.0
        %6659 = vmatprep.subr.mxu0 0.0
        %6660 = vmatpush1.xpose.msra.mxu0 0.0
        %6661 = vmatprep.subr.mxu0 0.0
        %6662 = vmatpush1.xpose.msra.mxu0 0.0
        %6663 = vmatprep.subr.mxu0 0.0
        %6664 = vmatpush1.xpose.msra.mxu0 0.0
        %6665 = vmatprep.subr.mxu0 0.0
        %6666 = vmatpush1.xpose.msra.mxu0 0.0
        %6667 = vmatprep.subr.mxu0 %v6636
        %6668 = vmatpush1.xpose.msra.mxu0 %v6635
        %6669 = vmatprep.subr.mxu0 %v6628
        %6670 = vmatpush1.xpose.msra.mxu0 %v6627
        %6671 = vmatprep.subr.mxu0 %v6620
        %6672 = vmatpush1.xpose.msra.mxu0 %v6619
        %6673 = vmatprep.subr.mxu0 %v6612
        %6674 = vmatpush1.xpose.msra.mxu0 %v6611
        %6675 = vmatprep.subr.mxu0 0.0
        %6676 = vmatpush2.xpose.msra.mxu0 0.0
        %6677 = vmatprep.subr.mxu0 0.0
        %6678 = vmatpush2.xpose.msra.mxu0 0.0
        %6679 = vmatprep.subr.mxu0 0.0
        %6680 = vmatpush2.xpose.msra.mxu0 0.0
        %6681 = vmatprep.subr.mxu0 0.0
        %6682 = vmatpush2.xpose.msra.mxu0 0.0
        %6683 = vmatprep.subr.mxu0 0.0
        %6684 = vmatpush2.xpose.msra.mxu0 0.0
        %6685 = vmatprep.subr.mxu0 0.0
        %6686 = vmatpush2.xpose.msra.mxu0 0.0
        %6687 = vmatprep.subr.mxu0 0.0
        %6688 = vmatpush2.xpose.msra.mxu0 0.0
        %6689 = vmatprep.subr.mxu0 0.0
        %6690 = vmatpush2.xpose.msra.mxu0 0.0
        %6691 = vmatprep.subr.mxu0 0.0
        %6692 = vmatpush2.xpose.msra.mxu0 0.0
        %6693 = vmatprep.subr.mxu0 0.0
        %6694 = vmatpush2.xpose.msra.mxu0 0.0
        %6695 = vmatprep.subr.mxu0 0.0
        %6696 = vmatpush2.xpose.msra.mxu0 0.0
        %6697 = vmatprep.subr.mxu0 0.0
        %6698 = vmatpush2.xpose.msra.mxu0 0.0
        %6699 = vmatprep.subr.mxu0 0.0
        %6700 = vmatpush2.xpose.msra.mxu0 0.0
        %6701 = vmatprep.subr.mxu0 0.0
        %6702 = vmatpush2.xpose.msra.mxu0 0.0
        %6703 = vmatprep.subr.mxu0 0.0
        %6704 = vmatpush2.xpose.msra.mxu0 0.0
        %6705 = vmatprep.subr.mxu0 0.0
        %6706 = vmatpush2.xpose.msra.mxu0 0.0
        %6707 = vmatprep.mubr.f32.mxu0 %v6603
        %6708 = vmatmul.mubr.f32.gmra.mxu0 %v6602
        %v6709 = vpop.f32.mrf.mxu0
        %v6710 = vadd.f32 0.0, %v6709
        %v6711 = vpop.f32.mrf.mxu0
        %6712 = vdwg.mxu0
        %6713 = vmatprep.subr.mxu0 0.0
        %6714 = vmatpush1.xpose.msra.mxu0 0.0
        %6715 = vmatprep.subr.mxu0 0.0
        %6716 = vmatpush1.xpose.msra.mxu0 0.0
        %6717 = vmatprep.subr.mxu0 0.0
        %6718 = vmatpush1.xpose.msra.mxu0 0.0
        %6719 = vmatprep.subr.mxu0 0.0
        %6720 = vmatpush1.xpose.msra.mxu0 0.0
        %6721 = vmatprep.subr.mxu0 0.0
        %6722 = vmatpush1.xpose.msra.mxu0 0.0
        %6723 = vmatprep.subr.mxu0 0.0
        %6724 = vmatpush1.xpose.msra.mxu0 0.0
        %6725 = vmatprep.subr.mxu0 0.0
        %6726 = vmatpush1.xpose.msra.mxu0 0.0
        %6727 = vmatprep.subr.mxu0 0.0
        %6728 = vmatpush1.xpose.msra.mxu0 0.0
        %6729 = vmatprep.subr.mxu0 0.0
        %6730 = vmatpush1.xpose.msra.mxu0 0.0
        %6731 = vmatprep.subr.mxu0 0.0
        %6732 = vmatpush1.xpose.msra.mxu0 0.0
        %6733 = vmatprep.subr.mxu0 0.0
        %6734 = vmatpush1.xpose.msra.mxu0 0.0
        %6735 = vmatprep.subr.mxu0 0.0
        %6736 = vmatpush1.xpose.msra.mxu0 0.0
        %6737 = vmatprep.subr.mxu0 %v6638
        %6738 = vmatpush1.xpose.msra.mxu0 %v6637
        %6739 = vmatprep.subr.mxu0 %v6630
        %6740 = vmatpush1.xpose.msra.mxu0 %v6629
        %6741 = vmatprep.subr.mxu0 %v6622
        %6742 = vmatpush1.xpose.msra.mxu0 %v6621
        %6743 = vmatprep.subr.mxu0 %v6614
        %6744 = vmatpush1.xpose.msra.mxu0 %v6613
        %6745 = vmatprep.subr.mxu0 0.0
        %6746 = vmatpush2.xpose.msra.mxu0 0.0
        %6747 = vmatprep.subr.mxu0 0.0
        %6748 = vmatpush2.xpose.msra.mxu0 0.0
        %6749 = vmatprep.subr.mxu0 0.0
        %6750 = vmatpush2.xpose.msra.mxu0 0.0
        %6751 = vmatprep.subr.mxu0 0.0
        %6752 = vmatpush2.xpose.msra.mxu0 0.0
        %6753 = vmatprep.subr.mxu0 0.0
        %6754 = vmatpush2.xpose.msra.mxu0 0.0
        %6755 = vmatprep.subr.mxu0 0.0
        %6756 = vmatpush2.xpose.msra.mxu0 0.0
        %6757 = vmatprep.subr.mxu0 0.0
        %6758 = vmatpush2.xpose.msra.mxu0 0.0
        %6759 = vmatprep.subr.mxu0 0.0
        %6760 = vmatpush2.xpose.msra.mxu0 0.0
        %6761 = vmatprep.subr.mxu0 0.0
        %6762 = vmatpush2.xpose.msra.mxu0 0.0
        %6763 = vmatprep.subr.mxu0 0.0
        %6764 = vmatpush2.xpose.msra.mxu0 0.0
        %6765 = vmatprep.subr.mxu0 0.0
        %6766 = vmatpush2.xpose.msra.mxu0 0.0
        %6767 = vmatprep.subr.mxu0 0.0
        %6768 = vmatpush2.xpose.msra.mxu0 0.0
        %6769 = vmatprep.subr.mxu0 0.0
        %6770 = vmatpush2.xpose.msra.mxu0 0.0
        %6771 = vmatprep.subr.mxu0 0.0
        %6772 = vmatpush2.xpose.msra.mxu0 0.0
        %6773 = vmatprep.subr.mxu0 0.0
        %6774 = vmatpush2.xpose.msra.mxu0 0.0
        %6775 = vmatprep.subr.mxu0 0.0
        %6776 = vmatpush2.xpose.msra.mxu0 0.0
        %6777 = vmatprep.mubr.f32.mxu0 %v6605
        %6778 = vmatmul.mubr.f32.gmra.mxu0 %v6604
        %v6779 = vpop.f32.mrf.mxu0
        %v6780 = vadd.f32 %v6710, %v6779
        %v6781 = vpop.f32.mrf.mxu0
        %6782 = vdwg.mxu0
        %6783 = vmatprep.subr.mxu0 0.0
        %6784 = vmatpush1.xpose.msra.mxu0 0.0
        %6785 = vmatprep.subr.mxu0 0.0
        %6786 = vmatpush1.xpose.msra.mxu0 0.0
        %6787 = vmatprep.subr.mxu0 0.0
        %6788 = vmatpush1.xpose.msra.mxu0 0.0
        %6789 = vmatprep.subr.mxu0 0.0
        %6790 = vmatpush1.xpose.msra.mxu0 0.0
        %6791 = vmatprep.subr.mxu0 0.0
        %6792 = vmatpush1.xpose.msra.mxu0 0.0
        %6793 = vmatprep.subr.mxu0 0.0
        %6794 = vmatpush1.xpose.msra.mxu0 0.0
        %6795 = vmatprep.subr.mxu0 0.0
        %6796 = vmatpush1.xpose.msra.mxu0 0.0
        %6797 = vmatprep.subr.mxu0 0.0
        %6798 = vmatpush1.xpose.msra.mxu0 0.0
        %6799 = vmatprep.subr.mxu0 0.0
        %6800 = vmatpush1.xpose.msra.mxu0 0.0
        %6801 = vmatprep.subr.mxu0 0.0
        %6802 = vmatpush1.xpose.msra.mxu0 0.0
        %6803 = vmatprep.subr.mxu0 0.0
        %6804 = vmatpush1.xpose.msra.mxu0 0.0
        %6805 = vmatprep.subr.mxu0 0.0
        %6806 = vmatpush1.xpose.msra.mxu0 0.0
        %6807 = vmatprep.subr.mxu0 %v6640
        %6808 = vmatpush1.xpose.msra.mxu0 %v6639
        %6809 = vmatprep.subr.mxu0 %v6632
        %6810 = vmatpush1.xpose.msra.mxu0 %v6631
        %6811 = vmatprep.subr.mxu0 %v6624
        %6812 = vmatpush1.xpose.msra.mxu0 %v6623
        %6813 = vmatprep.subr.mxu0 %v6616
        %6814 = vmatpush1.xpose.msra.mxu0 %v6615
        %6815 = vmatprep.subr.mxu0 0.0
        %6816 = vmatpush2.xpose.msra.mxu0 0.0
        %6817 = vmatprep.subr.mxu0 0.0
        %6818 = vmatpush2.xpose.msra.mxu0 0.0
        %6819 = vmatprep.subr.mxu0 0.0
        %6820 = vmatpush2.xpose.msra.mxu0 0.0
        %6821 = vmatprep.subr.mxu0 0.0
        %6822 = vmatpush2.xpose.msra.mxu0 0.0
        %6823 = vmatprep.subr.mxu0 0.0
        %6824 = vmatpush2.xpose.msra.mxu0 0.0
        %6825 = vmatprep.subr.mxu0 0.0
        %6826 = vmatpush2.xpose.msra.mxu0 0.0
        %6827 = vmatprep.subr.mxu0 0.0
        %6828 = vmatpush2.xpose.msra.mxu0 0.0
        %6829 = vmatprep.subr.mxu0 0.0
        %6830 = vmatpush2.xpose.msra.mxu0 0.0
        %6831 = vmatprep.subr.mxu0 0.0
        %6832 = vmatpush2.xpose.msra.mxu0 0.0
        %6833 = vmatprep.subr.mxu0 0.0
        %6834 = vmatpush2.xpose.msra.mxu0 0.0
        %6835 = vmatprep.subr.mxu0 0.0
        %6836 = vmatpush2.xpose.msra.mxu0 0.0
        %6837 = vmatprep.subr.mxu0 0.0
        %6838 = vmatpush2.xpose.msra.mxu0 0.0
        %6839 = vmatprep.subr.mxu0 0.0
        %6840 = vmatpush2.xpose.msra.mxu0 0.0
        %6841 = vmatprep.subr.mxu0 0.0
        %6842 = vmatpush2.xpose.msra.mxu0 0.0
        %6843 = vmatprep.subr.mxu0 0.0
        %6844 = vmatpush2.xpose.msra.mxu0 0.0
        %6845 = vmatprep.subr.mxu0 0.0
        %6846 = vmatpush2.xpose.msra.mxu0 0.0
        %6847 = vmatprep.mubr.f32.mxu0 %v6607
        %6848 = vmatmul.mubr.f32.gmra.mxu0 %v6606
        %v6849 = vpop.f32.mrf.mxu0
        %v6850 = vadd.f32 %v6780, %v6849
        %v6851 = vpop.f32.mrf.mxu0
        %6852 = vdwg.mxu0
        %6853 = vmatprep.subr.mxu0 0.0
        %6854 = vmatpush1.xpose.msra.mxu0 0.0
        %6855 = vmatprep.subr.mxu0 0.0
        %6856 = vmatpush1.xpose.msra.mxu0 0.0
        %6857 = vmatprep.subr.mxu0 0.0
        %6858 = vmatpush1.xpose.msra.mxu0 0.0
        %6859 = vmatprep.subr.mxu0 0.0
        %6860 = vmatpush1.xpose.msra.mxu0 0.0
        %6861 = vmatprep.subr.mxu0 0.0
        %6862 = vmatpush1.xpose.msra.mxu0 0.0
        %6863 = vmatprep.subr.mxu0 0.0
        %6864 = vmatpush1.xpose.msra.mxu0 0.0
        %6865 = vmatprep.subr.mxu0 0.0
        %6866 = vmatpush1.xpose.msra.mxu0 0.0
        %6867 = vmatprep.subr.mxu0 0.0
        %6868 = vmatpush1.xpose.msra.mxu0 0.0
        %6869 = vmatprep.subr.mxu0 0.0
        %6870 = vmatpush1.xpose.msra.mxu0 0.0
        %6871 = vmatprep.subr.mxu0 0.0
        %6872 = vmatpush1.xpose.msra.mxu0 0.0
        %6873 = vmatprep.subr.mxu0 0.0
        %6874 = vmatpush1.xpose.msra.mxu0 0.0
        %6875 = vmatprep.subr.mxu0 0.0
        %6876 = vmatpush1.xpose.msra.mxu0 0.0
        %6877 = vmatprep.subr.mxu0 %v6642
        %6878 = vmatpush1.xpose.msra.mxu0 %v6641
        %6879 = vmatprep.subr.mxu0 %v6634
        %6880 = vmatpush1.xpose.msra.mxu0 %v6633
        %6881 = vmatprep.subr.mxu0 %v6626
        %6882 = vmatpush1.xpose.msra.mxu0 %v6625
        %6883 = vmatprep.subr.mxu0 %v6618
        %6884 = vmatpush1.xpose.msra.mxu0 %v6617
        %6885 = vmatprep.subr.mxu0 0.0
        %6886 = vmatpush2.xpose.msra.mxu0 0.0
        %6887 = vmatprep.subr.mxu0 0.0
        %6888 = vmatpush2.xpose.msra.mxu0 0.0
        %6889 = vmatprep.subr.mxu0 0.0
        %6890 = vmatpush2.xpose.msra.mxu0 0.0
        %6891 = vmatprep.subr.mxu0 0.0
        %6892 = vmatpush2.xpose.msra.mxu0 0.0
        %6893 = vmatprep.subr.mxu0 0.0
        %6894 = vmatpush2.xpose.msra.mxu0 0.0
        %6895 = vmatprep.subr.mxu0 0.0
        %6896 = vmatpush2.xpose.msra.mxu0 0.0
        %6897 = vmatprep.subr.mxu0 0.0
        %6898 = vmatpush2.xpose.msra.mxu0 0.0
        %6899 = vmatprep.subr.mxu0 0.0
        %6900 = vmatpush2.xpose.msra.mxu0 0.0
        %6901 = vmatprep.subr.mxu0 0.0
        %6902 = vmatpush2.xpose.msra.mxu0 0.0
        %6903 = vmatprep.subr.mxu0 0.0
        %6904 = vmatpush2.xpose.msra.mxu0 0.0
        %6905 = vmatprep.subr.mxu0 0.0
        %6906 = vmatpush2.xpose.msra.mxu0 0.0
        %6907 = vmatprep.subr.mxu0 0.0
        %6908 = vmatpush2.xpose.msra.mxu0 0.0
        %6909 = vmatprep.subr.mxu0 0.0
        %6910 = vmatpush2.xpose.msra.mxu0 0.0
        %6911 = vmatprep.subr.mxu0 0.0
        %6912 = vmatpush2.xpose.msra.mxu0 0.0
        %6913 = vmatprep.subr.mxu0 0.0
        %6914 = vmatpush2.xpose.msra.mxu0 0.0
        %6915 = vmatprep.subr.mxu0 0.0
        %6916 = vmatpush2.xpose.msra.mxu0 0.0
        %6917 = vmatprep.mubr.f32.mxu0 %v6609
        %6918 = vmatmul.mubr.f32.gmra.mxu0 %v6608
        %v6919 = vpop.f32.mrf.mxu0
        %v6920 = vadd.f32 %v6850, %v6919
        %v6921 = vpop.f32.mrf.mxu0
        %6922 = vdwg.mxu0
        %v6923 = vadd.f32 %v6569, %v6920
        %v6924 = vlaneseq
        %v6925 = vshrl.u32 %v6924, 7
        %v6926 = vsub.s32 5, %v6925
        %v6927 = vrot.slane %v5141, %v6926
        %v6928 = vlaneseq
        %v6929 = vshrl.u32 %v6928, 7
        %v6930 = vsub.s32 5, %v6929
        %v6931 = vrot.slane %v5142, %v6930
        %v6932 = vlaneseq
        %v6933 = vshrl.u32 %v6932, 7
        %v6934 = vsub.s32 5, %v6933
        %v6935 = vrot.slane %v5143, %v6934
        %v6936 = vlaneseq
        %v6937 = vshrl.u32 %v6936, 7
        %v6938 = vsub.s32 5, %v6937
        %v6939 = vrot.slane %v5144, %v6938
        %v6940 = vlaneseq
        %v6941 = vshrl.u32 %v6940, 7
        %v6942 = vsub.s32 5, %v6941
        %v6943 = vrot.slane %v5145, %v6942
        %v6944 = vlaneseq
        %v6945 = vshrl.u32 %v6944, 7
        %v6946 = vsub.s32 5, %v6945
        %v6947 = vrot.slane %v5146, %v6946
        %v6948 = vlaneseq
        %v6949 = vshrl.u32 %v6948, 7
        %v6950 = vsub.s32 5, %v6949
        %v6951 = vrot.slane %v5147, %v6950
        %v6952 = vlaneseq
        %v6953 = vshrl.u32 %v6952, 7
        %v6954 = vsub.s32 5, %v6953
        %v6955 = vrot.slane %v5148, %v6954
        %v6956 = vmul.f32 %v5149, %v6927
        %v6957 = vmul.f32 %v5150, %v6931
        %v6958 = vmul.f32 %v5151, %v6935
        %v6959 = vmul.f32 %v5152, %v6939
        %v6960 = vmul.f32 %v5153, %v6943
        %v6961 = vmul.f32 %v5154, %v6947
        %v6962 = vmul.f32 %v5155, %v6951
        %v6963 = vmul.f32 %v5156, %v6955
        %s6964 = scalar_lea.vmem [#allocation15], 1280
        %v6965 = vld [vmem:[%s6964] sm:$0xff]
        %v6966 = vld [vmem:[%s6964 + $0x8] sm:$0xff]
        %v6967 = vld [vmem:[%s6964 + $0x10] sm:$0xff]
        %v6968 = vld [vmem:[%s6964 + $0x18] sm:$0xff]
        %v6969 = vld [vmem:[%s6964 + $0x20] sm:$0xff]
        %v6970 = vld [vmem:[%s6964 + $0x28] sm:$0xff]
        %v6971 = vld [vmem:[%s6964 + $0x30] sm:$0xff]
        %v6972 = vld [vmem:[%s6964 + $0x38] sm:$0xff]
        %v6973 = vld [vmem:[%s6964 + $0x40] sm:$0xff]
        %v6974 = vld [vmem:[%s6964 + $0x48] sm:$0xff]
        %v6975 = vld [vmem:[%s6964 + $0x50] sm:$0xff]
        %v6976 = vld [vmem:[%s6964 + $0x58] sm:$0xff]
        %v6977 = vld [vmem:[%s6964 + $0x60] sm:$0xff]
        %v6978 = vld [vmem:[%s6964 + $0x68] sm:$0xff]
        %v6979 = vld [vmem:[%s6964 + $0x70] sm:$0xff]
        %v6980 = vld [vmem:[%s6964 + $0x78] sm:$0xff]
        %v6981 = vld [vmem:[%s6964 + $0x80] sm:$0xff]
        %v6982 = vld [vmem:[%s6964 + $0x88] sm:$0xff]
        %v6983 = vld [vmem:[%s6964 + $0x90] sm:$0xff]
        %v6984 = vld [vmem:[%s6964 + $0x98] sm:$0xff]
        %v6985 = vld [vmem:[%s6964 + $0xa0] sm:$0xff]
        %v6986 = vld [vmem:[%s6964 + $0xa8] sm:$0xff]
        %v6987 = vld [vmem:[%s6964 + $0xb0] sm:$0xff]
        %v6988 = vld [vmem:[%s6964 + $0xb8] sm:$0xff]
        %v6989 = vld [vmem:[%s6964 + $0xc0] sm:$0xff]
        %v6990 = vld [vmem:[%s6964 + $0xc8] sm:$0xff]
        %v6991 = vld [vmem:[%s6964 + $0xd0] sm:$0xff]
        %v6992 = vld [vmem:[%s6964 + $0xd8] sm:$0xff]
        %v6993 = vld [vmem:[%s6964 + $0xe0] sm:$0xff]
        %v6994 = vld [vmem:[%s6964 + $0xe8] sm:$0xff]
        %v6995 = vld [vmem:[%s6964 + $0xf0] sm:$0xff]
        %v6996 = vld [vmem:[%s6964 + $0xf8] sm:$0xff]
        %6997 = vmatprep.subr.mxu0 0.0
        %6998 = vmatpush1.xpose.msra.mxu0 0.0
        %6999 = vmatprep.subr.mxu0 0.0
        %7000 = vmatpush1.xpose.msra.mxu0 0.0
        %7001 = vmatprep.subr.mxu0 0.0
        %7002 = vmatpush1.xpose.msra.mxu0 0.0
        %7003 = vmatprep.subr.mxu0 0.0
        %7004 = vmatpush1.xpose.msra.mxu0 0.0
        %7005 = vmatprep.subr.mxu0 0.0
        %7006 = vmatpush1.xpose.msra.mxu0 0.0
        %7007 = vmatprep.subr.mxu0 0.0
        %7008 = vmatpush1.xpose.msra.mxu0 0.0
        %7009 = vmatprep.subr.mxu0 0.0
        %7010 = vmatpush1.xpose.msra.mxu0 0.0
        %7011 = vmatprep.subr.mxu0 0.0
        %7012 = vmatpush1.xpose.msra.mxu0 0.0
        %7013 = vmatprep.subr.mxu0 0.0
        %7014 = vmatpush1.xpose.msra.mxu0 0.0
        %7015 = vmatprep.subr.mxu0 0.0
        %7016 = vmatpush1.xpose.msra.mxu0 0.0
        %7017 = vmatprep.subr.mxu0 0.0
        %7018 = vmatpush1.xpose.msra.mxu0 0.0
        %7019 = vmatprep.subr.mxu0 0.0
        %7020 = vmatpush1.xpose.msra.mxu0 0.0
        %7021 = vmatprep.subr.mxu0 %v6990
        %7022 = vmatpush1.xpose.msra.mxu0 %v6989
        %7023 = vmatprep.subr.mxu0 %v6982
        %7024 = vmatpush1.xpose.msra.mxu0 %v6981
        %7025 = vmatprep.subr.mxu0 %v6974
        %7026 = vmatpush1.xpose.msra.mxu0 %v6973
        %7027 = vmatprep.subr.mxu0 %v6966
        %7028 = vmatpush1.xpose.msra.mxu0 %v6965
        %7029 = vmatprep.subr.mxu0 0.0
        %7030 = vmatpush2.xpose.msra.mxu0 0.0
        %7031 = vmatprep.subr.mxu0 0.0
        %7032 = vmatpush2.xpose.msra.mxu0 0.0
        %7033 = vmatprep.subr.mxu0 0.0
        %7034 = vmatpush2.xpose.msra.mxu0 0.0
        %7035 = vmatprep.subr.mxu0 0.0
        %7036 = vmatpush2.xpose.msra.mxu0 0.0
        %7037 = vmatprep.subr.mxu0 0.0
        %7038 = vmatpush2.xpose.msra.mxu0 0.0
        %7039 = vmatprep.subr.mxu0 0.0
        %7040 = vmatpush2.xpose.msra.mxu0 0.0
        %7041 = vmatprep.subr.mxu0 0.0
        %7042 = vmatpush2.xpose.msra.mxu0 0.0
        %7043 = vmatprep.subr.mxu0 0.0
        %7044 = vmatpush2.xpose.msra.mxu0 0.0
        %7045 = vmatprep.subr.mxu0 0.0
        %7046 = vmatpush2.xpose.msra.mxu0 0.0
        %7047 = vmatprep.subr.mxu0 0.0
        %7048 = vmatpush2.xpose.msra.mxu0 0.0
        %7049 = vmatprep.subr.mxu0 0.0
        %7050 = vmatpush2.xpose.msra.mxu0 0.0
        %7051 = vmatprep.subr.mxu0 0.0
        %7052 = vmatpush2.xpose.msra.mxu0 0.0
        %7053 = vmatprep.subr.mxu0 0.0
        %7054 = vmatpush2.xpose.msra.mxu0 0.0
        %7055 = vmatprep.subr.mxu0 0.0
        %7056 = vmatpush2.xpose.msra.mxu0 0.0
        %7057 = vmatprep.subr.mxu0 0.0
        %7058 = vmatpush2.xpose.msra.mxu0 0.0
        %7059 = vmatprep.subr.mxu0 0.0
        %7060 = vmatpush2.xpose.msra.mxu0 0.0
        %7061 = vmatprep.mubr.f32.mxu0 %v6957
        %7062 = vmatmul.mubr.f32.gmra.mxu0 %v6956
        %v7063 = vpop.f32.mrf.mxu0
        %v7064 = vadd.f32 0.0, %v7063
        %v7065 = vpop.f32.mrf.mxu0
        %7066 = vdwg.mxu0
        %7067 = vmatprep.subr.mxu0 0.0
        %7068 = vmatpush1.xpose.msra.mxu0 0.0
        %7069 = vmatprep.subr.mxu0 0.0
        %7070 = vmatpush1.xpose.msra.mxu0 0.0
        %7071 = vmatprep.subr.mxu0 0.0
        %7072 = vmatpush1.xpose.msra.mxu0 0.0
        %7073 = vmatprep.subr.mxu0 0.0
        %7074 = vmatpush1.xpose.msra.mxu0 0.0
        %7075 = vmatprep.subr.mxu0 0.0
        %7076 = vmatpush1.xpose.msra.mxu0 0.0
        %7077 = vmatprep.subr.mxu0 0.0
        %7078 = vmatpush1.xpose.msra.mxu0 0.0
        %7079 = vmatprep.subr.mxu0 0.0
        %7080 = vmatpush1.xpose.msra.mxu0 0.0
        %7081 = vmatprep.subr.mxu0 0.0
        %7082 = vmatpush1.xpose.msra.mxu0 0.0
        %7083 = vmatprep.subr.mxu0 0.0
        %7084 = vmatpush1.xpose.msra.mxu0 0.0
        %7085 = vmatprep.subr.mxu0 0.0
        %7086 = vmatpush1.xpose.msra.mxu0 0.0
        %7087 = vmatprep.subr.mxu0 0.0
        %7088 = vmatpush1.xpose.msra.mxu0 0.0
        %7089 = vmatprep.subr.mxu0 0.0
        %7090 = vmatpush1.xpose.msra.mxu0 0.0
        %7091 = vmatprep.subr.mxu0 %v6992
        %7092 = vmatpush1.xpose.msra.mxu0 %v6991
        %7093 = vmatprep.subr.mxu0 %v6984
        %7094 = vmatpush1.xpose.msra.mxu0 %v6983
        %7095 = vmatprep.subr.mxu0 %v6976
        %7096 = vmatpush1.xpose.msra.mxu0 %v6975
        %7097 = vmatprep.subr.mxu0 %v6968
        %7098 = vmatpush1.xpose.msra.mxu0 %v6967
        %7099 = vmatprep.subr.mxu0 0.0
        %7100 = vmatpush2.xpose.msra.mxu0 0.0
        %7101 = vmatprep.subr.mxu0 0.0
        %7102 = vmatpush2.xpose.msra.mxu0 0.0
        %7103 = vmatprep.subr.mxu0 0.0
        %7104 = vmatpush2.xpose.msra.mxu0 0.0
        %7105 = vmatprep.subr.mxu0 0.0
        %7106 = vmatpush2.xpose.msra.mxu0 0.0
        %7107 = vmatprep.subr.mxu0 0.0
        %7108 = vmatpush2.xpose.msra.mxu0 0.0
        %7109 = vmatprep.subr.mxu0 0.0
        %7110 = vmatpush2.xpose.msra.mxu0 0.0
        %7111 = vmatprep.subr.mxu0 0.0
        %7112 = vmatpush2.xpose.msra.mxu0 0.0
        %7113 = vmatprep.subr.mxu0 0.0
        %7114 = vmatpush2.xpose.msra.mxu0 0.0
        %7115 = vmatprep.subr.mxu0 0.0
        %7116 = vmatpush2.xpose.msra.mxu0 0.0
        %7117 = vmatprep.subr.mxu0 0.0
        %7118 = vmatpush2.xpose.msra.mxu0 0.0
        %7119 = vmatprep.subr.mxu0 0.0
        %7120 = vmatpush2.xpose.msra.mxu0 0.0
        %7121 = vmatprep.subr.mxu0 0.0
        %7122 = vmatpush2.xpose.msra.mxu0 0.0
        %7123 = vmatprep.subr.mxu0 0.0
        %7124 = vmatpush2.xpose.msra.mxu0 0.0
        %7125 = vmatprep.subr.mxu0 0.0
        %7126 = vmatpush2.xpose.msra.mxu0 0.0
        %7127 = vmatprep.subr.mxu0 0.0
        %7128 = vmatpush2.xpose.msra.mxu0 0.0
        %7129 = vmatprep.subr.mxu0 0.0
        %7130 = vmatpush2.xpose.msra.mxu0 0.0
        %7131 = vmatprep.mubr.f32.mxu0 %v6959
        %7132 = vmatmul.mubr.f32.gmra.mxu0 %v6958
        %v7133 = vpop.f32.mrf.mxu0
        %v7134 = vadd.f32 %v7064, %v7133
        %v7135 = vpop.f32.mrf.mxu0
        %7136 = vdwg.mxu0
        %7137 = vmatprep.subr.mxu0 0.0
        %7138 = vmatpush1.xpose.msra.mxu0 0.0
        %7139 = vmatprep.subr.mxu0 0.0
        %7140 = vmatpush1.xpose.msra.mxu0 0.0
        %7141 = vmatprep.subr.mxu0 0.0
        %7142 = vmatpush1.xpose.msra.mxu0 0.0
        %7143 = vmatprep.subr.mxu0 0.0
        %7144 = vmatpush1.xpose.msra.mxu0 0.0
        %7145 = vmatprep.subr.mxu0 0.0
        %7146 = vmatpush1.xpose.msra.mxu0 0.0
        %7147 = vmatprep.subr.mxu0 0.0
        %7148 = vmatpush1.xpose.msra.mxu0 0.0
        %7149 = vmatprep.subr.mxu0 0.0
        %7150 = vmatpush1.xpose.msra.mxu0 0.0
        %7151 = vmatprep.subr.mxu0 0.0
        %7152 = vmatpush1.xpose.msra.mxu0 0.0
        %7153 = vmatprep.subr.mxu0 0.0
        %7154 = vmatpush1.xpose.msra.mxu0 0.0
        %7155 = vmatprep.subr.mxu0 0.0
        %7156 = vmatpush1.xpose.msra.mxu0 0.0
        %7157 = vmatprep.subr.mxu0 0.0
        %7158 = vmatpush1.xpose.msra.mxu0 0.0
        %7159 = vmatprep.subr.mxu0 0.0
        %7160 = vmatpush1.xpose.msra.mxu0 0.0
        %7161 = vmatprep.subr.mxu0 %v6994
        %7162 = vmatpush1.xpose.msra.mxu0 %v6993
        %7163 = vmatprep.subr.mxu0 %v6986
        %7164 = vmatpush1.xpose.msra.mxu0 %v6985
        %7165 = vmatprep.subr.mxu0 %v6978
        %7166 = vmatpush1.xpose.msra.mxu0 %v6977
        %7167 = vmatprep.subr.mxu0 %v6970
        %7168 = vmatpush1.xpose.msra.mxu0 %v6969
        %7169 = vmatprep.subr.mxu0 0.0
        %7170 = vmatpush2.xpose.msra.mxu0 0.0
        %7171 = vmatprep.subr.mxu0 0.0
        %7172 = vmatpush2.xpose.msra.mxu0 0.0
        %7173 = vmatprep.subr.mxu0 0.0
        %7174 = vmatpush2.xpose.msra.mxu0 0.0
        %7175 = vmatprep.subr.mxu0 0.0
        %7176 = vmatpush2.xpose.msra.mxu0 0.0
        %7177 = vmatprep.subr.mxu0 0.0
        %7178 = vmatpush2.xpose.msra.mxu0 0.0
        %7179 = vmatprep.subr.mxu0 0.0
        %7180 = vmatpush2.xpose.msra.mxu0 0.0
        %7181 = vmatprep.subr.mxu0 0.0
        %7182 = vmatpush2.xpose.msra.mxu0 0.0
        %7183 = vmatprep.subr.mxu0 0.0
        %7184 = vmatpush2.xpose.msra.mxu0 0.0
        %7185 = vmatprep.subr.mxu0 0.0
        %7186 = vmatpush2.xpose.msra.mxu0 0.0
        %7187 = vmatprep.subr.mxu0 0.0
        %7188 = vmatpush2.xpose.msra.mxu0 0.0
        %7189 = vmatprep.subr.mxu0 0.0
        %7190 = vmatpush2.xpose.msra.mxu0 0.0
        %7191 = vmatprep.subr.mxu0 0.0
        %7192 = vmatpush2.xpose.msra.mxu0 0.0
        %7193 = vmatprep.subr.mxu0 0.0
        %7194 = vmatpush2.xpose.msra.mxu0 0.0
        %7195 = vmatprep.subr.mxu0 0.0
        %7196 = vmatpush2.xpose.msra.mxu0 0.0
        %7197 = vmatprep.subr.mxu0 0.0
        %7198 = vmatpush2.xpose.msra.mxu0 0.0
        %7199 = vmatprep.subr.mxu0 0.0
        %7200 = vmatpush2.xpose.msra.mxu0 0.0
        %7201 = vmatprep.mubr.f32.mxu0 %v6961
        %7202 = vmatmul.mubr.f32.gmra.mxu0 %v6960
        %v7203 = vpop.f32.mrf.mxu0
        %v7204 = vadd.f32 %v7134, %v7203
        %v7205 = vpop.f32.mrf.mxu0
        %7206 = vdwg.mxu0
        %7207 = vmatprep.subr.mxu0 0.0
        %7208 = vmatpush1.xpose.msra.mxu0 0.0
        %7209 = vmatprep.subr.mxu0 0.0
        %7210 = vmatpush1.xpose.msra.mxu0 0.0
        %7211 = vmatprep.subr.mxu0 0.0
        %7212 = vmatpush1.xpose.msra.mxu0 0.0
        %7213 = vmatprep.subr.mxu0 0.0
        %7214 = vmatpush1.xpose.msra.mxu0 0.0
        %7215 = vmatprep.subr.mxu0 0.0
        %7216 = vmatpush1.xpose.msra.mxu0 0.0
        %7217 = vmatprep.subr.mxu0 0.0
        %7218 = vmatpush1.xpose.msra.mxu0 0.0
        %7219 = vmatprep.subr.mxu0 0.0
        %7220 = vmatpush1.xpose.msra.mxu0 0.0
        %7221 = vmatprep.subr.mxu0 0.0
        %7222 = vmatpush1.xpose.msra.mxu0 0.0
        %7223 = vmatprep.subr.mxu0 0.0
        %7224 = vmatpush1.xpose.msra.mxu0 0.0
        %7225 = vmatprep.subr.mxu0 0.0
        %7226 = vmatpush1.xpose.msra.mxu0 0.0
        %7227 = vmatprep.subr.mxu0 0.0
        %7228 = vmatpush1.xpose.msra.mxu0 0.0
        %7229 = vmatprep.subr.mxu0 0.0
        %7230 = vmatpush1.xpose.msra.mxu0 0.0
        %7231 = vmatprep.subr.mxu0 %v6996
        %7232 = vmatpush1.xpose.msra.mxu0 %v6995
        %7233 = vmatprep.subr.mxu0 %v6988
        %7234 = vmatpush1.xpose.msra.mxu0 %v6987
        %7235 = vmatprep.subr.mxu0 %v6980
        %7236 = vmatpush1.xpose.msra.mxu0 %v6979
        %7237 = vmatprep.subr.mxu0 %v6972
        %7238 = vmatpush1.xpose.msra.mxu0 %v6971
        %7239 = vmatprep.subr.mxu0 0.0
        %7240 = vmatpush2.xpose.msra.mxu0 0.0
        %7241 = vmatprep.subr.mxu0 0.0
        %7242 = vmatpush2.xpose.msra.mxu0 0.0
        %7243 = vmatprep.subr.mxu0 0.0
        %7244 = vmatpush2.xpose.msra.mxu0 0.0
        %7245 = vmatprep.subr.mxu0 0.0
        %7246 = vmatpush2.xpose.msra.mxu0 0.0
        %7247 = vmatprep.subr.mxu0 0.0
        %7248 = vmatpush2.xpose.msra.mxu0 0.0
        %7249 = vmatprep.subr.mxu0 0.0
        %7250 = vmatpush2.xpose.msra.mxu0 0.0
        %7251 = vmatprep.subr.mxu0 0.0
        %7252 = vmatpush2.xpose.msra.mxu0 0.0
        %7253 = vmatprep.subr.mxu0 0.0
        %7254 = vmatpush2.xpose.msra.mxu0 0.0
        %7255 = vmatprep.subr.mxu0 0.0
        %7256 = vmatpush2.xpose.msra.mxu0 0.0
        %7257 = vmatprep.subr.mxu0 0.0
        %7258 = vmatpush2.xpose.msra.mxu0 0.0
        %7259 = vmatprep.subr.mxu0 0.0
        %7260 = vmatpush2.xpose.msra.mxu0 0.0
        %7261 = vmatprep.subr.mxu0 0.0
        %7262 = vmatpush2.xpose.msra.mxu0 0.0
        %7263 = vmatprep.subr.mxu0 0.0
        %7264 = vmatpush2.xpose.msra.mxu0 0.0
        %7265 = vmatprep.subr.mxu0 0.0
        %7266 = vmatpush2.xpose.msra.mxu0 0.0
        %7267 = vmatprep.subr.mxu0 0.0
        %7268 = vmatpush2.xpose.msra.mxu0 0.0
        %7269 = vmatprep.subr.mxu0 0.0
        %7270 = vmatpush2.xpose.msra.mxu0 0.0
        %7271 = vmatprep.mubr.f32.mxu0 %v6963
        %7272 = vmatmul.mubr.f32.gmra.mxu0 %v6962
        %v7273 = vpop.f32.mrf.mxu0
        %v7274 = vadd.f32 %v7204, %v7273
        %v7275 = vpop.f32.mrf.mxu0
        %7276 = vdwg.mxu0
        %v7277 = vadd.f32 %v6923, %v7274
        %v7278 = vlaneseq
        %v7279 = vshrl.u32 %v7278, 7
        %v7280 = vsub.s32 6, %v7279
        %v7281 = vrot.slane %v5141, %v7280
        %v7282 = vlaneseq
        %v7283 = vshrl.u32 %v7282, 7
        %v7284 = vsub.s32 6, %v7283
        %v7285 = vrot.slane %v5142, %v7284
        %v7286 = vlaneseq
        %v7287 = vshrl.u32 %v7286, 7
        %v7288 = vsub.s32 6, %v7287
        %v7289 = vrot.slane %v5143, %v7288
        %v7290 = vlaneseq
        %v7291 = vshrl.u32 %v7290, 7
        %v7292 = vsub.s32 6, %v7291
        %v7293 = vrot.slane %v5144, %v7292
        %v7294 = vlaneseq
        %v7295 = vshrl.u32 %v7294, 7
        %v7296 = vsub.s32 6, %v7295
        %v7297 = vrot.slane %v5145, %v7296
        %v7298 = vlaneseq
        %v7299 = vshrl.u32 %v7298, 7
        %v7300 = vsub.s32 6, %v7299
        %v7301 = vrot.slane %v5146, %v7300
        %v7302 = vlaneseq
        %v7303 = vshrl.u32 %v7302, 7
        %v7304 = vsub.s32 6, %v7303
        %v7305 = vrot.slane %v5147, %v7304
        %v7306 = vlaneseq
        %v7307 = vshrl.u32 %v7306, 7
        %v7308 = vsub.s32 6, %v7307
        %v7309 = vrot.slane %v5148, %v7308
        %v7310 = vmul.f32 %v5149, %v7281
        %v7311 = vmul.f32 %v5150, %v7285
        %v7312 = vmul.f32 %v5151, %v7289
        %v7313 = vmul.f32 %v5152, %v7293
        %v7314 = vmul.f32 %v5153, %v7297
        %v7315 = vmul.f32 %v5154, %v7301
        %v7316 = vmul.f32 %v5155, %v7305
        %v7317 = vmul.f32 %v5156, %v7309
        %s7318 = scalar_lea.vmem [#allocation15], 1536
        %v7319 = vld [vmem:[%s7318] sm:$0xff]
        %v7320 = vld [vmem:[%s7318 + $0x8] sm:$0xff]
        %v7321 = vld [vmem:[%s7318 + $0x10] sm:$0xff]
        %v7322 = vld [vmem:[%s7318 + $0x18] sm:$0xff]
        %v7323 = vld [vmem:[%s7318 + $0x20] sm:$0xff]
        %v7324 = vld [vmem:[%s7318 + $0x28] sm:$0xff]
        %v7325 = vld [vmem:[%s7318 + $0x30] sm:$0xff]
        %v7326 = vld [vmem:[%s7318 + $0x38] sm:$0xff]
        %v7327 = vld [vmem:[%s7318 + $0x40] sm:$0xff]
        %v7328 = vld [vmem:[%s7318 + $0x48] sm:$0xff]
        %v7329 = vld [vmem:[%s7318 + $0x50] sm:$0xff]
        %v7330 = vld [vmem:[%s7318 + $0x58] sm:$0xff]
        %v7331 = vld [vmem:[%s7318 + $0x60] sm:$0xff]
        %v7332 = vld [vmem:[%s7318 + $0x68] sm:$0xff]
        %v7333 = vld [vmem:[%s7318 + $0x70] sm:$0xff]
        %v7334 = vld [vmem:[%s7318 + $0x78] sm:$0xff]
        %v7335 = vld [vmem:[%s7318 + $0x80] sm:$0xff]
        %v7336 = vld [vmem:[%s7318 + $0x88] sm:$0xff]
        %v7337 = vld [vmem:[%s7318 + $0x90] sm:$0xff]
        %v7338 = vld [vmem:[%s7318 + $0x98] sm:$0xff]
        %v7339 = vld [vmem:[%s7318 + $0xa0] sm:$0xff]
        %v7340 = vld [vmem:[%s7318 + $0xa8] sm:$0xff]
        %v7341 = vld [vmem:[%s7318 + $0xb0] sm:$0xff]
        %v7342 = vld [vmem:[%s7318 + $0xb8] sm:$0xff]
        %v7343 = vld [vmem:[%s7318 + $0xc0] sm:$0xff]
        %v7344 = vld [vmem:[%s7318 + $0xc8] sm:$0xff]
        %v7345 = vld [vmem:[%s7318 + $0xd0] sm:$0xff]
        %v7346 = vld [vmem:[%s7318 + $0xd8] sm:$0xff]
        %v7347 = vld [vmem:[%s7318 + $0xe0] sm:$0xff]
        %v7348 = vld [vmem:[%s7318 + $0xe8] sm:$0xff]
        %v7349 = vld [vmem:[%s7318 + $0xf0] sm:$0xff]
        %v7350 = vld [vmem:[%s7318 + $0xf8] sm:$0xff]
        %7351 = vmatprep.subr.mxu0 0.0
        %7352 = vmatpush1.xpose.msra.mxu0 0.0
        %7353 = vmatprep.subr.mxu0 0.0
        %7354 = vmatpush1.xpose.msra.mxu0 0.0
        %7355 = vmatprep.subr.mxu0 0.0
        %7356 = vmatpush1.xpose.msra.mxu0 0.0
        %7357 = vmatprep.subr.mxu0 0.0
        %7358 = vmatpush1.xpose.msra.mxu0 0.0
        %7359 = vmatprep.subr.mxu0 0.0
        %7360 = vmatpush1.xpose.msra.mxu0 0.0
        %7361 = vmatprep.subr.mxu0 0.0
        %7362 = vmatpush1.xpose.msra.mxu0 0.0
        %7363 = vmatprep.subr.mxu0 0.0
        %7364 = vmatpush1.xpose.msra.mxu0 0.0
        %7365 = vmatprep.subr.mxu0 0.0
        %7366 = vmatpush1.xpose.msra.mxu0 0.0
        %7367 = vmatprep.subr.mxu0 0.0
        %7368 = vmatpush1.xpose.msra.mxu0 0.0
        %7369 = vmatprep.subr.mxu0 0.0
        %7370 = vmatpush1.xpose.msra.mxu0 0.0
        %7371 = vmatprep.subr.mxu0 0.0
        %7372 = vmatpush1.xpose.msra.mxu0 0.0
        %7373 = vmatprep.subr.mxu0 0.0
        %7374 = vmatpush1.xpose.msra.mxu0 0.0
        %7375 = vmatprep.subr.mxu0 %v7344
        %7376 = vmatpush1.xpose.msra.mxu0 %v7343
        %7377 = vmatprep.subr.mxu0 %v7336
        %7378 = vmatpush1.xpose.msra.mxu0 %v7335
        %7379 = vmatprep.subr.mxu0 %v7328
        %7380 = vmatpush1.xpose.msra.mxu0 %v7327
        %7381 = vmatprep.subr.mxu0 %v7320
        %7382 = vmatpush1.xpose.msra.mxu0 %v7319
        %7383 = vmatprep.subr.mxu0 0.0
        %7384 = vmatpush2.xpose.msra.mxu0 0.0
        %7385 = vmatprep.subr.mxu0 0.0
        %7386 = vmatpush2.xpose.msra.mxu0 0.0
        %7387 = vmatprep.subr.mxu0 0.0
        %7388 = vmatpush2.xpose.msra.mxu0 0.0
        %7389 = vmatprep.subr.mxu0 0.0
        %7390 = vmatpush2.xpose.msra.mxu0 0.0
        %7391 = vmatprep.subr.mxu0 0.0
        %7392 = vmatpush2.xpose.msra.mxu0 0.0
        %7393 = vmatprep.subr.mxu0 0.0
        %7394 = vmatpush2.xpose.msra.mxu0 0.0
        %7395 = vmatprep.subr.mxu0 0.0
        %7396 = vmatpush2.xpose.msra.mxu0 0.0
        %7397 = vmatprep.subr.mxu0 0.0
        %7398 = vmatpush2.xpose.msra.mxu0 0.0
        %7399 = vmatprep.subr.mxu0 0.0
        %7400 = vmatpush2.xpose.msra.mxu0 0.0
        %7401 = vmatprep.subr.mxu0 0.0
        %7402 = vmatpush2.xpose.msra.mxu0 0.0
        %7403 = vmatprep.subr.mxu0 0.0
        %7404 = vmatpush2.xpose.msra.mxu0 0.0
        %7405 = vmatprep.subr.mxu0 0.0
        %7406 = vmatpush2.xpose.msra.mxu0 0.0
        %7407 = vmatprep.subr.mxu0 0.0
        %7408 = vmatpush2.xpose.msra.mxu0 0.0
        %7409 = vmatprep.subr.mxu0 0.0
        %7410 = vmatpush2.xpose.msra.mxu0 0.0
        %7411 = vmatprep.subr.mxu0 0.0
        %7412 = vmatpush2.xpose.msra.mxu0 0.0
        %7413 = vmatprep.subr.mxu0 0.0
        %7414 = vmatpush2.xpose.msra.mxu0 0.0
        %7415 = vmatprep.mubr.f32.mxu0 %v7311
        %7416 = vmatmul.mubr.f32.gmra.mxu0 %v7310
        %v7417 = vpop.f32.mrf.mxu0
        %v7418 = vadd.f32 0.0, %v7417
        %v7419 = vpop.f32.mrf.mxu0
        %7420 = vdwg.mxu0
        %7421 = vmatprep.subr.mxu0 0.0
        %7422 = vmatpush1.xpose.msra.mxu0 0.0
        %7423 = vmatprep.subr.mxu0 0.0
        %7424 = vmatpush1.xpose.msra.mxu0 0.0
        %7425 = vmatprep.subr.mxu0 0.0
        %7426 = vmatpush1.xpose.msra.mxu0 0.0
        %7427 = vmatprep.subr.mxu0 0.0
        %7428 = vmatpush1.xpose.msra.mxu0 0.0
        %7429 = vmatprep.subr.mxu0 0.0
        %7430 = vmatpush1.xpose.msra.mxu0 0.0
        %7431 = vmatprep.subr.mxu0 0.0
        %7432 = vmatpush1.xpose.msra.mxu0 0.0
        %7433 = vmatprep.subr.mxu0 0.0
        %7434 = vmatpush1.xpose.msra.mxu0 0.0
        %7435 = vmatprep.subr.mxu0 0.0
        %7436 = vmatpush1.xpose.msra.mxu0 0.0
        %7437 = vmatprep.subr.mxu0 0.0
        %7438 = vmatpush1.xpose.msra.mxu0 0.0
        %7439 = vmatprep.subr.mxu0 0.0
        %7440 = vmatpush1.xpose.msra.mxu0 0.0
        %7441 = vmatprep.subr.mxu0 0.0
        %7442 = vmatpush1.xpose.msra.mxu0 0.0
        %7443 = vmatprep.subr.mxu0 0.0
        %7444 = vmatpush1.xpose.msra.mxu0 0.0
        %7445 = vmatprep.subr.mxu0 %v7346
        %7446 = vmatpush1.xpose.msra.mxu0 %v7345
        %7447 = vmatprep.subr.mxu0 %v7338
        %7448 = vmatpush1.xpose.msra.mxu0 %v7337
        %7449 = vmatprep.subr.mxu0 %v7330
        %7450 = vmatpush1.xpose.msra.mxu0 %v7329
        %7451 = vmatprep.subr.mxu0 %v7322
        %7452 = vmatpush1.xpose.msra.mxu0 %v7321
        %7453 = vmatprep.subr.mxu0 0.0
        %7454 = vmatpush2.xpose.msra.mxu0 0.0
        %7455 = vmatprep.subr.mxu0 0.0
        %7456 = vmatpush2.xpose.msra.mxu0 0.0
        %7457 = vmatprep.subr.mxu0 0.0
        %7458 = vmatpush2.xpose.msra.mxu0 0.0
        %7459 = vmatprep.subr.mxu0 0.0
        %7460 = vmatpush2.xpose.msra.mxu0 0.0
        %7461 = vmatprep.subr.mxu0 0.0
        %7462 = vmatpush2.xpose.msra.mxu0 0.0
        %7463 = vmatprep.subr.mxu0 0.0
        %7464 = vmatpush2.xpose.msra.mxu0 0.0
        %7465 = vmatprep.subr.mxu0 0.0
        %7466 = vmatpush2.xpose.msra.mxu0 0.0
        %7467 = vmatprep.subr.mxu0 0.0
        %7468 = vmatpush2.xpose.msra.mxu0 0.0
        %7469 = vmatprep.subr.mxu0 0.0
        %7470 = vmatpush2.xpose.msra.mxu0 0.0
        %7471 = vmatprep.subr.mxu0 0.0
        %7472 = vmatpush2.xpose.msra.mxu0 0.0
        %7473 = vmatprep.subr.mxu0 0.0
        %7474 = vmatpush2.xpose.msra.mxu0 0.0
        %7475 = vmatprep.subr.mxu0 0.0
        %7476 = vmatpush2.xpose.msra.mxu0 0.0
        %7477 = vmatprep.subr.mxu0 0.0
        %7478 = vmatpush2.xpose.msra.mxu0 0.0
        %7479 = vmatprep.subr.mxu0 0.0
        %7480 = vmatpush2.xpose.msra.mxu0 0.0
        %7481 = vmatprep.subr.mxu0 0.0
        %7482 = vmatpush2.xpose.msra.mxu0 0.0
        %7483 = vmatprep.subr.mxu0 0.0
        %7484 = vmatpush2.xpose.msra.mxu0 0.0
        %7485 = vmatprep.mubr.f32.mxu0 %v7313
        %7486 = vmatmul.mubr.f32.gmra.mxu0 %v7312
        %v7487 = vpop.f32.mrf.mxu0
        %v7488 = vadd.f32 %v7418, %v7487
        %v7489 = vpop.f32.mrf.mxu0
        %7490 = vdwg.mxu0
        %7491 = vmatprep.subr.mxu0 0.0
        %7492 = vmatpush1.xpose.msra.mxu0 0.0
        %7493 = vmatprep.subr.mxu0 0.0
        %7494 = vmatpush1.xpose.msra.mxu0 0.0
        %7495 = vmatprep.subr.mxu0 0.0
        %7496 = vmatpush1.xpose.msra.mxu0 0.0
        %7497 = vmatprep.subr.mxu0 0.0
        %7498 = vmatpush1.xpose.msra.mxu0 0.0
        %7499 = vmatprep.subr.mxu0 0.0
        %7500 = vmatpush1.xpose.msra.mxu0 0.0
        %7501 = vmatprep.subr.mxu0 0.0
        %7502 = vmatpush1.xpose.msra.mxu0 0.0
        %7503 = vmatprep.subr.mxu0 0.0
        %7504 = vmatpush1.xpose.msra.mxu0 0.0
        %7505 = vmatprep.subr.mxu0 0.0
        %7506 = vmatpush1.xpose.msra.mxu0 0.0
        %7507 = vmatprep.subr.mxu0 0.0
        %7508 = vmatpush1.xpose.msra.mxu0 0.0
        %7509 = vmatprep.subr.mxu0 0.0
        %7510 = vmatpush1.xpose.msra.mxu0 0.0
        %7511 = vmatprep.subr.mxu0 0.0
        %7512 = vmatpush1.xpose.msra.mxu0 0.0
        %7513 = vmatprep.subr.mxu0 0.0
        %7514 = vmatpush1.xpose.msra.mxu0 0.0
        %7515 = vmatprep.subr.mxu0 %v7348
        %7516 = vmatpush1.xpose.msra.mxu0 %v7347
        %7517 = vmatprep.subr.mxu0 %v7340
        %7518 = vmatpush1.xpose.msra.mxu0 %v7339
        %7519 = vmatprep.subr.mxu0 %v7332
        %7520 = vmatpush1.xpose.msra.mxu0 %v7331
        %7521 = vmatprep.subr.mxu0 %v7324
        %7522 = vmatpush1.xpose.msra.mxu0 %v7323
        %7523 = vmatprep.subr.mxu0 0.0
        %7524 = vmatpush2.xpose.msra.mxu0 0.0
        %7525 = vmatprep.subr.mxu0 0.0
        %7526 = vmatpush2.xpose.msra.mxu0 0.0
        %7527 = vmatprep.subr.mxu0 0.0
        %7528 = vmatpush2.xpose.msra.mxu0 0.0
        %7529 = vmatprep.subr.mxu0 0.0
        %7530 = vmatpush2.xpose.msra.mxu0 0.0
        %7531 = vmatprep.subr.mxu0 0.0
        %7532 = vmatpush2.xpose.msra.mxu0 0.0
        %7533 = vmatprep.subr.mxu0 0.0
        %7534 = vmatpush2.xpose.msra.mxu0 0.0
        %7535 = vmatprep.subr.mxu0 0.0
        %7536 = vmatpush2.xpose.msra.mxu0 0.0
        %7537 = vmatprep.subr.mxu0 0.0
        %7538 = vmatpush2.xpose.msra.mxu0 0.0
        %7539 = vmatprep.subr.mxu0 0.0
        %7540 = vmatpush2.xpose.msra.mxu0 0.0
        %7541 = vmatprep.subr.mxu0 0.0
        %7542 = vmatpush2.xpose.msra.mxu0 0.0
        %7543 = vmatprep.subr.mxu0 0.0
        %7544 = vmatpush2.xpose.msra.mxu0 0.0
        %7545 = vmatprep.subr.mxu0 0.0
        %7546 = vmatpush2.xpose.msra.mxu0 0.0
        %7547 = vmatprep.subr.mxu0 0.0
        %7548 = vmatpush2.xpose.msra.mxu0 0.0
        %7549 = vmatprep.subr.mxu0 0.0
        %7550 = vmatpush2.xpose.msra.mxu0 0.0
        %7551 = vmatprep.subr.mxu0 0.0
        %7552 = vmatpush2.xpose.msra.mxu0 0.0
        %7553 = vmatprep.subr.mxu0 0.0
        %7554 = vmatpush2.xpose.msra.mxu0 0.0
        %7555 = vmatprep.mubr.f32.mxu0 %v7315
        %7556 = vmatmul.mubr.f32.gmra.mxu0 %v7314
        %v7557 = vpop.f32.mrf.mxu0
        %v7558 = vadd.f32 %v7488, %v7557
        %v7559 = vpop.f32.mrf.mxu0
        %7560 = vdwg.mxu0
        %7561 = vmatprep.subr.mxu0 0.0
        %7562 = vmatpush1.xpose.msra.mxu0 0.0
        %7563 = vmatprep.subr.mxu0 0.0
        %7564 = vmatpush1.xpose.msra.mxu0 0.0
        %7565 = vmatprep.subr.mxu0 0.0
        %7566 = vmatpush1.xpose.msra.mxu0 0.0
        %7567 = vmatprep.subr.mxu0 0.0
        %7568 = vmatpush1.xpose.msra.mxu0 0.0
        %7569 = vmatprep.subr.mxu0 0.0
        %7570 = vmatpush1.xpose.msra.mxu0 0.0
        %7571 = vmatprep.subr.mxu0 0.0
        %7572 = vmatpush1.xpose.msra.mxu0 0.0
        %7573 = vmatprep.subr.mxu0 0.0
        %7574 = vmatpush1.xpose.msra.mxu0 0.0
        %7575 = vmatprep.subr.mxu0 0.0
        %7576 = vmatpush1.xpose.msra.mxu0 0.0
        %7577 = vmatprep.subr.mxu0 0.0
        %7578 = vmatpush1.xpose.msra.mxu0 0.0
        %7579 = vmatprep.subr.mxu0 0.0
        %7580 = vmatpush1.xpose.msra.mxu0 0.0
        %7581 = vmatprep.subr.mxu0 0.0
        %7582 = vmatpush1.xpose.msra.mxu0 0.0
        %7583 = vmatprep.subr.mxu0 0.0
        %7584 = vmatpush1.xpose.msra.mxu0 0.0
        %7585 = vmatprep.subr.mxu0 %v7350
        %7586 = vmatpush1.xpose.msra.mxu0 %v7349
        %7587 = vmatprep.subr.mxu0 %v7342
        %7588 = vmatpush1.xpose.msra.mxu0 %v7341
        %7589 = vmatprep.subr.mxu0 %v7334
        %7590 = vmatpush1.xpose.msra.mxu0 %v7333
        %7591 = vmatprep.subr.mxu0 %v7326
        %7592 = vmatpush1.xpose.msra.mxu0 %v7325
        %7593 = vmatprep.subr.mxu0 0.0
        %7594 = vmatpush2.xpose.msra.mxu0 0.0
        %7595 = vmatprep.subr.mxu0 0.0
        %7596 = vmatpush2.xpose.msra.mxu0 0.0
        %7597 = vmatprep.subr.mxu0 0.0
        %7598 = vmatpush2.xpose.msra.mxu0 0.0
        %7599 = vmatprep.subr.mxu0 0.0
        %7600 = vmatpush2.xpose.msra.mxu0 0.0
        %7601 = vmatprep.subr.mxu0 0.0
        %7602 = vmatpush2.xpose.msra.mxu0 0.0
        %7603 = vmatprep.subr.mxu0 0.0
        %7604 = vmatpush2.xpose.msra.mxu0 0.0
        %7605 = vmatprep.subr.mxu0 0.0
        %7606 = vmatpush2.xpose.msra.mxu0 0.0
        %7607 = vmatprep.subr.mxu0 0.0
        %7608 = vmatpush2.xpose.msra.mxu0 0.0
        %7609 = vmatprep.subr.mxu0 0.0
        %7610 = vmatpush2.xpose.msra.mxu0 0.0
        %7611 = vmatprep.subr.mxu0 0.0
        %7612 = vmatpush2.xpose.msra.mxu0 0.0
        %7613 = vmatprep.subr.mxu0 0.0
        %7614 = vmatpush2.xpose.msra.mxu0 0.0
        %7615 = vmatprep.subr.mxu0 0.0
        %7616 = vmatpush2.xpose.msra.mxu0 0.0
        %7617 = vmatprep.subr.mxu0 0.0
        %7618 = vmatpush2.xpose.msra.mxu0 0.0
        %7619 = vmatprep.subr.mxu0 0.0
        %7620 = vmatpush2.xpose.msra.mxu0 0.0
        %7621 = vmatprep.subr.mxu0 0.0
        %7622 = vmatpush2.xpose.msra.mxu0 0.0
        %7623 = vmatprep.subr.mxu0 0.0
        %7624 = vmatpush2.xpose.msra.mxu0 0.0
        %7625 = vmatprep.mubr.f32.mxu0 %v7317
        %7626 = vmatmul.mubr.f32.gmra.mxu0 %v7316
        %v7627 = vpop.f32.mrf.mxu0
        %v7628 = vadd.f32 %v7558, %v7627
        %v7629 = vpop.f32.mrf.mxu0
        %7630 = vdwg.mxu0
        %v7631 = vadd.f32 %v7277, %v7628
        %v7632 = vlaneseq
        %v7633 = vshrl.u32 %v7632, 7
        %v7634 = vsub.s32 7, %v7633
        %v7635 = vrot.slane %v5141, %v7634
        %v7636 = vlaneseq
        %v7637 = vshrl.u32 %v7636, 7
        %v7638 = vsub.s32 7, %v7637
        %v7639 = vrot.slane %v5142, %v7638
        %v7640 = vlaneseq
        %v7641 = vshrl.u32 %v7640, 7
        %v7642 = vsub.s32 7, %v7641
        %v7643 = vrot.slane %v5143, %v7642
        %v7644 = vlaneseq
        %v7645 = vshrl.u32 %v7644, 7
        %v7646 = vsub.s32 7, %v7645
        %v7647 = vrot.slane %v5144, %v7646
        %v7648 = vlaneseq
        %v7649 = vshrl.u32 %v7648, 7
        %v7650 = vsub.s32 7, %v7649
        %v7651 = vrot.slane %v5145, %v7650
        %v7652 = vlaneseq
        %v7653 = vshrl.u32 %v7652, 7
        %v7654 = vsub.s32 7, %v7653
        %v7655 = vrot.slane %v5146, %v7654
        %v7656 = vlaneseq
        %v7657 = vshrl.u32 %v7656, 7
        %v7658 = vsub.s32 7, %v7657
        %v7659 = vrot.slane %v5147, %v7658
        %v7660 = vlaneseq
        %v7661 = vshrl.u32 %v7660, 7
        %v7662 = vsub.s32 7, %v7661
        %v7663 = vrot.slane %v5148, %v7662
        %v7664 = vmul.f32 %v5149, %v7635
        %v7665 = vmul.f32 %v5150, %v7639
        %v7666 = vmul.f32 %v5151, %v7643
        %v7667 = vmul.f32 %v5152, %v7647
        %v7668 = vmul.f32 %v5153, %v7651
        %v7669 = vmul.f32 %v5154, %v7655
        %v7670 = vmul.f32 %v5155, %v7659
        %v7671 = vmul.f32 %v5156, %v7663
        %s7672 = scalar_lea.vmem [#allocation15], 1792
        %v7673 = vld [vmem:[%s7672] sm:$0xff]
        %v7674 = vld [vmem:[%s7672 + $0x8] sm:$0xff]
        %v7675 = vld [vmem:[%s7672 + $0x10] sm:$0xff]
        %v7676 = vld [vmem:[%s7672 + $0x18] sm:$0xff]
        %v7677 = vld [vmem:[%s7672 + $0x20] sm:$0xff]
        %v7678 = vld [vmem:[%s7672 + $0x28] sm:$0xff]
        %v7679 = vld [vmem:[%s7672 + $0x30] sm:$0xff]
        %v7680 = vld [vmem:[%s7672 + $0x38] sm:$0xff]
        %v7681 = vld [vmem:[%s7672 + $0x40] sm:$0xff]
        %v7682 = vld [vmem:[%s7672 + $0x48] sm:$0xff]
        %v7683 = vld [vmem:[%s7672 + $0x50] sm:$0xff]
        %v7684 = vld [vmem:[%s7672 + $0x58] sm:$0xff]
        %v7685 = vld [vmem:[%s7672 + $0x60] sm:$0xff]
        %v7686 = vld [vmem:[%s7672 + $0x68] sm:$0xff]
        %v7687 = vld [vmem:[%s7672 + $0x70] sm:$0xff]
        %v7688 = vld [vmem:[%s7672 + $0x78] sm:$0xff]
        %v7689 = vld [vmem:[%s7672 + $0x80] sm:$0xff]
        %v7690 = vld [vmem:[%s7672 + $0x88] sm:$0xff]
        %v7691 = vld [vmem:[%s7672 + $0x90] sm:$0xff]
        %v7692 = vld [vmem:[%s7672 + $0x98] sm:$0xff]
        %v7693 = vld [vmem:[%s7672 + $0xa0] sm:$0xff]
        %v7694 = vld [vmem:[%s7672 + $0xa8] sm:$0xff]
        %v7695 = vld [vmem:[%s7672 + $0xb0] sm:$0xff]
        %v7696 = vld [vmem:[%s7672 + $0xb8] sm:$0xff]
        %v7697 = vld [vmem:[%s7672 + $0xc0] sm:$0xff]
        %v7698 = vld [vmem:[%s7672 + $0xc8] sm:$0xff]
        %v7699 = vld [vmem:[%s7672 + $0xd0] sm:$0xff]
        %v7700 = vld [vmem:[%s7672 + $0xd8] sm:$0xff]
        %v7701 = vld [vmem:[%s7672 + $0xe0] sm:$0xff]
        %v7702 = vld [vmem:[%s7672 + $0xe8] sm:$0xff]
        %v7703 = vld [vmem:[%s7672 + $0xf0] sm:$0xff]
        %v7704 = vld [vmem:[%s7672 + $0xf8] sm:$0xff]
        %7705 = vmatprep.subr.mxu0 0.0
        %7706 = vmatpush1.xpose.msra.mxu0 0.0
        %7707 = vmatprep.subr.mxu0 0.0
        %7708 = vmatpush1.xpose.msra.mxu0 0.0
        %7709 = vmatprep.subr.mxu0 0.0
        %7710 = vmatpush1.xpose.msra.mxu0 0.0
        %7711 = vmatprep.subr.mxu0 0.0
        %7712 = vmatpush1.xpose.msra.mxu0 0.0
        %7713 = vmatprep.subr.mxu0 0.0
        %7714 = vmatpush1.xpose.msra.mxu0 0.0
        %7715 = vmatprep.subr.mxu0 0.0
        %7716 = vmatpush1.xpose.msra.mxu0 0.0
        %7717 = vmatprep.subr.mxu0 0.0
        %7718 = vmatpush1.xpose.msra.mxu0 0.0
        %7719 = vmatprep.subr.mxu0 0.0
        %7720 = vmatpush1.xpose.msra.mxu0 0.0
        %7721 = vmatprep.subr.mxu0 0.0
        %7722 = vmatpush1.xpose.msra.mxu0 0.0
        %7723 = vmatprep.subr.mxu0 0.0
        %7724 = vmatpush1.xpose.msra.mxu0 0.0
        %7725 = vmatprep.subr.mxu0 0.0
        %7726 = vmatpush1.xpose.msra.mxu0 0.0
        %7727 = vmatprep.subr.mxu0 0.0
        %7728 = vmatpush1.xpose.msra.mxu0 0.0
        %7729 = vmatprep.subr.mxu0 %v7698
        %7730 = vmatpush1.xpose.msra.mxu0 %v7697
        %7731 = vmatprep.subr.mxu0 %v7690
        %7732 = vmatpush1.xpose.msra.mxu0 %v7689
        %7733 = vmatprep.subr.mxu0 %v7682
        %7734 = vmatpush1.xpose.msra.mxu0 %v7681
        %7735 = vmatprep.subr.mxu0 %v7674
        %7736 = vmatpush1.xpose.msra.mxu0 %v7673
        %7737 = vmatprep.subr.mxu0 0.0
        %7738 = vmatpush2.xpose.msra.mxu0 0.0
        %7739 = vmatprep.subr.mxu0 0.0
        %7740 = vmatpush2.xpose.msra.mxu0 0.0
        %7741 = vmatprep.subr.mxu0 0.0
        %7742 = vmatpush2.xpose.msra.mxu0 0.0
        %7743 = vmatprep.subr.mxu0 0.0
        %7744 = vmatpush2.xpose.msra.mxu0 0.0
        %7745 = vmatprep.subr.mxu0 0.0
        %7746 = vmatpush2.xpose.msra.mxu0 0.0
        %7747 = vmatprep.subr.mxu0 0.0
        %7748 = vmatpush2.xpose.msra.mxu0 0.0
        %7749 = vmatprep.subr.mxu0 0.0
        %7750 = vmatpush2.xpose.msra.mxu0 0.0
        %7751 = vmatprep.subr.mxu0 0.0
        %7752 = vmatpush2.xpose.msra.mxu0 0.0
        %7753 = vmatprep.subr.mxu0 0.0
        %7754 = vmatpush2.xpose.msra.mxu0 0.0
        %7755 = vmatprep.subr.mxu0 0.0
        %7756 = vmatpush2.xpose.msra.mxu0 0.0
        %7757 = vmatprep.subr.mxu0 0.0
        %7758 = vmatpush2.xpose.msra.mxu0 0.0
        %7759 = vmatprep.subr.mxu0 0.0
        %7760 = vmatpush2.xpose.msra.mxu0 0.0
        %7761 = vmatprep.subr.mxu0 0.0
        %7762 = vmatpush2.xpose.msra.mxu0 0.0
        %7763 = vmatprep.subr.mxu0 0.0
        %7764 = vmatpush2.xpose.msra.mxu0 0.0
        %7765 = vmatprep.subr.mxu0 0.0
        %7766 = vmatpush2.xpose.msra.mxu0 0.0
        %7767 = vmatprep.subr.mxu0 0.0
        %7768 = vmatpush2.xpose.msra.mxu0 0.0
        %7769 = vmatprep.mubr.f32.mxu0 %v7665
        %7770 = vmatmul.mubr.f32.gmra.mxu0 %v7664
        %v7771 = vpop.f32.mrf.mxu0
        %v7772 = vadd.f32 0.0, %v7771
        %v7773 = vpop.f32.mrf.mxu0
        %7774 = vdwg.mxu0
        %7775 = vmatprep.subr.mxu0 0.0
        %7776 = vmatpush1.xpose.msra.mxu0 0.0
        %7777 = vmatprep.subr.mxu0 0.0
        %7778 = vmatpush1.xpose.msra.mxu0 0.0
        %7779 = vmatprep.subr.mxu0 0.0
        %7780 = vmatpush1.xpose.msra.mxu0 0.0
        %7781 = vmatprep.subr.mxu0 0.0
        %7782 = vmatpush1.xpose.msra.mxu0 0.0
        %7783 = vmatprep.subr.mxu0 0.0
        %7784 = vmatpush1.xpose.msra.mxu0 0.0
        %7785 = vmatprep.subr.mxu0 0.0
        %7786 = vmatpush1.xpose.msra.mxu0 0.0
        %7787 = vmatprep.subr.mxu0 0.0
        %7788 = vmatpush1.xpose.msra.mxu0 0.0
        %7789 = vmatprep.subr.mxu0 0.0
        %7790 = vmatpush1.xpose.msra.mxu0 0.0
        %7791 = vmatprep.subr.mxu0 0.0
        %7792 = vmatpush1.xpose.msra.mxu0 0.0
        %7793 = vmatprep.subr.mxu0 0.0
        %7794 = vmatpush1.xpose.msra.mxu0 0.0
        %7795 = vmatprep.subr.mxu0 0.0
        %7796 = vmatpush1.xpose.msra.mxu0 0.0
        %7797 = vmatprep.subr.mxu0 0.0
        %7798 = vmatpush1.xpose.msra.mxu0 0.0
        %7799 = vmatprep.subr.mxu0 %v7700
        %7800 = vmatpush1.xpose.msra.mxu0 %v7699
        %7801 = vmatprep.subr.mxu0 %v7692
        %7802 = vmatpush1.xpose.msra.mxu0 %v7691
        %7803 = vmatprep.subr.mxu0 %v7684
        %7804 = vmatpush1.xpose.msra.mxu0 %v7683
        %7805 = vmatprep.subr.mxu0 %v7676
        %7806 = vmatpush1.xpose.msra.mxu0 %v7675
        %7807 = vmatprep.subr.mxu0 0.0
        %7808 = vmatpush2.xpose.msra.mxu0 0.0
        %7809 = vmatprep.subr.mxu0 0.0
        %7810 = vmatpush2.xpose.msra.mxu0 0.0
        %7811 = vmatprep.subr.mxu0 0.0
        %7812 = vmatpush2.xpose.msra.mxu0 0.0
        %7813 = vmatprep.subr.mxu0 0.0
        %7814 = vmatpush2.xpose.msra.mxu0 0.0
        %7815 = vmatprep.subr.mxu0 0.0
        %7816 = vmatpush2.xpose.msra.mxu0 0.0
        %7817 = vmatprep.subr.mxu0 0.0
        %7818 = vmatpush2.xpose.msra.mxu0 0.0
        %7819 = vmatprep.subr.mxu0 0.0
        %7820 = vmatpush2.xpose.msra.mxu0 0.0
        %7821 = vmatprep.subr.mxu0 0.0
        %7822 = vmatpush2.xpose.msra.mxu0 0.0
        %7823 = vmatprep.subr.mxu0 0.0
        %7824 = vmatpush2.xpose.msra.mxu0 0.0
        %7825 = vmatprep.subr.mxu0 0.0
        %7826 = vmatpush2.xpose.msra.mxu0 0.0
        %7827 = vmatprep.subr.mxu0 0.0
        %7828 = vmatpush2.xpose.msra.mxu0 0.0
        %7829 = vmatprep.subr.mxu0 0.0
        %7830 = vmatpush2.xpose.msra.mxu0 0.0
        %7831 = vmatprep.subr.mxu0 0.0
        %7832 = vmatpush2.xpose.msra.mxu0 0.0
        %7833 = vmatprep.subr.mxu0 0.0
        %7834 = vmatpush2.xpose.msra.mxu0 0.0
        %7835 = vmatprep.subr.mxu0 0.0
        %7836 = vmatpush2.xpose.msra.mxu0 0.0
        %7837 = vmatprep.subr.mxu0 0.0
        %7838 = vmatpush2.xpose.msra.mxu0 0.0
        %7839 = vmatprep.mubr.f32.mxu0 %v7667
        %7840 = vmatmul.mubr.f32.gmra.mxu0 %v7666
        %v7841 = vpop.f32.mrf.mxu0
        %v7842 = vadd.f32 %v7772, %v7841
        %v7843 = vpop.f32.mrf.mxu0
        %7844 = vdwg.mxu0
        %7845 = vmatprep.subr.mxu0 0.0
        %7846 = vmatpush1.xpose.msra.mxu0 0.0
        %7847 = vmatprep.subr.mxu0 0.0
        %7848 = vmatpush1.xpose.msra.mxu0 0.0
        %7849 = vmatprep.subr.mxu0 0.0
        %7850 = vmatpush1.xpose.msra.mxu0 0.0
        %7851 = vmatprep.subr.mxu0 0.0
        %7852 = vmatpush1.xpose.msra.mxu0 0.0
        %7853 = vmatprep.subr.mxu0 0.0
        %7854 = vmatpush1.xpose.msra.mxu0 0.0
        %7855 = vmatprep.subr.mxu0 0.0
        %7856 = vmatpush1.xpose.msra.mxu0 0.0
        %7857 = vmatprep.subr.mxu0 0.0
        %7858 = vmatpush1.xpose.msra.mxu0 0.0
        %7859 = vmatprep.subr.mxu0 0.0
        %7860 = vmatpush1.xpose.msra.mxu0 0.0
        %7861 = vmatprep.subr.mxu0 0.0
        %7862 = vmatpush1.xpose.msra.mxu0 0.0
        %7863 = vmatprep.subr.mxu0 0.0
        %7864 = vmatpush1.xpose.msra.mxu0 0.0
        %7865 = vmatprep.subr.mxu0 0.0
        %7866 = vmatpush1.xpose.msra.mxu0 0.0
        %7867 = vmatprep.subr.mxu0 0.0
        %7868 = vmatpush1.xpose.msra.mxu0 0.0
        %7869 = vmatprep.subr.mxu0 %v7702
        %7870 = vmatpush1.xpose.msra.mxu0 %v7701
        %7871 = vmatprep.subr.mxu0 %v7694
        %7872 = vmatpush1.xpose.msra.mxu0 %v7693
        %7873 = vmatprep.subr.mxu0 %v7686
        %7874 = vmatpush1.xpose.msra.mxu0 %v7685
        %7875 = vmatprep.subr.mxu0 %v7678
        %7876 = vmatpush1.xpose.msra.mxu0 %v7677
        %7877 = vmatprep.subr.mxu0 0.0
        %7878 = vmatpush2.xpose.msra.mxu0 0.0
        %7879 = vmatprep.subr.mxu0 0.0
        %7880 = vmatpush2.xpose.msra.mxu0 0.0
        %7881 = vmatprep.subr.mxu0 0.0
        %7882 = vmatpush2.xpose.msra.mxu0 0.0
        %7883 = vmatprep.subr.mxu0 0.0
        %7884 = vmatpush2.xpose.msra.mxu0 0.0
        %7885 = vmatprep.subr.mxu0 0.0
        %7886 = vmatpush2.xpose.msra.mxu0 0.0
        %7887 = vmatprep.subr.mxu0 0.0
        %7888 = vmatpush2.xpose.msra.mxu0 0.0
        %7889 = vmatprep.subr.mxu0 0.0
        %7890 = vmatpush2.xpose.msra.mxu0 0.0
        %7891 = vmatprep.subr.mxu0 0.0
        %7892 = vmatpush2.xpose.msra.mxu0 0.0
        %7893 = vmatprep.subr.mxu0 0.0
        %7894 = vmatpush2.xpose.msra.mxu0 0.0
        %7895 = vmatprep.subr.mxu0 0.0
        %7896 = vmatpush2.xpose.msra.mxu0 0.0
        %7897 = vmatprep.subr.mxu0 0.0
        %7898 = vmatpush2.xpose.msra.mxu0 0.0
        %7899 = vmatprep.subr.mxu0 0.0
        %7900 = vmatpush2.xpose.msra.mxu0 0.0
        %7901 = vmatprep.subr.mxu0 0.0
        %7902 = vmatpush2.xpose.msra.mxu0 0.0
        %7903 = vmatprep.subr.mxu0 0.0
        %7904 = vmatpush2.xpose.msra.mxu0 0.0
        %7905 = vmatprep.subr.mxu0 0.0
        %7906 = vmatpush2.xpose.msra.mxu0 0.0
        %7907 = vmatprep.subr.mxu0 0.0
        %7908 = vmatpush2.xpose.msra.mxu0 0.0
        %7909 = vmatprep.mubr.f32.mxu0 %v7669
        %7910 = vmatmul.mubr.f32.gmra.mxu0 %v7668
        %v7911 = vpop.f32.mrf.mxu0
        %v7912 = vadd.f32 %v7842, %v7911
        %v7913 = vpop.f32.mrf.mxu0
        %7914 = vdwg.mxu0
        %7915 = vmatprep.subr.mxu0 0.0
        %7916 = vmatpush1.xpose.msra.mxu0 0.0
        %7917 = vmatprep.subr.mxu0 0.0
        %7918 = vmatpush1.xpose.msra.mxu0 0.0
        %7919 = vmatprep.subr.mxu0 0.0
        %7920 = vmatpush1.xpose.msra.mxu0 0.0
        %7921 = vmatprep.subr.mxu0 0.0
        %7922 = vmatpush1.xpose.msra.mxu0 0.0
        %7923 = vmatprep.subr.mxu0 0.0
        %7924 = vmatpush1.xpose.msra.mxu0 0.0
        %7925 = vmatprep.subr.mxu0 0.0
        %7926 = vmatpush1.xpose.msra.mxu0 0.0
        %7927 = vmatprep.subr.mxu0 0.0
        %7928 = vmatpush1.xpose.msra.mxu0 0.0
        %7929 = vmatprep.subr.mxu0 0.0
        %7930 = vmatpush1.xpose.msra.mxu0 0.0
        %7931 = vmatprep.subr.mxu0 0.0
        %7932 = vmatpush1.xpose.msra.mxu0 0.0
        %7933 = vmatprep.subr.mxu0 0.0
        %7934 = vmatpush1.xpose.msra.mxu0 0.0
        %7935 = vmatprep.subr.mxu0 0.0
        %7936 = vmatpush1.xpose.msra.mxu0 0.0
        %7937 = vmatprep.subr.mxu0 0.0
        %7938 = vmatpush1.xpose.msra.mxu0 0.0
        %7939 = vmatprep.subr.mxu0 %v7704
        %7940 = vmatpush1.xpose.msra.mxu0 %v7703
        %7941 = vmatprep.subr.mxu0 %v7696
        %7942 = vmatpush1.xpose.msra.mxu0 %v7695
        %7943 = vmatprep.subr.mxu0 %v7688
        %7944 = vmatpush1.xpose.msra.mxu0 %v7687
        %7945 = vmatprep.subr.mxu0 %v7680
        %7946 = vmatpush1.xpose.msra.mxu0 %v7679
        %7947 = vmatprep.subr.mxu0 0.0
        %7948 = vmatpush2.xpose.msra.mxu0 0.0
        %7949 = vmatprep.subr.mxu0 0.0
        %7950 = vmatpush2.xpose.msra.mxu0 0.0
        %7951 = vmatprep.subr.mxu0 0.0
        %7952 = vmatpush2.xpose.msra.mxu0 0.0
        %7953 = vmatprep.subr.mxu0 0.0
        %7954 = vmatpush2.xpose.msra.mxu0 0.0
        %7955 = vmatprep.subr.mxu0 0.0
        %7956 = vmatpush2.xpose.msra.mxu0 0.0
        %7957 = vmatprep.subr.mxu0 0.0
        %7958 = vmatpush2.xpose.msra.mxu0 0.0
        %7959 = vmatprep.subr.mxu0 0.0
        %7960 = vmatpush2.xpose.msra.mxu0 0.0
        %7961 = vmatprep.subr.mxu0 0.0
        %7962 = vmatpush2.xpose.msra.mxu0 0.0
        %7963 = vmatprep.subr.mxu0 0.0
        %7964 = vmatpush2.xpose.msra.mxu0 0.0
        %7965 = vmatprep.subr.mxu0 0.0
        %7966 = vmatpush2.xpose.msra.mxu0 0.0
        %7967 = vmatprep.subr.mxu0 0.0
        %7968 = vmatpush2.xpose.msra.mxu0 0.0
        %7969 = vmatprep.subr.mxu0 0.0
        %7970 = vmatpush2.xpose.msra.mxu0 0.0
        %7971 = vmatprep.subr.mxu0 0.0
        %7972 = vmatpush2.xpose.msra.mxu0 0.0
        %7973 = vmatprep.subr.mxu0 0.0
        %7974 = vmatpush2.xpose.msra.mxu0 0.0
        %7975 = vmatprep.subr.mxu0 0.0
        %7976 = vmatpush2.xpose.msra.mxu0 0.0
        %7977 = vmatprep.subr.mxu0 0.0
        %7978 = vmatpush2.xpose.msra.mxu0 0.0
        %7979 = vmatprep.mubr.f32.mxu0 %v7671
        %7980 = vmatmul.mubr.f32.gmra.mxu0 %v7670
        %v7981 = vpop.f32.mrf.mxu0
        %v7982 = vadd.f32 %v7912, %v7981
        %v7983 = vpop.f32.mrf.mxu0
        %7984 = vdwg.mxu0
        %v7985 = vadd.f32 %v7631, %v7982
        %v7986 = vld [vmem:[%s15] sm:$0x1]
        %v7988 = vlaneseq
        %v7989 = vshrl.u32 %v7988, 7
        %v7990 = vsub.s32 0, %v7989
        %v7991 = vrot.slane %v7986, %v7990
        %v7993 = vadd.f32 %v7985, %v7991
        %v7994 = vmax.f32 %v7993, 0.0
        %v7995 = vld [vmem:[%s16] sm:$0xff]
        %v7996 = vld [vmem:[%s16 + $0x8] sm:$0xff]
        %v7997 = vld [vmem:[%s16 + $0x10] sm:$0xff]
        %v7998 = vld [vmem:[%s16 + $0x18] sm:$0xff]
        %v7999 = vld [vmem:[%s17] sm:$0x1]
        %v8001 = vlaneseq
        %v8002 = vshrl.u32 %v8001, 7
        %v8003 = vsub.s32 0, %v8002
        %v8004 = vrot.slane %v7999, %v8003
        %vm8006 = vcmask 261120
        %v8008 = vsel %vm8006, %v7994, 0
        %8010 = vmatprep.subr.mxu0 0.0
        %8011 = vmatpush1.msra.mxu0 0.0
        %8012 = vmatprep.subr.mxu0 0.0
        %8013 = vmatpush1.msra.mxu0 0.0
        %8014 = vmatprep.subr.mxu0 0.0
        %8015 = vmatpush1.msra.mxu0 0.0
        %8016 = vmatprep.subr.mxu0 0.0
        %8017 = vmatpush1.msra.mxu0 0.0
        %8018 = vmatprep.subr.mxu0 0.0
        %8019 = vmatpush1.msra.mxu0 0.0
        %8020 = vmatprep.subr.mxu0 0.0
        %8021 = vmatpush1.msra.mxu0 0.0
        %8022 = vmatprep.subr.mxu0 0.0
        %8023 = vmatpush1.msra.mxu0 0.0
        %8024 = vmatprep.subr.mxu0 0.0
        %8025 = vmatpush1.msra.mxu0 0.0
        %8026 = vmatprep.subr.mxu0 0.0
        %8027 = vmatpush1.msra.mxu0 0.0
        %8028 = vmatprep.subr.mxu0 0.0
        %8029 = vmatpush1.msra.mxu0 0.0
        %8030 = vmatprep.subr.mxu0 0.0
        %8031 = vmatpush1.msra.mxu0 0.0
        %8032 = vmatprep.subr.mxu0 0.0
        %8033 = vmatpush1.msra.mxu0 0.0
        %8034 = vmatprep.subr.mxu0 0.0
        %8035 = vmatpush1.msra.mxu0 %v7998
        %8036 = vmatprep.subr.mxu0 0.0
        %8037 = vmatpush1.msra.mxu0 %v7997
        %8038 = vmatprep.subr.mxu0 0.0
        %8039 = vmatpush1.msra.mxu0 %v7996
        %8040 = vmatprep.subr.mxu0 0.0
        %8041 = vmatpush1.msra.mxu0 %v7995
        %8042 = vmatprep.subr.mxu0 0.0
        %8043 = vmatpush2.msra.mxu0 0.0
        %8044 = vmatprep.subr.mxu0 0.0
        %8045 = vmatpush2.msra.mxu0 0.0
        %8046 = vmatprep.subr.mxu0 0.0
        %8047 = vmatpush2.msra.mxu0 0.0
        %8048 = vmatprep.subr.mxu0 0.0
        %8049 = vmatpush2.msra.mxu0 0.0
        %8050 = vmatprep.subr.mxu0 0.0
        %8051 = vmatpush2.msra.mxu0 0.0
        %8052 = vmatprep.subr.mxu0 0.0
        %8053 = vmatpush2.msra.mxu0 0.0
        %8054 = vmatprep.subr.mxu0 0.0
        %8055 = vmatpush2.msra.mxu0 0.0
        %8056 = vmatprep.subr.mxu0 0.0
        %8057 = vmatpush2.msra.mxu0 0.0
        %8058 = vmatprep.subr.mxu0 0.0
        %8059 = vmatpush2.msra.mxu0 0.0
        %8060 = vmatprep.subr.mxu0 0.0
        %8061 = vmatpush2.msra.mxu0 0.0
        %8062 = vmatprep.subr.mxu0 0.0
        %8063 = vmatpush2.msra.mxu0 0.0
        %8064 = vmatprep.subr.mxu0 0.0
        %8065 = vmatpush2.msra.mxu0 0.0
        %8066 = vmatprep.subr.mxu0 0.0
        %8067 = vmatpush2.msra.mxu0 0.0
        %8068 = vmatprep.subr.mxu0 0.0
        %8069 = vmatpush2.msra.mxu0 0.0
        %8070 = vmatprep.subr.mxu0 0.0
        %8071 = vmatpush2.msra.mxu0 0.0
        %8072 = vmatprep.subr.mxu0 0.0
        %8073 = vmatpush2.msra.mxu0 0.0
        %8074 = vmatprep.mubr.f32.mxu0 0.0
        %8075 = vmatmul.mubr.f32.gmra.mxu0 %v8008
        %v8076 = vpop.f32.mrf.mxu0
        %v8077 = vadd.f32 %v8004, %v8076
        %v8078 = vpop.f32.mrf.mxu0
        %8079 = vdwg.mxu0
        %vm8080 = vcmask 31744
        %8081 = vst.msk [vmem:[%s703] sm:$0xff] %vm8080, %v8077
        %p8082 = scmp.lt.s32.totalorder %s37, 1
        %s8083 = scalar_select %p8082, %s37, 1
        %s8084 = smul.addr %s8083, 8
        %s8085 = scalar_lea.vmem %s18, %s8084
        // Predicated region
        $region121: #{tpu_custom_call.1} parent=91 // pred_check
          %p8086 = pneg %p443
        $region122: #{tpu_custom_call.1} parent=91 // pred_check_branch
          %8088 = sbr.rel (%p8086) target = $region124
        $region123: #{tpu_custom_call.1} parent=91 // pred_region
          _
        $region124: #{tpu_custom_call.1} parent=91 // pred_fallthru
          _
      $region92: #{tpu_custom_call.1} parent=5 // pred_fallthru
        _
      %p8089 = scmp.le.s32.totalorder 2, %s32
      // Predicated region
      $region125: #{tpu_custom_call.1} parent=5 // pred_check
        %p8090 = pneg %p8089
      $region126: #{tpu_custom_call.1} parent=5 // pred_check_branch
        %8092 = sbr.rel (%p8090) target = $region128
      $region127: #{tpu_custom_call.1} parent=5 // pred_region
        %s8093 = ssub.s32 %s32, 2
        // Predicated region
        $region129: #{tpu_custom_call.1} parent=127 // pred_check
          %p8094 = pneg %p449
        $region130: #{tpu_custom_call.1} parent=127 // pred_check_branch
          %8096 = sbr.rel (%p8094) target = $region132
        $region131: #{tpu_custom_call.1} parent=127 // pred_region
          %p8097 = scmp.lt.s32.totalorder %s38, 1
          %s8098 = scalar_select %p8097, %s38, 1
          %s8099 = smul.addr %s8098, 8
          %s8100 = scalar_lea.vmem %s18, %s8099
        $region132: #{tpu_custom_call.1} parent=127 // pred_fallthru
          _
      $region128: #{tpu_custom_call.1} parent=5 // pred_fallthru
        _
    $region6: #{tpu_custom_call.1} parent=1 // loop_footer
      %s36 = sadd.s32 1, %s32
    $region7: #{tpu_custom_call.1} parent=1 // loop_footer_branch
      %31 = sbr.rel target = $region3
    $region8: #{tpu_custom_call.1} parent=1 // loop_exit
      _
    %8101 = vsyncpa [#allocation6], 1
    %s8102 = scalar_lea.sflag [#allocation6], 1
    %8103 = vsyncpa %s8102, 1
    %8104 = vsyncpa [#allocation8], 1
    %s8105 = scalar_lea.sflag [#allocation8], 1
    %8106 = vsyncpa %s8105, 1
    %8107 = vsyncpa [#allocation11], 1
    %8108 = vsyncpa [#allocation14], 1

</llo_original>
